<compile_context>
chip_gen: v7x
topology: tpu7x:2x2x1
jax: 0.10.0
libtpu: 0.0.40
codegen_flags: <defaults>
</compile_context>

<pallas_src>
import functools

import jax
import jax.numpy as jnp
import numpy as np
from jax.experimental import pallas as pl
from jax.experimental.pallas import tpu as pltpu

C_HID = 128  # conv1/conv2 channel count == TPU lane width


# ----------------------------------------------------------------------------
# Fused encoder kernel: B_TILE images per grid step, everything stays in VMEM.
# ----------------------------------------------------------------------------
def _encoder_kernel(p1_ref, w1_ref, b1_ref, w2_ref, b2_ref, w3_ref, b3_ref,
                    out_ref, g_ref, h2p_ref, im2_ref, im3_ref, *, oh2, b_tile):
    """Shapes (oh2 = H//4, bt = b_tile, c = 128, m2 = oh2*oh2, m1 = 4*m2):
      p1_ref : (m1*bt, 32)            bf16  conv1 im2col, rows (pi,pj,s,t,batch)
      w1_ref : (32, 128)              bf16
      w2_ref : (2048, 128)            bf16  K packed as (kh,kw,cin)
      w3_ref : (1152, 128)            bf16  K packed as (kh,kw,cin), Cout padded
      b*_ref : (1, 128)               f32
      out_ref: (m2*bt, 128)           f32   lane-dense, wrapper slices channels
      g_ref  : (4*(oh2+1), oh2+1, bt, 128) bf16  phase-split padded conv1 out
      h2p_ref: (oh2+2, oh2+2, bt, 128)     bf16  zero-padded conv2 out
      im2_ref: (m2*bt, 2048)          bf16  conv2 im2col (taps packed along K)
      im3_ref: (m2*bt, 1152)          bf16  conv3 im2col (taps packed along K)
    """
    c = C_HID
    bt = b_tile
    m2 = oh2 * oh2

    # ---- zero only the halo borders of the padded scratch grids.  Interiors
    # are fully overwritten below every step, so per-step border zeroing is
    # cheap AND correct when the grid is partitioned across TensorCores.
    zrow_g = jnp.zeros((oh2 + 1, bt, c), jnp.bfloat16)
    zrow_h = jnp.zeros((oh2 + 2, bt, c), jnp.bfloat16)
    for pi in range(2):
        for pj in range(2):
            base = (pi * 2 + pj) * (oh2 + 1)
            g_ref[base + (1 - pi) * oh2, :, :, :] = zrow_g
            g_ref[base:base + oh2 + 1, (1 - pj) * oh2, :, :] = zrow_g
    h2p_ref[0, :, :, :] = zrow_h
    h2p_ref[oh2 + 1, :, :, :] = zrow_h
    h2p_ref[:, 0, :, :] = zrow_h
    h2p_ref[:, oh2 + 1, :, :] = zrow_h

    # ---- conv1: one (m1*bt, 32) @ (32, 128) MXU matmul; bias + ReLU in f32.
    h1 = jnp.dot(p1_ref[...], w1_ref[...], preferred_element_type=jnp.float32)
    h1 = jnp.maximum(h1 + b1_ref[...], 0.0).astype(jnp.bfloat16)   # (m1*bt, 128)

    # Scatter the four phase interiors into the zero-padded phase grids.
    # Conv1 output pixel (i, j) = (2s + pi, 2t + pj) lives at grid position
    # (pi + s, pj + t) of phase (pi, pj); all stores are whole-(bt,128) tiles.
    for pi in range(2):
        for pj in range(2):
            q = pi * 2 + pj
            base = q * (oh2 + 1)
            blk = h1[q * m2 * bt:(q + 1) * m2 * bt].reshape(oh2, oh2, bt, c)
            g_ref[base + pi:base + pi + oh2, pj:pj + oh2, :, :] = blk

    # ---- conv2: 16 stride-2 taps packed along K -> one (m2*bt, 2048) matmul.
    # Tap (kh, kw) reads phase (1-kh%2, 1-kw%2) at unstrided offset
    # (kh//2, kw//2); the window copy doubles as the im2col write.
    for kh in range(4):
        for kw in range(4):
            t = kh * 4 + kw
            q = 2 * (1 - kh % 2) + (1 - kw % 2)
            base = q * (oh2 + 1)
            win = g_ref[base + kh // 2:base + kh // 2 + oh2,
                        kw // 2:kw // 2 + oh2, :, :]
            im2_ref[:, t * c:(t + 1) * c] = win.reshape(m2 * bt, c)
    h2 = jnp.dot(im2_ref[...], w2_ref[...], preferred_element_type=jnp.float32)
    h2 = jnp.maximum(h2 + b2_ref[...], 0.0).astype(jnp.bfloat16)   # (m2*bt, 128)
    h2p_ref[1:1 + oh2, 1:1 + oh2, :, :] = h2.reshape(oh2, oh2, bt, c)

    # ---- conv3 (stride 1): 9 taps packed along K -> one (m2*bt, 1152) matmul.
    for kh in range(3):
        for kw in range(3):
            t = kh * 3 + kw
            win = h2p_ref[kh:kh + oh2, kw:kw + oh2, :, :]
            im3_ref[:, t * c:(t + 1) * c] = win.reshape(m2 * bt, c)
    acc3 = jnp.dot(im3_ref[...], w3_ref[...], preferred_element_type=jnp.float32)
    out_ref[...] = acc3 + b3_ref[...]


# ----------------------------------------------------------------------------
# Wrapper-side glue (boundary transpose + tiny conv1 im2col, plain JAX).
# ----------------------------------------------------------------------------
def _conv1_patches(x_nchw, b_tile):
    """im2col for conv1 (k=4, s=2, p=1), feature order (kh, kw, cin).

    Rows within a grid-step block are ordered (pi, pj, s, t, batch-minor),
    where conv1 output pixel (i, j) = (2s + pi, 2t + pj), so the kernel can
    scatter conv1's matmul output straight into its phase-split grids.
    Only strided slices / reshapes / transposes (no gathers).  The activations
    are cast to bf16 here (documented MXU-operand precision choice).
    """
    N, C, H, W = x_nchw.shape
    oh1, oh2 = H // 2, H // 4
    x = jnp.transpose(x_nchw, (0, 2, 3, 1))                     # NHWC (boundary)
    xp = jnp.pad(x, ((0, 0), (1, 1), (1, 1), (0, 0)))           # (N, H+2, W+2, C)
    taps = []
    for kh in range(4):
        for kw in range(4):
            taps.append(xp[:, kh:kh + 2 * oh1:2, kw:kw + 2 * oh1:2, :])
    f = 16 * C
    p = jnp.stack(taps, axis=3).reshape(N, oh1, oh1, f)         # (n, i, j, feat)
    # (i, j) -> (pi, pj, s, t): pure reshape + transpose deinterleave.
    p = p.reshape(N, oh2, 2, oh2, 2, f).transpose(0, 2, 4, 1, 3, 5)
    m1 = 4 * oh2 * oh2
    g = N // b_tile
    p = p.reshape(g, b_tile, m1, f).transpose(0, 2, 1, 3)       # batch-minor
    return p.reshape(g * m1 * b_tile, f).astype(jnp.bfloat16)


def init_encoder_params(key, embedding_dim=3):
    k1, k2, k3, k4, k5, k6 = jax.random.split(key, 6)
    return {
        "w1": 0.1 * jax.random.normal(k1, (4, 4, 2, 128), jnp.float32),   # HWIO
        "b1": 0.1 * jax.random.normal(k2, (128,), jnp.float32),
        "w2": 0.05 * jax.random.normal(k3, (4, 4, 128, 128), jnp.float32),
        "b2": 0.1 * jax.random.normal(k4, (128,), jnp.float32),
        "w3": 0.05 * jax.random.normal(k5, (3, 3, 128, embedding_dim), jnp.float32),
        "b3": 0.1 * jax.random.normal(k6, (embedding_dim,), jnp.float32),
    }


@functools.partial(jax.jit, static_argnames=("b_tile",))
def encoder_forward(params, x_nchw, b_tile=16):
    N, c_in, H, W = x_nchw.shape
    assert c_in == 2 and H == W and H % 4 == 0, "expects NCHW, Cin=2, H=W, H%4==0"
    assert N % b_tile == 0, "batch must be a multiple of b_tile"
    emb = params["b3"].shape[0]
    assert emb <= C_HID
    oh2 = H // 4
    m2 = oh2 * oh2
    m1 = 4 * m2
    g = N // b_tile
    kdim1 = 16 * c_in                                            # 32

    patches = _conv1_patches(x_nchw, b_tile)                     # (g*m1*bt, 32)
    w1 = params["w1"].reshape(kdim1, C_HID).astype(jnp.bfloat16)
    b1 = params["b1"].reshape(1, C_HID).astype(jnp.float32)
    w2 = params["w2"].reshape(16 * C_HID, C_HID).astype(jnp.bfloat16)
    b2 = params["b2"].reshape(1, C_HID).astype(jnp.float32)
    w3 = jnp.pad(params["w3"], ((0, 0), (0, 0), (0, 0), (0, C_HID - emb)))
    w3 = w3.reshape(9 * C_HID, C_HID).astype(jnp.bfloat16)
    b3 = jnp.pad(params["b3"], ((0, C_HID - emb),)).reshape(1, C_HID)
    b3 = b3.astype(jnp.float32)

    kernel = functools.partial(_encoder_kernel, oh2=oh2, b_tile=b_tile)
    out = pl.pallas_call(
        kernel,
        out_shape=jax.ShapeDtypeStruct((g * m2 * b_tile, C_HID), jnp.float32),
        grid_spec=pltpu.PrefetchScalarGridSpec(
            num_scalar_prefetch=0,
            grid=(g,),
            in_specs=[
                pl.BlockSpec((m1 * b_tile, kdim1), lambda i: (i, 0)),
                pl.BlockSpec((kdim1, C_HID), lambda i: (0, 0)),
                pl.BlockSpec((1, C_HID), lambda i: (0, 0)),
                pl.BlockSpec((16 * C_HID, C_HID), lambda i: (0, 0)),
                pl.BlockSpec((1, C_HID), lambda i: (0, 0)),
                pl.BlockSpec((9 * C_HID, C_HID), lambda i: (0, 0)),
                pl.BlockSpec((1, C_HID), lambda i: (0, 0)),
            ],
            out_specs=pl.BlockSpec((m2 * b_tile, C_HID), lambda i: (i, 0)),
            scratch_shapes=[
                pltpu.VMEM((4 * (oh2 + 1), oh2 + 1, b_tile, C_HID), jnp.bfloat16),
                pltpu.VMEM((oh2 + 2, oh2 + 2, b_tile, C_HID), jnp.bfloat16),
                pltpu.VMEM((m2 * b_tile, 16 * C_HID), jnp.bfloat16),
                pltpu.VMEM((m2 * b_tile, 9 * C_HID), jnp.bfloat16),
            ],
        ),
        compiler_params=pltpu.CompilerParams(
            dimension_semantics=("parallel",),
        ),
    )(patches, w1, b1, w2, b2, w3, b3)

    # (g*m2*bt, 128) -> NCHW, slice off the padded output channels.
    out = out.reshape(g, oh2, oh2, b_tile, C_HID)
    out = jnp.transpose(out, (0, 3, 4, 1, 2)).reshape(N, C_HID, oh2, oh2)
    return out[:, :emb]


# ----------------------------------------------------------------------------
# Pure-JAX f32 reference (correctness sanity check).
# ----------------------------------------------------------------------------
def _conv_ref(x_nchw, w_hwio, bias, stride, pad):
    out = jax.lax.conv_general_dilated(
        x_nchw, w_hwio, window_strides=(stride, stride),
        padding=[(pad, pad), (pad, pad)],
        dimension_numbers=("NCHW", "HWIO", "NCHW"),
        precision=jax.lax.Precision.HIGHEST)
    return out + bias[None, :, None, None]


def _encoder_ref(params, x):
    x = jnp.maximum(_conv_ref(x, params["w1"], params["b1"], 2, 1), 0.0)
    x = jnp.maximum(_conv_ref(x, params["w2"], params["b2"], 2, 1), 0.0)
    return _conv_ref(x, params["w3"], params["b3"], 1, 1)


if __name__ == "__main__":
    key = jax.random.PRNGKey(0)
    pkey, xkey, xkey2 = jax.random.split(key, 3)
    params = init_encoder_params(pkey, embedding_dim=3)

    # Primary check: 32 images of 2x16x16, B_TILE=16 -> grid=(2,).
    x = jax.random.normal(xkey, (32, 2, 16, 16), jnp.float32)
    out = jax.block_until_ready(encoder_forward(params, x, b_tile=16))
    assert out.shape == (32, 3, 4, 4), out.shape
    ref = jax.block_until_ready(_encoder_ref(params, x))
    # bf16 MXU operands with f32 accumulation -> ~1% relative error budget.
    np.testing.assert_allclose(np.asarray(out), np.asarray(ref),
                               rtol=2e-2, atol=3e-2)

    # Secondary check at a different spatial size: validates that the
    # phase/halo index arithmetic generalizes beyond H=16.
    x2 = jax.random.normal(xkey2, (16, 2, 8, 8), jnp.float32)
    out2 = jax.block_until_ready(encoder_forward(params, x2, b_tile=16))
    assert out2.shape == (16, 3, 2, 2), out2.shape
    ref2 = jax.block_until_ready(_encoder_ref(params, x2))
    np.testing.assert_allclose(np.asarray(out2), np.asarray(ref2),
                               rtol=2e-2, atol=3e-2)

    print("KERNEL_OK")
</pallas_src>

<mosaic_0001>
module attributes {stable_mosaic.version = 11 : i64} {
  func.func @_encoder_kernel(%arg0: i32, %arg1: memref<1024x32xbf16, #tpu.memory_space<vmem>>, %arg2: memref<32x128xbf16, #tpu.memory_space<vmem>>, %arg3: memref<1x128xf32, #tpu.memory_space<vmem>>, %arg4: memref<2048x128xbf16, #tpu.memory_space<vmem>>, %arg5: memref<1x128xf32, #tpu.memory_space<vmem>>, %arg6: memref<1152x128xbf16, #tpu.memory_space<vmem>>, %arg7: memref<1x128xf32, #tpu.memory_space<vmem>>, %arg8: memref<256x128xf32, #tpu.memory_space<vmem>>, %arg9: memref<20x5x16x128xbf16, #tpu.memory_space<vmem>>, %arg10: memref<6x6x16x128xbf16, #tpu.memory_space<vmem>>, %arg11: memref<256x2048xbf16, #tpu.memory_space<vmem>>, %arg12: memref<256x1152xbf16, #tpu.memory_space<vmem>>) attributes {dimension_semantics = [#tpu.dimension_semantics<parallel>], iteration_bounds = array<i64: 2>, scalar_prefetch = 0 : i64, scratch_operands = 4 : i64, tpu.core_type = #tpu.core_type<tc>, window_params = [{transform_indices = @transform_0, window_bounds = array<i64: 1024, 32>}, {pipeline_mode = #tpu.pipeline_mode<synchronous>, transform_indices = @transform_1, window_bounds = array<i64: 32, 128>}, {pipeline_mode = #tpu.pipeline_mode<synchronous>, transform_indices = @transform_2, window_bounds = array<i64: 1, 128>}, {pipeline_mode = #tpu.pipeline_mode<synchronous>, transform_indices = @transform_3, window_bounds = array<i64: 2048, 128>}, {pipeline_mode = #tpu.pipeline_mode<synchronous>, transform_indices = @transform_4, window_bounds = array<i64: 1, 128>}, {pipeline_mode = #tpu.pipeline_mode<synchronous>, transform_indices = @transform_5, window_bounds = array<i64: 1152, 128>}, {pipeline_mode = #tpu.pipeline_mode<synchronous>, transform_indices = @transform_6, window_bounds = array<i64: 1, 128>}, {transform_indices = @transform_7, window_bounds = array<i64: 256, 128>}]} {
    %cst = arith.constant 0.000000e+00 : bf16
    %0 = vector.broadcast %cst : bf16 to vector<5x16x128xbf16>
    %cst_0 = arith.constant 0.000000e+00 : bf16
    %1 = vector.broadcast %cst_0 : bf16 to vector<6x16x128xbf16>
    %c4 = arith.constant 4 : index
    %c0 = arith.constant 0 : index
    %c0_1 = arith.constant 0 : index
    %c0_2 = arith.constant 0 : index
    %2 = vector.load %arg9[%c4, %c0, %c0_1, %c0_2] : memref<20x5x16x128xbf16, #tpu.memory_space<vmem>>, vector<1x5x16x128xbf16>
    %3 = vector.shape_cast %2 : vector<1x5x16x128xbf16> to vector<5x16x128xbf16>
    %4 = vector.shape_cast %0 : vector<5x16x128xbf16> to vector<1x5x16x128xbf16>
    tpu.vector_store %arg9[%c4, %c0, %c0_1, %c0_2], %4 {strides = array<i32>} : memref<20x5x16x128xbf16, #tpu.memory_space<vmem>>, vector<1x5x16x128xbf16>,
    %c0_3 = arith.constant 0 : index
    %c4_4 = arith.constant 4 : index
    %c0_5 = arith.constant 0 : index
    %c0_6 = arith.constant 0 : index
    %5 = vector.load %arg9[%c0_3, %c4_4, %c0_5, %c0_6] : memref<20x5x16x128xbf16, #tpu.memory_space<vmem>>, vector<5x1x16x128xbf16>
    %6 = vector.shape_cast %5 : vector<5x1x16x128xbf16> to vector<5x16x128xbf16>
    %7 = vector.shape_cast %0 : vector<5x16x128xbf16> to vector<5x1x16x128xbf16>
    tpu.vector_store %arg9[%c0_3, %c4_4, %c0_5, %c0_6], %7 {strides = array<i32>} : memref<20x5x16x128xbf16, #tpu.memory_space<vmem>>, vector<5x1x16x128xbf16>,
    %c9 = arith.constant 9 : index
    %c0_7 = arith.constant 0 : index
    %c0_8 = arith.constant 0 : index
    %c0_9 = arith.constant 0 : index
    %8 = vector.load %arg9[%c9, %c0_7, %c0_8, %c0_9] : memref<20x5x16x128xbf16, #tpu.memory_space<vmem>>, vector<1x5x16x128xbf16>
    %9 = vector.shape_cast %8 : vector<1x5x16x128xbf16> to vector<5x16x128xbf16>
    %10 = vector.shape_cast %0 : vector<5x16x128xbf16> to vector<1x5x16x128xbf16>
    tpu.vector_store %arg9[%c9, %c0_7, %c0_8, %c0_9], %10 {strides = array<i32>} : memref<20x5x16x128xbf16, #tpu.memory_space<vmem>>, vector<1x5x16x128xbf16>,
    %c5 = arith.constant 5 : index
    %c0_10 = arith.constant 0 : index
    %c0_11 = arith.constant 0 : index
    %c0_12 = arith.constant 0 : index
    %11 = vector.load %arg9[%c5, %c0_10, %c0_11, %c0_12] : memref<20x5x16x128xbf16, #tpu.memory_space<vmem>>, vector<5x1x16x128xbf16>
    %12 = vector.shape_cast %11 : vector<5x1x16x128xbf16> to vector<5x16x128xbf16>
    %13 = vector.shape_cast %0 : vector<5x16x128xbf16> to vector<5x1x16x128xbf16>
    tpu.vector_store %arg9[%c5, %c0_10, %c0_11, %c0_12], %13 {strides = array<i32>} : memref<20x5x16x128xbf16, #tpu.memory_space<vmem>>, vector<5x1x16x128xbf16>,
    %c10 = arith.constant 10 : index
    %c0_13 = arith.constant 0 : index
    %c0_14 = arith.constant 0 : index
    %c0_15 = arith.constant 0 : index
    %14 = vector.load %arg9[%c10, %c0_13, %c0_14, %c0_15] : memref<20x5x16x128xbf16, #tpu.memory_space<vmem>>, vector<1x5x16x128xbf16>
    %15 = vector.shape_cast %14 : vector<1x5x16x128xbf16> to vector<5x16x128xbf16>
    %16 = vector.shape_cast %0 : vector<5x16x128xbf16> to vector<1x5x16x128xbf16>
    tpu.vector_store %arg9[%c10, %c0_13, %c0_14, %c0_15], %16 {strides = array<i32>} : memref<20x5x16x128xbf16, #tpu.memory_space<vmem>>, vector<1x5x16x128xbf16>,
    %c10_16 = arith.constant 10 : index
    %c4_17 = arith.constant 4 : index
    %c0_18 = arith.constant 0 : index
    %c0_19 = arith.constant 0 : index
    %17 = vector.load %arg9[%c10_16, %c4_17, %c0_18, %c0_19] : memref<20x5x16x128xbf16, #tpu.memory_space<vmem>>, vector<5x1x16x128xbf16>
    %18 = vector.shape_cast %17 : vector<5x1x16x128xbf16> to vector<5x16x128xbf16>
    %19 = vector.shape_cast %0 : vector<5x16x128xbf16> to vector<5x1x16x128xbf16>
    tpu.vector_store %arg9[%c10_16, %c4_17, %c0_18, %c0_19], %19 {strides = array<i32>} : memref<20x5x16x128xbf16, #tpu.memory_space<vmem>>, vector<5x1x16x128xbf16>,
    %c15 = arith.constant 15 : index
    %c0_20 = arith.constant 0 : index
    %c0_21 = arith.constant 0 : index
    %c0_22 = arith.constant 0 : index
    %20 = vector.load %arg9[%c15, %c0_20, %c0_21, %c0_22] : memref<20x5x16x128xbf16, #tpu.memory_space<vmem>>, vector<1x5x16x128xbf16>
    %21 = vector.shape_cast %20 : vector<1x5x16x128xbf16> to vector<5x16x128xbf16>
    %22 = vector.shape_cast %0 : vector<5x16x128xbf16> to vector<1x5x16x128xbf16>
    tpu.vector_store %arg9[%c15, %c0_20, %c0_21, %c0_22], %22 {strides = array<i32>} : memref<20x5x16x128xbf16, #tpu.memory_space<vmem>>, vector<1x5x16x128xbf16>,
    %c15_23 = arith.constant 15 : index
    %c0_24 = arith.constant 0 : index
    %c0_25 = arith.constant 0 : index
    %c0_26 = arith.constant 0 : index
    %23 = vector.load %arg9[%c15_23, %c0_24, %c0_25, %c0_26] : memref<20x5x16x128xbf16, #tpu.memory_space<vmem>>, vector<5x1x16x128xbf16>
    %24 = vector.shape_cast %23 : vector<5x1x16x128xbf16> to vector<5x16x128xbf16>
    %25 = vector.shape_cast %0 : vector<5x16x128xbf16> to vector<5x1x16x128xbf16>
    tpu.vector_store %arg9[%c15_23, %c0_24, %c0_25, %c0_26], %25 {strides = array<i32>} : memref<20x5x16x128xbf16, #tpu.memory_space<vmem>>, vector<5x1x16x128xbf16>,
    %c0_27 = arith.constant 0 : index
    %c0_28 = arith.constant 0 : index
    %c0_29 = arith.constant 0 : index
    %c0_30 = arith.constant 0 : index
    %26 = vector.load %arg10[%c0_27, %c0_28, %c0_29, %c0_30] : memref<6x6x16x128xbf16, #tpu.memory_space<vmem>>, vector<1x6x16x128xbf16>
    %27 = vector.shape_cast %26 : vector<1x6x16x128xbf16> to vector<6x16x128xbf16>
    %28 = vector.shape_cast %1 : vector<6x16x128xbf16> to vector<1x6x16x128xbf16>
    tpu.vector_store %arg10[%c0_27, %c0_28, %c0_29, %c0_30], %28 {strides = array<i32>} : memref<6x6x16x128xbf16, #tpu.memory_space<vmem>>, vector<1x6x16x128xbf16>,
    %c5_31 = arith.constant 5 : index
    %c0_32 = arith.constant 0 : index
    %c0_33 = arith.constant 0 : index
    %c0_34 = arith.constant 0 : index
    %29 = vector.load %arg10[%c5_31, %c0_32, %c0_33, %c0_34] : memref<6x6x16x128xbf16, #tpu.memory_space<vmem>>, vector<1x6x16x128xbf16>
    %30 = vector.shape_cast %29 : vector<1x6x16x128xbf16> to vector<6x16x128xbf16>
    %31 = vector.shape_cast %1 : vector<6x16x128xbf16> to vector<1x6x16x128xbf16>
    tpu.vector_store %arg10[%c5_31, %c0_32, %c0_33, %c0_34], %31 {strides = array<i32>} : memref<6x6x16x128xbf16, #tpu.memory_space<vmem>>, vector<1x6x16x128xbf16>,
    %c0_35 = arith.constant 0 : index
    %c0_36 = arith.constant 0 : index
    %c0_37 = arith.constant 0 : index
    %c0_38 = arith.constant 0 : index
    %32 = vector.load %arg10[%c0_35, %c0_36, %c0_37, %c0_38] : memref<6x6x16x128xbf16, #tpu.memory_space<vmem>>, vector<6x1x16x128xbf16>
    %33 = vector.shape_cast %32 : vector<6x1x16x128xbf16> to vector<6x16x128xbf16>
    %34 = vector.shape_cast %1 : vector<6x16x128xbf16> to vector<6x1x16x128xbf16>
    tpu.vector_store %arg10[%c0_35, %c0_36, %c0_37, %c0_38], %34 {strides = array<i32>} : memref<6x6x16x128xbf16, #tpu.memory_space<vmem>>, vector<6x1x16x128xbf16>,
    %c0_39 = arith.constant 0 : index
    %c5_40 = arith.constant 5 : index
    %c0_41 = arith.constant 0 : index
    %c0_42 = arith.constant 0 : index
    %35 = vector.load %arg10[%c0_39, %c5_40, %c0_41, %c0_42] : memref<6x6x16x128xbf16, #tpu.memory_space<vmem>>, vector<6x1x16x128xbf16>
    %36 = vector.shape_cast %35 : vector<6x1x16x128xbf16> to vector<6x16x128xbf16>
    %37 = vector.shape_cast %1 : vector<6x16x128xbf16> to vector<6x1x16x128xbf16>
    tpu.vector_store %arg10[%c0_39, %c5_40, %c0_41, %c0_42], %37 {strides = array<i32>} : memref<6x6x16x128xbf16, #tpu.memory_space<vmem>>, vector<6x1x16x128xbf16>,
    %c0_43 = arith.constant 0 : index
    %c0_44 = arith.constant 0 : index
    %38 = vector.load %arg1[%c0_43, %c0_44] : memref<1024x32xbf16, #tpu.memory_space<vmem>>, vector<1024x32xbf16>
    %c0_45 = arith.constant 0 : index
    %c0_46 = arith.constant 0 : index
    %39 = vector.load %arg2[%c0_45, %c0_46] : memref<32x128xbf16, #tpu.memory_space<vmem>>, vector<32x128xbf16>
    %cst_47 = arith.constant dense<0.000000e+00> : vector<1024x128xf32>
    %40 = tpu.matmul %38, %39, %cst_47 {dimension_numbers = #tpu.dot_dimension_numbers<[1], [0], [0], [1], [0, 0, 1, 1], [], []>} : vector<1024x32xbf16>, vector<32x128xbf16>, vector<1024x128xf32> -> vector<1024x128xf32>
    %c0_48 = arith.constant 0 : index
    %c0_49 = arith.constant 0 : index
    %41 = vector.load %arg3[%c0_48, %c0_49] : memref<1x128xf32, #tpu.memory_space<vmem>>, vector<1x128xf32>
    %42 = vector.broadcast %41 : vector<1x128xf32> to vector<1024x128xf32>
    %43 = arith.addf %40, %42 : vector<1024x128xf32>
    %cst_50 = arith.constant 0.000000e+00 : f32
    %44 = vector.broadcast %cst_50 : f32 to vector<1024x128xf32>
    %45 = arith.maximumf %43, %44 : vector<1024x128xf32>
    %46 = arith.truncf %45 : vector<1024x128xf32> to vector<1024x128xbf16>
    %47 = vector.extract_strided_slice %46 {offsets = [0, 0], sizes = [256, 128], strides = [1, 1]} : vector<1024x128xbf16> to vector<256x128xbf16>
    %48 = vector.shape_cast %47 : vector<256x128xbf16> to vector<4x4x16x128xbf16>
    %c0_51 = arith.constant 0 : index
    %c0_52 = arith.constant 0 : index
    %c0_53 = arith.constant 0 : index
    %c0_54 = arith.constant 0 : index
    %49 = vector.load %arg9[%c0_51, %c0_52, %c0_53, %c0_54] : memref<20x5x16x128xbf16, #tpu.memory_space<vmem>>, vector<4x4x16x128xbf16>
    tpu.vector_store %arg9[%c0_51, %c0_52, %c0_53, %c0_54], %48 {strides = array<i32>} : memref<20x5x16x128xbf16, #tpu.memory_space<vmem>>, vector<4x4x16x128xbf16>,
    %50 = vector.extract_strided_slice %46 {offsets = [256, 0], sizes = [256, 128], strides = [1, 1]} : vector<1024x128xbf16> to vector<256x128xbf16>
    %51 = vector.shape_cast %50 : vector<256x128xbf16> to vector<4x4x16x128xbf16>
    %c5_55 = arith.constant 5 : index
    %c1 = arith.constant 1 : index
    %c0_56 = arith.constant 0 : index
    %c0_57 = arith.constant 0 : index
    %52 = vector.load %arg9[%c5_55, %c1, %c0_56, %c0_57] : memref<20x5x16x128xbf16, #tpu.memory_space<vmem>>, vector<4x4x16x128xbf16>
    tpu.vector_store %arg9[%c5_55, %c1, %c0_56, %c0_57], %51 {strides = array<i32>} : memref<20x5x16x128xbf16, #tpu.memory_space<vmem>>, vector<4x4x16x128xbf16>,
    %53 = vector.extract_strided_slice %46 {offsets = [512, 0], sizes = [256, 128], strides = [1, 1]} : vector<1024x128xbf16> to vector<256x128xbf16>
    %54 = vector.shape_cast %53 : vector<256x128xbf16> to vector<4x4x16x128xbf16>
    %c11 = arith.constant 11 : index
    %c0_58 = arith.constant 0 : index
    %c0_59 = arith.constant 0 : index
    %c0_60 = arith.constant 0 : index
    %55 = vector.load %arg9[%c11, %c0_58, %c0_59, %c0_60] : memref<20x5x16x128xbf16, #tpu.memory_space<vmem>>, vector<4x4x16x128xbf16>
    tpu.vector_store %arg9[%c11, %c0_58, %c0_59, %c0_60], %54 {strides = array<i32>} : memref<20x5x16x128xbf16, #tpu.memory_space<vmem>>, vector<4x4x16x128xbf16>,
    %56 = vector.extract_strided_slice %46 {offsets = [768, 0], sizes = [256, 128], strides = [1, 1]} : vector<1024x128xbf16> to vector<256x128xbf16>
    %57 = vector.shape_cast %56 : vector<256x128xbf16> to vector<4x4x16x128xbf16>
    %c16 = arith.constant 16 : index
    %c1_61 = arith.constant 1 : index
    %c0_62 = arith.constant 0 : index
    %c0_63 = arith.constant 0 : index
    %58 = vector.load %arg9[%c16, %c1_61, %c0_62, %c0_63] : memref<20x5x16x128xbf16, #tpu.memory_space<vmem>>, vector<4x4x16x128xbf16>
    tpu.vector_store %arg9[%c16, %c1_61, %c0_62, %c0_63], %57 {strides = array<i32>} : memref<20x5x16x128xbf16, #tpu.memory_space<vmem>>, vector<4x4x16x128xbf16>,
    %c15_64 = arith.constant 15 : index
    %c0_65 = arith.constant 0 : index
    %c0_66 = arith.constant 0 : index
    %c0_67 = arith.constant 0 : index
    %59 = vector.load %arg9[%c15_64, %c0_65, %c0_66, %c0_67] : memref<20x5x16x128xbf16, #tpu.memory_space<vmem>>, vector<4x4x16x128xbf16>
    %60 = vector.shape_cast %59 : vector<4x4x16x128xbf16> to vector<256x128xbf16>
    %c0_68 = arith.constant 0 : index
    %c0_69 = arith.constant 0 : index
    %61 = vector.load %arg11[%c0_68, %c0_69] : memref<256x2048xbf16, #tpu.memory_space<vmem>>, vector<256x128xbf16>
    tpu.vector_store %arg11[%c0_68, %c0_69], %60 {strides = array<i32>} : memref<256x2048xbf16, #tpu.memory_space<vmem>>, vector<256x128xbf16>,
    %c10_70 = arith.constant 10 : index
    %c0_71 = arith.constant 0 : index
    %c0_72 = arith.constant 0 : index
    %c0_73 = arith.constant 0 : index
    %62 = vector.load %arg9[%c10_70, %c0_71, %c0_72, %c0_73] : memref<20x5x16x128xbf16, #tpu.memory_space<vmem>>, vector<4x4x16x128xbf16>
    %63 = vector.shape_cast %62 : vector<4x4x16x128xbf16> to vector<256x128xbf16>
    %c0_74 = arith.constant 0 : index
    %c128 = arith.constant 128 : index
    %64 = vector.load %arg11[%c0_74, %c128] : memref<256x2048xbf16, #tpu.memory_space<vmem>>, vector<256x128xbf16>
    tpu.vector_store %arg11[%c0_74, %c128], %63 {strides = array<i32>} : memref<256x2048xbf16, #tpu.memory_space<vmem>>, vector<256x128xbf16>,
    %c15_75 = arith.constant 15 : index
    %c1_76 = arith.constant 1 : index
    %c0_77 = arith.constant 0 : index
    %c0_78 = arith.constant 0 : index
    %65 = vector.load %arg9[%c15_75, %c1_76, %c0_77, %c0_78] : memref<20x5x16x128xbf16, #tpu.memory_space<vmem>>, vector<4x4x16x128xbf16>
    %66 = vector.shape_cast %65 : vector<4x4x16x128xbf16> to vector<256x128xbf16>
    %c0_79 = arith.constant 0 : index
    %c256 = arith.constant 256 : index
    %67 = vector.load %arg11[%c0_79, %c256] : memref<256x2048xbf16, #tpu.memory_space<vmem>>, vector<256x128xbf16>
    tpu.vector_store %arg11[%c0_79, %c256], %66 {strides = array<i32>} : memref<256x2048xbf16, #tpu.memory_space<vmem>>, vector<256x128xbf16>,
    %c10_80 = arith.constant 10 : index
    %c1_81 = arith.constant 1 : index
    %c0_82 = arith.constant 0 : index
    %c0_83 = arith.constant 0 : index
    %68 = vector.load %arg9[%c10_80, %c1_81, %c0_82, %c0_83] : memref<20x5x16x128xbf16, #tpu.memory_space<vmem>>, vector<4x4x16x128xbf16>
    %69 = vector.shape_cast %68 : vector<4x4x16x128xbf16> to vector<256x128xbf16>
    %c0_84 = arith.constant 0 : index
    %c384 = arith.constant 384 : index
    %70 = vector.load %arg11[%c0_84, %c384] : memref<256x2048xbf16, #tpu.memory_space<vmem>>, vector<256x128xbf16>
    tpu.vector_store %arg11[%c0_84, %c384], %69 {strides = array<i32>} : memref<256x2048xbf16, #tpu.memory_space<vmem>>, vector<256x128xbf16>,
    %c5_85 = arith.constant 5 : index
    %c0_86 = arith.constant 0 : index
    %c0_87 = arith.constant 0 : index
    %c0_88 = arith.constant 0 : index
    %71 = vector.load %arg9[%c5_85, %c0_86, %c0_87, %c0_88] : memref<20x5x16x128xbf16, #tpu.memory_space<vmem>>, vector<4x4x16x128xbf16>
    %72 = vector.shape_cast %71 : vector<4x4x16x128xbf16> to vector<256x128xbf16>
    %c0_89 = arith.constant 0 : index
    %c512 = arith.constant 512 : index
    %73 = vector.load %arg11[%c0_89, %c512] : memref<256x2048xbf16, #tpu.memory_space<vmem>>, vector<256x128xbf16>
    tpu.vector_store %arg11[%c0_89, %c512], %72 {strides = array<i32>} : memref<256x2048xbf16, #tpu.memory_space<vmem>>, vector<256x128xbf16>,
    %c0_90 = arith.constant 0 : index
    %c0_91 = arith.constant 0 : index
    %c0_92 = arith.constant 0 : index
    %c0_93 = arith.constant 0 : index
    %74 = vector.load %arg9[%c0_90, %c0_91, %c0_92, %c0_93] : memref<20x5x16x128xbf16, #tpu.memory_space<vmem>>, vector<4x4x16x128xbf16>
    %75 = vector.shape_cast %74 : vector<4x4x16x128xbf16> to vector<256x128xbf16>
    %c0_94 = arith.constant 0 : index
    %c640 = arith.constant 640 : index
    %76 = vector.load %arg11[%c0_94, %c640] : memref<256x2048xbf16, #tpu.memory_space<vmem>>, vector<256x128xbf16>
    tpu.vector_store %arg11[%c0_94, %c640], %75 {strides = array<i32>} : memref<256x2048xbf16, #tpu.memory_space<vmem>>, vector<256x128xbf16>,
    %c5_95 = arith.constant 5 : index
    %c1_96 = arith.constant 1 : index
    %c0_97 = arith.constant 0 : index
    %c0_98 = arith.constant 0 : index
    %77 = vector.load %arg9[%c5_95, %c1_96, %c0_97, %c0_98] : memref<20x5x16x128xbf16, #tpu.memory_space<vmem>>, vector<4x4x16x128xbf16>
    %78 = vector.shape_cast %77 : vector<4x4x16x128xbf16> to vector<256x128xbf16>
    %c0_99 = arith.constant 0 : index
    %c768 = arith.constant 768 : index
    %79 = vector.load %arg11[%c0_99, %c768] : memref<256x2048xbf16, #tpu.memory_space<vmem>>, vector<256x128xbf16>
    tpu.vector_store %arg11[%c0_99, %c768], %78 {strides = array<i32>} : memref<256x2048xbf16, #tpu.memory_space<vmem>>, vector<256x128xbf16>,
    %c0_100 = arith.constant 0 : index
    %c1_101 = arith.constant 1 : index
    %c0_102 = arith.constant 0 : index
    %c0_103 = arith.constant 0 : index
    %80 = vector.load %arg9[%c0_100, %c1_101, %c0_102, %c0_103] : memref<20x5x16x128xbf16, #tpu.memory_space<vmem>>, vector<4x4x16x128xbf16>
    %81 = vector.shape_cast %80 : vector<4x4x16x128xbf16> to vector<256x128xbf16>
    %c0_104 = arith.constant 0 : index
    %c896 = arith.constant 896 : index
    %82 = vector.load %arg11[%c0_104, %c896] : memref<256x2048xbf16, #tpu.memory_space<vmem>>, vector<256x128xbf16>
    tpu.vector_store %arg11[%c0_104, %c896], %81 {strides = array<i32>} : memref<256x2048xbf16, #tpu.memory_space<vmem>>, vector<256x128xbf16>,
    %c16_105 = arith.constant 16 : index
    %c0_106 = arith.constant 0 : index
    %c0_107 = arith.constant 0 : index
    %c0_108 = arith.constant 0 : index
    %83 = vector.load %arg9[%c16_105, %c0_106, %c0_107, %c0_108] : memref<20x5x16x128xbf16, #tpu.memory_space<vmem>>, vector<4x4x16x128xbf16>
    %84 = vector.shape_cast %83 : vector<4x4x16x128xbf16> to vector<256x128xbf16>
    %c0_109 = arith.constant 0 : index
    %c1024 = arith.constant 1024 : index
    %85 = vector.load %arg11[%c0_109, %c1024] : memref<256x2048xbf16, #tpu.memory_space<vmem>>, vector<256x128xbf16>
    tpu.vector_store %arg11[%c0_109, %c1024], %84 {strides = array<i32>} : memref<256x2048xbf16, #tpu.memory_space<vmem>>, vector<256x128xbf16>,
    %c11_110 = arith.constant 11 : index
    %c0_111 = arith.constant 0 : index
    %c0_112 = arith.constant 0 : index
    %c0_113 = arith.constant 0 : index
    %86 = vector.load %arg9[%c11_110, %c0_111, %c0_112, %c0_113] : memref<20x5x16x128xbf16, #tpu.memory_space<vmem>>, vector<4x4x16x128xbf16>
    %87 = vector.shape_cast %86 : vector<4x4x16x128xbf16> to vector<256x128xbf16>
    %c0_114 = arith.constant 0 : index
    %c1152 = arith.constant 1152 : index
    %88 = vector.load %arg11[%c0_114, %c1152] : memref<256x2048xbf16, #tpu.memory_space<vmem>>, vector<256x128xbf16>
    tpu.vector_store %arg11[%c0_114, %c1152], %87 {strides = array<i32>} : memref<256x2048xbf16, #tpu.memory_space<vmem>>, vector<256x128xbf16>,
    %c16_115 = arith.constant 16 : index
    %c1_116 = arith.constant 1 : index
    %c0_117 = arith.constant 0 : index
    %c0_118 = arith.constant 0 : index
    %89 = vector.load %arg9[%c16_115, %c1_116, %c0_117, %c0_118] : memref<20x5x16x128xbf16, #tpu.memory_space<vmem>>, vector<4x4x16x128xbf16>
    %90 = vector.shape_cast %89 : vector<4x4x16x128xbf16> to vector<256x128xbf16>
    %c0_119 = arith.constant 0 : index
    %c1280 = arith.constant 1280 : index
    %91 = vector.load %arg11[%c0_119, %c1280] : memref<256x2048xbf16, #tpu.memory_space<vmem>>, vector<256x128xbf16>
    tpu.vector_store %arg11[%c0_119, %c1280], %90 {strides = array<i32>} : memref<256x2048xbf16, #tpu.memory_space<vmem>>, vector<256x128xbf16>,
    %c11_120 = arith.constant 11 : index
    %c1_121 = arith.constant 1 : index
    %c0_122 = arith.constant 0 : index
    %c0_123 = arith.constant 0 : index
    %92 = vector.load %arg9[%c11_120, %c1_121, %c0_122, %c0_123] : memref<20x5x16x128xbf16, #tpu.memory_space<vmem>>, vector<4x4x16x128xbf16>
    %93 = vector.shape_cast %92 : vector<4x4x16x128xbf16> to vector<256x128xbf16>
    %c0_124 = arith.constant 0 : index
    %c1408 = arith.constant 1408 : index
    %94 = vector.load %arg11[%c0_124, %c1408] : memref<256x2048xbf16, #tpu.memory_space<vmem>>, vector<256x128xbf16>
    tpu.vector_store %arg11[%c0_124, %c1408], %93 {strides = array<i32>} : memref<256x2048xbf16, #tpu.memory_space<vmem>>, vector<256x128xbf16>,
    %c6 = arith.constant 6 : index
    %c0_125 = arith.constant 0 : index
    %c0_126 = arith.constant 0 : index
    %c0_127 = arith.constant 0 : index
    %95 = vector.load %arg9[%c6, %c0_125, %c0_126, %c0_127] : memref<20x5x16x128xbf16, #tpu.memory_space<vmem>>, vector<4x4x16x128xbf16>
    %96 = vector.shape_cast %95 : vector<4x4x16x128xbf16> to vector<256x128xbf16>
    %c0_128 = arith.constant 0 : index
    %c1536 = arith.constant 1536 : index
    %97 = vector.load %arg11[%c0_128, %c1536] : memref<256x2048xbf16, #tpu.memory_space<vmem>>, vector<256x128xbf16>
    tpu.vector_store %arg11[%c0_128, %c1536], %96 {strides = array<i32>} : memref<256x2048xbf16, #tpu.memory_space<vmem>>, vector<256x128xbf16>,
    %c1_129 = arith.constant 1 : index
    %c0_130 = arith.constant 0 : index
    %c0_131 = arith.constant 0 : index
    %c0_132 = arith.constant 0 : index
    %98 = vector.load %arg9[%c1_129, %c0_130, %c0_131, %c0_132] : memref<20x5x16x128xbf16, #tpu.memory_space<vmem>>, vector<4x4x16x128xbf16>
    %99 = vector.shape_cast %98 : vector<4x4x16x128xbf16> to vector<256x128xbf16>
    %c0_133 = arith.constant 0 : index
    %c1664 = arith.constant 1664 : index
    %100 = vector.load %arg11[%c0_133, %c1664] : memref<256x2048xbf16, #tpu.memory_space<vmem>>, vector<256x128xbf16>
    tpu.vector_store %arg11[%c0_133, %c1664], %99 {strides = array<i32>} : memref<256x2048xbf16, #tpu.memory_space<vmem>>, vector<256x128xbf16>,
    %c6_134 = arith.constant 6 : index
    %c1_135 = arith.constant 1 : index
    %c0_136 = arith.constant 0 : index
    %c0_137 = arith.constant 0 : index
    %101 = vector.load %arg9[%c6_134, %c1_135, %c0_136, %c0_137] : memref<20x5x16x128xbf16, #tpu.memory_space<vmem>>, vector<4x4x16x128xbf16>
    %102 = vector.shape_cast %101 : vector<4x4x16x128xbf16> to vector<256x128xbf16>
    %c0_138 = arith.constant 0 : index
    %c1792 = arith.constant 1792 : index
    %103 = vector.load %arg11[%c0_138, %c1792] : memref<256x2048xbf16, #tpu.memory_space<vmem>>, vector<256x128xbf16>
    tpu.vector_store %arg11[%c0_138, %c1792], %102 {strides = array<i32>} : memref<256x2048xbf16, #tpu.memory_space<vmem>>, vector<256x128xbf16>,
    %c1_139 = arith.constant 1 : index
    %c1_140 = arith.constant 1 : index
    %c0_141 = arith.constant 0 : index
    %c0_142 = arith.constant 0 : index
    %104 = vector.load %arg9[%c1_139, %c1_140, %c0_141, %c0_142] : memref<20x5x16x128xbf16, #tpu.memory_space<vmem>>, vector<4x4x16x128xbf16>
    %105 = vector.shape_cast %104 : vector<4x4x16x128xbf16> to vector<256x128xbf16>
    %c0_143 = arith.constant 0 : index
    %c1920 = arith.constant 1920 : index
    %106 = vector.load %arg11[%c0_143, %c1920] : memref<256x2048xbf16, #tpu.memory_space<vmem>>, vector<256x128xbf16>
    tpu.vector_store %arg11[%c0_143, %c1920], %105 {strides = array<i32>} : memref<256x2048xbf16, #tpu.memory_space<vmem>>, vector<256x128xbf16>,
    %c0_144 = arith.constant 0 : index
    %c0_145 = arith.constant 0 : index
    %107 = vector.load %arg11[%c0_144, %c0_145] : memref<256x2048xbf16, #tpu.memory_space<vmem>>, vector<256x2048xbf16>
    %c0_146 = arith.constant 0 : index
    %c0_147 = arith.constant 0 : index
    %108 = vector.load %arg4[%c0_146, %c0_147] : memref<2048x128xbf16, #tpu.memory_space<vmem>>, vector<2048x128xbf16>
    %cst_148 = arith.constant dense<0.000000e+00> : vector<256x128xf32>
    %109 = tpu.matmul %107, %108, %cst_148 {dimension_numbers = #tpu.dot_dimension_numbers<[1], [0], [0], [1], [0, 0, 1, 1], [], []>} : vector<256x2048xbf16>, vector<2048x128xbf16>, vector<256x128xf32> -> vector<256x128xf32>
    %c0_149 = arith.constant 0 : index
    %c0_150 = arith.constant 0 : index
    %110 = vector.load %arg5[%c0_149, %c0_150] : memref<1x128xf32, #tpu.memory_space<vmem>>, vector<1x128xf32>
    %111 = vector.broadcast %110 : vector<1x128xf32> to vector<256x128xf32>
    %112 = arith.addf %109, %111 : vector<256x128xf32>
    %cst_151 = arith.constant 0.000000e+00 : f32
    %113 = vector.broadcast %cst_151 : f32 to vector<256x128xf32>
    %114 = arith.maximumf %112, %113 : vector<256x128xf32>
    %115 = arith.truncf %114 : vector<256x128xf32> to vector<256x128xbf16>
    %116 = vector.shape_cast %115 : vector<256x128xbf16> to vector<4x4x16x128xbf16>
    %c1_152 = arith.constant 1 : index
    %c1_153 = arith.constant 1 : index
    %c0_154 = arith.constant 0 : index
    %c0_155 = arith.constant 0 : index
    %117 = vector.load %arg10[%c1_152, %c1_153, %c0_154, %c0_155] : memref<6x6x16x128xbf16, #tpu.memory_space<vmem>>, vector<4x4x16x128xbf16>
    tpu.vector_store %arg10[%c1_152, %c1_153, %c0_154, %c0_155], %116 {strides = array<i32>} : memref<6x6x16x128xbf16, #tpu.memory_space<vmem>>, vector<4x4x16x128xbf16>,
    %c0_156 = arith.constant 0 : index
    %c0_157 = arith.constant 0 : index
    %c0_158 = arith.constant 0 : index
    %c0_159 = arith.constant 0 : index
    %118 = vector.load %arg10[%c0_156, %c0_157, %c0_158, %c0_159] : memref<6x6x16x128xbf16, #tpu.memory_space<vmem>>, vector<4x4x16x128xbf16>
    %119 = vector.shape_cast %118 : vector<4x4x16x128xbf16> to vector<256x128xbf16>
    %c0_160 = arith.constant 0 : index
    %c0_161 = arith.constant 0 : index
    %120 = vector.load %arg12[%c0_160, %c0_161] : memref<256x1152xbf16, #tpu.memory_space<vmem>>, vector<256x128xbf16>
    tpu.vector_store %arg12[%c0_160, %c0_161], %119 {strides = array<i32>} : memref<256x1152xbf16, #tpu.memory_space<vmem>>, vector<256x128xbf16>,
    %c0_162 = arith.constant 0 : index
    %c1_163 = arith.constant 1 : index
    %c0_164 = arith.constant 0 : index
    %c0_165 = arith.constant 0 : index
    %121 = vector.load %arg10[%c0_162, %c1_163, %c0_164, %c0_165] : memref<6x6x16x128xbf16, #tpu.memory_space<vmem>>, vector<4x4x16x128xbf16>
    %122 = vector.shape_cast %121 : vector<4x4x16x128xbf16> to vector<256x128xbf16>
    %c0_166 = arith.constant 0 : index
    %c128_167 = arith.constant 128 : index
    %123 = vector.load %arg12[%c0_166, %c128_167] : memref<256x1152xbf16, #tpu.memory_space<vmem>>, vector<256x128xbf16>
    tpu.vector_store %arg12[%c0_166, %c128_167], %122 {strides = array<i32>} : memref<256x1152xbf16, #tpu.memory_space<vmem>>, vector<256x128xbf16>,
    %c0_168 = arith.constant 0 : index
    %c2 = arith.constant 2 : index
    %c0_169 = arith.constant 0 : index
    %c0_170 = arith.constant 0 : index
    %124 = vector.load %arg10[%c0_168, %c2, %c0_169, %c0_170] : memref<6x6x16x128xbf16, #tpu.memory_space<vmem>>, vector<4x4x16x128xbf16>
    %125 = vector.shape_cast %124 : vector<4x4x16x128xbf16> to vector<256x128xbf16>
    %c0_171 = arith.constant 0 : index
    %c256_172 = arith.constant 256 : index
    %126 = vector.load %arg12[%c0_171, %c256_172] : memref<256x1152xbf16, #tpu.memory_space<vmem>>, vector<256x128xbf16>
    tpu.vector_store %arg12[%c0_171, %c256_172], %125 {strides = array<i32>} : memref<256x1152xbf16, #tpu.memory_space<vmem>>, vector<256x128xbf16>,
    %c1_173 = arith.constant 1 : index
    %c0_174 = arith.constant 0 : index
    %c0_175 = arith.constant 0 : index
    %c0_176 = arith.constant 0 : index
    %127 = vector.load %arg10[%c1_173, %c0_174, %c0_175, %c0_176] : memref<6x6x16x128xbf16, #tpu.memory_space<vmem>>, vector<4x4x16x128xbf16>
    %128 = vector.shape_cast %127 : vector<4x4x16x128xbf16> to vector<256x128xbf16>
    %c0_177 = arith.constant 0 : index
    %c384_178 = arith.constant 384 : index
    %129 = vector.load %arg12[%c0_177, %c384_178] : memref<256x1152xbf16, #tpu.memory_space<vmem>>, vector<256x128xbf16>
    tpu.vector_store %arg12[%c0_177, %c384_178], %128 {strides = array<i32>} : memref<256x1152xbf16, #tpu.memory_space<vmem>>, vector<256x128xbf16>,
    %c1_179 = arith.constant 1 : index
    %c1_180 = arith.constant 1 : index
    %c0_181 = arith.constant 0 : index
    %c0_182 = arith.constant 0 : index
    %130 = vector.load %arg10[%c1_179, %c1_180, %c0_181, %c0_182] : memref<6x6x16x128xbf16, #tpu.memory_space<vmem>>, vector<4x4x16x128xbf16>
    %131 = vector.shape_cast %130 : vector<4x4x16x128xbf16> to vector<256x128xbf16>
    %c0_183 = arith.constant 0 : index
    %c512_184 = arith.constant 512 : index
    %132 = vector.load %arg12[%c0_183, %c512_184] : memref<256x1152xbf16, #tpu.memory_space<vmem>>, vector<256x128xbf16>
    tpu.vector_store %arg12[%c0_183, %c512_184], %131 {strides = array<i32>} : memref<256x1152xbf16, #tpu.memory_space<vmem>>, vector<256x128xbf16>,
    %c1_185 = arith.constant 1 : index
    %c2_186 = arith.constant 2 : index
    %c0_187 = arith.constant 0 : index
    %c0_188 = arith.constant 0 : index
    %133 = vector.load %arg10[%c1_185, %c2_186, %c0_187, %c0_188] : memref<6x6x16x128xbf16, #tpu.memory_space<vmem>>, vector<4x4x16x128xbf16>
    %134 = vector.shape_cast %133 : vector<4x4x16x128xbf16> to vector<256x128xbf16>
    %c0_189 = arith.constant 0 : index
    %c640_190 = arith.constant 640 : index
    %135 = vector.load %arg12[%c0_189, %c640_190] : memref<256x1152xbf16, #tpu.memory_space<vmem>>, vector<256x128xbf16>
    tpu.vector_store %arg12[%c0_189, %c640_190], %134 {strides = array<i32>} : memref<256x1152xbf16, #tpu.memory_space<vmem>>, vector<256x128xbf16>,
    %c2_191 = arith.constant 2 : index
    %c0_192 = arith.constant 0 : index
    %c0_193 = arith.constant 0 : index
    %c0_194 = arith.constant 0 : index
    %136 = vector.load %arg10[%c2_191, %c0_192, %c0_193, %c0_194] : memref<6x6x16x128xbf16, #tpu.memory_space<vmem>>, vector<4x4x16x128xbf16>
    %137 = vector.shape_cast %136 : vector<4x4x16x128xbf16> to vector<256x128xbf16>
    %c0_195 = arith.constant 0 : index
    %c768_196 = arith.constant 768 : index
    %138 = vector.load %arg12[%c0_195, %c768_196] : memref<256x1152xbf16, #tpu.memory_space<vmem>>, vector<256x128xbf16>
    tpu.vector_store %arg12[%c0_195, %c768_196], %137 {strides = array<i32>} : memref<256x1152xbf16, #tpu.memory_space<vmem>>, vector<256x128xbf16>,
    %c2_197 = arith.constant 2 : index
    %c1_198 = arith.constant 1 : index
    %c0_199 = arith.constant 0 : index
    %c0_200 = arith.constant 0 : index
    %139 = vector.load %arg10[%c2_197, %c1_198, %c0_199, %c0_200] : memref<6x6x16x128xbf16, #tpu.memory_space<vmem>>, vector<4x4x16x128xbf16>
    %140 = vector.shape_cast %139 : vector<4x4x16x128xbf16> to vector<256x128xbf16>
    %c0_201 = arith.constant 0 : index
    %c896_202 = arith.constant 896 : index
    %141 = vector.load %arg12[%c0_201, %c896_202] : memref<256x1152xbf16, #tpu.memory_space<vmem>>, vector<256x128xbf16>
    tpu.vector_store %arg12[%c0_201, %c896_202], %140 {strides = array<i32>} : memref<256x1152xbf16, #tpu.memory_space<vmem>>, vector<256x128xbf16>,
    %c2_203 = arith.constant 2 : index
    %c2_204 = arith.constant 2 : index
    %c0_205 = arith.constant 0 : index
    %c0_206 = arith.constant 0 : index
    %142 = vector.load %arg10[%c2_203, %c2_204, %c0_205, %c0_206] : memref<6x6x16x128xbf16, #tpu.memory_space<vmem>>, vector<4x4x16x128xbf16>
    %143 = vector.shape_cast %142 : vector<4x4x16x128xbf16> to vector<256x128xbf16>
    %c0_207 = arith.constant 0 : index
    %c1024_208 = arith.constant 1024 : index
    %144 = vector.load %arg12[%c0_207, %c1024_208] : memref<256x1152xbf16, #tpu.memory_space<vmem>>, vector<256x128xbf16>
    tpu.vector_store %arg12[%c0_207, %c1024_208], %143 {strides = array<i32>} : memref<256x1152xbf16, #tpu.memory_space<vmem>>, vector<256x128xbf16>,
    %c0_209 = arith.constant 0 : index
    %c0_210 = arith.constant 0 : index
    %145 = vector.load %arg12[%c0_209, %c0_210] : memref<256x1152xbf16, #tpu.memory_space<vmem>>, vector<256x1152xbf16>
    %c0_211 = arith.constant 0 : index
    %c0_212 = arith.constant 0 : index
    %146 = vector.load %arg6[%c0_211, %c0_212] : memref<1152x128xbf16, #tpu.memory_space<vmem>>, vector<1152x128xbf16>
    %cst_213 = arith.constant dense<0.000000e+00> : vector<256x128xf32>
    %147 = tpu.matmul %145, %146, %cst_213 {dimension_numbers = #tpu.dot_dimension_numbers<[1], [0], [0], [1], [0, 0, 1, 1], [], []>} : vector<256x1152xbf16>, vector<1152x128xbf16>, vector<256x128xf32> -> vector<256x128xf32>
    %c0_214 = arith.constant 0 : index
    %c0_215 = arith.constant 0 : index
    %148 = vector.load %arg7[%c0_214, %c0_215] : memref<1x128xf32, #tpu.memory_space<vmem>>, vector<1x128xf32>
    %149 = vector.broadcast %148 : vector<1x128xf32> to vector<256x128xf32>
    %150 = arith.addf %147, %149 : vector<256x128xf32>
    %c0_216 = arith.constant 0 : index
    %c0_217 = arith.constant 0 : index
    %151 = vector.load %arg8[%c0_216, %c0_217] : memref<256x128xf32, #tpu.memory_space<vmem>>, vector<256x128xf32>
    tpu.vector_store %arg8[%c0_216, %c0_217], %150 {strides = array<i32>} : memref<256x128xf32, #tpu.memory_space<vmem>>, vector<256x128xf32>,
    return
  }
  func.func @transform_0(%arg0: i32) -> (i32, i32) {
    %c0_i32 = arith.constant 0 : i32
    %c0_i32_0 = arith.constant 0 : i32
    return %arg0, %c0_i32 : i32, i32
  }
  func.func @transform_1(%arg0: i32) -> (i32, i32) {
    %c0_i32 = arith.constant 0 : i32
    %c0_i32_0 = arith.constant 0 : i32
    %c0_i32_1 = arith.constant 0 : i32
    return %c0_i32, %c0_i32_0 : i32, i32
  }
  func.func @transform_2(%arg0: i32) -> (i32, i32) {
    %c0_i32 = arith.constant 0 : i32
    %c0_i32_0 = arith.constant 0 : i32
    %c0_i32_1 = arith.constant 0 : i32
    return %c0_i32, %c0_i32_0 : i32, i32
  }
  func.func @transform_3(%arg0: i32) -> (i32, i32) {
    %c0_i32 = arith.constant 0 : i32
    %c0_i32_0 = arith.constant 0 : i32
    %c0_i32_1 = arith.constant 0 : i32
    return %c0_i32, %c0_i32_0 : i32, i32
  }
  func.func @transform_4(%arg0: i32) -> (i32, i32) {
    %c0_i32 = arith.constant 0 : i32
    %c0_i32_0 = arith.constant 0 : i32
    %c0_i32_1 = arith.constant 0 : i32
    return %c0_i32, %c0_i32_0 : i32, i32
  }
  func.func @transform_5(%arg0: i32) -> (i32, i32) {
    %c0_i32 = arith.constant 0 : i32
    %c0_i32_0 = arith.constant 0 : i32
    %c0_i32_1 = arith.constant 0 : i32
    return %c0_i32, %c0_i32_0 : i32, i32
  }
  func.func @transform_6(%arg0: i32) -> (i32, i32) {
    %c0_i32 = arith.constant 0 : i32
    %c0_i32_0 = arith.constant 0 : i32
    %c0_i32_1 = arith.constant 0 : i32
    return %c0_i32, %c0_i32_0 : i32, i32
  }
  func.func @transform_7(%arg0: i32) -> (i32, i32) {
    %c0_i32 = arith.constant 0 : i32
    %c0_i32_0 = arith.constant 0 : i32
    return %arg0, %c0_i32 : i32, i32
  }
}

</mosaic_0001>

<llo_original>
// kernel: encoder_forward.1
$region0: #{encoder_forward.1}
  #allocation0 [shape = 'u32[]', space=smem, size = 0x4, offset = 0x4, fixed_abs, tag = 'smem constant byte address 0x4 - core index']
  #allocation1 [shape = 'u32[144,128]{1,0:T(1,128)}', space=vmem, size = 0x12000, scoped, tag = 'internal scratch']
  #allocation2 [shape = 'bf16[20,5,16,128]{3,2,1,0:T(16,128)(2,1)}', space=vmem, size = 0x64000, scoped, tag = 'scratch operand']
  #allocation3 [shape = 'bf16[6,6,16,128]{3,2,1,0:T(16,128)(2,1)}', space=vmem, size = 0x24000, scoped, tag = 'scratch operand']
  #allocation4 [shape = 'bf16[256,2048]{1,0:T(16,128)(2,1)}', space=vmem, size = 0x100000, scoped, tag = 'scratch operand']
  #allocation5 [shape = 'bf16[256,1152]{1,0:T(16,128)(2,1)}', space=vmem, size = 0x90000, scoped, tag = 'scratch operand']
  %s0 = inlined_call_operand.vmem [shape: bf16[2048,32], index: 0, kind: input, shape index: {}]
  %s1 = inlined_call_operand.vmem [shape: bf16[32,128], index: 1, kind: input, shape index: {}]
  %s2 = inlined_call_operand.vmem [shape: f32[1,128], index: 2, kind: input, shape index: {}]
  %s3 = inlined_call_operand.vmem [shape: bf16[2048,128], index: 3, kind: input, shape index: {}]
  %s4 = inlined_call_operand.vmem [shape: f32[1,128], index: 4, kind: input, shape index: {}]
  %s5 = inlined_call_operand.vmem [shape: bf16[1152,128], index: 5, kind: input, shape index: {}]
  %s6 = inlined_call_operand.vmem [shape: f32[1,128], index: 6, kind: input, shape index: {}]
  %s7 = inlined_call_operand.vmem [shape: f32[512,128], index: 7, kind: output, shape index: {}]
  %s8 = sld [smem:[#allocation0]]
  $region61: #{encoder_forward.1} parent=0
    _
  %s10 = ssub.s32 1, %s8
  %s11 = scalar_select 0, %s10, %s8
  loop: start=0, step=1, limit=4
  $region2: #{encoder_forward.1} parent=0 // loop_pre_header
    _
  $region3: #{encoder_forward.1} parent=0 // loop_header
    %s13 = sphi 0, %s17
    %p14 = scmp.ge.s32.totalorder %s13, 4
    %s23 = sphi 0, %s25
    %s26 = sphi 0, %s23
    %s27 = sphi 0, %s26
    %s43 = sphi 0, %s27
    %s47 = sphi 0, %s47
    %s49 = sphi 0, %s47
    %s50 = sphi 0, %s49
    %s64 = sphi 0, %s50
    %s68 = sphi 0, %s68
    %s70 = sphi 0, %s68
    %s71 = sphi 0, %s70
    %s85 = sphi 0, %s71
    %s89 = sphi 0, %s89
    %s91 = sphi 0, %s89
    %s92 = sphi 0, %s91
    %s106 = sphi 0, %s92
    %s110 = sphi 0, %s110
    %s112 = sphi 0, %s110
    %s113 = sphi 0, %s112
    %s127 = sphi 0, %s113
    %s131 = sphi 0, %s131
    %s133 = sphi 0, %s131
    %s134 = sphi 0, %s133
    %s148 = sphi 0, %s134
    %s152 = sphi 0, %s152
    %s154 = sphi 0, %s152
    %s155 = sphi 0, %s154
    %s169 = sphi 0, %s155
    %s175 = sphi 0, %s177
    %s178 = sphi 0, %s175
    %s179 = sphi 0, %s178
    %s195 = sphi 0, %s179
  $region4: #{encoder_forward.1} parent=0 // loop_header_branch
    %16 = sbr.rel (%p14) target = $region8
  $region5: #{encoder_forward.1} parent=0 // loop_body
    %s18 = ssub.s32 %s13, 1
    %s19 = ssub.s32 %s13, 2
    %s20 = sadd.s32 %s13, 1
    %s21 = ssub.s32 %s13, %s20
    %p22 = scmp.eq.s32.totalorder %s21, 0
    %s24 = sadd.s32 %s23, 1
    %s25 = scalar_select %p22, %s23, %s24
    %p28 = pneg %p22
    %p29 = scmp.eq.s32.totalorder %s13, 1
    %p30 = por %p28, %p29
    %p31 = scmp.ne.s32.totalorder %s23, %s26
    %p32 = scmp.eq.s32.totalorder %s13, 0
    %p33 = por %p31, %p32
    %p34 = scmp.ne.s32.totalorder %s23, %s26
    %p35 = scmp.eq.s32.totalorder %s18, 1
    %p36 = por %p34, %p35
    %p37 = scmp.ne.s32.totalorder %s26, %s27
    %p38 = scmp.eq.s32.totalorder %s18, 0
    %p39 = por %p37, %p38
    %p40 = scmp.ne.s32.totalorder %s26, %s27
    %p41 = scmp.eq.s32.totalorder %s19, 1
    %p42 = por %p40, %p41
    %p44 = scmp.ne.s32.totalorder %s27, %s43
    %p45 = scmp.eq.s32.totalorder %s19, 0
    %p46 = por %p44, %p45
    %s48 = sadd.s32 %s47, 1
    %p51 = scmp.eq.s32.totalorder %s13, 1
    %p52 = scmp.ne.s32.totalorder %s47, %s49
    %p53 = scmp.eq.s32.totalorder %s13, 0
    %p54 = por %p52, %p53
    %p55 = scmp.ne.s32.totalorder %s47, %s49
    %p56 = scmp.eq.s32.totalorder %s18, 1
    %p57 = por %p55, %p56
    %p58 = scmp.ne.s32.totalorder %s49, %s50
    %p59 = scmp.eq.s32.totalorder %s18, 0
    %p60 = por %p58, %p59
    %p61 = scmp.ne.s32.totalorder %s49, %s50
    %p62 = scmp.eq.s32.totalorder %s19, 1
    %p63 = por %p61, %p62
    %p65 = scmp.ne.s32.totalorder %s50, %s64
    %p66 = scmp.eq.s32.totalorder %s19, 0
    %p67 = por %p65, %p66
    %s69 = sadd.s32 %s68, 1
    %p72 = scmp.eq.s32.totalorder %s13, 1
    %p73 = scmp.ne.s32.totalorder %s68, %s70
    %p74 = scmp.eq.s32.totalorder %s13, 0
    %p75 = por %p73, %p74
    %p76 = scmp.ne.s32.totalorder %s68, %s70
    %p77 = scmp.eq.s32.totalorder %s18, 1
    %p78 = por %p76, %p77
    %p79 = scmp.ne.s32.totalorder %s70, %s71
    %p80 = scmp.eq.s32.totalorder %s18, 0
    %p81 = por %p79, %p80
    %p82 = scmp.ne.s32.totalorder %s70, %s71
    %p83 = scmp.eq.s32.totalorder %s19, 1
    %p84 = por %p82, %p83
    %p86 = scmp.ne.s32.totalorder %s71, %s85
    %p87 = scmp.eq.s32.totalorder %s19, 0
    %p88 = por %p86, %p87
    %s90 = sadd.s32 %s89, 1
    %p93 = scmp.eq.s32.totalorder %s13, 1
    %p94 = scmp.ne.s32.totalorder %s89, %s91
    %p95 = scmp.eq.s32.totalorder %s13, 0
    %p96 = por %p94, %p95
    %p97 = scmp.ne.s32.totalorder %s89, %s91
    %p98 = scmp.eq.s32.totalorder %s18, 1
    %p99 = por %p97, %p98
    %p100 = scmp.ne.s32.totalorder %s91, %s92
    %p101 = scmp.eq.s32.totalorder %s18, 0
    %p102 = por %p100, %p101
    %p103 = scmp.ne.s32.totalorder %s91, %s92
    %p104 = scmp.eq.s32.totalorder %s19, 1
    %p105 = por %p103, %p104
    %p107 = scmp.ne.s32.totalorder %s92, %s106
    %p108 = scmp.eq.s32.totalorder %s19, 0
    %p109 = por %p107, %p108
    %s111 = sadd.s32 %s110, 1
    %p114 = scmp.eq.s32.totalorder %s13, 1
    %p115 = scmp.ne.s32.totalorder %s110, %s112
    %p116 = scmp.eq.s32.totalorder %s13, 0
    %p117 = por %p115, %p116
    %p118 = scmp.ne.s32.totalorder %s110, %s112
    %p119 = scmp.eq.s32.totalorder %s18, 1
    %p120 = por %p118, %p119
    %p121 = scmp.ne.s32.totalorder %s112, %s113
    %p122 = scmp.eq.s32.totalorder %s18, 0
    %p123 = por %p121, %p122
    %p124 = scmp.ne.s32.totalorder %s112, %s113
    %p125 = scmp.eq.s32.totalorder %s19, 1
    %p126 = por %p124, %p125
    %p128 = scmp.ne.s32.totalorder %s113, %s127
    %p129 = scmp.eq.s32.totalorder %s19, 0
    %p130 = por %p128, %p129
    %s132 = sadd.s32 %s131, 1
    %p135 = scmp.eq.s32.totalorder %s13, 1
    %p136 = scmp.ne.s32.totalorder %s131, %s133
    %p137 = scmp.eq.s32.totalorder %s13, 0
    %p138 = por %p136, %p137
    %p139 = scmp.ne.s32.totalorder %s131, %s133
    %p140 = scmp.eq.s32.totalorder %s18, 1
    %p141 = por %p139, %p140
    %p142 = scmp.ne.s32.totalorder %s133, %s134
    %p143 = scmp.eq.s32.totalorder %s18, 0
    %p144 = por %p142, %p143
    %p145 = scmp.ne.s32.totalorder %s133, %s134
    %p146 = scmp.eq.s32.totalorder %s19, 1
    %p147 = por %p145, %p146
    %p149 = scmp.ne.s32.totalorder %s134, %s148
    %p150 = scmp.eq.s32.totalorder %s19, 0
    %p151 = por %p149, %p150
    %s153 = sadd.s32 %s152, 1
    %p156 = scmp.eq.s32.totalorder %s13, 1
    %p157 = scmp.ne.s32.totalorder %s152, %s154
    %p158 = scmp.eq.s32.totalorder %s13, 0
    %p159 = por %p157, %p158
    %p160 = scmp.ne.s32.totalorder %s152, %s154
    %p161 = scmp.eq.s32.totalorder %s18, 1
    %p162 = por %p160, %p161
    %p163 = scmp.ne.s32.totalorder %s154, %s155
    %p164 = scmp.eq.s32.totalorder %s18, 0
    %p165 = por %p163, %p164
    %p166 = scmp.ne.s32.totalorder %s154, %s155
    %p167 = scmp.eq.s32.totalorder %s19, 1
    %p168 = por %p166, %p167
    %p170 = scmp.ne.s32.totalorder %s155, %s169
    %p171 = scmp.eq.s32.totalorder %s19, 0
    %p172 = por %p170, %p171
    %s173 = ssub.s32 %s13, %s20
    %p174 = scmp.eq.s32.totalorder %s173, 0
    %s176 = sadd.s32 %s175, 1
    %s177 = scalar_select %p174, %s175, %s176
    %p180 = pneg %p174
    %p181 = scmp.eq.s32.totalorder %s13, 1
    %p182 = por %p180, %p181
    %p183 = scmp.ne.s32.totalorder %s175, %s178
    %p184 = scmp.eq.s32.totalorder %s13, 0
    %p185 = por %p183, %p184
    %p186 = scmp.ne.s32.totalorder %s175, %s178
    %p187 = scmp.eq.s32.totalorder %s18, 1
    %p188 = por %p186, %p187
    %p189 = scmp.ne.s32.totalorder %s178, %s179
    %p190 = scmp.eq.s32.totalorder %s18, 0
    %p191 = por %p189, %p190
    %p192 = scmp.ne.s32.totalorder %s178, %s179
    %p193 = scmp.eq.s32.totalorder %s19, 1
    %p194 = por %p192, %p193
    %p196 = scmp.ne.s32.totalorder %s179, %s195
    %p197 = scmp.eq.s32.totalorder %s19, 0
    %p198 = por %p196, %p197
    %p199 = scmp.le.s32.totalorder 1, %s13
    %p200 = scmp.lt.s32.totalorder %s13, 3
    %p201 = pnand %p199, %p200
    %p202 = pneg %p201
    // Predicated region
    $region9: #{encoder_forward.1} parent=5 // pred_check
      _
    $region10: #{encoder_forward.1} parent=5 // pred_check_branch
      %204 = sbr.rel (%p201) target = $region12
    $region11: #{encoder_forward.1} parent=5 // pred_region
      %s205 = ssub.s32 %s13, 1
      // Predicated region
      $region13: #{encoder_forward.1} parent=11 // pred_check
        %p206 = pneg %p60
      $region14: #{encoder_forward.1} parent=11 // pred_check_branch
        %208 = sbr.rel (%p206) target = $region16
      $region15: #{encoder_forward.1} parent=11 // pred_region
        _
      $region16: #{encoder_forward.1} parent=11 // pred_fallthru
        _
      // Predicated region
      $region17: #{encoder_forward.1} parent=11 // pred_check
        %p209 = pneg %p81
      $region18: #{encoder_forward.1} parent=11 // pred_check_branch
        %211 = sbr.rel (%p209) target = $region20
      $region19: #{encoder_forward.1} parent=11 // pred_region
        _
      $region20: #{encoder_forward.1} parent=11 // pred_fallthru
        _
      // Predicated region
      $region21: #{encoder_forward.1} parent=11 // pred_check
        %p212 = pneg %p102
      $region22: #{encoder_forward.1} parent=11 // pred_check_branch
        %214 = sbr.rel (%p212) target = $region24
      $region23: #{encoder_forward.1} parent=11 // pred_region
        _
      $region24: #{encoder_forward.1} parent=11 // pred_fallthru
        _
      // Predicated region
      $region25: #{encoder_forward.1} parent=11 // pred_check
        %p215 = pneg %p123
      $region26: #{encoder_forward.1} parent=11 // pred_check_branch
        %217 = sbr.rel (%p215) target = $region28
      $region27: #{encoder_forward.1} parent=11 // pred_region
        _
      $region28: #{encoder_forward.1} parent=11 // pred_fallthru
        _
      // Predicated region
      $region29: #{encoder_forward.1} parent=11 // pred_check
        %p218 = pneg %p144
      $region30: #{encoder_forward.1} parent=11 // pred_check_branch
        %220 = sbr.rel (%p218) target = $region32
      $region31: #{encoder_forward.1} parent=11 // pred_region
        _
      $region32: #{encoder_forward.1} parent=11 // pred_fallthru
        _
      // Predicated region
      $region33: #{encoder_forward.1} parent=11 // pred_check
        %p221 = pneg %p165
      $region34: #{encoder_forward.1} parent=11 // pred_check_branch
        %223 = sbr.rel (%p221) target = $region36
      $region35: #{encoder_forward.1} parent=11 // pred_region
        _
      $region36: #{encoder_forward.1} parent=11 // pred_fallthru
        _
    $region12: #{encoder_forward.1} parent=5 // pred_fallthru
      _
    %p224 = scmp.lt.s32.totalorder %s13, 2
    // Predicated region
    $region37: #{encoder_forward.1} parent=5 // pred_check
      %p225 = pneg %p224
    $region38: #{encoder_forward.1} parent=5 // pred_check_branch
      %227 = sbr.rel (%p225) target = $region40
    $region39: #{encoder_forward.1} parent=5 // pred_region
      // Predicated region
      $region41: #{encoder_forward.1} parent=39 // pred_check
        %p228 = pneg %p33
      $region42: #{encoder_forward.1} parent=39 // pred_check_branch
        %230 = sbr.rel (%p228) target = $region44
      $region43: #{encoder_forward.1} parent=39 // pred_region
        %s231 = smul.u32 128, %s13
        %p232 = scmp.lt.s32.totalorder %s231, 255
        %s233 = scalar_select %p232, %s231, 255
        %s234 = smul.addr %s233, 4
        %s235 = scalar_lea.vmem %s0, %s234
        %s236 = smul.u32 128, %s13
      $region44: #{encoder_forward.1} parent=39 // pred_fallthru
        _
    $region40: #{encoder_forward.1} parent=5 // pred_fallthru
      _
    %p237 = scmp.le.s32.totalorder 1, %s13
    %p238 = scmp.lt.s32.totalorder %s13, 3
    %p239 = pnand %p237, %p238
    %p240 = pneg %p239
    // Predicated region
    $region45: #{encoder_forward.1} parent=5 // pred_check
      _
    $region46: #{encoder_forward.1} parent=5 // pred_check_branch
      %242 = sbr.rel (%p239) target = $region48
    $region47: #{encoder_forward.1} parent=5 // pred_region
      %s243 = ssub.s32 %s13, 1
      %s244 = smul.u32 128, %s18
      %p245 = scmp.lt.s32.totalorder %s244, 255
      %s246 = scalar_select %p245, %s244, 255
      %s247 = smul.addr %s246, 4
      %s248 = scalar_lea.vmem %s0, %s247
      %p249 = pneg %p39
      %p250 = pneg %p36
      %p251 = pneg %p60
      %p252 = pneg %p57
      %p253 = pneg %p81
      %p254 = pneg %p78
      %p255 = pneg %p102
      %p256 = pneg %p99
      %p257 = pneg %p123
      %p258 = pneg %p120
      %p259 = pneg %p144
      %p260 = pneg %p141
      %p261 = pneg %p165
      %p262 = pneg %p162
      %p263 = pneg %p191
      %p264 = pneg %p188
      %s265 = smul.u32 32, %s18
      %p266 = scmp.lt.s32.totalorder %s265, 63
      %s267 = scalar_select %p266, %s265, 63
      %s268 = smul.addr %s267, 8
      %s269 = scalar_lea.vmem %s7, %s268
      %s270 = smul.u32 128, %s18
      %p271 = scmp.lt.s32.totalorder %s270, 255
      %s272 = scalar_select %p271, %s270, 255
      %s273 = smul.addr %s272, 4
      %s274 = scalar_lea.vmem %s0, %s273
      %s275 = smul.u32 128, %s18
      %s276 = smul.u32 32, %s18
      %p277 = scmp.lt.s32.totalorder %s276, 63
      %s278 = scalar_select %p277, %s276, 63
      %s279 = smul.addr %s278, 8
      %s280 = scalar_lea.vmem %s7, %s279
      %s281 = smul.u32 32, %s18
      %s283 = scalar_lea.vmem [#allocation2], 160
      %284 = vst [vmem:[%s283] sm:$0xff] 0
      %285 = vst [vmem:[%s283 + $0x8] sm:$0xff] 0
      %286 = vst [vmem:[%s283 + $0x10] sm:$0xff] 0
      %287 = vst [vmem:[%s283 + $0x18] sm:$0xff] 0
      %288 = vst [vmem:[%s283 + $0x20] sm:$0xff] 0
      %s289 = scalar_lea.vmem [#allocation2], 32
      %290 = vst [vmem:[%s289] sm:$0xff] 0
      %291 = vst [vmem:[%s289 + $0x28] sm:$0xff] 0
      %292 = vst [vmem:[%s289 + $0x50] sm:$0xff] 0
      %293 = vst [vmem:[%s289 + $0x78] sm:$0xff] 0
      %294 = vst [vmem:[%s289 + $0xa0] sm:$0xff] 0
      %s295 = scalar_lea.vmem [#allocation2], 360
      %296 = vst [vmem:[%s295] sm:$0xff] 0
      %297 = vst [vmem:[%s295 + $0x8] sm:$0xff] 0
      %298 = vst [vmem:[%s295 + $0x10] sm:$0xff] 0
      %299 = vst [vmem:[%s295 + $0x18] sm:$0xff] 0
      %300 = vst [vmem:[%s295 + $0x20] sm:$0xff] 0
      %s301 = scalar_lea.vmem [#allocation2], 200
      %302 = vst [vmem:[%s301] sm:$0xff] 0
      %303 = vst [vmem:[%s301 + $0x28] sm:$0xff] 0
      %304 = vst [vmem:[%s301 + $0x50] sm:$0xff] 0
      %305 = vst [vmem:[%s301 + $0x78] sm:$0xff] 0
      %306 = vst [vmem:[%s301 + $0xa0] sm:$0xff] 0
      %s307 = scalar_lea.vmem [#allocation2], 400
      %308 = vst [vmem:[%s307] sm:$0xff] 0
      %309 = vst [vmem:[%s307 + $0x8] sm:$0xff] 0
      %310 = vst [vmem:[%s307 + $0x10] sm:$0xff] 0
      %311 = vst [vmem:[%s307 + $0x18] sm:$0xff] 0
      %312 = vst [vmem:[%s307 + $0x20] sm:$0xff] 0
      %s313 = scalar_lea.vmem [#allocation2], 432
      %314 = vst [vmem:[%s313] sm:$0xff] 0
      %315 = vst [vmem:[%s313 + $0x28] sm:$0xff] 0
      %316 = vst [vmem:[%s313 + $0x50] sm:$0xff] 0
      %317 = vst [vmem:[%s313 + $0x78] sm:$0xff] 0
      %318 = vst [vmem:[%s313 + $0xa0] sm:$0xff] 0
      %s319 = scalar_lea.vmem [#allocation2], 600
      %320 = vst [vmem:[%s319] sm:$0xff] 0
      %321 = vst [vmem:[%s319 + $0x8] sm:$0xff] 0
      %322 = vst [vmem:[%s319 + $0x10] sm:$0xff] 0
      %323 = vst [vmem:[%s319 + $0x18] sm:$0xff] 0
      %324 = vst [vmem:[%s319 + $0x20] sm:$0xff] 0
      %325 = vst [vmem:[%s319] sm:$0xff] 0
      %326 = vst [vmem:[%s319 + $0x28] sm:$0xff] 0
      %327 = vst [vmem:[%s319 + $0x50] sm:$0xff] 0
      %328 = vst [vmem:[%s319 + $0x78] sm:$0xff] 0
      %329 = vst [vmem:[%s319 + $0xa0] sm:$0xff] 0
      %330 = vst [vmem:[#allocation3] sm:$0xff] 0
      %331 = vst [vmem:[#allocation3 + $0x8] sm:$0xff] 0
      %332 = vst [vmem:[#allocation3 + $0x10] sm:$0xff] 0
      %333 = vst [vmem:[#allocation3 + $0x18] sm:$0xff] 0
      %334 = vst [vmem:[#allocation3 + $0x20] sm:$0xff] 0
      %335 = vst [vmem:[#allocation3 + $0x28] sm:$0xff] 0
      %s336 = scalar_lea.vmem [#allocation3], 240
      %337 = vst [vmem:[%s336] sm:$0xff] 0
      %338 = vst [vmem:[%s336 + $0x8] sm:$0xff] 0
      %339 = vst [vmem:[%s336 + $0x10] sm:$0xff] 0
      %340 = vst [vmem:[%s336 + $0x18] sm:$0xff] 0
      %341 = vst [vmem:[%s336 + $0x20] sm:$0xff] 0
      %342 = vst [vmem:[%s336 + $0x28] sm:$0xff] 0
      %343 = vst [vmem:[#allocation3] sm:$0xff] 0
      %344 = vst [vmem:[#allocation3 + $0x30] sm:$0xff] 0
      %345 = vst [vmem:[#allocation3 + $0x60] sm:$0xff] 0
      %346 = vst [vmem:[#allocation3 + $0x90] sm:$0xff] 0
      %347 = vst [vmem:[#allocation3 + $0xc0] sm:$0xff] 0
      %348 = vst [vmem:[#allocation3 + $0xf0] sm:$0xff] 0
      %s349 = scalar_lea.vmem [#allocation3], 40
      %350 = vst [vmem:[%s349] sm:$0xff] 0
      %351 = vst [vmem:[%s349 + $0x30] sm:$0xff] 0
      %352 = vst [vmem:[%s349 + $0x60] sm:$0xff] 0
      %353 = vst [vmem:[%s349 + $0x90] sm:$0xff] 0
      %354 = vst [vmem:[%s349 + $0xc0] sm:$0xff] 0
      %355 = vst [vmem:[%s349 + $0xf0] sm:$0xff] 0
      %v356 = vld [vmem:[%s274] sm:$0xf]
      %v357 = vld [vmem:[%s274 + $0x4] sm:$0xf]
      %v358 = vld [vmem:[%s274 + $0x8] sm:$0xf]
      %v359 = vld [vmem:[%s274 + $0xc] sm:$0xf]
      %v360 = vld [vmem:[%s274 + $0x10] sm:$0xf]
      %v361 = vld [vmem:[%s274 + $0x14] sm:$0xf]
      %v362 = vld [vmem:[%s274 + $0x18] sm:$0xf]
      %v363 = vld [vmem:[%s274 + $0x1c] sm:$0xf]
      %v364 = vld [vmem:[%s274 + $0x20] sm:$0xf]
      %v365 = vld [vmem:[%s274 + $0x24] sm:$0xf]
      %v366 = vld [vmem:[%s274 + $0x28] sm:$0xf]
      %v367 = vld [vmem:[%s274 + $0x2c] sm:$0xf]
      %v368 = vld [vmem:[%s274 + $0x30] sm:$0xf]
      %v369 = vld [vmem:[%s274 + $0x34] sm:$0xf]
      %v370 = vld [vmem:[%s274 + $0x38] sm:$0xf]
      %v371 = vld [vmem:[%s274 + $0x3c] sm:$0xf]
      %v372 = vld [vmem:[%s274 + $0x40] sm:$0xf]
      %v373 = vld [vmem:[%s274 + $0x44] sm:$0xf]
      %v374 = vld [vmem:[%s274 + $0x48] sm:$0xf]
      %v375 = vld [vmem:[%s274 + $0x4c] sm:$0xf]
      %v376 = vld [vmem:[%s274 + $0x50] sm:$0xf]
      %v377 = vld [vmem:[%s274 + $0x54] sm:$0xf]
      %v378 = vld [vmem:[%s274 + $0x58] sm:$0xf]
      %v379 = vld [vmem:[%s274 + $0x5c] sm:$0xf]
      %v380 = vld [vmem:[%s274 + $0x60] sm:$0xf]
      %v381 = vld [vmem:[%s274 + $0x64] sm:$0xf]
      %v382 = vld [vmem:[%s274 + $0x68] sm:$0xf]
      %v383 = vld [vmem:[%s274 + $0x6c] sm:$0xf]
      %v384 = vld [vmem:[%s274 + $0x70] sm:$0xf]
      %v385 = vld [vmem:[%s274 + $0x74] sm:$0xf]
      %v386 = vld [vmem:[%s274 + $0x78] sm:$0xf]
      %v387 = vld [vmem:[%s274 + $0x7c] sm:$0xf]
      %v388 = vld [vmem:[%s274 + $0x80] sm:$0xf]
      %v389 = vld [vmem:[%s274 + $0x84] sm:$0xf]
      %v390 = vld [vmem:[%s274 + $0x88] sm:$0xf]
      %v391 = vld [vmem:[%s274 + $0x8c] sm:$0xf]
      %v392 = vld [vmem:[%s274 + $0x90] sm:$0xf]
      %v393 = vld [vmem:[%s274 + $0x94] sm:$0xf]
      %v394 = vld [vmem:[%s274 + $0x98] sm:$0xf]
      %v395 = vld [vmem:[%s274 + $0x9c] sm:$0xf]
      %v396 = vld [vmem:[%s274 + $0xa0] sm:$0xf]
      %v397 = vld [vmem:[%s274 + $0xa4] sm:$0xf]
      %v398 = vld [vmem:[%s274 + $0xa8] sm:$0xf]
      %v399 = vld [vmem:[%s274 + $0xac] sm:$0xf]
      %v400 = vld [vmem:[%s274 + $0xb0] sm:$0xf]
      %v401 = vld [vmem:[%s274 + $0xb4] sm:$0xf]
      %v402 = vld [vmem:[%s274 + $0xb8] sm:$0xf]
      %v403 = vld [vmem:[%s274 + $0xbc] sm:$0xf]
      %v404 = vld [vmem:[%s274 + $0xc0] sm:$0xf]
      %v405 = vld [vmem:[%s274 + $0xc4] sm:$0xf]
      %v406 = vld [vmem:[%s274 + $0xc8] sm:$0xf]
      %v407 = vld [vmem:[%s274 + $0xcc] sm:$0xf]
      %v408 = vld [vmem:[%s274 + $0xd0] sm:$0xf]
      %v409 = vld [vmem:[%s274 + $0xd4] sm:$0xf]
      %v410 = vld [vmem:[%s274 + $0xd8] sm:$0xf]
      %v411 = vld [vmem:[%s274 + $0xdc] sm:$0xf]
      %v412 = vld [vmem:[%s274 + $0xe0] sm:$0xf]
      %v413 = vld [vmem:[%s274 + $0xe4] sm:$0xf]
      %v414 = vld [vmem:[%s274 + $0xe8] sm:$0xf]
      %v415 = vld [vmem:[%s274 + $0xec] sm:$0xf]
      %v416 = vld [vmem:[%s274 + $0xf0] sm:$0xf]
      %v417 = vld [vmem:[%s274 + $0xf4] sm:$0xf]
      %v418 = vld [vmem:[%s274 + $0xf8] sm:$0xf]
      %v419 = vld [vmem:[%s274 + $0xfc] sm:$0xf]
      %v420 = vld [vmem:[%s274 + $0x100] sm:$0xf]
      %v421 = vld [vmem:[%s274 + $0x104] sm:$0xf]
      %v422 = vld [vmem:[%s274 + $0x108] sm:$0xf]
      %v423 = vld [vmem:[%s274 + $0x10c] sm:$0xf]
      %v424 = vld [vmem:[%s274 + $0x110] sm:$0xf]
      %v425 = vld [vmem:[%s274 + $0x114] sm:$0xf]
      %v426 = vld [vmem:[%s274 + $0x118] sm:$0xf]
      %v427 = vld [vmem:[%s274 + $0x11c] sm:$0xf]
      %v428 = vld [vmem:[%s274 + $0x120] sm:$0xf]
      %v429 = vld [vmem:[%s274 + $0x124] sm:$0xf]
      %v430 = vld [vmem:[%s274 + $0x128] sm:$0xf]
      %v431 = vld [vmem:[%s274 + $0x12c] sm:$0xf]
      %v432 = vld [vmem:[%s274 + $0x130] sm:$0xf]
      %v433 = vld [vmem:[%s274 + $0x134] sm:$0xf]
      %v434 = vld [vmem:[%s274 + $0x138] sm:$0xf]
      %v435 = vld [vmem:[%s274 + $0x13c] sm:$0xf]
      %v436 = vld [vmem:[%s274 + $0x140] sm:$0xf]
      %v437 = vld [vmem:[%s274 + $0x144] sm:$0xf]
      %v438 = vld [vmem:[%s274 + $0x148] sm:$0xf]
      %v439 = vld [vmem:[%s274 + $0x14c] sm:$0xf]
      %v440 = vld [vmem:[%s274 + $0x150] sm:$0xf]
      %v441 = vld [vmem:[%s274 + $0x154] sm:$0xf]
      %v442 = vld [vmem:[%s274 + $0x158] sm:$0xf]
      %v443 = vld [vmem:[%s274 + $0x15c] sm:$0xf]
      %v444 = vld [vmem:[%s274 + $0x160] sm:$0xf]
      %v445 = vld [vmem:[%s274 + $0x164] sm:$0xf]
      %v446 = vld [vmem:[%s274 + $0x168] sm:$0xf]
      %v447 = vld [vmem:[%s274 + $0x16c] sm:$0xf]
      %v448 = vld [vmem:[%s274 + $0x170] sm:$0xf]
      %v449 = vld [vmem:[%s274 + $0x174] sm:$0xf]
      %v450 = vld [vmem:[%s274 + $0x178] sm:$0xf]
      %v451 = vld [vmem:[%s274 + $0x17c] sm:$0xf]
      %v452 = vld [vmem:[%s274 + $0x180] sm:$0xf]
      %v453 = vld [vmem:[%s274 + $0x184] sm:$0xf]
      %v454 = vld [vmem:[%s274 + $0x188] sm:$0xf]
      %v455 = vld [vmem:[%s274 + $0x18c] sm:$0xf]
      %v456 = vld [vmem:[%s274 + $0x190] sm:$0xf]
      %v457 = vld [vmem:[%s274 + $0x194] sm:$0xf]
      %v458 = vld [vmem:[%s274 + $0x198] sm:$0xf]
      %v459 = vld [vmem:[%s274 + $0x19c] sm:$0xf]
      %v460 = vld [vmem:[%s274 + $0x1a0] sm:$0xf]
      %v461 = vld [vmem:[%s274 + $0x1a4] sm:$0xf]
      %v462 = vld [vmem:[%s274 + $0x1a8] sm:$0xf]
      %v463 = vld [vmem:[%s274 + $0x1ac] sm:$0xf]
      %v464 = vld [vmem:[%s274 + $0x1b0] sm:$0xf]
      %v465 = vld [vmem:[%s274 + $0x1b4] sm:$0xf]
      %v466 = vld [vmem:[%s274 + $0x1b8] sm:$0xf]
      %v467 = vld [vmem:[%s274 + $0x1bc] sm:$0xf]
      %v468 = vld [vmem:[%s274 + $0x1c0] sm:$0xf]
      %v469 = vld [vmem:[%s274 + $0x1c4] sm:$0xf]
      %v470 = vld [vmem:[%s274 + $0x1c8] sm:$0xf]
      %v471 = vld [vmem:[%s274 + $0x1cc] sm:$0xf]
      %v472 = vld [vmem:[%s274 + $0x1d0] sm:$0xf]
      %v473 = vld [vmem:[%s274 + $0x1d4] sm:$0xf]
      %v474 = vld [vmem:[%s274 + $0x1d8] sm:$0xf]
      %v475 = vld [vmem:[%s274 + $0x1dc] sm:$0xf]
      %v476 = vld [vmem:[%s274 + $0x1e0] sm:$0xf]
      %v477 = vld [vmem:[%s274 + $0x1e4] sm:$0xf]
      %v478 = vld [vmem:[%s274 + $0x1e8] sm:$0xf]
      %v479 = vld [vmem:[%s274 + $0x1ec] sm:$0xf]
      %v480 = vld [vmem:[%s274 + $0x1f0] sm:$0xf]
      %v481 = vld [vmem:[%s274 + $0x1f4] sm:$0xf]
      %v482 = vld [vmem:[%s274 + $0x1f8] sm:$0xf]
      %v483 = vld [vmem:[%s274 + $0x1fc] sm:$0xf]
      %v484 = vld [vmem:[%s1] sm:$0xf]
      %v485 = vld [vmem:[%s1 + $0x4] sm:$0xf]
      %v486 = vld [vmem:[%s1 + $0x8] sm:$0xf]
      %v487 = vld [vmem:[%s1 + $0xc] sm:$0xf]
      %v488 = vld [vmem:[%s2] sm:$0x1]
      %v490 = vlaneseq
      %v491 = vshrl.u32 %v490, 7
      %v492 = vsub.s32 0, %v491
      %v493 = vrot.slane %v488, %v492
      %v623 = vunpack.c.l.b16 %v356
      %v624 = vunpack.c.l.b16 %v357
      %v625 = vunpack.c.l.b16 %v358
      %v626 = vunpack.c.l.b16 %v359
      %v627 = vunpack.c.l.b16 %v360
      %v628 = vunpack.c.l.b16 %v361
      %v629 = vunpack.c.l.b16 %v362
      %v630 = vunpack.c.l.b16 %v363
      %v631 = vunpack.c.l.b16 %v364
      %v632 = vunpack.c.l.b16 %v365
      %v633 = vunpack.c.l.b16 %v366
      %v634 = vunpack.c.l.b16 %v367
      %v635 = vunpack.c.l.b16 %v368
      %v636 = vunpack.c.l.b16 %v369
      %v637 = vunpack.c.l.b16 %v370
      %v638 = vunpack.c.l.b16 %v371
      %v639 = vunpack.c.l.b16 %v372
      %v640 = vunpack.c.l.b16 %v373
      %v641 = vunpack.c.l.b16 %v374
      %v642 = vunpack.c.l.b16 %v375
      %v643 = vunpack.c.l.b16 %v376
      %v644 = vunpack.c.l.b16 %v377
      %v645 = vunpack.c.l.b16 %v378
      %v646 = vunpack.c.l.b16 %v379
      %v647 = vunpack.c.l.b16 %v380
      %v648 = vunpack.c.l.b16 %v381
      %v649 = vunpack.c.l.b16 %v382
      %v650 = vunpack.c.l.b16 %v383
      %v651 = vunpack.c.l.b16 %v384
      %v652 = vunpack.c.l.b16 %v385
      %v653 = vunpack.c.l.b16 %v386
      %v654 = vunpack.c.l.b16 %v387
      %v655 = vunpack.c.l.b16 %v388
      %v656 = vunpack.c.l.b16 %v389
      %v657 = vunpack.c.l.b16 %v390
      %v658 = vunpack.c.l.b16 %v391
      %v659 = vunpack.c.l.b16 %v392
      %v660 = vunpack.c.l.b16 %v393
      %v661 = vunpack.c.l.b16 %v394
      %v662 = vunpack.c.l.b16 %v395
      %v663 = vunpack.c.l.b16 %v396
      %v664 = vunpack.c.l.b16 %v397
      %v665 = vunpack.c.l.b16 %v398
      %v666 = vunpack.c.l.b16 %v399
      %v667 = vunpack.c.l.b16 %v400
      %v668 = vunpack.c.l.b16 %v401
      %v669 = vunpack.c.l.b16 %v402
      %v670 = vunpack.c.l.b16 %v403
      %v671 = vunpack.c.l.b16 %v404
      %v672 = vunpack.c.l.b16 %v405
      %v673 = vunpack.c.l.b16 %v406
      %v674 = vunpack.c.l.b16 %v407
      %v675 = vunpack.c.l.b16 %v408
      %v676 = vunpack.c.l.b16 %v409
      %v677 = vunpack.c.l.b16 %v410
      %v678 = vunpack.c.l.b16 %v411
      %v679 = vunpack.c.l.b16 %v412
      %v680 = vunpack.c.l.b16 %v413
      %v681 = vunpack.c.l.b16 %v414
      %v682 = vunpack.c.l.b16 %v415
      %v683 = vunpack.c.l.b16 %v416
      %v684 = vunpack.c.l.b16 %v417
      %v685 = vunpack.c.l.b16 %v418
      %v686 = vunpack.c.l.b16 %v419
      %v687 = vunpack.c.l.b16 %v420
      %v688 = vunpack.c.l.b16 %v421
      %v689 = vunpack.c.l.b16 %v422
      %v690 = vunpack.c.l.b16 %v423
      %v691 = vunpack.c.l.b16 %v424
      %v692 = vunpack.c.l.b16 %v425
      %v693 = vunpack.c.l.b16 %v426
      %v694 = vunpack.c.l.b16 %v427
      %v695 = vunpack.c.l.b16 %v428
      %v696 = vunpack.c.l.b16 %v429
      %v697 = vunpack.c.l.b16 %v430
      %v698 = vunpack.c.l.b16 %v431
      %v699 = vunpack.c.l.b16 %v432
      %v700 = vunpack.c.l.b16 %v433
      %v701 = vunpack.c.l.b16 %v434
      %v702 = vunpack.c.l.b16 %v435
      %v703 = vunpack.c.l.b16 %v436
      %v704 = vunpack.c.l.b16 %v437
      %v705 = vunpack.c.l.b16 %v438
      %v706 = vunpack.c.l.b16 %v439
      %v707 = vunpack.c.l.b16 %v440
      %v708 = vunpack.c.l.b16 %v441
      %v709 = vunpack.c.l.b16 %v442
      %v710 = vunpack.c.l.b16 %v443
      %v711 = vunpack.c.l.b16 %v444
      %v712 = vunpack.c.l.b16 %v445
      %v713 = vunpack.c.l.b16 %v446
      %v714 = vunpack.c.l.b16 %v447
      %v715 = vunpack.c.l.b16 %v448
      %v716 = vunpack.c.l.b16 %v449
      %v717 = vunpack.c.l.b16 %v450
      %v718 = vunpack.c.l.b16 %v451
      %v719 = vunpack.c.l.b16 %v452
      %v720 = vunpack.c.l.b16 %v453
      %v721 = vunpack.c.l.b16 %v454
      %v722 = vunpack.c.l.b16 %v455
      %v723 = vunpack.c.l.b16 %v456
      %v724 = vunpack.c.l.b16 %v457
      %v725 = vunpack.c.l.b16 %v458
      %v726 = vunpack.c.l.b16 %v459
      %v727 = vunpack.c.l.b16 %v460
      %v728 = vunpack.c.l.b16 %v461
      %v729 = vunpack.c.l.b16 %v462
      %v730 = vunpack.c.l.b16 %v463
      %v731 = vunpack.c.l.b16 %v464
      %v732 = vunpack.c.l.b16 %v465
      %v733 = vunpack.c.l.b16 %v466
      %v734 = vunpack.c.l.b16 %v467
      %v735 = vunpack.c.l.b16 %v468
      %v736 = vunpack.c.l.b16 %v469
      %v737 = vunpack.c.l.b16 %v470
      %v738 = vunpack.c.l.b16 %v471
      %v739 = vunpack.c.l.b16 %v472
      %v740 = vunpack.c.l.b16 %v473
      %v741 = vunpack.c.l.b16 %v474
      %v742 = vunpack.c.l.b16 %v475
      %v743 = vunpack.c.l.b16 %v476
      %v744 = vunpack.c.l.b16 %v477
      %v745 = vunpack.c.l.b16 %v478
      %v746 = vunpack.c.l.b16 %v479
      %v747 = vunpack.c.l.b16 %v480
      %v748 = vunpack.c.l.b16 %v481
      %v749 = vunpack.c.l.b16 %v482
      %v750 = vunpack.c.l.b16 %v483
      %v751 = vpack.c.b16 %v624, %v623
      %v752 = vpack.c.b16 %v626, %v625
      %v753 = vpack.c.b16 %v628, %v627
      %v754 = vpack.c.b16 %v630, %v629
      %v755 = vpack.c.b16 %v632, %v631
      %v756 = vpack.c.b16 %v634, %v633
      %v757 = vpack.c.b16 %v636, %v635
      %v758 = vpack.c.b16 %v638, %v637
      %v759 = vpack.c.b16 %v640, %v639
      %v760 = vpack.c.b16 %v642, %v641
      %v761 = vpack.c.b16 %v644, %v643
      %v762 = vpack.c.b16 %v646, %v645
      %v763 = vpack.c.b16 %v648, %v647
      %v764 = vpack.c.b16 %v650, %v649
      %v765 = vpack.c.b16 %v652, %v651
      %v766 = vpack.c.b16 %v654, %v653
      %v767 = vpack.c.b16 %v656, %v655
      %v768 = vpack.c.b16 %v658, %v657
      %v769 = vpack.c.b16 %v660, %v659
      %v770 = vpack.c.b16 %v662, %v661
      %v771 = vpack.c.b16 %v664, %v663
      %v772 = vpack.c.b16 %v666, %v665
      %v773 = vpack.c.b16 %v668, %v667
      %v774 = vpack.c.b16 %v670, %v669
      %v775 = vpack.c.b16 %v672, %v671
      %v776 = vpack.c.b16 %v674, %v673
      %v777 = vpack.c.b16 %v676, %v675
      %v778 = vpack.c.b16 %v678, %v677
      %v779 = vpack.c.b16 %v680, %v679
      %v780 = vpack.c.b16 %v682, %v681
      %v781 = vpack.c.b16 %v684, %v683
      %v782 = vpack.c.b16 %v686, %v685
      %v783 = vpack.c.b16 %v688, %v687
      %v784 = vpack.c.b16 %v690, %v689
      %v785 = vpack.c.b16 %v692, %v691
      %v786 = vpack.c.b16 %v694, %v693
      %v787 = vpack.c.b16 %v696, %v695
      %v788 = vpack.c.b16 %v698, %v697
      %v789 = vpack.c.b16 %v700, %v699
      %v790 = vpack.c.b16 %v702, %v701
      %v791 = vpack.c.b16 %v704, %v703
      %v792 = vpack.c.b16 %v706, %v705
      %v793 = vpack.c.b16 %v708, %v707
      %v794 = vpack.c.b16 %v710, %v709
      %v795 = vpack.c.b16 %v712, %v711
      %v796 = vpack.c.b16 %v714, %v713
      %v797 = vpack.c.b16 %v716, %v715
      %v798 = vpack.c.b16 %v718, %v717
      %v799 = vpack.c.b16 %v720, %v719
      %v800 = vpack.c.b16 %v722, %v721
      %v801 = vpack.c.b16 %v724, %v723
      %v802 = vpack.c.b16 %v726, %v725
      %v803 = vpack.c.b16 %v728, %v727
      %v804 = vpack.c.b16 %v730, %v729
      %v805 = vpack.c.b16 %v732, %v731
      %v806 = vpack.c.b16 %v734, %v733
      %v807 = vpack.c.b16 %v736, %v735
      %v808 = vpack.c.b16 %v738, %v737
      %v809 = vpack.c.b16 %v740, %v739
      %v810 = vpack.c.b16 %v742, %v741
      %v811 = vpack.c.b16 %v744, %v743
      %v812 = vpack.c.b16 %v746, %v745
      %v813 = vpack.c.b16 %v748, %v747
      %v814 = vpack.c.b16 %v750, %v749
      %v819 = vunpack.c.l.b16 %v484
      %v820 = vunpack.c.l.b16 %v485
      %v821 = vunpack.c.l.b16 %v486
      %v822 = vunpack.c.l.b16 %v487
      %v823 = vpack.c.b16 %v820, %v819
      %v824 = vpack.c.b16 %v822, %v821
      %vm827 = vcmask 261120
      %v829 = vsel %vm827, %v751, 0
      %v832 = vsel %vm827, %v752, 0
      %v835 = vsel %vm827, %v753, 0
      %v838 = vsel %vm827, %v754, 0
      %v841 = vsel %vm827, %v755, 0
      %v844 = vsel %vm827, %v756, 0
      %v847 = vsel %vm827, %v757, 0
      %v850 = vsel %vm827, %v758, 0
      %v853 = vsel %vm827, %v759, 0
      %v856 = vsel %vm827, %v760, 0
      %v859 = vsel %vm827, %v761, 0
      %v862 = vsel %vm827, %v762, 0
      %v865 = vsel %vm827, %v763, 0
      %v868 = vsel %vm827, %v764, 0
      %v871 = vsel %vm827, %v765, 0
      %v874 = vsel %vm827, %v766, 0
      %v877 = vsel %vm827, %v767, 0
      %v880 = vsel %vm827, %v768, 0
      %v883 = vsel %vm827, %v769, 0
      %v886 = vsel %vm827, %v770, 0
      %v889 = vsel %vm827, %v771, 0
      %v892 = vsel %vm827, %v772, 0
      %v895 = vsel %vm827, %v773, 0
      %v898 = vsel %vm827, %v774, 0
      %v901 = vsel %vm827, %v775, 0
      %v904 = vsel %vm827, %v776, 0
      %v907 = vsel %vm827, %v777, 0
      %v910 = vsel %vm827, %v778, 0
      %v913 = vsel %vm827, %v779, 0
      %v916 = vsel %vm827, %v780, 0
      %v919 = vsel %vm827, %v781, 0
      %v922 = vsel %vm827, %v782, 0
      %v925 = vsel %vm827, %v783, 0
      %v928 = vsel %vm827, %v784, 0
      %v931 = vsel %vm827, %v785, 0
      %v934 = vsel %vm827, %v786, 0
      %v937 = vsel %vm827, %v787, 0
      %v940 = vsel %vm827, %v788, 0
      %v943 = vsel %vm827, %v789, 0
      %v946 = vsel %vm827, %v790, 0
      %v949 = vsel %vm827, %v791, 0
      %v952 = vsel %vm827, %v792, 0
      %v955 = vsel %vm827, %v793, 0
      %v958 = vsel %vm827, %v794, 0
      %v961 = vsel %vm827, %v795, 0
      %v964 = vsel %vm827, %v796, 0
      %v967 = vsel %vm827, %v797, 0
      %v970 = vsel %vm827, %v798, 0
      %v973 = vsel %vm827, %v799, 0
      %v976 = vsel %vm827, %v800, 0
      %v979 = vsel %vm827, %v801, 0
      %v982 = vsel %vm827, %v802, 0
      %v985 = vsel %vm827, %v803, 0
      %v988 = vsel %vm827, %v804, 0
      %v991 = vsel %vm827, %v805, 0
      %v994 = vsel %vm827, %v806, 0
      %v997 = vsel %vm827, %v807, 0
      %v1000 = vsel %vm827, %v808, 0
      %v1003 = vsel %vm827, %v809, 0
      %v1006 = vsel %vm827, %v810, 0
      %v1009 = vsel %vm827, %v811, 0
      %v1012 = vsel %vm827, %v812, 0
      %v1015 = vsel %vm827, %v813, 0
      %v1018 = vsel %vm827, %v814, 0
      %1020 = vmatprep.subr.bf16.mxu0 0
      %1021 = vmatpush1.bf16.msra.mxu0 %v823
      %1022 = vmatprep.subr.bf16.mxu0 0
      %1023 = vmatpush1.bf16.msra.mxu0 %v824
      %1024 = vmatprep.subr.bf16.mxu0 0
      %1025 = vmatpush1.bf16.msra.mxu0 0
      %1026 = vmatprep.subr.bf16.mxu0 0
      %1027 = vmatpush1.bf16.msra.mxu0 0
      %1028 = vmatprep.subr.bf16.mxu0 0
      %1029 = vmatpush1.bf16.msra.mxu0 0
      %1030 = vmatprep.subr.bf16.mxu0 0
      %1031 = vmatpush1.bf16.msra.mxu0 0
      %1032 = vmatprep.subr.bf16.mxu0 0
      %1033 = vmatpush1.bf16.msra.mxu0 0
      %1034 = vmatprep.subr.bf16.mxu0 0
      %1035 = vmatpush1.bf16.msra.mxu0 0
      %1036 = vmatprep.subr.bf16.mxu0 0
      %1037 = vmatpush1.bf16.msra.mxu0 0
      %1038 = vmatprep.subr.bf16.mxu0 0
      %1039 = vmatpush1.bf16.msra.mxu0 0
      %1040 = vmatprep.subr.bf16.mxu0 0
      %1041 = vmatpush1.bf16.msra.mxu0 0
      %1042 = vmatprep.subr.bf16.mxu0 0
      %1043 = vmatpush1.bf16.msra.mxu0 0
      %1044 = vmatprep.subr.bf16.mxu0 0
      %1045 = vmatpush1.bf16.msra.mxu0 0
      %1046 = vmatprep.subr.bf16.mxu0 0
      %1047 = vmatpush1.bf16.msra.mxu0 0
      %1048 = vmatprep.subr.bf16.mxu0 0
      %1049 = vmatpush1.bf16.msra.mxu0 0
      %1050 = vmatprep.subr.bf16.mxu0 0
      %1051 = vmatpush1.bf16.msra.mxu0 0
      %1052 = vmatprep.mubr.bf16.mxu0 0
      %1053 = vmatmul.mubr.bf16.gmra.mrb[0].mxu0 %v829
      %v1054 = vpop.f32.mrb[0].mxu0
      %v1055 = vadd.f32 %v493, %v1054
      %v1056 = vpop.f32.mrb[0].mxu0
      %v1057 = vpop.f32.mrb[0].mxu0
      %v1058 = vadd.f32 %v493, %v1057
      %v1059 = vpop.f32.mrb[0].mxu0
      %1060 = vmatprep.mubr.bf16.mxu0 0
      %1061 = vmatmul.mubr.bf16.gmra.mrb[0].mxu0 %v832
      %v1062 = vpop.f32.mrb[0].mxu0
      %v1063 = vadd.f32 %v493, %v1062
      %v1064 = vpop.f32.mrb[0].mxu0
      %v1065 = vpop.f32.mrb[0].mxu0
      %v1066 = vadd.f32 %v493, %v1065
      %v1067 = vpop.f32.mrb[0].mxu0
      %1068 = vmatprep.mubr.bf16.mxu0 0
      %1069 = vmatmul.mubr.bf16.gmra.mrb[0].mxu0 %v835
      %v1070 = vpop.f32.mrb[0].mxu0
      %v1071 = vadd.f32 %v493, %v1070
      %v1072 = vpop.f32.mrb[0].mxu0
      %v1073 = vpop.f32.mrb[0].mxu0
      %v1074 = vadd.f32 %v493, %v1073
      %v1075 = vpop.f32.mrb[0].mxu0
      %1076 = vmatprep.mubr.bf16.mxu0 0
      %1077 = vmatmul.mubr.bf16.gmra.mrb[0].mxu0 %v838
      %v1078 = vpop.f32.mrb[0].mxu0
      %v1079 = vadd.f32 %v493, %v1078
      %v1080 = vpop.f32.mrb[0].mxu0
      %v1081 = vpop.f32.mrb[0].mxu0
      %v1082 = vadd.f32 %v493, %v1081
      %v1083 = vpop.f32.mrb[0].mxu0
      %1084 = vmatprep.mubr.bf16.mxu0 0
      %1085 = vmatmul.mubr.bf16.gmra.mrb[0].mxu0 %v841
      %v1086 = vpop.f32.mrb[0].mxu0
      %v1087 = vadd.f32 %v493, %v1086
      %v1088 = vpop.f32.mrb[0].mxu0
      %v1089 = vpop.f32.mrb[0].mxu0
      %v1090 = vadd.f32 %v493, %v1089
      %v1091 = vpop.f32.mrb[0].mxu0
      %1092 = vmatprep.mubr.bf16.mxu0 0
      %1093 = vmatmul.mubr.bf16.gmra.mrb[0].mxu0 %v844
      %v1094 = vpop.f32.mrb[0].mxu0
      %v1095 = vadd.f32 %v493, %v1094
      %v1096 = vpop.f32.mrb[0].mxu0
      %v1097 = vpop.f32.mrb[0].mxu0
      %v1098 = vadd.f32 %v493, %v1097
      %v1099 = vpop.f32.mrb[0].mxu0
      %1100 = vmatprep.mubr.bf16.mxu0 0
      %1101 = vmatmul.mubr.bf16.gmra.mrb[0].mxu0 %v847
      %v1102 = vpop.f32.mrb[0].mxu0
      %v1103 = vadd.f32 %v493, %v1102
      %v1104 = vpop.f32.mrb[0].mxu0
      %v1105 = vpop.f32.mrb[0].mxu0
      %v1106 = vadd.f32 %v493, %v1105
      %v1107 = vpop.f32.mrb[0].mxu0
      %1108 = vmatprep.mubr.bf16.mxu0 0
      %1109 = vmatmul.mubr.bf16.gmra.mrb[0].mxu0 %v850
      %v1110 = vpop.f32.mrb[0].mxu0
      %v1111 = vadd.f32 %v493, %v1110
      %v1112 = vpop.f32.mrb[0].mxu0
      %v1113 = vpop.f32.mrb[0].mxu0
      %v1114 = vadd.f32 %v493, %v1113
      %v1115 = vpop.f32.mrb[0].mxu0
      %1116 = vmatprep.mubr.bf16.mxu0 0
      %1117 = vmatmul.mubr.bf16.gmra.mrb[0].mxu0 %v853
      %v1118 = vpop.f32.mrb[0].mxu0
      %v1119 = vadd.f32 %v493, %v1118
      %v1120 = vpop.f32.mrb[0].mxu0
      %v1121 = vpop.f32.mrb[0].mxu0
      %v1122 = vadd.f32 %v493, %v1121
      %v1123 = vpop.f32.mrb[0].mxu0
      %1124 = vmatprep.mubr.bf16.mxu0 0
      %1125 = vmatmul.mubr.bf16.gmra.mrb[0].mxu0 %v856
      %v1126 = vpop.f32.mrb[0].mxu0
      %v1127 = vadd.f32 %v493, %v1126
      %v1128 = vpop.f32.mrb[0].mxu0
      %v1129 = vpop.f32.mrb[0].mxu0
      %v1130 = vadd.f32 %v493, %v1129
      %v1131 = vpop.f32.mrb[0].mxu0
      %1132 = vmatprep.mubr.bf16.mxu0 0
      %1133 = vmatmul.mubr.bf16.gmra.mrb[0].mxu0 %v859
      %v1134 = vpop.f32.mrb[0].mxu0
      %v1135 = vadd.f32 %v493, %v1134
      %v1136 = vpop.f32.mrb[0].mxu0
      %v1137 = vpop.f32.mrb[0].mxu0
      %v1138 = vadd.f32 %v493, %v1137
      %v1139 = vpop.f32.mrb[0].mxu0
      %1140 = vmatprep.mubr.bf16.mxu0 0
      %1141 = vmatmul.mubr.bf16.gmra.mrb[0].mxu0 %v862
      %v1142 = vpop.f32.mrb[0].mxu0
      %v1143 = vadd.f32 %v493, %v1142
      %v1144 = vpop.f32.mrb[0].mxu0
      %v1145 = vpop.f32.mrb[0].mxu0
      %v1146 = vadd.f32 %v493, %v1145
      %v1147 = vpop.f32.mrb[0].mxu0
      %1148 = vmatprep.mubr.bf16.mxu0 0
      %1149 = vmatmul.mubr.bf16.gmra.mrb[0].mxu0 %v865
      %v1150 = vpop.f32.mrb[0].mxu0
      %v1151 = vadd.f32 %v493, %v1150
      %v1152 = vpop.f32.mrb[0].mxu0
      %v1153 = vpop.f32.mrb[0].mxu0
      %v1154 = vadd.f32 %v493, %v1153
      %v1155 = vpop.f32.mrb[0].mxu0
      %1156 = vmatprep.mubr.bf16.mxu0 0
      %1157 = vmatmul.mubr.bf16.gmra.mrb[0].mxu0 %v868
      %v1158 = vpop.f32.mrb[0].mxu0
      %v1159 = vadd.f32 %v493, %v1158
      %v1160 = vpop.f32.mrb[0].mxu0
      %v1161 = vpop.f32.mrb[0].mxu0
      %v1162 = vadd.f32 %v493, %v1161
      %v1163 = vpop.f32.mrb[0].mxu0
      %1164 = vmatprep.mubr.bf16.mxu0 0
      %1165 = vmatmul.mubr.bf16.gmra.mrb[0].mxu0 %v871
      %v1166 = vpop.f32.mrb[0].mxu0
      %v1167 = vadd.f32 %v493, %v1166
      %v1168 = vpop.f32.mrb[0].mxu0
      %v1169 = vpop.f32.mrb[0].mxu0
      %v1170 = vadd.f32 %v493, %v1169
      %v1171 = vpop.f32.mrb[0].mxu0
      %1172 = vmatprep.mubr.bf16.mxu0 0
      %1173 = vmatmul.mubr.bf16.gmra.mrb[0].mxu0 %v874
      %v1174 = vpop.f32.mrb[0].mxu0
      %v1175 = vadd.f32 %v493, %v1174
      %v1176 = vpop.f32.mrb[0].mxu0
      %v1177 = vpop.f32.mrb[0].mxu0
      %v1178 = vadd.f32 %v493, %v1177
      %v1179 = vpop.f32.mrb[0].mxu0
      %1180 = vmatprep.mubr.bf16.mxu0 0
      %1181 = vmatmul.mubr.bf16.gmra.mrb[0].mxu0 %v877
      %v1182 = vpop.f32.mrb[0].mxu0
      %v1183 = vadd.f32 %v493, %v1182
      %v1184 = vpop.f32.mrb[0].mxu0
      %v1185 = vpop.f32.mrb[0].mxu0
      %v1186 = vadd.f32 %v493, %v1185
      %v1187 = vpop.f32.mrb[0].mxu0
      %1188 = vmatprep.mubr.bf16.mxu0 0
      %1189 = vmatmul.mubr.bf16.gmra.mrb[0].mxu0 %v880
      %v1190 = vpop.f32.mrb[0].mxu0
      %v1191 = vadd.f32 %v493, %v1190
      %v1192 = vpop.f32.mrb[0].mxu0
      %v1193 = vpop.f32.mrb[0].mxu0
      %v1194 = vadd.f32 %v493, %v1193
      %v1195 = vpop.f32.mrb[0].mxu0
      %1196 = vmatprep.mubr.bf16.mxu0 0
      %1197 = vmatmul.mubr.bf16.gmra.mrb[0].mxu0 %v883
      %v1198 = vpop.f32.mrb[0].mxu0
      %v1199 = vadd.f32 %v493, %v1198
      %v1200 = vpop.f32.mrb[0].mxu0
      %v1201 = vpop.f32.mrb[0].mxu0
      %v1202 = vadd.f32 %v493, %v1201
      %v1203 = vpop.f32.mrb[0].mxu0
      %1204 = vmatprep.mubr.bf16.mxu0 0
      %1205 = vmatmul.mubr.bf16.gmra.mrb[0].mxu0 %v886
      %v1206 = vpop.f32.mrb[0].mxu0
      %v1207 = vadd.f32 %v493, %v1206
      %v1208 = vpop.f32.mrb[0].mxu0
      %v1209 = vpop.f32.mrb[0].mxu0
      %v1210 = vadd.f32 %v493, %v1209
      %v1211 = vpop.f32.mrb[0].mxu0
      %1212 = vmatprep.mubr.bf16.mxu0 0
      %1213 = vmatmul.mubr.bf16.gmra.mrb[0].mxu0 %v889
      %v1214 = vpop.f32.mrb[0].mxu0
      %v1215 = vadd.f32 %v493, %v1214
      %v1216 = vpop.f32.mrb[0].mxu0
      %v1217 = vpop.f32.mrb[0].mxu0
      %v1218 = vadd.f32 %v493, %v1217
      %v1219 = vpop.f32.mrb[0].mxu0
      %1220 = vmatprep.mubr.bf16.mxu0 0
      %1221 = vmatmul.mubr.bf16.gmra.mrb[0].mxu0 %v892
      %v1222 = vpop.f32.mrb[0].mxu0
      %v1223 = vadd.f32 %v493, %v1222
      %v1224 = vpop.f32.mrb[0].mxu0
      %v1225 = vpop.f32.mrb[0].mxu0
      %v1226 = vadd.f32 %v493, %v1225
      %v1227 = vpop.f32.mrb[0].mxu0
      %1228 = vmatprep.mubr.bf16.mxu0 0
      %1229 = vmatmul.mubr.bf16.gmra.mrb[0].mxu0 %v895
      %v1230 = vpop.f32.mrb[0].mxu0
      %v1231 = vadd.f32 %v493, %v1230
      %v1232 = vpop.f32.mrb[0].mxu0
      %v1233 = vpop.f32.mrb[0].mxu0
      %v1234 = vadd.f32 %v493, %v1233
      %v1235 = vpop.f32.mrb[0].mxu0
      %1236 = vmatprep.mubr.bf16.mxu0 0
      %1237 = vmatmul.mubr.bf16.gmra.mrb[0].mxu0 %v898
      %v1238 = vpop.f32.mrb[0].mxu0
      %v1239 = vadd.f32 %v493, %v1238
      %v1240 = vpop.f32.mrb[0].mxu0
      %v1241 = vpop.f32.mrb[0].mxu0
      %v1242 = vadd.f32 %v493, %v1241
      %v1243 = vpop.f32.mrb[0].mxu0
      %1244 = vmatprep.mubr.bf16.mxu0 0
      %1245 = vmatmul.mubr.bf16.gmra.mrb[0].mxu0 %v901
      %v1246 = vpop.f32.mrb[0].mxu0
      %v1247 = vadd.f32 %v493, %v1246
      %v1248 = vpop.f32.mrb[0].mxu0
      %v1249 = vpop.f32.mrb[0].mxu0
      %v1250 = vadd.f32 %v493, %v1249
      %v1251 = vpop.f32.mrb[0].mxu0
      %1252 = vmatprep.mubr.bf16.mxu0 0
      %1253 = vmatmul.mubr.bf16.gmra.mrb[0].mxu0 %v904
      %v1254 = vpop.f32.mrb[0].mxu0
      %v1255 = vadd.f32 %v493, %v1254
      %v1256 = vpop.f32.mrb[0].mxu0
      %v1257 = vpop.f32.mrb[0].mxu0
      %v1258 = vadd.f32 %v493, %v1257
      %v1259 = vpop.f32.mrb[0].mxu0
      %1260 = vmatprep.mubr.bf16.mxu0 0
      %1261 = vmatmul.mubr.bf16.gmra.mrb[0].mxu0 %v907
      %v1262 = vpop.f32.mrb[0].mxu0
      %v1263 = vadd.f32 %v493, %v1262
      %v1264 = vpop.f32.mrb[0].mxu0
      %v1265 = vpop.f32.mrb[0].mxu0
      %v1266 = vadd.f32 %v493, %v1265
      %v1267 = vpop.f32.mrb[0].mxu0
      %1268 = vmatprep.mubr.bf16.mxu0 0
      %1269 = vmatmul.mubr.bf16.gmra.mrb[0].mxu0 %v910
      %v1270 = vpop.f32.mrb[0].mxu0
      %v1271 = vadd.f32 %v493, %v1270
      %v1272 = vpop.f32.mrb[0].mxu0
      %v1273 = vpop.f32.mrb[0].mxu0
      %v1274 = vadd.f32 %v493, %v1273
      %v1275 = vpop.f32.mrb[0].mxu0
      %1276 = vmatprep.mubr.bf16.mxu0 0
      %1277 = vmatmul.mubr.bf16.gmra.mrb[0].mxu0 %v913
      %v1278 = vpop.f32.mrb[0].mxu0
      %v1279 = vadd.f32 %v493, %v1278
      %v1280 = vpop.f32.mrb[0].mxu0
      %v1281 = vpop.f32.mrb[0].mxu0
      %v1282 = vadd.f32 %v493, %v1281
      %v1283 = vpop.f32.mrb[0].mxu0
      %1284 = vmatprep.mubr.bf16.mxu0 0
      %1285 = vmatmul.mubr.bf16.gmra.mrb[0].mxu0 %v916
      %v1286 = vpop.f32.mrb[0].mxu0
      %v1287 = vadd.f32 %v493, %v1286
      %v1288 = vpop.f32.mrb[0].mxu0
      %v1289 = vpop.f32.mrb[0].mxu0
      %v1290 = vadd.f32 %v493, %v1289
      %v1291 = vpop.f32.mrb[0].mxu0
      %1292 = vmatprep.mubr.bf16.mxu0 0
      %1293 = vmatmul.mubr.bf16.gmra.mrb[0].mxu0 %v919
      %v1294 = vpop.f32.mrb[0].mxu0
      %v1295 = vadd.f32 %v493, %v1294
      %v1296 = vpop.f32.mrb[0].mxu0
      %v1297 = vpop.f32.mrb[0].mxu0
      %v1298 = vadd.f32 %v493, %v1297
      %v1299 = vpop.f32.mrb[0].mxu0
      %1300 = vmatprep.mubr.bf16.mxu0 0
      %1301 = vmatmul.mubr.bf16.gmra.mrb[0].mxu0 %v922
      %v1302 = vpop.f32.mrb[0].mxu0
      %v1303 = vadd.f32 %v493, %v1302
      %v1304 = vpop.f32.mrb[0].mxu0
      %v1305 = vpop.f32.mrb[0].mxu0
      %v1306 = vadd.f32 %v493, %v1305
      %v1307 = vpop.f32.mrb[0].mxu0
      %1308 = vmatprep.mubr.bf16.mxu0 0
      %1309 = vmatmul.mubr.bf16.gmra.mrb[0].mxu0 %v925
      %v1310 = vpop.f32.mrb[0].mxu0
      %v1311 = vadd.f32 %v493, %v1310
      %v1312 = vpop.f32.mrb[0].mxu0
      %v1313 = vpop.f32.mrb[0].mxu0
      %v1314 = vadd.f32 %v493, %v1313
      %v1315 = vpop.f32.mrb[0].mxu0
      %1316 = vmatprep.mubr.bf16.mxu0 0
      %1317 = vmatmul.mubr.bf16.gmra.mrb[0].mxu0 %v928
      %v1318 = vpop.f32.mrb[0].mxu0
      %v1319 = vadd.f32 %v493, %v1318
      %v1320 = vpop.f32.mrb[0].mxu0
      %v1321 = vpop.f32.mrb[0].mxu0
      %v1322 = vadd.f32 %v493, %v1321
      %v1323 = vpop.f32.mrb[0].mxu0
      %1324 = vmatprep.mubr.bf16.mxu0 0
      %1325 = vmatmul.mubr.bf16.gmra.mrb[0].mxu0 %v931
      %v1326 = vpop.f32.mrb[0].mxu0
      %v1327 = vadd.f32 %v493, %v1326
      %v1328 = vpop.f32.mrb[0].mxu0
      %v1329 = vpop.f32.mrb[0].mxu0
      %v1330 = vadd.f32 %v493, %v1329
      %v1331 = vpop.f32.mrb[0].mxu0
      %1332 = vmatprep.mubr.bf16.mxu0 0
      %1333 = vmatmul.mubr.bf16.gmra.mrb[0].mxu0 %v934
      %v1334 = vpop.f32.mrb[0].mxu0
      %v1335 = vadd.f32 %v493, %v1334
      %v1336 = vpop.f32.mrb[0].mxu0
      %v1337 = vpop.f32.mrb[0].mxu0
      %v1338 = vadd.f32 %v493, %v1337
      %v1339 = vpop.f32.mrb[0].mxu0
      %1340 = vmatprep.mubr.bf16.mxu0 0
      %1341 = vmatmul.mubr.bf16.gmra.mrb[0].mxu0 %v937
      %v1342 = vpop.f32.mrb[0].mxu0
      %v1343 = vadd.f32 %v493, %v1342
      %v1344 = vpop.f32.mrb[0].mxu0
      %v1345 = vpop.f32.mrb[0].mxu0
      %v1346 = vadd.f32 %v493, %v1345
      %v1347 = vpop.f32.mrb[0].mxu0
      %1348 = vmatprep.mubr.bf16.mxu0 0
      %1349 = vmatmul.mubr.bf16.gmra.mrb[0].mxu0 %v940
      %v1350 = vpop.f32.mrb[0].mxu0
      %v1351 = vadd.f32 %v493, %v1350
      %v1352 = vpop.f32.mrb[0].mxu0
      %v1353 = vpop.f32.mrb[0].mxu0
      %v1354 = vadd.f32 %v493, %v1353
      %v1355 = vpop.f32.mrb[0].mxu0
      %1356 = vmatprep.mubr.bf16.mxu0 0
      %1357 = vmatmul.mubr.bf16.gmra.mrb[0].mxu0 %v943
      %v1358 = vpop.f32.mrb[0].mxu0
      %v1359 = vadd.f32 %v493, %v1358
      %v1360 = vpop.f32.mrb[0].mxu0
      %v1361 = vpop.f32.mrb[0].mxu0
      %v1362 = vadd.f32 %v493, %v1361
      %v1363 = vpop.f32.mrb[0].mxu0
      %1364 = vmatprep.mubr.bf16.mxu0 0
      %1365 = vmatmul.mubr.bf16.gmra.mrb[0].mxu0 %v946
      %v1366 = vpop.f32.mrb[0].mxu0
      %v1367 = vadd.f32 %v493, %v1366
      %v1368 = vpop.f32.mrb[0].mxu0
      %v1369 = vpop.f32.mrb[0].mxu0
      %v1370 = vadd.f32 %v493, %v1369
      %v1371 = vpop.f32.mrb[0].mxu0
      %1372 = vmatprep.mubr.bf16.mxu0 0
      %1373 = vmatmul.mubr.bf16.gmra.mrb[0].mxu0 %v949
      %v1374 = vpop.f32.mrb[0].mxu0
      %v1375 = vadd.f32 %v493, %v1374
      %v1376 = vpop.f32.mrb[0].mxu0
      %v1377 = vpop.f32.mrb[0].mxu0
      %v1378 = vadd.f32 %v493, %v1377
      %v1379 = vpop.f32.mrb[0].mxu0
      %1380 = vmatprep.mubr.bf16.mxu0 0
      %1381 = vmatmul.mubr.bf16.gmra.mrb[0].mxu0 %v952
      %v1382 = vpop.f32.mrb[0].mxu0
      %v1383 = vadd.f32 %v493, %v1382
      %v1384 = vpop.f32.mrb[0].mxu0
      %v1385 = vpop.f32.mrb[0].mxu0
      %v1386 = vadd.f32 %v493, %v1385
      %v1387 = vpop.f32.mrb[0].mxu0
      %1388 = vmatprep.mubr.bf16.mxu0 0
      %1389 = vmatmul.mubr.bf16.gmra.mrb[0].mxu0 %v955
      %v1390 = vpop.f32.mrb[0].mxu0
      %v1391 = vadd.f32 %v493, %v1390
      %v1392 = vpop.f32.mrb[0].mxu0
      %v1393 = vpop.f32.mrb[0].mxu0
      %v1394 = vadd.f32 %v493, %v1393
      %v1395 = vpop.f32.mrb[0].mxu0
      %1396 = vmatprep.mubr.bf16.mxu0 0
      %1397 = vmatmul.mubr.bf16.gmra.mrb[0].mxu0 %v958
      %v1398 = vpop.f32.mrb[0].mxu0
      %v1399 = vadd.f32 %v493, %v1398
      %v1400 = vpop.f32.mrb[0].mxu0
      %v1401 = vpop.f32.mrb[0].mxu0
      %v1402 = vadd.f32 %v493, %v1401
      %v1403 = vpop.f32.mrb[0].mxu0
      %1404 = vmatprep.mubr.bf16.mxu0 0
      %1405 = vmatmul.mubr.bf16.gmra.mrb[0].mxu0 %v961
      %v1406 = vpop.f32.mrb[0].mxu0
      %v1407 = vadd.f32 %v493, %v1406
      %v1408 = vpop.f32.mrb[0].mxu0
      %v1409 = vpop.f32.mrb[0].mxu0
      %v1410 = vadd.f32 %v493, %v1409
      %v1411 = vpop.f32.mrb[0].mxu0
      %1412 = vmatprep.mubr.bf16.mxu0 0
      %1413 = vmatmul.mubr.bf16.gmra.mrb[0].mxu0 %v964
      %v1414 = vpop.f32.mrb[0].mxu0
      %v1415 = vadd.f32 %v493, %v1414
      %v1416 = vpop.f32.mrb[0].mxu0
      %v1417 = vpop.f32.mrb[0].mxu0
      %v1418 = vadd.f32 %v493, %v1417
      %v1419 = vpop.f32.mrb[0].mxu0
      %1420 = vmatprep.mubr.bf16.mxu0 0
      %1421 = vmatmul.mubr.bf16.gmra.mrb[0].mxu0 %v967
      %v1422 = vpop.f32.mrb[0].mxu0
      %v1423 = vadd.f32 %v493, %v1422
      %v1424 = vpop.f32.mrb[0].mxu0
      %v1425 = vpop.f32.mrb[0].mxu0
      %v1426 = vadd.f32 %v493, %v1425
      %v1427 = vpop.f32.mrb[0].mxu0
      %1428 = vmatprep.mubr.bf16.mxu0 0
      %1429 = vmatmul.mubr.bf16.gmra.mrb[0].mxu0 %v970
      %v1430 = vpop.f32.mrb[0].mxu0
      %v1431 = vadd.f32 %v493, %v1430
      %v1432 = vpop.f32.mrb[0].mxu0
      %v1433 = vpop.f32.mrb[0].mxu0
      %v1434 = vadd.f32 %v493, %v1433
      %v1435 = vpop.f32.mrb[0].mxu0
      %1436 = vmatprep.mubr.bf16.mxu0 0
      %1437 = vmatmul.mubr.bf16.gmra.mrb[0].mxu0 %v973
      %v1438 = vpop.f32.mrb[0].mxu0
      %v1439 = vadd.f32 %v493, %v1438
      %v1440 = vpop.f32.mrb[0].mxu0
      %v1441 = vpop.f32.mrb[0].mxu0
      %v1442 = vadd.f32 %v493, %v1441
      %v1443 = vpop.f32.mrb[0].mxu0
      %1444 = vmatprep.mubr.bf16.mxu0 0
      %1445 = vmatmul.mubr.bf16.gmra.mrb[0].mxu0 %v976
      %v1446 = vpop.f32.mrb[0].mxu0
      %v1447 = vadd.f32 %v493, %v1446
      %v1448 = vpop.f32.mrb[0].mxu0
      %v1449 = vpop.f32.mrb[0].mxu0
      %v1450 = vadd.f32 %v493, %v1449
      %v1451 = vpop.f32.mrb[0].mxu0
      %1452 = vmatprep.mubr.bf16.mxu0 0
      %1453 = vmatmul.mubr.bf16.gmra.mrb[0].mxu0 %v979
      %v1454 = vpop.f32.mrb[0].mxu0
      %v1455 = vadd.f32 %v493, %v1454
      %v1456 = vpop.f32.mrb[0].mxu0
      %v1457 = vpop.f32.mrb[0].mxu0
      %v1458 = vadd.f32 %v493, %v1457
      %v1459 = vpop.f32.mrb[0].mxu0
      %1460 = vmatprep.mubr.bf16.mxu0 0
      %1461 = vmatmul.mubr.bf16.gmra.mrb[0].mxu0 %v982
      %v1462 = vpop.f32.mrb[0].mxu0
      %v1463 = vadd.f32 %v493, %v1462
      %v1464 = vpop.f32.mrb[0].mxu0
      %v1465 = vpop.f32.mrb[0].mxu0
      %v1466 = vadd.f32 %v493, %v1465
      %v1467 = vpop.f32.mrb[0].mxu0
      %1468 = vmatprep.mubr.bf16.mxu0 0
      %1469 = vmatmul.mubr.bf16.gmra.mrb[0].mxu0 %v985
      %v1470 = vpop.f32.mrb[0].mxu0
      %v1471 = vadd.f32 %v493, %v1470
      %v1472 = vpop.f32.mrb[0].mxu0
      %v1473 = vpop.f32.mrb[0].mxu0
      %v1474 = vadd.f32 %v493, %v1473
      %v1475 = vpop.f32.mrb[0].mxu0
      %1476 = vmatprep.mubr.bf16.mxu0 0
      %1477 = vmatmul.mubr.bf16.gmra.mrb[0].mxu0 %v988
      %v1478 = vpop.f32.mrb[0].mxu0
      %v1479 = vadd.f32 %v493, %v1478
      %v1480 = vpop.f32.mrb[0].mxu0
      %v1481 = vpop.f32.mrb[0].mxu0
      %v1482 = vadd.f32 %v493, %v1481
      %v1483 = vpop.f32.mrb[0].mxu0
      %1484 = vmatprep.mubr.bf16.mxu0 0
      %1485 = vmatmul.mubr.bf16.gmra.mrb[0].mxu0 %v991
      %v1486 = vpop.f32.mrb[0].mxu0
      %v1487 = vadd.f32 %v493, %v1486
      %v1488 = vpop.f32.mrb[0].mxu0
      %v1489 = vpop.f32.mrb[0].mxu0
      %v1490 = vadd.f32 %v493, %v1489
      %v1491 = vpop.f32.mrb[0].mxu0
      %1492 = vmatprep.mubr.bf16.mxu0 0
      %1493 = vmatmul.mubr.bf16.gmra.mrb[0].mxu0 %v994
      %v1494 = vpop.f32.mrb[0].mxu0
      %v1495 = vadd.f32 %v493, %v1494
      %v1496 = vpop.f32.mrb[0].mxu0
      %v1497 = vpop.f32.mrb[0].mxu0
      %v1498 = vadd.f32 %v493, %v1497
      %v1499 = vpop.f32.mrb[0].mxu0
      %1500 = vmatprep.mubr.bf16.mxu0 0
      %1501 = vmatmul.mubr.bf16.gmra.mrb[0].mxu0 %v997
      %v1502 = vpop.f32.mrb[0].mxu0
      %v1503 = vadd.f32 %v493, %v1502
      %v1504 = vpop.f32.mrb[0].mxu0
      %v1505 = vpop.f32.mrb[0].mxu0
      %v1506 = vadd.f32 %v493, %v1505
      %v1507 = vpop.f32.mrb[0].mxu0
      %1508 = vmatprep.mubr.bf16.mxu0 0
      %1509 = vmatmul.mubr.bf16.gmra.mrb[0].mxu0 %v1000
      %v1510 = vpop.f32.mrb[0].mxu0
      %v1511 = vadd.f32 %v493, %v1510
      %v1512 = vpop.f32.mrb[0].mxu0
      %v1513 = vpop.f32.mrb[0].mxu0
      %v1514 = vadd.f32 %v493, %v1513
      %v1515 = vpop.f32.mrb[0].mxu0
      %1516 = vmatprep.mubr.bf16.mxu0 0
      %1517 = vmatmul.mubr.bf16.gmra.mrb[0].mxu0 %v1003
      %v1518 = vpop.f32.mrb[0].mxu0
      %v1519 = vadd.f32 %v493, %v1518
      %v1520 = vpop.f32.mrb[0].mxu0
      %v1521 = vpop.f32.mrb[0].mxu0
      %v1522 = vadd.f32 %v493, %v1521
      %v1523 = vpop.f32.mrb[0].mxu0
      %1524 = vmatprep.mubr.bf16.mxu0 0
      %1525 = vmatmul.mubr.bf16.gmra.mrb[0].mxu0 %v1006
      %v1526 = vpop.f32.mrb[0].mxu0
      %v1527 = vadd.f32 %v493, %v1526
      %v1528 = vpop.f32.mrb[0].mxu0
      %v1529 = vpop.f32.mrb[0].mxu0
      %v1530 = vadd.f32 %v493, %v1529
      %v1531 = vpop.f32.mrb[0].mxu0
      %1532 = vmatprep.mubr.bf16.mxu0 0
      %1533 = vmatmul.mubr.bf16.gmra.mrb[0].mxu0 %v1009
      %v1534 = vpop.f32.mrb[0].mxu0
      %v1535 = vadd.f32 %v493, %v1534
      %v1536 = vpop.f32.mrb[0].mxu0
      %v1537 = vpop.f32.mrb[0].mxu0
      %v1538 = vadd.f32 %v493, %v1537
      %v1539 = vpop.f32.mrb[0].mxu0
      %1540 = vmatprep.mubr.bf16.mxu0 0
      %1541 = vmatmul.mubr.bf16.gmra.mrb[0].mxu0 %v1012
      %v1542 = vpop.f32.mrb[0].mxu0
      %v1543 = vadd.f32 %v493, %v1542
      %v1544 = vpop.f32.mrb[0].mxu0
      %v1545 = vpop.f32.mrb[0].mxu0
      %v1546 = vadd.f32 %v493, %v1545
      %v1547 = vpop.f32.mrb[0].mxu0
      %1548 = vmatprep.mubr.bf16.mxu0 0
      %1549 = vmatmul.mubr.bf16.gmra.mrb[0].mxu0 %v1015
      %v1550 = vpop.f32.mrb[0].mxu0
      %v1551 = vadd.f32 %v493, %v1550
      %v1552 = vpop.f32.mrb[0].mxu0
      %v1553 = vpop.f32.mrb[0].mxu0
      %v1554 = vadd.f32 %v493, %v1553
      %v1555 = vpop.f32.mrb[0].mxu0
      %1556 = vmatprep.mubr.bf16.mxu0 0
      %1557 = vmatmul.mubr.bf16.gmra.mrb[0].mxu0 %v1018
      %v1558 = vpop.f32.mrb[0].mxu0
      %v1559 = vadd.f32 %v493, %v1558
      %v1560 = vpop.f32.mrb[0].mxu0
      %v1561 = vpop.f32.mrb[0].mxu0
      %v1562 = vadd.f32 %v493, %v1561
      %v1563 = vpop.f32.mrb[0].mxu0
      %1564 = vdwg.mxu0
      %v1565 = vmax.f32 %v1055, 0.0
      %v1566 = vmax.f32 %v1058, 0.0
      %v1567 = vmax.f32 %v1063, 0.0
      %v1568 = vmax.f32 %v1066, 0.0
      %v1569 = vmax.f32 %v1071, 0.0
      %v1570 = vmax.f32 %v1074, 0.0
      %v1571 = vmax.f32 %v1079, 0.0
      %v1572 = vmax.f32 %v1082, 0.0
      %v1573 = vmax.f32 %v1087, 0.0
      %v1574 = vmax.f32 %v1090, 0.0
      %v1575 = vmax.f32 %v1095, 0.0
      %v1576 = vmax.f32 %v1098, 0.0
      %v1577 = vmax.f32 %v1103, 0.0
      %v1578 = vmax.f32 %v1106, 0.0
      %v1579 = vmax.f32 %v1111, 0.0
      %v1580 = vmax.f32 %v1114, 0.0
      %v1581 = vmax.f32 %v1119, 0.0
      %v1582 = vmax.f32 %v1122, 0.0
      %v1583 = vmax.f32 %v1127, 0.0
      %v1584 = vmax.f32 %v1130, 0.0
      %v1585 = vmax.f32 %v1135, 0.0
      %v1586 = vmax.f32 %v1138, 0.0
      %v1587 = vmax.f32 %v1143, 0.0
      %v1588 = vmax.f32 %v1146, 0.0
      %v1589 = vmax.f32 %v1151, 0.0
      %v1590 = vmax.f32 %v1154, 0.0
      %v1591 = vmax.f32 %v1159, 0.0
      %v1592 = vmax.f32 %v1162, 0.0
      %v1593 = vmax.f32 %v1167, 0.0
      %v1594 = vmax.f32 %v1170, 0.0
      %v1595 = vmax.f32 %v1175, 0.0
      %v1596 = vmax.f32 %v1178, 0.0
      %v1597 = vmax.f32 %v1183, 0.0
      %v1598 = vmax.f32 %v1186, 0.0
      %v1599 = vmax.f32 %v1191, 0.0
      %v1600 = vmax.f32 %v1194, 0.0
      %v1601 = vmax.f32 %v1199, 0.0
      %v1602 = vmax.f32 %v1202, 0.0
      %v1603 = vmax.f32 %v1207, 0.0
      %v1604 = vmax.f32 %v1210, 0.0
      %v1605 = vmax.f32 %v1215, 0.0
      %v1606 = vmax.f32 %v1218, 0.0
      %v1607 = vmax.f32 %v1223, 0.0
      %v1608 = vmax.f32 %v1226, 0.0
      %v1609 = vmax.f32 %v1231, 0.0
      %v1610 = vmax.f32 %v1234, 0.0
      %v1611 = vmax.f32 %v1239, 0.0
      %v1612 = vmax.f32 %v1242, 0.0
      %v1613 = vmax.f32 %v1247, 0.0
      %v1614 = vmax.f32 %v1250, 0.0
      %v1615 = vmax.f32 %v1255, 0.0
      %v1616 = vmax.f32 %v1258, 0.0
      %v1617 = vmax.f32 %v1263, 0.0
      %v1618 = vmax.f32 %v1266, 0.0
      %v1619 = vmax.f32 %v1271, 0.0
      %v1620 = vmax.f32 %v1274, 0.0
      %v1621 = vmax.f32 %v1279, 0.0
      %v1622 = vmax.f32 %v1282, 0.0
      %v1623 = vmax.f32 %v1287, 0.0
      %v1624 = vmax.f32 %v1290, 0.0
      %v1625 = vmax.f32 %v1295, 0.0
      %v1626 = vmax.f32 %v1298, 0.0
      %v1627 = vmax.f32 %v1303, 0.0
      %v1628 = vmax.f32 %v1306, 0.0
      %v1629 = vmax.f32 %v1311, 0.0
      %v1630 = vmax.f32 %v1314, 0.0
      %v1631 = vmax.f32 %v1319, 0.0
      %v1632 = vmax.f32 %v1322, 0.0
      %v1633 = vmax.f32 %v1327, 0.0
      %v1634 = vmax.f32 %v1330, 0.0
      %v1635 = vmax.f32 %v1335, 0.0
      %v1636 = vmax.f32 %v1338, 0.0
      %v1637 = vmax.f32 %v1343, 0.0
      %v1638 = vmax.f32 %v1346, 0.0
      %v1639 = vmax.f32 %v1351, 0.0
      %v1640 = vmax.f32 %v1354, 0.0
      %v1641 = vmax.f32 %v1359, 0.0
      %v1642 = vmax.f32 %v1362, 0.0
      %v1643 = vmax.f32 %v1367, 0.0
      %v1644 = vmax.f32 %v1370, 0.0
      %v1645 = vmax.f32 %v1375, 0.0
      %v1646 = vmax.f32 %v1378, 0.0
      %v1647 = vmax.f32 %v1383, 0.0
      %v1648 = vmax.f32 %v1386, 0.0
      %v1649 = vmax.f32 %v1391, 0.0
      %v1650 = vmax.f32 %v1394, 0.0
      %v1651 = vmax.f32 %v1399, 0.0
      %v1652 = vmax.f32 %v1402, 0.0
      %v1653 = vmax.f32 %v1407, 0.0
      %v1654 = vmax.f32 %v1410, 0.0
      %v1655 = vmax.f32 %v1415, 0.0
      %v1656 = vmax.f32 %v1418, 0.0
      %v1657 = vmax.f32 %v1423, 0.0
      %v1658 = vmax.f32 %v1426, 0.0
      %v1659 = vmax.f32 %v1431, 0.0
      %v1660 = vmax.f32 %v1434, 0.0
      %v1661 = vmax.f32 %v1439, 0.0
      %v1662 = vmax.f32 %v1442, 0.0
      %v1663 = vmax.f32 %v1447, 0.0
      %v1664 = vmax.f32 %v1450, 0.0
      %v1665 = vmax.f32 %v1455, 0.0
      %v1666 = vmax.f32 %v1458, 0.0
      %v1667 = vmax.f32 %v1463, 0.0
      %v1668 = vmax.f32 %v1466, 0.0
      %v1669 = vmax.f32 %v1471, 0.0
      %v1670 = vmax.f32 %v1474, 0.0
      %v1671 = vmax.f32 %v1479, 0.0
      %v1672 = vmax.f32 %v1482, 0.0
      %v1673 = vmax.f32 %v1487, 0.0
      %v1674 = vmax.f32 %v1490, 0.0
      %v1675 = vmax.f32 %v1495, 0.0
      %v1676 = vmax.f32 %v1498, 0.0
      %v1677 = vmax.f32 %v1503, 0.0
      %v1678 = vmax.f32 %v1506, 0.0
      %v1679 = vmax.f32 %v1511, 0.0
      %v1680 = vmax.f32 %v1514, 0.0
      %v1681 = vmax.f32 %v1519, 0.0
      %v1682 = vmax.f32 %v1522, 0.0
      %v1683 = vmax.f32 %v1527, 0.0
      %v1684 = vmax.f32 %v1530, 0.0
      %v1685 = vmax.f32 %v1535, 0.0
      %v1686 = vmax.f32 %v1538, 0.0
      %v1687 = vmax.f32 %v1543, 0.0
      %v1688 = vmax.f32 %v1546, 0.0
      %v1689 = vmax.f32 %v1551, 0.0
      %v1690 = vmax.f32 %v1554, 0.0
      %v1691 = vmax.f32 %v1559, 0.0
      %v1692 = vmax.f32 %v1562, 0.0
      %v1693 = vpack.c.bf16 %v1566, %v1565
      %v1694 = vpack.c.bf16 %v1568, %v1567
      %v1695 = vpack.c.bf16 %v1570, %v1569
      %v1696 = vpack.c.bf16 %v1572, %v1571
      %v1697 = vpack.c.bf16 %v1574, %v1573
      %v1698 = vpack.c.bf16 %v1576, %v1575
      %v1699 = vpack.c.bf16 %v1578, %v1577
      %v1700 = vpack.c.bf16 %v1580, %v1579
      %v1701 = vpack.c.bf16 %v1582, %v1581
      %v1702 = vpack.c.bf16 %v1584, %v1583
      %v1703 = vpack.c.bf16 %v1586, %v1585
      %v1704 = vpack.c.bf16 %v1588, %v1587
      %v1705 = vpack.c.bf16 %v1590, %v1589
      %v1706 = vpack.c.bf16 %v1592, %v1591
      %v1707 = vpack.c.bf16 %v1594, %v1593
      %v1708 = vpack.c.bf16 %v1596, %v1595
      %v1709 = vpack.c.bf16 %v1598, %v1597
      %v1710 = vpack.c.bf16 %v1600, %v1599
      %v1711 = vpack.c.bf16 %v1602, %v1601
      %v1712 = vpack.c.bf16 %v1604, %v1603
      %v1713 = vpack.c.bf16 %v1606, %v1605
      %v1714 = vpack.c.bf16 %v1608, %v1607
      %v1715 = vpack.c.bf16 %v1610, %v1609
      %v1716 = vpack.c.bf16 %v1612, %v1611
      %v1717 = vpack.c.bf16 %v1614, %v1613
      %v1718 = vpack.c.bf16 %v1616, %v1615
      %v1719 = vpack.c.bf16 %v1618, %v1617
      %v1720 = vpack.c.bf16 %v1620, %v1619
      %v1721 = vpack.c.bf16 %v1622, %v1621
      %v1722 = vpack.c.bf16 %v1624, %v1623
      %v1723 = vpack.c.bf16 %v1626, %v1625
      %v1724 = vpack.c.bf16 %v1628, %v1627
      %v1725 = vpack.c.bf16 %v1630, %v1629
      %v1726 = vpack.c.bf16 %v1632, %v1631
      %v1727 = vpack.c.bf16 %v1634, %v1633
      %v1728 = vpack.c.bf16 %v1636, %v1635
      %v1729 = vpack.c.bf16 %v1638, %v1637
      %v1730 = vpack.c.bf16 %v1640, %v1639
      %v1731 = vpack.c.bf16 %v1642, %v1641
      %v1732 = vpack.c.bf16 %v1644, %v1643
      %v1733 = vpack.c.bf16 %v1646, %v1645
      %v1734 = vpack.c.bf16 %v1648, %v1647
      %v1735 = vpack.c.bf16 %v1650, %v1649
      %v1736 = vpack.c.bf16 %v1652, %v1651
      %v1737 = vpack.c.bf16 %v1654, %v1653
      %v1738 = vpack.c.bf16 %v1656, %v1655
      %v1739 = vpack.c.bf16 %v1658, %v1657
      %v1740 = vpack.c.bf16 %v1660, %v1659
      %v1741 = vpack.c.bf16 %v1662, %v1661
      %v1742 = vpack.c.bf16 %v1664, %v1663
      %v1743 = vpack.c.bf16 %v1666, %v1665
      %v1744 = vpack.c.bf16 %v1668, %v1667
      %v1745 = vpack.c.bf16 %v1670, %v1669
      %v1746 = vpack.c.bf16 %v1672, %v1671
      %v1747 = vpack.c.bf16 %v1674, %v1673
      %v1748 = vpack.c.bf16 %v1676, %v1675
      %v1749 = vpack.c.bf16 %v1678, %v1677
      %v1750 = vpack.c.bf16 %v1680, %v1679
      %v1751 = vpack.c.bf16 %v1682, %v1681
      %v1752 = vpack.c.bf16 %v1684, %v1683
      %v1753 = vpack.c.bf16 %v1686, %v1685
      %v1754 = vpack.c.bf16 %v1688, %v1687
      %v1755 = vpack.c.bf16 %v1690, %v1689
      %v1756 = vpack.c.bf16 %v1692, %v1691
      %1757 = vst [vmem:[#allocation2] sm:$0xff] %v1693
      %1758 = vst [vmem:[#allocation2 + $0x8] sm:$0xff] %v1694
      %1759 = vst [vmem:[#allocation2 + $0x10] sm:$0xff] %v1695
      %1760 = vst [vmem:[#allocation2 + $0x18] sm:$0xff] %v1696
      %1761 = vst [vmem:[#allocation2 + $0x28] sm:$0xff] %v1697
      %1762 = vst [vmem:[#allocation2 + $0x30] sm:$0xff] %v1698
      %1763 = vst [vmem:[#allocation2 + $0x38] sm:$0xff] %v1699
      %1764 = vst [vmem:[#allocation2 + $0x40] sm:$0xff] %v1700
      %1765 = vst [vmem:[#allocation2 + $0x50] sm:$0xff] %v1701
      %1766 = vst [vmem:[#allocation2 + $0x58] sm:$0xff] %v1702
      %1767 = vst [vmem:[#allocation2 + $0x60] sm:$0xff] %v1703
      %1768 = vst [vmem:[#allocation2 + $0x68] sm:$0xff] %v1704
      %1769 = vst [vmem:[#allocation2 + $0x78] sm:$0xff] %v1705
      %1770 = vst [vmem:[#allocation2 + $0x80] sm:$0xff] %v1706
      %1771 = vst [vmem:[#allocation2 + $0x88] sm:$0xff] %v1707
      %1772 = vst [vmem:[#allocation2 + $0x90] sm:$0xff] %v1708
      %s1773 = scalar_lea.vmem [#allocation2], 208
      %1774 = vst [vmem:[%s1773] sm:$0xff] %v1709
      %1775 = vst [vmem:[%s1773 + $0x8] sm:$0xff] %v1710
      %1776 = vst [vmem:[%s1773 + $0x10] sm:$0xff] %v1711
      %1777 = vst [vmem:[%s1773 + $0x18] sm:$0xff] %v1712
      %1778 = vst [vmem:[%s1773 + $0x28] sm:$0xff] %v1713
      %1779 = vst [vmem:[%s1773 + $0x30] sm:$0xff] %v1714
      %1780 = vst [vmem:[%s1773 + $0x38] sm:$0xff] %v1715
      %1781 = vst [vmem:[%s1773 + $0x40] sm:$0xff] %v1716
      %1782 = vst [vmem:[%s1773 + $0x50] sm:$0xff] %v1717
      %1783 = vst [vmem:[%s1773 + $0x58] sm:$0xff] %v1718
      %1784 = vst [vmem:[%s1773 + $0x60] sm:$0xff] %v1719
      %1785 = vst [vmem:[%s1773 + $0x68] sm:$0xff] %v1720
      %1786 = vst [vmem:[%s1773 + $0x78] sm:$0xff] %v1721
      %1787 = vst [vmem:[%s1773 + $0x80] sm:$0xff] %v1722
      %1788 = vst [vmem:[%s1773 + $0x88] sm:$0xff] %v1723
      %1789 = vst [vmem:[%s1773 + $0x90] sm:$0xff] %v1724
      %s1790 = scalar_lea.vmem [#allocation2], 440
      %1791 = vst [vmem:[%s1790] sm:$0xff] %v1725
      %1792 = vst [vmem:[%s1790 + $0x8] sm:$0xff] %v1726
      %1793 = vst [vmem:[%s1790 + $0x10] sm:$0xff] %v1727
      %1794 = vst [vmem:[%s1790 + $0x18] sm:$0xff] %v1728
      %1795 = vst [vmem:[%s1790 + $0x28] sm:$0xff] %v1729
      %1796 = vst [vmem:[%s1790 + $0x30] sm:$0xff] %v1730
      %1797 = vst [vmem:[%s1790 + $0x38] sm:$0xff] %v1731
      %1798 = vst [vmem:[%s1790 + $0x40] sm:$0xff] %v1732
      %1799 = vst [vmem:[%s1790 + $0x50] sm:$0xff] %v1733
      %1800 = vst [vmem:[%s1790 + $0x58] sm:$0xff] %v1734
      %1801 = vst [vmem:[%s1790 + $0x60] sm:$0xff] %v1735
      %1802 = vst [vmem:[%s1790 + $0x68] sm:$0xff] %v1736
      %1803 = vst [vmem:[%s1790 + $0x78] sm:$0xff] %v1737
      %1804 = vst [vmem:[%s1790 + $0x80] sm:$0xff] %v1738
      %1805 = vst [vmem:[%s1790 + $0x88] sm:$0xff] %v1739
      %1806 = vst [vmem:[%s1790 + $0x90] sm:$0xff] %v1740
      %s1807 = scalar_lea.vmem [#allocation2], 648
      %1808 = vst [vmem:[%s1807] sm:$0xff] %v1741
      %1809 = vst [vmem:[%s1807 + $0x8] sm:$0xff] %v1742
      %1810 = vst [vmem:[%s1807 + $0x10] sm:$0xff] %v1743
      %1811 = vst [vmem:[%s1807 + $0x18] sm:$0xff] %v1744
      %1812 = vst [vmem:[%s1807 + $0x28] sm:$0xff] %v1745
      %1813 = vst [vmem:[%s1807 + $0x30] sm:$0xff] %v1746
      %1814 = vst [vmem:[%s1807 + $0x38] sm:$0xff] %v1747
      %1815 = vst [vmem:[%s1807 + $0x40] sm:$0xff] %v1748
      %1816 = vst [vmem:[%s1807 + $0x50] sm:$0xff] %v1749
      %1817 = vst [vmem:[%s1807 + $0x58] sm:$0xff] %v1750
      %1818 = vst [vmem:[%s1807 + $0x60] sm:$0xff] %v1751
      %1819 = vst [vmem:[%s1807 + $0x68] sm:$0xff] %v1752
      %1820 = vst [vmem:[%s1807 + $0x78] sm:$0xff] %v1753
      %1821 = vst [vmem:[%s1807 + $0x80] sm:$0xff] %v1754
      %1822 = vst [vmem:[%s1807 + $0x88] sm:$0xff] %v1755
      %1823 = vst [vmem:[%s1807 + $0x90] sm:$0xff] %v1756
      %v1824 = vld [vmem:[%s319] sm:$0xff]
      %v1825 = vld [vmem:[%s319 + $0x8] sm:$0xff]
      %v1826 = vld [vmem:[%s319 + $0x10] sm:$0xff]
      %v1827 = vld [vmem:[%s319 + $0x18] sm:$0xff]
      %v1828 = vld [vmem:[%s319 + $0x28] sm:$0xff]
      %v1829 = vld [vmem:[%s319 + $0x30] sm:$0xff]
      %v1830 = vld [vmem:[%s319 + $0x38] sm:$0xff]
      %v1831 = vld [vmem:[%s319 + $0x40] sm:$0xff]
      %v1832 = vld [vmem:[%s319 + $0x50] sm:$0xff]
      %v1833 = vld [vmem:[%s319 + $0x58] sm:$0xff]
      %v1834 = vld [vmem:[%s319 + $0x60] sm:$0xff]
      %v1835 = vld [vmem:[%s319 + $0x68] sm:$0xff]
      %v1836 = vld [vmem:[%s319 + $0x78] sm:$0xff]
      %v1837 = vld [vmem:[%s319 + $0x80] sm:$0xff]
      %v1838 = vld [vmem:[%s319 + $0x88] sm:$0xff]
      %v1839 = vld [vmem:[%s319 + $0x90] sm:$0xff]
      %1840 = vst [vmem:[#allocation4] sm:$0xff] %v1824
      %1841 = vst [vmem:[#allocation4 + $0x80] sm:$0xff] %v1825
      %1842 = vst [vmem:[#allocation4 + $0x100] sm:$0xff] %v1826
      %1843 = vst [vmem:[#allocation4 + $0x180] sm:$0xff] %v1827
      %1844 = vst [vmem:[#allocation4 + $0x200] sm:$0xff] %v1828
      %1845 = vst [vmem:[#allocation4 + $0x280] sm:$0xff] %v1829
      %1846 = vst [vmem:[#allocation4 + $0x300] sm:$0xff] %v1830
      %1847 = vst [vmem:[#allocation4 + $0x380] sm:$0xff] %v1831
      %1848 = vst [vmem:[#allocation4 + $0x400] sm:$0xff] %v1832
      %1849 = vst [vmem:[#allocation4 + $0x480] sm:$0xff] %v1833
      %1850 = vst [vmem:[#allocation4 + $0x500] sm:$0xff] %v1834
      %1851 = vst [vmem:[#allocation4 + $0x580] sm:$0xff] %v1835
      %1852 = vst [vmem:[#allocation4 + $0x600] sm:$0xff] %v1836
      %1853 = vst [vmem:[#allocation4 + $0x680] sm:$0xff] %v1837
      %1854 = vst [vmem:[#allocation4 + $0x700] sm:$0xff] %v1838
      %1855 = vst [vmem:[#allocation4 + $0x780] sm:$0xff] %v1839
      %v1856 = vld [vmem:[%s307] sm:$0xff]
      %v1857 = vld [vmem:[%s307 + $0x8] sm:$0xff]
      %v1858 = vld [vmem:[%s307 + $0x10] sm:$0xff]
      %v1859 = vld [vmem:[%s307 + $0x18] sm:$0xff]
      %v1860 = vld [vmem:[%s307 + $0x28] sm:$0xff]
      %v1861 = vld [vmem:[%s307 + $0x30] sm:$0xff]
      %v1862 = vld [vmem:[%s307 + $0x38] sm:$0xff]
      %v1863 = vld [vmem:[%s307 + $0x40] sm:$0xff]
      %v1864 = vld [vmem:[%s307 + $0x50] sm:$0xff]
      %v1865 = vld [vmem:[%s307 + $0x58] sm:$0xff]
      %v1866 = vld [vmem:[%s307 + $0x60] sm:$0xff]
      %v1867 = vld [vmem:[%s307 + $0x68] sm:$0xff]
      %v1868 = vld [vmem:[%s307 + $0x78] sm:$0xff]
      %v1869 = vld [vmem:[%s307 + $0x80] sm:$0xff]
      %v1870 = vld [vmem:[%s307 + $0x88] sm:$0xff]
      %v1871 = vld [vmem:[%s307 + $0x90] sm:$0xff]
      %1872 = vst [vmem:[#allocation4 + $0x8] sm:$0xff] %v1856
      %1873 = vst [vmem:[#allocation4 + $0x88] sm:$0xff] %v1857
      %1874 = vst [vmem:[#allocation4 + $0x108] sm:$0xff] %v1858
      %1875 = vst [vmem:[#allocation4 + $0x188] sm:$0xff] %v1859
      %1876 = vst [vmem:[#allocation4 + $0x208] sm:$0xff] %v1860
      %1877 = vst [vmem:[#allocation4 + $0x288] sm:$0xff] %v1861
      %1878 = vst [vmem:[#allocation4 + $0x308] sm:$0xff] %v1862
      %1879 = vst [vmem:[#allocation4 + $0x388] sm:$0xff] %v1863
      %1880 = vst [vmem:[#allocation4 + $0x408] sm:$0xff] %v1864
      %1881 = vst [vmem:[#allocation4 + $0x488] sm:$0xff] %v1865
      %1882 = vst [vmem:[#allocation4 + $0x508] sm:$0xff] %v1866
      %1883 = vst [vmem:[#allocation4 + $0x588] sm:$0xff] %v1867
      %1884 = vst [vmem:[#allocation4 + $0x608] sm:$0xff] %v1868
      %1885 = vst [vmem:[#allocation4 + $0x688] sm:$0xff] %v1869
      %1886 = vst [vmem:[#allocation4 + $0x708] sm:$0xff] %v1870
      %1887 = vst [vmem:[#allocation4 + $0x788] sm:$0xff] %v1871
      %s1888 = scalar_lea.vmem [#allocation2], 608
      %v1889 = vld [vmem:[%s1888] sm:$0xff]
      %v1890 = vld [vmem:[%s1888 + $0x8] sm:$0xff]
      %v1891 = vld [vmem:[%s1888 + $0x10] sm:$0xff]
      %v1892 = vld [vmem:[%s1888 + $0x18] sm:$0xff]
      %v1893 = vld [vmem:[%s1888 + $0x28] sm:$0xff]
      %v1894 = vld [vmem:[%s1888 + $0x30] sm:$0xff]
      %v1895 = vld [vmem:[%s1888 + $0x38] sm:$0xff]
      %v1896 = vld [vmem:[%s1888 + $0x40] sm:$0xff]
      %v1897 = vld [vmem:[%s1888 + $0x50] sm:$0xff]
      %v1898 = vld [vmem:[%s1888 + $0x58] sm:$0xff]
      %v1899 = vld [vmem:[%s1888 + $0x60] sm:$0xff]
      %v1900 = vld [vmem:[%s1888 + $0x68] sm:$0xff]
      %v1901 = vld [vmem:[%s1888 + $0x78] sm:$0xff]
      %v1902 = vld [vmem:[%s1888 + $0x80] sm:$0xff]
      %v1903 = vld [vmem:[%s1888 + $0x88] sm:$0xff]
      %v1904 = vld [vmem:[%s1888 + $0x90] sm:$0xff]
      %1905 = vst [vmem:[#allocation4 + $0x10] sm:$0xff] %v1889
      %1906 = vst [vmem:[#allocation4 + $0x90] sm:$0xff] %v1890
      %1907 = vst [vmem:[#allocation4 + $0x110] sm:$0xff] %v1891
      %1908 = vst [vmem:[#allocation4 + $0x190] sm:$0xff] %v1892
      %1909 = vst [vmem:[#allocation4 + $0x210] sm:$0xff] %v1893
      %1910 = vst [vmem:[#allocation4 + $0x290] sm:$0xff] %v1894
      %1911 = vst [vmem:[#allocation4 + $0x310] sm:$0xff] %v1895
      %1912 = vst [vmem:[#allocation4 + $0x390] sm:$0xff] %v1896
      %1913 = vst [vmem:[#allocation4 + $0x410] sm:$0xff] %v1897
      %1914 = vst [vmem:[#allocation4 + $0x490] sm:$0xff] %v1898
      %1915 = vst [vmem:[#allocation4 + $0x510] sm:$0xff] %v1899
      %1916 = vst [vmem:[#allocation4 + $0x590] sm:$0xff] %v1900
      %1917 = vst [vmem:[#allocation4 + $0x610] sm:$0xff] %v1901
      %1918 = vst [vmem:[#allocation4 + $0x690] sm:$0xff] %v1902
      %1919 = vst [vmem:[#allocation4 + $0x710] sm:$0xff] %v1903
      %1920 = vst [vmem:[#allocation4 + $0x790] sm:$0xff] %v1904
      %s1921 = scalar_lea.vmem [#allocation2], 408
      %v1922 = vld [vmem:[%s1921] sm:$0xff]
      %v1923 = vld [vmem:[%s1921 + $0x8] sm:$0xff]
      %v1924 = vld [vmem:[%s1921 + $0x10] sm:$0xff]
      %v1925 = vld [vmem:[%s1921 + $0x18] sm:$0xff]
      %v1926 = vld [vmem:[%s1921 + $0x28] sm:$0xff]
      %v1927 = vld [vmem:[%s1921 + $0x30] sm:$0xff]
      %v1928 = vld [vmem:[%s1921 + $0x38] sm:$0xff]
      %v1929 = vld [vmem:[%s1921 + $0x40] sm:$0xff]
      %v1930 = vld [vmem:[%s1921 + $0x50] sm:$0xff]
      %v1931 = vld [vmem:[%s1921 + $0x58] sm:$0xff]
      %v1932 = vld [vmem:[%s1921 + $0x60] sm:$0xff]
      %v1933 = vld [vmem:[%s1921 + $0x68] sm:$0xff]
      %v1934 = vld [vmem:[%s1921 + $0x78] sm:$0xff]
      %v1935 = vld [vmem:[%s1921 + $0x80] sm:$0xff]
      %v1936 = vld [vmem:[%s1921 + $0x88] sm:$0xff]
      %v1937 = vld [vmem:[%s1921 + $0x90] sm:$0xff]
      %1938 = vst [vmem:[#allocation4 + $0x18] sm:$0xff] %v1922
      %1939 = vst [vmem:[#allocation4 + $0x98] sm:$0xff] %v1923
      %1940 = vst [vmem:[#allocation4 + $0x118] sm:$0xff] %v1924
      %1941 = vst [vmem:[#allocation4 + $0x198] sm:$0xff] %v1925
      %1942 = vst [vmem:[#allocation4 + $0x218] sm:$0xff] %v1926
      %1943 = vst [vmem:[#allocation4 + $0x298] sm:$0xff] %v1927
      %1944 = vst [vmem:[#allocation4 + $0x318] sm:$0xff] %v1928
      %1945 = vst [vmem:[#allocation4 + $0x398] sm:$0xff] %v1929
      %1946 = vst [vmem:[#allocation4 + $0x418] sm:$0xff] %v1930
      %1947 = vst [vmem:[#allocation4 + $0x498] sm:$0xff] %v1931
      %1948 = vst [vmem:[#allocation4 + $0x518] sm:$0xff] %v1932
      %1949 = vst [vmem:[#allocation4 + $0x598] sm:$0xff] %v1933
      %1950 = vst [vmem:[#allocation4 + $0x618] sm:$0xff] %v1934
      %1951 = vst [vmem:[#allocation4 + $0x698] sm:$0xff] %v1935
      %1952 = vst [vmem:[#allocation4 + $0x718] sm:$0xff] %v1936
      %1953 = vst [vmem:[#allocation4 + $0x798] sm:$0xff] %v1937
      %v1954 = vld [vmem:[%s301] sm:$0xff]
      %v1955 = vld [vmem:[%s301 + $0x8] sm:$0xff]
      %v1956 = vld [vmem:[%s301 + $0x10] sm:$0xff]
      %v1957 = vld [vmem:[%s301 + $0x18] sm:$0xff]
      %v1958 = vld [vmem:[%s301 + $0x28] sm:$0xff]
      %v1959 = vld [vmem:[%s301 + $0x30] sm:$0xff]
      %v1960 = vld [vmem:[%s301 + $0x38] sm:$0xff]
      %v1961 = vld [vmem:[%s301 + $0x40] sm:$0xff]
      %v1962 = vld [vmem:[%s301 + $0x50] sm:$0xff]
      %v1963 = vld [vmem:[%s301 + $0x58] sm:$0xff]
      %v1964 = vld [vmem:[%s301 + $0x60] sm:$0xff]
      %v1965 = vld [vmem:[%s301 + $0x68] sm:$0xff]
      %v1966 = vld [vmem:[%s301 + $0x78] sm:$0xff]
      %v1967 = vld [vmem:[%s301 + $0x80] sm:$0xff]
      %v1968 = vld [vmem:[%s301 + $0x88] sm:$0xff]
      %v1969 = vld [vmem:[%s301 + $0x90] sm:$0xff]
      %1970 = vst [vmem:[#allocation4 + $0x20] sm:$0xff] %v1954
      %1971 = vst [vmem:[#allocation4 + $0xa0] sm:$0xff] %v1955
      %1972 = vst [vmem:[#allocation4 + $0x120] sm:$0xff] %v1956
      %1973 = vst [vmem:[#allocation4 + $0x1a0] sm:$0xff] %v1957
      %1974 = vst [vmem:[#allocation4 + $0x220] sm:$0xff] %v1958
      %1975 = vst [vmem:[#allocation4 + $0x2a0] sm:$0xff] %v1959
      %1976 = vst [vmem:[#allocation4 + $0x320] sm:$0xff] %v1960
      %1977 = vst [vmem:[#allocation4 + $0x3a0] sm:$0xff] %v1961
      %1978 = vst [vmem:[#allocation4 + $0x420] sm:$0xff] %v1962
      %1979 = vst [vmem:[#allocation4 + $0x4a0] sm:$0xff] %v1963
      %1980 = vst [vmem:[#allocation4 + $0x520] sm:$0xff] %v1964
      %1981 = vst [vmem:[#allocation4 + $0x5a0] sm:$0xff] %v1965
      %1982 = vst [vmem:[#allocation4 + $0x620] sm:$0xff] %v1966
      %1983 = vst [vmem:[#allocation4 + $0x6a0] sm:$0xff] %v1967
      %1984 = vst [vmem:[#allocation4 + $0x720] sm:$0xff] %v1968
      %1985 = vst [vmem:[#allocation4 + $0x7a0] sm:$0xff] %v1969
      %v1986 = vld [vmem:[#allocation2] sm:$0xff]
      %v1987 = vld [vmem:[#allocation2 + $0x8] sm:$0xff]
      %v1988 = vld [vmem:[#allocation2 + $0x10] sm:$0xff]
      %v1989 = vld [vmem:[#allocation2 + $0x18] sm:$0xff]
      %v1990 = vld [vmem:[#allocation2 + $0x28] sm:$0xff]
      %v1991 = vld [vmem:[#allocation2 + $0x30] sm:$0xff]
      %v1992 = vld [vmem:[#allocation2 + $0x38] sm:$0xff]
      %v1993 = vld [vmem:[#allocation2 + $0x40] sm:$0xff]
      %v1994 = vld [vmem:[#allocation2 + $0x50] sm:$0xff]
      %v1995 = vld [vmem:[#allocation2 + $0x58] sm:$0xff]
      %v1996 = vld [vmem:[#allocation2 + $0x60] sm:$0xff]
      %v1997 = vld [vmem:[#allocation2 + $0x68] sm:$0xff]
      %v1998 = vld [vmem:[#allocation2 + $0x78] sm:$0xff]
      %v1999 = vld [vmem:[#allocation2 + $0x80] sm:$0xff]
      %v2000 = vld [vmem:[#allocation2 + $0x88] sm:$0xff]
      %v2001 = vld [vmem:[#allocation2 + $0x90] sm:$0xff]
      %2002 = vst [vmem:[#allocation4 + $0x28] sm:$0xff] %v1986
      %2003 = vst [vmem:[#allocation4 + $0xa8] sm:$0xff] %v1987
      %2004 = vst [vmem:[#allocation4 + $0x128] sm:$0xff] %v1988
      %2005 = vst [vmem:[#allocation4 + $0x1a8] sm:$0xff] %v1989
      %2006 = vst [vmem:[#allocation4 + $0x228] sm:$0xff] %v1990
      %2007 = vst [vmem:[#allocation4 + $0x2a8] sm:$0xff] %v1991
      %2008 = vst [vmem:[#allocation4 + $0x328] sm:$0xff] %v1992
      %2009 = vst [vmem:[#allocation4 + $0x3a8] sm:$0xff] %v1993
      %2010 = vst [vmem:[#allocation4 + $0x428] sm:$0xff] %v1994
      %2011 = vst [vmem:[#allocation4 + $0x4a8] sm:$0xff] %v1995
      %2012 = vst [vmem:[#allocation4 + $0x528] sm:$0xff] %v1996
      %2013 = vst [vmem:[#allocation4 + $0x5a8] sm:$0xff] %v1997
      %2014 = vst [vmem:[#allocation4 + $0x628] sm:$0xff] %v1998
      %2015 = vst [vmem:[#allocation4 + $0x6a8] sm:$0xff] %v1999
      %2016 = vst [vmem:[#allocation4 + $0x728] sm:$0xff] %v2000
      %2017 = vst [vmem:[#allocation4 + $0x7a8] sm:$0xff] %v2001
      %v2018 = vld [vmem:[%s1773] sm:$0xff]
      %v2019 = vld [vmem:[%s1773 + $0x8] sm:$0xff]
      %v2020 = vld [vmem:[%s1773 + $0x10] sm:$0xff]
      %v2021 = vld [vmem:[%s1773 + $0x18] sm:$0xff]
      %v2022 = vld [vmem:[%s1773 + $0x28] sm:$0xff]
      %v2023 = vld [vmem:[%s1773 + $0x30] sm:$0xff]
      %v2024 = vld [vmem:[%s1773 + $0x38] sm:$0xff]
      %v2025 = vld [vmem:[%s1773 + $0x40] sm:$0xff]
      %v2026 = vld [vmem:[%s1773 + $0x50] sm:$0xff]
      %v2027 = vld [vmem:[%s1773 + $0x58] sm:$0xff]
      %v2028 = vld [vmem:[%s1773 + $0x60] sm:$0xff]
      %v2029 = vld [vmem:[%s1773 + $0x68] sm:$0xff]
      %v2030 = vld [vmem:[%s1773 + $0x78] sm:$0xff]
      %v2031 = vld [vmem:[%s1773 + $0x80] sm:$0xff]
      %v2032 = vld [vmem:[%s1773 + $0x88] sm:$0xff]
      %v2033 = vld [vmem:[%s1773 + $0x90] sm:$0xff]
      %2034 = vst [vmem:[#allocation4 + $0x30] sm:$0xff] %v2018
      %2035 = vst [vmem:[#allocation4 + $0xb0] sm:$0xff] %v2019
      %2036 = vst [vmem:[#allocation4 + $0x130] sm:$0xff] %v2020
      %2037 = vst [vmem:[#allocation4 + $0x1b0] sm:$0xff] %v2021
      %2038 = vst [vmem:[#allocation4 + $0x230] sm:$0xff] %v2022
      %2039 = vst [vmem:[#allocation4 + $0x2b0] sm:$0xff] %v2023
      %2040 = vst [vmem:[#allocation4 + $0x330] sm:$0xff] %v2024
      %2041 = vst [vmem:[#allocation4 + $0x3b0] sm:$0xff] %v2025
      %2042 = vst [vmem:[#allocation4 + $0x430] sm:$0xff] %v2026
      %2043 = vst [vmem:[#allocation4 + $0x4b0] sm:$0xff] %v2027
      %2044 = vst [vmem:[#allocation4 + $0x530] sm:$0xff] %v2028
      %2045 = vst [vmem:[#allocation4 + $0x5b0] sm:$0xff] %v2029
      %2046 = vst [vmem:[#allocation4 + $0x630] sm:$0xff] %v2030
      %2047 = vst [vmem:[#allocation4 + $0x6b0] sm:$0xff] %v2031
      %2048 = vst [vmem:[#allocation4 + $0x730] sm:$0xff] %v2032
      %2049 = vst [vmem:[#allocation4 + $0x7b0] sm:$0xff] %v2033
      %s2050 = scalar_lea.vmem [#allocation2], 8
      %v2051 = vld [vmem:[%s2050] sm:$0xff]
      %v2052 = vld [vmem:[%s2050 + $0x8] sm:$0xff]
      %v2053 = vld [vmem:[%s2050 + $0x10] sm:$0xff]
      %v2054 = vld [vmem:[%s2050 + $0x18] sm:$0xff]
      %v2055 = vld [vmem:[%s2050 + $0x28] sm:$0xff]
      %v2056 = vld [vmem:[%s2050 + $0x30] sm:$0xff]
      %v2057 = vld [vmem:[%s2050 + $0x38] sm:$0xff]
      %v2058 = vld [vmem:[%s2050 + $0x40] sm:$0xff]
      %v2059 = vld [vmem:[%s2050 + $0x50] sm:$0xff]
      %v2060 = vld [vmem:[%s2050 + $0x58] sm:$0xff]
      %v2061 = vld [vmem:[%s2050 + $0x60] sm:$0xff]
      %v2062 = vld [vmem:[%s2050 + $0x68] sm:$0xff]
      %v2063 = vld [vmem:[%s2050 + $0x78] sm:$0xff]
      %v2064 = vld [vmem:[%s2050 + $0x80] sm:$0xff]
      %v2065 = vld [vmem:[%s2050 + $0x88] sm:$0xff]
      %v2066 = vld [vmem:[%s2050 + $0x90] sm:$0xff]
      %2067 = vst [vmem:[#allocation4 + $0x38] sm:$0xff] %v2051
      %2068 = vst [vmem:[#allocation4 + $0xb8] sm:$0xff] %v2052
      %2069 = vst [vmem:[#allocation4 + $0x138] sm:$0xff] %v2053
      %2070 = vst [vmem:[#allocation4 + $0x1b8] sm:$0xff] %v2054
      %2071 = vst [vmem:[#allocation4 + $0x238] sm:$0xff] %v2055
      %2072 = vst [vmem:[#allocation4 + $0x2b8] sm:$0xff] %v2056
      %2073 = vst [vmem:[#allocation4 + $0x338] sm:$0xff] %v2057
      %2074 = vst [vmem:[#allocation4 + $0x3b8] sm:$0xff] %v2058
      %2075 = vst [vmem:[#allocation4 + $0x438] sm:$0xff] %v2059
      %2076 = vst [vmem:[#allocation4 + $0x4b8] sm:$0xff] %v2060
      %2077 = vst [vmem:[#allocation4 + $0x538] sm:$0xff] %v2061
      %2078 = vst [vmem:[#allocation4 + $0x5b8] sm:$0xff] %v2062
      %2079 = vst [vmem:[#allocation4 + $0x638] sm:$0xff] %v2063
      %2080 = vst [vmem:[#allocation4 + $0x6b8] sm:$0xff] %v2064
      %2081 = vst [vmem:[#allocation4 + $0x738] sm:$0xff] %v2065
      %2082 = vst [vmem:[#allocation4 + $0x7b8] sm:$0xff] %v2066
      %s2083 = scalar_lea.vmem [#allocation2], 640
      %v2084 = vld [vmem:[%s2083] sm:$0xff]
      %v2085 = vld [vmem:[%s2083 + $0x8] sm:$0xff]
      %v2086 = vld [vmem:[%s2083 + $0x10] sm:$0xff]
      %v2087 = vld [vmem:[%s2083 + $0x18] sm:$0xff]
      %v2088 = vld [vmem:[%s2083 + $0x28] sm:$0xff]
      %v2089 = vld [vmem:[%s2083 + $0x30] sm:$0xff]
      %v2090 = vld [vmem:[%s2083 + $0x38] sm:$0xff]
      %v2091 = vld [vmem:[%s2083 + $0x40] sm:$0xff]
      %v2092 = vld [vmem:[%s2083 + $0x50] sm:$0xff]
      %v2093 = vld [vmem:[%s2083 + $0x58] sm:$0xff]
      %v2094 = vld [vmem:[%s2083 + $0x60] sm:$0xff]
      %v2095 = vld [vmem:[%s2083 + $0x68] sm:$0xff]
      %v2096 = vld [vmem:[%s2083 + $0x78] sm:$0xff]
      %v2097 = vld [vmem:[%s2083 + $0x80] sm:$0xff]
      %v2098 = vld [vmem:[%s2083 + $0x88] sm:$0xff]
      %v2099 = vld [vmem:[%s2083 + $0x90] sm:$0xff]
      %2100 = vst [vmem:[#allocation4 + $0x40] sm:$0xff] %v2084
      %2101 = vst [vmem:[#allocation4 + $0xc0] sm:$0xff] %v2085
      %2102 = vst [vmem:[#allocation4 + $0x140] sm:$0xff] %v2086
      %2103 = vst [vmem:[#allocation4 + $0x1c0] sm:$0xff] %v2087
      %2104 = vst [vmem:[#allocation4 + $0x240] sm:$0xff] %v2088
      %2105 = vst [vmem:[#allocation4 + $0x2c0] sm:$0xff] %v2089
      %2106 = vst [vmem:[#allocation4 + $0x340] sm:$0xff] %v2090
      %2107 = vst [vmem:[#allocation4 + $0x3c0] sm:$0xff] %v2091
      %2108 = vst [vmem:[#allocation4 + $0x440] sm:$0xff] %v2092
      %2109 = vst [vmem:[#allocation4 + $0x4c0] sm:$0xff] %v2093
      %2110 = vst [vmem:[#allocation4 + $0x540] sm:$0xff] %v2094
      %2111 = vst [vmem:[#allocation4 + $0x5c0] sm:$0xff] %v2095
      %2112 = vst [vmem:[#allocation4 + $0x640] sm:$0xff] %v2096
      %2113 = vst [vmem:[#allocation4 + $0x6c0] sm:$0xff] %v2097
      %2114 = vst [vmem:[#allocation4 + $0x740] sm:$0xff] %v2098
      %2115 = vst [vmem:[#allocation4 + $0x7c0] sm:$0xff] %v2099
      %v2116 = vld [vmem:[%s1790] sm:$0xff]
      %v2117 = vld [vmem:[%s1790 + $0x8] sm:$0xff]
      %v2118 = vld [vmem:[%s1790 + $0x10] sm:$0xff]
      %v2119 = vld [vmem:[%s1790 + $0x18] sm:$0xff]
      %v2120 = vld [vmem:[%s1790 + $0x28] sm:$0xff]
      %v2121 = vld [vmem:[%s1790 + $0x30] sm:$0xff]
      %v2122 = vld [vmem:[%s1790 + $0x38] sm:$0xff]
      %v2123 = vld [vmem:[%s1790 + $0x40] sm:$0xff]
      %v2124 = vld [vmem:[%s1790 + $0x50] sm:$0xff]
      %v2125 = vld [vmem:[%s1790 + $0x58] sm:$0xff]
      %v2126 = vld [vmem:[%s1790 + $0x60] sm:$0xff]
      %v2127 = vld [vmem:[%s1790 + $0x68] sm:$0xff]
      %v2128 = vld [vmem:[%s1790 + $0x78] sm:$0xff]
      %v2129 = vld [vmem:[%s1790 + $0x80] sm:$0xff]
      %v2130 = vld [vmem:[%s1790 + $0x88] sm:$0xff]
      %v2131 = vld [vmem:[%s1790 + $0x90] sm:$0xff]
      %2132 = vst [vmem:[#allocation4 + $0x48] sm:$0xff] %v2116
      %2133 = vst [vmem:[#allocation4 + $0xc8] sm:$0xff] %v2117
      %2134 = vst [vmem:[#allocation4 + $0x148] sm:$0xff] %v2118
      %2135 = vst [vmem:[#allocation4 + $0x1c8] sm:$0xff] %v2119
      %2136 = vst [vmem:[#allocation4 + $0x248] sm:$0xff] %v2120
      %2137 = vst [vmem:[#allocation4 + $0x2c8] sm:$0xff] %v2121
      %2138 = vst [vmem:[#allocation4 + $0x348] sm:$0xff] %v2122
      %2139 = vst [vmem:[#allocation4 + $0x3c8] sm:$0xff] %v2123
      %2140 = vst [vmem:[#allocation4 + $0x448] sm:$0xff] %v2124
      %2141 = vst [vmem:[#allocation4 + $0x4c8] sm:$0xff] %v2125
      %2142 = vst [vmem:[#allocation4 + $0x548] sm:$0xff] %v2126
      %2143 = vst [vmem:[#allocation4 + $0x5c8] sm:$0xff] %v2127
      %2144 = vst [vmem:[#allocation4 + $0x648] sm:$0xff] %v2128
      %2145 = vst [vmem:[#allocation4 + $0x6c8] sm:$0xff] %v2129
      %2146 = vst [vmem:[#allocation4 + $0x748] sm:$0xff] %v2130
      %2147 = vst [vmem:[#allocation4 + $0x7c8] sm:$0xff] %v2131
      %v2148 = vld [vmem:[%s1807] sm:$0xff]
      %v2149 = vld [vmem:[%s1807 + $0x8] sm:$0xff]
      %v2150 = vld [vmem:[%s1807 + $0x10] sm:$0xff]
      %v2151 = vld [vmem:[%s1807 + $0x18] sm:$0xff]
      %v2152 = vld [vmem:[%s1807 + $0x28] sm:$0xff]
      %v2153 = vld [vmem:[%s1807 + $0x30] sm:$0xff]
      %v2154 = vld [vmem:[%s1807 + $0x38] sm:$0xff]
      %v2155 = vld [vmem:[%s1807 + $0x40] sm:$0xff]
      %v2156 = vld [vmem:[%s1807 + $0x50] sm:$0xff]
      %v2157 = vld [vmem:[%s1807 + $0x58] sm:$0xff]
      %v2158 = vld [vmem:[%s1807 + $0x60] sm:$0xff]
      %v2159 = vld [vmem:[%s1807 + $0x68] sm:$0xff]
      %v2160 = vld [vmem:[%s1807 + $0x78] sm:$0xff]
      %v2161 = vld [vmem:[%s1807 + $0x80] sm:$0xff]
      %v2162 = vld [vmem:[%s1807 + $0x88] sm:$0xff]
      %v2163 = vld [vmem:[%s1807 + $0x90] sm:$0xff]
      %2164 = vst [vmem:[#allocation4 + $0x50] sm:$0xff] %v2148
      %2165 = vst [vmem:[#allocation4 + $0xd0] sm:$0xff] %v2149
      %2166 = vst [vmem:[#allocation4 + $0x150] sm:$0xff] %v2150
      %2167 = vst [vmem:[#allocation4 + $0x1d0] sm:$0xff] %v2151
      %2168 = vst [vmem:[#allocation4 + $0x250] sm:$0xff] %v2152
      %2169 = vst [vmem:[#allocation4 + $0x2d0] sm:$0xff] %v2153
      %2170 = vst [vmem:[#allocation4 + $0x350] sm:$0xff] %v2154
      %2171 = vst [vmem:[#allocation4 + $0x3d0] sm:$0xff] %v2155
      %2172 = vst [vmem:[#allocation4 + $0x450] sm:$0xff] %v2156
      %2173 = vst [vmem:[#allocation4 + $0x4d0] sm:$0xff] %v2157
      %2174 = vst [vmem:[#allocation4 + $0x550] sm:$0xff] %v2158
      %2175 = vst [vmem:[#allocation4 + $0x5d0] sm:$0xff] %v2159
      %2176 = vst [vmem:[#allocation4 + $0x650] sm:$0xff] %v2160
      %2177 = vst [vmem:[#allocation4 + $0x6d0] sm:$0xff] %v2161
      %2178 = vst [vmem:[#allocation4 + $0x750] sm:$0xff] %v2162
      %2179 = vst [vmem:[#allocation4 + $0x7d0] sm:$0xff] %v2163
      %s2180 = scalar_lea.vmem [#allocation2], 448
      %v2181 = vld [vmem:[%s2180] sm:$0xff]
      %v2182 = vld [vmem:[%s2180 + $0x8] sm:$0xff]
      %v2183 = vld [vmem:[%s2180 + $0x10] sm:$0xff]
      %v2184 = vld [vmem:[%s2180 + $0x18] sm:$0xff]
      %v2185 = vld [vmem:[%s2180 + $0x28] sm:$0xff]
      %v2186 = vld [vmem:[%s2180 + $0x30] sm:$0xff]
      %v2187 = vld [vmem:[%s2180 + $0x38] sm:$0xff]
      %v2188 = vld [vmem:[%s2180 + $0x40] sm:$0xff]
      %v2189 = vld [vmem:[%s2180 + $0x50] sm:$0xff]
      %v2190 = vld [vmem:[%s2180 + $0x58] sm:$0xff]
      %v2191 = vld [vmem:[%s2180 + $0x60] sm:$0xff]
      %v2192 = vld [vmem:[%s2180 + $0x68] sm:$0xff]
      %v2193 = vld [vmem:[%s2180 + $0x78] sm:$0xff]
      %v2194 = vld [vmem:[%s2180 + $0x80] sm:$0xff]
      %v2195 = vld [vmem:[%s2180 + $0x88] sm:$0xff]
      %v2196 = vld [vmem:[%s2180 + $0x90] sm:$0xff]
      %2197 = vst [vmem:[#allocation4 + $0x58] sm:$0xff] %v2181
      %2198 = vst [vmem:[#allocation4 + $0xd8] sm:$0xff] %v2182
      %2199 = vst [vmem:[#allocation4 + $0x158] sm:$0xff] %v2183
      %2200 = vst [vmem:[#allocation4 + $0x1d8] sm:$0xff] %v2184
      %2201 = vst [vmem:[#allocation4 + $0x258] sm:$0xff] %v2185
      %2202 = vst [vmem:[#allocation4 + $0x2d8] sm:$0xff] %v2186
      %2203 = vst [vmem:[#allocation4 + $0x358] sm:$0xff] %v2187
      %2204 = vst [vmem:[#allocation4 + $0x3d8] sm:$0xff] %v2188
      %2205 = vst [vmem:[#allocation4 + $0x458] sm:$0xff] %v2189
      %2206 = vst [vmem:[#allocation4 + $0x4d8] sm:$0xff] %v2190
      %2207 = vst [vmem:[#allocation4 + $0x558] sm:$0xff] %v2191
      %2208 = vst [vmem:[#allocation4 + $0x5d8] sm:$0xff] %v2192
      %2209 = vst [vmem:[#allocation4 + $0x658] sm:$0xff] %v2193
      %2210 = vst [vmem:[#allocation4 + $0x6d8] sm:$0xff] %v2194
      %2211 = vst [vmem:[#allocation4 + $0x758] sm:$0xff] %v2195
      %2212 = vst [vmem:[#allocation4 + $0x7d8] sm:$0xff] %v2196
      %s2213 = scalar_lea.vmem [#allocation2], 240
      %v2214 = vld [vmem:[%s2213] sm:$0xff]
      %v2215 = vld [vmem:[%s2213 + $0x8] sm:$0xff]
      %v2216 = vld [vmem:[%s2213 + $0x10] sm:$0xff]
      %v2217 = vld [vmem:[%s2213 + $0x18] sm:$0xff]
      %v2218 = vld [vmem:[%s2213 + $0x28] sm:$0xff]
      %v2219 = vld [vmem:[%s2213 + $0x30] sm:$0xff]
      %v2220 = vld [vmem:[%s2213 + $0x38] sm:$0xff]
      %v2221 = vld [vmem:[%s2213 + $0x40] sm:$0xff]
      %v2222 = vld [vmem:[%s2213 + $0x50] sm:$0xff]
      %v2223 = vld [vmem:[%s2213 + $0x58] sm:$0xff]
      %v2224 = vld [vmem:[%s2213 + $0x60] sm:$0xff]
      %v2225 = vld [vmem:[%s2213 + $0x68] sm:$0xff]
      %v2226 = vld [vmem:[%s2213 + $0x78] sm:$0xff]
      %v2227 = vld [vmem:[%s2213 + $0x80] sm:$0xff]
      %v2228 = vld [vmem:[%s2213 + $0x88] sm:$0xff]
      %v2229 = vld [vmem:[%s2213 + $0x90] sm:$0xff]
      %2230 = vst [vmem:[#allocation4 + $0x60] sm:$0xff] %v2214
      %2231 = vst [vmem:[#allocation4 + $0xe0] sm:$0xff] %v2215
      %2232 = vst [vmem:[#allocation4 + $0x160] sm:$0xff] %v2216
      %2233 = vst [vmem:[#allocation4 + $0x1e0] sm:$0xff] %v2217
      %2234 = vst [vmem:[#allocation4 + $0x260] sm:$0xff] %v2218
      %2235 = vst [vmem:[#allocation4 + $0x2e0] sm:$0xff] %v2219
      %2236 = vst [vmem:[#allocation4 + $0x360] sm:$0xff] %v2220
      %2237 = vst [vmem:[#allocation4 + $0x3e0] sm:$0xff] %v2221
      %2238 = vst [vmem:[#allocation4 + $0x460] sm:$0xff] %v2222
      %2239 = vst [vmem:[#allocation4 + $0x4e0] sm:$0xff] %v2223
      %2240 = vst [vmem:[#allocation4 + $0x560] sm:$0xff] %v2224
      %2241 = vst [vmem:[#allocation4 + $0x5e0] sm:$0xff] %v2225
      %2242 = vst [vmem:[#allocation4 + $0x660] sm:$0xff] %v2226
      %2243 = vst [vmem:[#allocation4 + $0x6e0] sm:$0xff] %v2227
      %2244 = vst [vmem:[#allocation4 + $0x760] sm:$0xff] %v2228
      %2245 = vst [vmem:[#allocation4 + $0x7e0] sm:$0xff] %v2229
      %s2246 = scalar_lea.vmem [#allocation2], 40
      %v2247 = vld [vmem:[%s2246] sm:$0xff]
      %v2248 = vld [vmem:[%s2246 + $0x8] sm:$0xff]
      %v2249 = vld [vmem:[%s2246 + $0x10] sm:$0xff]
      %v2250 = vld [vmem:[%s2246 + $0x18] sm:$0xff]
      %v2251 = vld [vmem:[%s2246 + $0x28] sm:$0xff]
      %v2252 = vld [vmem:[%s2246 + $0x30] sm:$0xff]
      %v2253 = vld [vmem:[%s2246 + $0x38] sm:$0xff]
      %v2254 = vld [vmem:[%s2246 + $0x40] sm:$0xff]
      %v2255 = vld [vmem:[%s2246 + $0x50] sm:$0xff]
      %v2256 = vld [vmem:[%s2246 + $0x58] sm:$0xff]
      %v2257 = vld [vmem:[%s2246 + $0x60] sm:$0xff]
      %v2258 = vld [vmem:[%s2246 + $0x68] sm:$0xff]
      %v2259 = vld [vmem:[%s2246 + $0x78] sm:$0xff]
      %v2260 = vld [vmem:[%s2246 + $0x80] sm:$0xff]
      %v2261 = vld [vmem:[%s2246 + $0x88] sm:$0xff]
      %v2262 = vld [vmem:[%s2246 + $0x90] sm:$0xff]
      %2263 = vst [vmem:[#allocation4 + $0x68] sm:$0xff] %v2247
      %2264 = vst [vmem:[#allocation4 + $0xe8] sm:$0xff] %v2248
      %2265 = vst [vmem:[#allocation4 + $0x168] sm:$0xff] %v2249
      %2266 = vst [vmem:[#allocation4 + $0x1e8] sm:$0xff] %v2250
      %2267 = vst [vmem:[#allocation4 + $0x268] sm:$0xff] %v2251
      %2268 = vst [vmem:[#allocation4 + $0x2e8] sm:$0xff] %v2252
      %2269 = vst [vmem:[#allocation4 + $0x368] sm:$0xff] %v2253
      %2270 = vst [vmem:[#allocation4 + $0x3e8] sm:$0xff] %v2254
      %2271 = vst [vmem:[#allocation4 + $0x468] sm:$0xff] %v2255
      %2272 = vst [vmem:[#allocation4 + $0x4e8] sm:$0xff] %v2256
      %2273 = vst [vmem:[#allocation4 + $0x568] sm:$0xff] %v2257
      %2274 = vst [vmem:[#allocation4 + $0x5e8] sm:$0xff] %v2258
      %2275 = vst [vmem:[#allocation4 + $0x668] sm:$0xff] %v2259
      %2276 = vst [vmem:[#allocation4 + $0x6e8] sm:$0xff] %v2260
      %2277 = vst [vmem:[#allocation4 + $0x768] sm:$0xff] %v2261
      %2278 = vst [vmem:[#allocation4 + $0x7e8] sm:$0xff] %v2262
      %s2279 = scalar_lea.vmem [#allocation2], 248
      %v2280 = vld [vmem:[%s2279] sm:$0xff]
      %v2281 = vld [vmem:[%s2279 + $0x8] sm:$0xff]
      %v2282 = vld [vmem:[%s2279 + $0x10] sm:$0xff]
      %v2283 = vld [vmem:[%s2279 + $0x18] sm:$0xff]
      %v2284 = vld [vmem:[%s2279 + $0x28] sm:$0xff]
      %v2285 = vld [vmem:[%s2279 + $0x30] sm:$0xff]
      %v2286 = vld [vmem:[%s2279 + $0x38] sm:$0xff]
      %v2287 = vld [vmem:[%s2279 + $0x40] sm:$0xff]
      %v2288 = vld [vmem:[%s2279 + $0x50] sm:$0xff]
      %v2289 = vld [vmem:[%s2279 + $0x58] sm:$0xff]
      %v2290 = vld [vmem:[%s2279 + $0x60] sm:$0xff]
      %v2291 = vld [vmem:[%s2279 + $0x68] sm:$0xff]
      %v2292 = vld [vmem:[%s2279 + $0x78] sm:$0xff]
      %v2293 = vld [vmem:[%s2279 + $0x80] sm:$0xff]
      %v2294 = vld [vmem:[%s2279 + $0x88] sm:$0xff]
      %v2295 = vld [vmem:[%s2279 + $0x90] sm:$0xff]
      %2296 = vst [vmem:[#allocation4 + $0x70] sm:$0xff] %v2280
      %2297 = vst [vmem:[#allocation4 + $0xf0] sm:$0xff] %v2281
      %2298 = vst [vmem:[#allocation4 + $0x170] sm:$0xff] %v2282
      %2299 = vst [vmem:[#allocation4 + $0x1f0] sm:$0xff] %v2283
      %2300 = vst [vmem:[#allocation4 + $0x270] sm:$0xff] %v2284
      %2301 = vst [vmem:[#allocation4 + $0x2f0] sm:$0xff] %v2285
      %2302 = vst [vmem:[#allocation4 + $0x370] sm:$0xff] %v2286
      %2303 = vst [vmem:[#allocation4 + $0x3f0] sm:$0xff] %v2287
      %2304 = vst [vmem:[#allocation4 + $0x470] sm:$0xff] %v2288
      %2305 = vst [vmem:[#allocation4 + $0x4f0] sm:$0xff] %v2289
      %2306 = vst [vmem:[#allocation4 + $0x570] sm:$0xff] %v2290
      %2307 = vst [vmem:[#allocation4 + $0x5f0] sm:$0xff] %v2291
      %2308 = vst [vmem:[#allocation4 + $0x670] sm:$0xff] %v2292
      %2309 = vst [vmem:[#allocation4 + $0x6f0] sm:$0xff] %v2293
      %2310 = vst [vmem:[#allocation4 + $0x770] sm:$0xff] %v2294
      %2311 = vst [vmem:[#allocation4 + $0x7f0] sm:$0xff] %v2295
      %s2312 = scalar_lea.vmem [#allocation2], 48
      %v2313 = vld [vmem:[%s2312] sm:$0xff]
      %v2314 = vld [vmem:[%s2312 + $0x8] sm:$0xff]
      %v2315 = vld [vmem:[%s2312 + $0x10] sm:$0xff]
      %v2316 = vld [vmem:[%s2312 + $0x18] sm:$0xff]
      %v2317 = vld [vmem:[%s2312 + $0x28] sm:$0xff]
      %v2318 = vld [vmem:[%s2312 + $0x30] sm:$0xff]
      %v2319 = vld [vmem:[%s2312 + $0x38] sm:$0xff]
      %v2320 = vld [vmem:[%s2312 + $0x40] sm:$0xff]
      %v2321 = vld [vmem:[%s2312 + $0x50] sm:$0xff]
      %v2322 = vld [vmem:[%s2312 + $0x58] sm:$0xff]
      %v2323 = vld [vmem:[%s2312 + $0x60] sm:$0xff]
      %v2324 = vld [vmem:[%s2312 + $0x68] sm:$0xff]
      %v2325 = vld [vmem:[%s2312 + $0x78] sm:$0xff]
      %v2326 = vld [vmem:[%s2312 + $0x80] sm:$0xff]
      %v2327 = vld [vmem:[%s2312 + $0x88] sm:$0xff]
      %v2328 = vld [vmem:[%s2312 + $0x90] sm:$0xff]
      %2329 = vst [vmem:[#allocation4 + $0x78] sm:$0xff] %v2313
      %2330 = vst [vmem:[#allocation4 + $0xf8] sm:$0xff] %v2314
      %2331 = vst [vmem:[#allocation4 + $0x178] sm:$0xff] %v2315
      %2332 = vst [vmem:[#allocation4 + $0x1f8] sm:$0xff] %v2316
      %2333 = vst [vmem:[#allocation4 + $0x278] sm:$0xff] %v2317
      %2334 = vst [vmem:[#allocation4 + $0x2f8] sm:$0xff] %v2318
      %2335 = vst [vmem:[#allocation4 + $0x378] sm:$0xff] %v2319
      %2336 = vst [vmem:[#allocation4 + $0x3f8] sm:$0xff] %v2320
      %2337 = vst [vmem:[#allocation4 + $0x478] sm:$0xff] %v2321
      %2338 = vst [vmem:[#allocation4 + $0x4f8] sm:$0xff] %v2322
      %2339 = vst [vmem:[#allocation4 + $0x578] sm:$0xff] %v2323
      %2340 = vst [vmem:[#allocation4 + $0x5f8] sm:$0xff] %v2324
      %2341 = vst [vmem:[#allocation4 + $0x678] sm:$0xff] %v2325
      %2342 = vst [vmem:[#allocation4 + $0x6f8] sm:$0xff] %v2326
      %2343 = vst [vmem:[#allocation4 + $0x778] sm:$0xff] %v2327
      %2344 = vst [vmem:[#allocation4 + $0x7f8] sm:$0xff] %v2328
      %v2345 = vld [vmem:[#allocation4] sm:$0xff]
      %v2346 = vld [vmem:[#allocation4 + $0x8] sm:$0xff]
      %v2347 = vld [vmem:[#allocation4 + $0x10] sm:$0xff]
      %v2348 = vld [vmem:[#allocation4 + $0x18] sm:$0xff]
      %v2349 = vld [vmem:[#allocation4 + $0x20] sm:$0xff]
      %v2350 = vld [vmem:[#allocation4 + $0x28] sm:$0xff]
      %v2351 = vld [vmem:[#allocation4 + $0x30] sm:$0xff]
      %v2352 = vld [vmem:[#allocation4 + $0x38] sm:$0xff]
      %v2353 = vld [vmem:[#allocation4 + $0x40] sm:$0xff]
      %v2354 = vld [vmem:[#allocation4 + $0x48] sm:$0xff]
      %v2355 = vld [vmem:[#allocation4 + $0x50] sm:$0xff]
      %v2356 = vld [vmem:[#allocation4 + $0x58] sm:$0xff]
      %v2357 = vld [vmem:[#allocation4 + $0x60] sm:$0xff]
      %v2358 = vld [vmem:[#allocation4 + $0x68] sm:$0xff]
      %v2359 = vld [vmem:[#allocation4 + $0x70] sm:$0xff]
      %v2360 = vld [vmem:[#allocation4 + $0x78] sm:$0xff]
      %v2361 = vld [vmem:[#allocation4 + $0x80] sm:$0xff]
      %v2362 = vld [vmem:[#allocation4 + $0x88] sm:$0xff]
      %v2363 = vld [vmem:[#allocation4 + $0x90] sm:$0xff]
      %v2364 = vld [vmem:[#allocation4 + $0x98] sm:$0xff]
      %v2365 = vld [vmem:[#allocation4 + $0xa0] sm:$0xff]
      %v2366 = vld [vmem:[#allocation4 + $0xa8] sm:$0xff]
      %v2367 = vld [vmem:[#allocation4 + $0xb0] sm:$0xff]
      %v2368 = vld [vmem:[#allocation4 + $0xb8] sm:$0xff]
      %v2369 = vld [vmem:[#allocation4 + $0xc0] sm:$0xff]
      %v2370 = vld [vmem:[#allocation4 + $0xc8] sm:$0xff]
      %v2371 = vld [vmem:[#allocation4 + $0xd0] sm:$0xff]
      %v2372 = vld [vmem:[#allocation4 + $0xd8] sm:$0xff]
      %v2373 = vld [vmem:[#allocation4 + $0xe0] sm:$0xff]
      %v2374 = vld [vmem:[#allocation4 + $0xe8] sm:$0xff]
      %v2375 = vld [vmem:[#allocation4 + $0xf0] sm:$0xff]
      %v2376 = vld [vmem:[#allocation4 + $0xf8] sm:$0xff]
      %v2377 = vld [vmem:[#allocation4 + $0x100] sm:$0xff]
      %v2378 = vld [vmem:[#allocation4 + $0x108] sm:$0xff]
      %v2379 = vld [vmem:[#allocation4 + $0x110] sm:$0xff]
      %v2380 = vld [vmem:[#allocation4 + $0x118] sm:$0xff]
      %v2381 = vld [vmem:[#allocation4 + $0x120] sm:$0xff]
      %v2382 = vld [vmem:[#allocation4 + $0x128] sm:$0xff]
      %v2383 = vld [vmem:[#allocation4 + $0x130] sm:$0xff]
      %v2384 = vld [vmem:[#allocation4 + $0x138] sm:$0xff]
      %v2385 = vld [vmem:[#allocation4 + $0x140] sm:$0xff]
      %v2386 = vld [vmem:[#allocation4 + $0x148] sm:$0xff]
      %v2387 = vld [vmem:[#allocation4 + $0x150] sm:$0xff]
      %v2388 = vld [vmem:[#allocation4 + $0x158] sm:$0xff]
      %v2389 = vld [vmem:[#allocation4 + $0x160] sm:$0xff]
      %v2390 = vld [vmem:[#allocation4 + $0x168] sm:$0xff]
      %v2391 = vld [vmem:[#allocation4 + $0x170] sm:$0xff]
      %v2392 = vld [vmem:[#allocation4 + $0x178] sm:$0xff]
      %v2393 = vld [vmem:[#allocation4 + $0x180] sm:$0xff]
      %v2394 = vld [vmem:[#allocation4 + $0x188] sm:$0xff]
      %v2395 = vld [vmem:[#allocation4 + $0x190] sm:$0xff]
      %v2396 = vld [vmem:[#allocation4 + $0x198] sm:$0xff]
      %v2397 = vld [vmem:[#allocation4 + $0x1a0] sm:$0xff]
      %v2398 = vld [vmem:[#allocation4 + $0x1a8] sm:$0xff]
      %v2399 = vld [vmem:[#allocation4 + $0x1b0] sm:$0xff]
      %v2400 = vld [vmem:[#allocation4 + $0x1b8] sm:$0xff]
      %v2401 = vld [vmem:[#allocation4 + $0x1c0] sm:$0xff]
      %v2402 = vld [vmem:[#allocation4 + $0x1c8] sm:$0xff]
      %v2403 = vld [vmem:[#allocation4 + $0x1d0] sm:$0xff]
      %v2404 = vld [vmem:[#allocation4 + $0x1d8] sm:$0xff]
      %v2405 = vld [vmem:[#allocation4 + $0x1e0] sm:$0xff]
      %v2406 = vld [vmem:[#allocation4 + $0x1e8] sm:$0xff]
      %v2407 = vld [vmem:[#allocation4 + $0x1f0] sm:$0xff]
      %v2408 = vld [vmem:[#allocation4 + $0x1f8] sm:$0xff]
      %v2409 = vld [vmem:[#allocation4 + $0x200] sm:$0xff]
      %v2410 = vld [vmem:[#allocation4 + $0x208] sm:$0xff]
      %v2411 = vld [vmem:[#allocation4 + $0x210] sm:$0xff]
      %v2412 = vld [vmem:[#allocation4 + $0x218] sm:$0xff]
      %v2413 = vld [vmem:[#allocation4 + $0x220] sm:$0xff]
      %v2414 = vld [vmem:[#allocation4 + $0x228] sm:$0xff]
      %v2415 = vld [vmem:[#allocation4 + $0x230] sm:$0xff]
      %v2416 = vld [vmem:[#allocation4 + $0x238] sm:$0xff]
      %v2417 = vld [vmem:[#allocation4 + $0x240] sm:$0xff]
      %v2418 = vld [vmem:[#allocation4 + $0x248] sm:$0xff]
      %v2419 = vld [vmem:[#allocation4 + $0x250] sm:$0xff]
      %v2420 = vld [vmem:[#allocation4 + $0x258] sm:$0xff]
      %v2421 = vld [vmem:[#allocation4 + $0x260] sm:$0xff]
      %v2422 = vld [vmem:[#allocation4 + $0x268] sm:$0xff]
      %v2423 = vld [vmem:[#allocation4 + $0x270] sm:$0xff]
      %v2424 = vld [vmem:[#allocation4 + $0x278] sm:$0xff]
      %v2425 = vld [vmem:[#allocation4 + $0x280] sm:$0xff]
      %v2426 = vld [vmem:[#allocation4 + $0x288] sm:$0xff]
      %v2427 = vld [vmem:[#allocation4 + $0x290] sm:$0xff]
      %v2428 = vld [vmem:[#allocation4 + $0x298] sm:$0xff]
      %v2429 = vld [vmem:[#allocation4 + $0x2a0] sm:$0xff]
      %v2430 = vld [vmem:[#allocation4 + $0x2a8] sm:$0xff]
      %v2431 = vld [vmem:[#allocation4 + $0x2b0] sm:$0xff]
      %v2432 = vld [vmem:[#allocation4 + $0x2b8] sm:$0xff]
      %v2433 = vld [vmem:[#allocation4 + $0x2c0] sm:$0xff]
      %v2434 = vld [vmem:[#allocation4 + $0x2c8] sm:$0xff]
      %v2435 = vld [vmem:[#allocation4 + $0x2d0] sm:$0xff]
      %v2436 = vld [vmem:[#allocation4 + $0x2d8] sm:$0xff]
      %v2437 = vld [vmem:[#allocation4 + $0x2e0] sm:$0xff]
      %v2438 = vld [vmem:[#allocation4 + $0x2e8] sm:$0xff]
      %v2439 = vld [vmem:[#allocation4 + $0x2f0] sm:$0xff]
      %v2440 = vld [vmem:[#allocation4 + $0x2f8] sm:$0xff]
      %v2441 = vld [vmem:[#allocation4 + $0x300] sm:$0xff]
      %v2442 = vld [vmem:[#allocation4 + $0x308] sm:$0xff]
      %v2443 = vld [vmem:[#allocation4 + $0x310] sm:$0xff]
      %v2444 = vld [vmem:[#allocation4 + $0x318] sm:$0xff]
      %v2445 = vld [vmem:[#allocation4 + $0x320] sm:$0xff]
      %v2446 = vld [vmem:[#allocation4 + $0x328] sm:$0xff]
      %v2447 = vld [vmem:[#allocation4 + $0x330] sm:$0xff]
      %v2448 = vld [vmem:[#allocation4 + $0x338] sm:$0xff]
      %v2449 = vld [vmem:[#allocation4 + $0x340] sm:$0xff]
      %v2450 = vld [vmem:[#allocation4 + $0x348] sm:$0xff]
      %v2451 = vld [vmem:[#allocation4 + $0x350] sm:$0xff]
      %v2452 = vld [vmem:[#allocation4 + $0x358] sm:$0xff]
      %v2453 = vld [vmem:[#allocation4 + $0x360] sm:$0xff]
      %v2454 = vld [vmem:[#allocation4 + $0x368] sm:$0xff]
      %v2455 = vld [vmem:[#allocation4 + $0x370] sm:$0xff]
      %v2456 = vld [vmem:[#allocation4 + $0x378] sm:$0xff]
      %v2457 = vld [vmem:[#allocation4 + $0x380] sm:$0xff]
      %v2458 = vld [vmem:[#allocation4 + $0x388] sm:$0xff]
      %v2459 = vld [vmem:[#allocation4 + $0x390] sm:$0xff]
      %v2460 = vld [vmem:[#allocation4 + $0x398] sm:$0xff]
      %v2461 = vld [vmem:[#allocation4 + $0x3a0] sm:$0xff]
      %v2462 = vld [vmem:[#allocation4 + $0x3a8] sm:$0xff]
      %v2463 = vld [vmem:[#allocation4 + $0x3b0] sm:$0xff]
      %v2464 = vld [vmem:[#allocation4 + $0x3b8] sm:$0xff]
      %v2465 = vld [vmem:[#allocation4 + $0x3c0] sm:$0xff]
      %v2466 = vld [vmem:[#allocation4 + $0x3c8] sm:$0xff]
      %v2467 = vld [vmem:[#allocation4 + $0x3d0] sm:$0xff]
      %v2468 = vld [vmem:[#allocation4 + $0x3d8] sm:$0xff]
      %v2469 = vld [vmem:[#allocation4 + $0x3e0] sm:$0xff]
      %v2470 = vld [vmem:[#allocation4 + $0x3e8] sm:$0xff]
      %v2471 = vld [vmem:[#allocation4 + $0x3f0] sm:$0xff]
      %v2472 = vld [vmem:[#allocation4 + $0x3f8] sm:$0xff]
      %v2473 = vld [vmem:[#allocation4 + $0x400] sm:$0xff]
      %v2474 = vld [vmem:[#allocation4 + $0x408] sm:$0xff]
      %v2475 = vld [vmem:[#allocation4 + $0x410] sm:$0xff]
      %v2476 = vld [vmem:[#allocation4 + $0x418] sm:$0xff]
      %v2477 = vld [vmem:[#allocation4 + $0x420] sm:$0xff]
      %v2478 = vld [vmem:[#allocation4 + $0x428] sm:$0xff]
      %v2479 = vld [vmem:[#allocation4 + $0x430] sm:$0xff]
      %v2480 = vld [vmem:[#allocation4 + $0x438] sm:$0xff]
      %v2481 = vld [vmem:[#allocation4 + $0x440] sm:$0xff]
      %v2482 = vld [vmem:[#allocation4 + $0x448] sm:$0xff]
      %v2483 = vld [vmem:[#allocation4 + $0x450] sm:$0xff]
      %v2484 = vld [vmem:[#allocation4 + $0x458] sm:$0xff]
      %v2485 = vld [vmem:[#allocation4 + $0x460] sm:$0xff]
      %v2486 = vld [vmem:[#allocation4 + $0x468] sm:$0xff]
      %v2487 = vld [vmem:[#allocation4 + $0x470] sm:$0xff]
      %v2488 = vld [vmem:[#allocation4 + $0x478] sm:$0xff]
      %v2489 = vld [vmem:[#allocation4 + $0x480] sm:$0xff]
      %v2490 = vld [vmem:[#allocation4 + $0x488] sm:$0xff]
      %v2491 = vld [vmem:[#allocation4 + $0x490] sm:$0xff]
      %v2492 = vld [vmem:[#allocation4 + $0x498] sm:$0xff]
      %v2493 = vld [vmem:[#allocation4 + $0x4a0] sm:$0xff]
      %v2494 = vld [vmem:[#allocation4 + $0x4a8] sm:$0xff]
      %v2495 = vld [vmem:[#allocation4 + $0x4b0] sm:$0xff]
      %v2496 = vld [vmem:[#allocation4 + $0x4b8] sm:$0xff]
      %v2497 = vld [vmem:[#allocation4 + $0x4c0] sm:$0xff]
      %v2498 = vld [vmem:[#allocation4 + $0x4c8] sm:$0xff]
      %v2499 = vld [vmem:[#allocation4 + $0x4d0] sm:$0xff]
      %v2500 = vld [vmem:[#allocation4 + $0x4d8] sm:$0xff]
      %v2501 = vld [vmem:[#allocation4 + $0x4e0] sm:$0xff]
      %v2502 = vld [vmem:[#allocation4 + $0x4e8] sm:$0xff]
      %v2503 = vld [vmem:[#allocation4 + $0x4f0] sm:$0xff]
      %v2504 = vld [vmem:[#allocation4 + $0x4f8] sm:$0xff]
      %v2505 = vld [vmem:[#allocation4 + $0x500] sm:$0xff]
      %v2506 = vld [vmem:[#allocation4 + $0x508] sm:$0xff]
      %v2507 = vld [vmem:[#allocation4 + $0x510] sm:$0xff]
      %v2508 = vld [vmem:[#allocation4 + $0x518] sm:$0xff]
      %v2509 = vld [vmem:[#allocation4 + $0x520] sm:$0xff]
      %v2510 = vld [vmem:[#allocation4 + $0x528] sm:$0xff]
      %v2511 = vld [vmem:[#allocation4 + $0x530] sm:$0xff]
      %v2512 = vld [vmem:[#allocation4 + $0x538] sm:$0xff]
      %v2513 = vld [vmem:[#allocation4 + $0x540] sm:$0xff]
      %v2514 = vld [vmem:[#allocation4 + $0x548] sm:$0xff]
      %v2515 = vld [vmem:[#allocation4 + $0x550] sm:$0xff]
      %v2516 = vld [vmem:[#allocation4 + $0x558] sm:$0xff]
      %v2517 = vld [vmem:[#allocation4 + $0x560] sm:$0xff]
      %v2518 = vld [vmem:[#allocation4 + $0x568] sm:$0xff]
      %v2519 = vld [vmem:[#allocation4 + $0x570] sm:$0xff]
      %v2520 = vld [vmem:[#allocation4 + $0x578] sm:$0xff]
      %v2521 = vld [vmem:[#allocation4 + $0x580] sm:$0xff]
      %v2522 = vld [vmem:[#allocation4 + $0x588] sm:$0xff]
      %v2523 = vld [vmem:[#allocation4 + $0x590] sm:$0xff]
      %v2524 = vld [vmem:[#allocation4 + $0x598] sm:$0xff]
      %v2525 = vld [vmem:[#allocation4 + $0x5a0] sm:$0xff]
      %v2526 = vld [vmem:[#allocation4 + $0x5a8] sm:$0xff]
      %v2527 = vld [vmem:[#allocation4 + $0x5b0] sm:$0xff]
      %v2528 = vld [vmem:[#allocation4 + $0x5b8] sm:$0xff]
      %v2529 = vld [vmem:[#allocation4 + $0x5c0] sm:$0xff]
      %v2530 = vld [vmem:[#allocation4 + $0x5c8] sm:$0xff]
      %v2531 = vld [vmem:[#allocation4 + $0x5d0] sm:$0xff]
      %v2532 = vld [vmem:[#allocation4 + $0x5d8] sm:$0xff]
      %v2533 = vld [vmem:[#allocation4 + $0x5e0] sm:$0xff]
      %v2534 = vld [vmem:[#allocation4 + $0x5e8] sm:$0xff]
      %v2535 = vld [vmem:[#allocation4 + $0x5f0] sm:$0xff]
      %v2536 = vld [vmem:[#allocation4 + $0x5f8] sm:$0xff]
      %v2537 = vld [vmem:[#allocation4 + $0x600] sm:$0xff]
      %v2538 = vld [vmem:[#allocation4 + $0x608] sm:$0xff]
      %v2539 = vld [vmem:[#allocation4 + $0x610] sm:$0xff]
      %v2540 = vld [vmem:[#allocation4 + $0x618] sm:$0xff]
      %v2541 = vld [vmem:[#allocation4 + $0x620] sm:$0xff]
      %v2542 = vld [vmem:[#allocation4 + $0x628] sm:$0xff]
      %v2543 = vld [vmem:[#allocation4 + $0x630] sm:$0xff]
      %v2544 = vld [vmem:[#allocation4 + $0x638] sm:$0xff]
      %v2545 = vld [vmem:[#allocation4 + $0x640] sm:$0xff]
      %v2546 = vld [vmem:[#allocation4 + $0x648] sm:$0xff]
      %v2547 = vld [vmem:[#allocation4 + $0x650] sm:$0xff]
      %v2548 = vld [vmem:[#allocation4 + $0x658] sm:$0xff]
      %v2549 = vld [vmem:[#allocation4 + $0x660] sm:$0xff]
      %v2550 = vld [vmem:[#allocation4 + $0x668] sm:$0xff]
      %v2551 = vld [vmem:[#allocation4 + $0x670] sm:$0xff]
      %v2552 = vld [vmem:[#allocation4 + $0x678] sm:$0xff]
      %v2553 = vld [vmem:[#allocation4 + $0x680] sm:$0xff]
      %v2554 = vld [vmem:[#allocation4 + $0x688] sm:$0xff]
      %v2555 = vld [vmem:[#allocation4 + $0x690] sm:$0xff]
      %v2556 = vld [vmem:[#allocation4 + $0x698] sm:$0xff]
      %v2557 = vld [vmem:[#allocation4 + $0x6a0] sm:$0xff]
      %v2558 = vld [vmem:[#allocation4 + $0x6a8] sm:$0xff]
      %v2559 = vld [vmem:[#allocation4 + $0x6b0] sm:$0xff]
      %v2560 = vld [vmem:[#allocation4 + $0x6b8] sm:$0xff]
      %v2561 = vld [vmem:[#allocation4 + $0x6c0] sm:$0xff]
      %v2562 = vld [vmem:[#allocation4 + $0x6c8] sm:$0xff]
      %v2563 = vld [vmem:[#allocation4 + $0x6d0] sm:$0xff]
      %v2564 = vld [vmem:[#allocation4 + $0x6d8] sm:$0xff]
      %v2565 = vld [vmem:[#allocation4 + $0x6e0] sm:$0xff]
      %v2566 = vld [vmem:[#allocation4 + $0x6e8] sm:$0xff]
      %v2567 = vld [vmem:[#allocation4 + $0x6f0] sm:$0xff]
      %v2568 = vld [vmem:[#allocation4 + $0x6f8] sm:$0xff]
      %v2569 = vld [vmem:[#allocation4 + $0x700] sm:$0xff]
      %v2570 = vld [vmem:[#allocation4 + $0x708] sm:$0xff]
      %v2571 = vld [vmem:[#allocation4 + $0x710] sm:$0xff]
      %v2572 = vld [vmem:[#allocation4 + $0x718] sm:$0xff]
      %v2573 = vld [vmem:[#allocation4 + $0x720] sm:$0xff]
      %v2574 = vld [vmem:[#allocation4 + $0x728] sm:$0xff]
      %v2575 = vld [vmem:[#allocation4 + $0x730] sm:$0xff]
      %v2576 = vld [vmem:[#allocation4 + $0x738] sm:$0xff]
      %v2577 = vld [vmem:[#allocation4 + $0x740] sm:$0xff]
      %v2578 = vld [vmem:[#allocation4 + $0x748] sm:$0xff]
      %v2579 = vld [vmem:[#allocation4 + $0x750] sm:$0xff]
      %v2580 = vld [vmem:[#allocation4 + $0x758] sm:$0xff]
      %v2581 = vld [vmem:[#allocation4 + $0x760] sm:$0xff]
      %v2582 = vld [vmem:[#allocation4 + $0x768] sm:$0xff]
      %v2583 = vld [vmem:[#allocation4 + $0x770] sm:$0xff]
      %v2584 = vld [vmem:[#allocation4 + $0x778] sm:$0xff]
      %v2585 = vld [vmem:[#allocation4 + $0x780] sm:$0xff]
      %v2586 = vld [vmem:[#allocation4 + $0x788] sm:$0xff]
      %v2587 = vld [vmem:[#allocation4 + $0x790] sm:$0xff]
      %v2588 = vld [vmem:[#allocation4 + $0x798] sm:$0xff]
      %v2589 = vld [vmem:[#allocation4 + $0x7a0] sm:$0xff]
      %v2590 = vld [vmem:[#allocation4 + $0x7a8] sm:$0xff]
      %v2591 = vld [vmem:[#allocation4 + $0x7b0] sm:$0xff]
      %v2592 = vld [vmem:[#allocation4 + $0x7b8] sm:$0xff]
      %v2593 = vld [vmem:[#allocation4 + $0x7c0] sm:$0xff]
      %v2594 = vld [vmem:[#allocation4 + $0x7c8] sm:$0xff]
      %v2595 = vld [vmem:[#allocation4 + $0x7d0] sm:$0xff]
      %v2596 = vld [vmem:[#allocation4 + $0x7d8] sm:$0xff]
      %v2597 = vld [vmem:[#allocation4 + $0x7e0] sm:$0xff]
      %v2598 = vld [vmem:[#allocation4 + $0x7e8] sm:$0xff]
      %v2599 = vld [vmem:[#allocation4 + $0x7f0] sm:$0xff]
      %v2600 = vld [vmem:[#allocation4 + $0x7f8] sm:$0xff]
      %v2601 = vld [vmem:[%s3] sm:$0xf]
      %v2602 = vld [vmem:[%s3 + $0x4] sm:$0xf]
      %v2603 = vld [vmem:[%s3 + $0x8] sm:$0xf]
      %v2604 = vld [vmem:[%s3 + $0xc] sm:$0xf]
      %v2605 = vld [vmem:[%s3 + $0x10] sm:$0xf]
      %v2606 = vld [vmem:[%s3 + $0x14] sm:$0xf]
      %v2607 = vld [vmem:[%s3 + $0x18] sm:$0xf]
      %v2608 = vld [vmem:[%s3 + $0x1c] sm:$0xf]
      %v2609 = vld [vmem:[%s3 + $0x20] sm:$0xf]
      %v2610 = vld [vmem:[%s3 + $0x24] sm:$0xf]
      %v2611 = vld [vmem:[%s3 + $0x28] sm:$0xf]
      %v2612 = vld [vmem:[%s3 + $0x2c] sm:$0xf]
      %v2613 = vld [vmem:[%s3 + $0x30] sm:$0xf]
      %v2614 = vld [vmem:[%s3 + $0x34] sm:$0xf]
      %v2615 = vld [vmem:[%s3 + $0x38] sm:$0xf]
      %v2616 = vld [vmem:[%s3 + $0x3c] sm:$0xf]
      %v2617 = vld [vmem:[%s3 + $0x40] sm:$0xf]
      %v2618 = vld [vmem:[%s3 + $0x44] sm:$0xf]
      %v2619 = vld [vmem:[%s3 + $0x48] sm:$0xf]
      %v2620 = vld [vmem:[%s3 + $0x4c] sm:$0xf]
      %v2621 = vld [vmem:[%s3 + $0x50] sm:$0xf]
      %v2622 = vld [vmem:[%s3 + $0x54] sm:$0xf]
      %v2623 = vld [vmem:[%s3 + $0x58] sm:$0xf]
      %v2624 = vld [vmem:[%s3 + $0x5c] sm:$0xf]
      %v2625 = vld [vmem:[%s3 + $0x60] sm:$0xf]
      %v2626 = vld [vmem:[%s3 + $0x64] sm:$0xf]
      %v2627 = vld [vmem:[%s3 + $0x68] sm:$0xf]
      %v2628 = vld [vmem:[%s3 + $0x6c] sm:$0xf]
      %v2629 = vld [vmem:[%s3 + $0x70] sm:$0xf]
      %v2630 = vld [vmem:[%s3 + $0x74] sm:$0xf]
      %v2631 = vld [vmem:[%s3 + $0x78] sm:$0xf]
      %v2632 = vld [vmem:[%s3 + $0x7c] sm:$0xf]
      %v2633 = vld [vmem:[%s3 + $0x80] sm:$0xf]
      %v2634 = vld [vmem:[%s3 + $0x84] sm:$0xf]
      %v2635 = vld [vmem:[%s3 + $0x88] sm:$0xf]
      %v2636 = vld [vmem:[%s3 + $0x8c] sm:$0xf]
      %v2637 = vld [vmem:[%s3 + $0x90] sm:$0xf]
      %v2638 = vld [vmem:[%s3 + $0x94] sm:$0xf]
      %v2639 = vld [vmem:[%s3 + $0x98] sm:$0xf]
      %v2640 = vld [vmem:[%s3 + $0x9c] sm:$0xf]
      %v2641 = vld [vmem:[%s3 + $0xa0] sm:$0xf]
      %v2642 = vld [vmem:[%s3 + $0xa4] sm:$0xf]
      %v2643 = vld [vmem:[%s3 + $0xa8] sm:$0xf]
      %v2644 = vld [vmem:[%s3 + $0xac] sm:$0xf]
      %v2645 = vld [vmem:[%s3 + $0xb0] sm:$0xf]
      %v2646 = vld [vmem:[%s3 + $0xb4] sm:$0xf]
      %v2647 = vld [vmem:[%s3 + $0xb8] sm:$0xf]
      %v2648 = vld [vmem:[%s3 + $0xbc] sm:$0xf]
      %v2649 = vld [vmem:[%s3 + $0xc0] sm:$0xf]
      %v2650 = vld [vmem:[%s3 + $0xc4] sm:$0xf]
      %v2651 = vld [vmem:[%s3 + $0xc8] sm:$0xf]
      %v2652 = vld [vmem:[%s3 + $0xcc] sm:$0xf]
      %v2653 = vld [vmem:[%s3 + $0xd0] sm:$0xf]
      %v2654 = vld [vmem:[%s3 + $0xd4] sm:$0xf]
      %v2655 = vld [vmem:[%s3 + $0xd8] sm:$0xf]
      %v2656 = vld [vmem:[%s3 + $0xdc] sm:$0xf]
      %v2657 = vld [vmem:[%s3 + $0xe0] sm:$0xf]
      %v2658 = vld [vmem:[%s3 + $0xe4] sm:$0xf]
      %v2659 = vld [vmem:[%s3 + $0xe8] sm:$0xf]
      %v2660 = vld [vmem:[%s3 + $0xec] sm:$0xf]
      %v2661 = vld [vmem:[%s3 + $0xf0] sm:$0xf]
      %v2662 = vld [vmem:[%s3 + $0xf4] sm:$0xf]
      %v2663 = vld [vmem:[%s3 + $0xf8] sm:$0xf]
      %v2664 = vld [vmem:[%s3 + $0xfc] sm:$0xf]
      %v2665 = vld [vmem:[%s3 + $0x100] sm:$0xf]
      %v2666 = vld [vmem:[%s3 + $0x104] sm:$0xf]
      %v2667 = vld [vmem:[%s3 + $0x108] sm:$0xf]
      %v2668 = vld [vmem:[%s3 + $0x10c] sm:$0xf]
      %v2669 = vld [vmem:[%s3 + $0x110] sm:$0xf]
      %v2670 = vld [vmem:[%s3 + $0x114] sm:$0xf]
      %v2671 = vld [vmem:[%s3 + $0x118] sm:$0xf]
      %v2672 = vld [vmem:[%s3 + $0x11c] sm:$0xf]
      %v2673 = vld [vmem:[%s3 + $0x120] sm:$0xf]
      %v2674 = vld [vmem:[%s3 + $0x124] sm:$0xf]
      %v2675 = vld [vmem:[%s3 + $0x128] sm:$0xf]
      %v2676 = vld [vmem:[%s3 + $0x12c] sm:$0xf]
      %v2677 = vld [vmem:[%s3 + $0x130] sm:$0xf]
      %v2678 = vld [vmem:[%s3 + $0x134] sm:$0xf]
      %v2679 = vld [vmem:[%s3 + $0x138] sm:$0xf]
      %v2680 = vld [vmem:[%s3 + $0x13c] sm:$0xf]
      %v2681 = vld [vmem:[%s3 + $0x140] sm:$0xf]
      %v2682 = vld [vmem:[%s3 + $0x144] sm:$0xf]
      %v2683 = vld [vmem:[%s3 + $0x148] sm:$0xf]
      %v2684 = vld [vmem:[%s3 + $0x14c] sm:$0xf]
      %v2685 = vld [vmem:[%s3 + $0x150] sm:$0xf]
      %v2686 = vld [vmem:[%s3 + $0x154] sm:$0xf]
      %v2687 = vld [vmem:[%s3 + $0x158] sm:$0xf]
      %v2688 = vld [vmem:[%s3 + $0x15c] sm:$0xf]
      %v2689 = vld [vmem:[%s3 + $0x160] sm:$0xf]
      %v2690 = vld [vmem:[%s3 + $0x164] sm:$0xf]
      %v2691 = vld [vmem:[%s3 + $0x168] sm:$0xf]
      %v2692 = vld [vmem:[%s3 + $0x16c] sm:$0xf]
      %v2693 = vld [vmem:[%s3 + $0x170] sm:$0xf]
      %v2694 = vld [vmem:[%s3 + $0x174] sm:$0xf]
      %v2695 = vld [vmem:[%s3 + $0x178] sm:$0xf]
      %v2696 = vld [vmem:[%s3 + $0x17c] sm:$0xf]
      %v2697 = vld [vmem:[%s3 + $0x180] sm:$0xf]
      %v2698 = vld [vmem:[%s3 + $0x184] sm:$0xf]
      %v2699 = vld [vmem:[%s3 + $0x188] sm:$0xf]
      %v2700 = vld [vmem:[%s3 + $0x18c] sm:$0xf]
      %v2701 = vld [vmem:[%s3 + $0x190] sm:$0xf]
      %v2702 = vld [vmem:[%s3 + $0x194] sm:$0xf]
      %v2703 = vld [vmem:[%s3 + $0x198] sm:$0xf]
      %v2704 = vld [vmem:[%s3 + $0x19c] sm:$0xf]
      %v2705 = vld [vmem:[%s3 + $0x1a0] sm:$0xf]
      %v2706 = vld [vmem:[%s3 + $0x1a4] sm:$0xf]
      %v2707 = vld [vmem:[%s3 + $0x1a8] sm:$0xf]
      %v2708 = vld [vmem:[%s3 + $0x1ac] sm:$0xf]
      %v2709 = vld [vmem:[%s3 + $0x1b0] sm:$0xf]
      %v2710 = vld [vmem:[%s3 + $0x1b4] sm:$0xf]
      %v2711 = vld [vmem:[%s3 + $0x1b8] sm:$0xf]
      %v2712 = vld [vmem:[%s3 + $0x1bc] sm:$0xf]
      %v2713 = vld [vmem:[%s3 + $0x1c0] sm:$0xf]
      %v2714 = vld [vmem:[%s3 + $0x1c4] sm:$0xf]
      %v2715 = vld [vmem:[%s3 + $0x1c8] sm:$0xf]
      %v2716 = vld [vmem:[%s3 + $0x1cc] sm:$0xf]
      %v2717 = vld [vmem:[%s3 + $0x1d0] sm:$0xf]
      %v2718 = vld [vmem:[%s3 + $0x1d4] sm:$0xf]
      %v2719 = vld [vmem:[%s3 + $0x1d8] sm:$0xf]
      %v2720 = vld [vmem:[%s3 + $0x1dc] sm:$0xf]
      %v2721 = vld [vmem:[%s3 + $0x1e0] sm:$0xf]
      %v2722 = vld [vmem:[%s3 + $0x1e4] sm:$0xf]
      %v2723 = vld [vmem:[%s3 + $0x1e8] sm:$0xf]
      %v2724 = vld [vmem:[%s3 + $0x1ec] sm:$0xf]
      %v2725 = vld [vmem:[%s3 + $0x1f0] sm:$0xf]
      %v2726 = vld [vmem:[%s3 + $0x1f4] sm:$0xf]
      %v2727 = vld [vmem:[%s3 + $0x1f8] sm:$0xf]
      %v2728 = vld [vmem:[%s3 + $0x1fc] sm:$0xf]
      %v2729 = vld [vmem:[%s3 + $0x200] sm:$0xf]
      %v2730 = vld [vmem:[%s3 + $0x204] sm:$0xf]
      %v2731 = vld [vmem:[%s3 + $0x208] sm:$0xf]
      %v2732 = vld [vmem:[%s3 + $0x20c] sm:$0xf]
      %v2733 = vld [vmem:[%s3 + $0x210] sm:$0xf]
      %v2734 = vld [vmem:[%s3 + $0x214] sm:$0xf]
      %v2735 = vld [vmem:[%s3 + $0x218] sm:$0xf]
      %v2736 = vld [vmem:[%s3 + $0x21c] sm:$0xf]
      %v2737 = vld [vmem:[%s3 + $0x220] sm:$0xf]
      %v2738 = vld [vmem:[%s3 + $0x224] sm:$0xf]
      %v2739 = vld [vmem:[%s3 + $0x228] sm:$0xf]
      %v2740 = vld [vmem:[%s3 + $0x22c] sm:$0xf]
      %v2741 = vld [vmem:[%s3 + $0x230] sm:$0xf]
      %v2742 = vld [vmem:[%s3 + $0x234] sm:$0xf]
      %v2743 = vld [vmem:[%s3 + $0x238] sm:$0xf]
      %v2744 = vld [vmem:[%s3 + $0x23c] sm:$0xf]
      %v2745 = vld [vmem:[%s3 + $0x240] sm:$0xf]
      %v2746 = vld [vmem:[%s3 + $0x244] sm:$0xf]
      %v2747 = vld [vmem:[%s3 + $0x248] sm:$0xf]
      %v2748 = vld [vmem:[%s3 + $0x24c] sm:$0xf]
      %v2749 = vld [vmem:[%s3 + $0x250] sm:$0xf]
      %v2750 = vld [vmem:[%s3 + $0x254] sm:$0xf]
      %v2751 = vld [vmem:[%s3 + $0x258] sm:$0xf]
      %v2752 = vld [vmem:[%s3 + $0x25c] sm:$0xf]
      %v2753 = vld [vmem:[%s3 + $0x260] sm:$0xf]
      %v2754 = vld [vmem:[%s3 + $0x264] sm:$0xf]
      %v2755 = vld [vmem:[%s3 + $0x268] sm:$0xf]
      %v2756 = vld [vmem:[%s3 + $0x26c] sm:$0xf]
      %v2757 = vld [vmem:[%s3 + $0x270] sm:$0xf]
      %v2758 = vld [vmem:[%s3 + $0x274] sm:$0xf]
      %v2759 = vld [vmem:[%s3 + $0x278] sm:$0xf]
      %v2760 = vld [vmem:[%s3 + $0x27c] sm:$0xf]
      %v2761 = vld [vmem:[%s3 + $0x280] sm:$0xf]
      %v2762 = vld [vmem:[%s3 + $0x284] sm:$0xf]
      %v2763 = vld [vmem:[%s3 + $0x288] sm:$0xf]
      %v2764 = vld [vmem:[%s3 + $0x28c] sm:$0xf]
      %v2765 = vld [vmem:[%s3 + $0x290] sm:$0xf]
      %v2766 = vld [vmem:[%s3 + $0x294] sm:$0xf]
      %v2767 = vld [vmem:[%s3 + $0x298] sm:$0xf]
      %v2768 = vld [vmem:[%s3 + $0x29c] sm:$0xf]
      %v2769 = vld [vmem:[%s3 + $0x2a0] sm:$0xf]
      %v2770 = vld [vmem:[%s3 + $0x2a4] sm:$0xf]
      %v2771 = vld [vmem:[%s3 + $0x2a8] sm:$0xf]
      %v2772 = vld [vmem:[%s3 + $0x2ac] sm:$0xf]
      %v2773 = vld [vmem:[%s3 + $0x2b0] sm:$0xf]
      %v2774 = vld [vmem:[%s3 + $0x2b4] sm:$0xf]
      %v2775 = vld [vmem:[%s3 + $0x2b8] sm:$0xf]
      %v2776 = vld [vmem:[%s3 + $0x2bc] sm:$0xf]
      %v2777 = vld [vmem:[%s3 + $0x2c0] sm:$0xf]
      %v2778 = vld [vmem:[%s3 + $0x2c4] sm:$0xf]
      %v2779 = vld [vmem:[%s3 + $0x2c8] sm:$0xf]
      %v2780 = vld [vmem:[%s3 + $0x2cc] sm:$0xf]
      %v2781 = vld [vmem:[%s3 + $0x2d0] sm:$0xf]
      %v2782 = vld [vmem:[%s3 + $0x2d4] sm:$0xf]
      %v2783 = vld [vmem:[%s3 + $0x2d8] sm:$0xf]
      %v2784 = vld [vmem:[%s3 + $0x2dc] sm:$0xf]
      %v2785 = vld [vmem:[%s3 + $0x2e0] sm:$0xf]
      %v2786 = vld [vmem:[%s3 + $0x2e4] sm:$0xf]
      %v2787 = vld [vmem:[%s3 + $0x2e8] sm:$0xf]
      %v2788 = vld [vmem:[%s3 + $0x2ec] sm:$0xf]
      %v2789 = vld [vmem:[%s3 + $0x2f0] sm:$0xf]
      %v2790 = vld [vmem:[%s3 + $0x2f4] sm:$0xf]
      %v2791 = vld [vmem:[%s3 + $0x2f8] sm:$0xf]
      %v2792 = vld [vmem:[%s3 + $0x2fc] sm:$0xf]
      %v2793 = vld [vmem:[%s3 + $0x300] sm:$0xf]
      %v2794 = vld [vmem:[%s3 + $0x304] sm:$0xf]
      %v2795 = vld [vmem:[%s3 + $0x308] sm:$0xf]
      %v2796 = vld [vmem:[%s3 + $0x30c] sm:$0xf]
      %v2797 = vld [vmem:[%s3 + $0x310] sm:$0xf]
      %v2798 = vld [vmem:[%s3 + $0x314] sm:$0xf]
      %v2799 = vld [vmem:[%s3 + $0x318] sm:$0xf]
      %v2800 = vld [vmem:[%s3 + $0x31c] sm:$0xf]
      %v2801 = vld [vmem:[%s3 + $0x320] sm:$0xf]
      %v2802 = vld [vmem:[%s3 + $0x324] sm:$0xf]
      %v2803 = vld [vmem:[%s3 + $0x328] sm:$0xf]
      %v2804 = vld [vmem:[%s3 + $0x32c] sm:$0xf]
      %v2805 = vld [vmem:[%s3 + $0x330] sm:$0xf]
      %v2806 = vld [vmem:[%s3 + $0x334] sm:$0xf]
      %v2807 = vld [vmem:[%s3 + $0x338] sm:$0xf]
      %v2808 = vld [vmem:[%s3 + $0x33c] sm:$0xf]
      %v2809 = vld [vmem:[%s3 + $0x340] sm:$0xf]
      %v2810 = vld [vmem:[%s3 + $0x344] sm:$0xf]
      %v2811 = vld [vmem:[%s3 + $0x348] sm:$0xf]
      %v2812 = vld [vmem:[%s3 + $0x34c] sm:$0xf]
      %v2813 = vld [vmem:[%s3 + $0x350] sm:$0xf]
      %v2814 = vld [vmem:[%s3 + $0x354] sm:$0xf]
      %v2815 = vld [vmem:[%s3 + $0x358] sm:$0xf]
      %v2816 = vld [vmem:[%s3 + $0x35c] sm:$0xf]
      %v2817 = vld [vmem:[%s3 + $0x360] sm:$0xf]
      %v2818 = vld [vmem:[%s3 + $0x364] sm:$0xf]
      %v2819 = vld [vmem:[%s3 + $0x368] sm:$0xf]
      %v2820 = vld [vmem:[%s3 + $0x36c] sm:$0xf]
      %v2821 = vld [vmem:[%s3 + $0x370] sm:$0xf]
      %v2822 = vld [vmem:[%s3 + $0x374] sm:$0xf]
      %v2823 = vld [vmem:[%s3 + $0x378] sm:$0xf]
      %v2824 = vld [vmem:[%s3 + $0x37c] sm:$0xf]
      %v2825 = vld [vmem:[%s3 + $0x380] sm:$0xf]
      %v2826 = vld [vmem:[%s3 + $0x384] sm:$0xf]
      %v2827 = vld [vmem:[%s3 + $0x388] sm:$0xf]
      %v2828 = vld [vmem:[%s3 + $0x38c] sm:$0xf]
      %v2829 = vld [vmem:[%s3 + $0x390] sm:$0xf]
      %v2830 = vld [vmem:[%s3 + $0x394] sm:$0xf]
      %v2831 = vld [vmem:[%s3 + $0x398] sm:$0xf]
      %v2832 = vld [vmem:[%s3 + $0x39c] sm:$0xf]
      %v2833 = vld [vmem:[%s3 + $0x3a0] sm:$0xf]
      %v2834 = vld [vmem:[%s3 + $0x3a4] sm:$0xf]
      %v2835 = vld [vmem:[%s3 + $0x3a8] sm:$0xf]
      %v2836 = vld [vmem:[%s3 + $0x3ac] sm:$0xf]
      %v2837 = vld [vmem:[%s3 + $0x3b0] sm:$0xf]
      %v2838 = vld [vmem:[%s3 + $0x3b4] sm:$0xf]
      %v2839 = vld [vmem:[%s3 + $0x3b8] sm:$0xf]
      %v2840 = vld [vmem:[%s3 + $0x3bc] sm:$0xf]
      %v2841 = vld [vmem:[%s3 + $0x3c0] sm:$0xf]
      %v2842 = vld [vmem:[%s3 + $0x3c4] sm:$0xf]
      %v2843 = vld [vmem:[%s3 + $0x3c8] sm:$0xf]
      %v2844 = vld [vmem:[%s3 + $0x3cc] sm:$0xf]
      %v2845 = vld [vmem:[%s3 + $0x3d0] sm:$0xf]
      %v2846 = vld [vmem:[%s3 + $0x3d4] sm:$0xf]
      %v2847 = vld [vmem:[%s3 + $0x3d8] sm:$0xf]
      %v2848 = vld [vmem:[%s3 + $0x3dc] sm:$0xf]
      %v2849 = vld [vmem:[%s3 + $0x3e0] sm:$0xf]
      %v2850 = vld [vmem:[%s3 + $0x3e4] sm:$0xf]
      %v2851 = vld [vmem:[%s3 + $0x3e8] sm:$0xf]
      %v2852 = vld [vmem:[%s3 + $0x3ec] sm:$0xf]
      %v2853 = vld [vmem:[%s3 + $0x3f0] sm:$0xf]
      %v2854 = vld [vmem:[%s3 + $0x3f4] sm:$0xf]
      %v2855 = vld [vmem:[%s3 + $0x3f8] sm:$0xf]
      %v2856 = vld [vmem:[%s3 + $0x3fc] sm:$0xf]
      %v2857 = vld [vmem:[%s4] sm:$0x1]
      %v2859 = vlaneseq
      %v2860 = vshrl.u32 %v2859, 7
      %v2861 = vsub.s32 0, %v2860
      %v2862 = vrot.slane %v2857, %v2861
      %v3120 = vunpack.c.l.b16 %v2601
      %v3121 = vunpack.c.l.b16 %v2602
      %v3122 = vunpack.c.l.b16 %v2603
      %v3123 = vunpack.c.l.b16 %v2604
      %v3124 = vunpack.c.l.b16 %v2605
      %v3125 = vunpack.c.l.b16 %v2606
      %v3126 = vunpack.c.l.b16 %v2607
      %v3127 = vunpack.c.l.b16 %v2608
      %v3128 = vunpack.c.l.b16 %v2609
      %v3129 = vunpack.c.l.b16 %v2610
      %v3130 = vunpack.c.l.b16 %v2611
      %v3131 = vunpack.c.l.b16 %v2612
      %v3132 = vunpack.c.l.b16 %v2613
      %v3133 = vunpack.c.l.b16 %v2614
      %v3134 = vunpack.c.l.b16 %v2615
      %v3135 = vunpack.c.l.b16 %v2616
      %v3136 = vunpack.c.l.b16 %v2617
      %v3137 = vunpack.c.l.b16 %v2618
      %v3138 = vunpack.c.l.b16 %v2619
      %v3139 = vunpack.c.l.b16 %v2620
      %v3140 = vunpack.c.l.b16 %v2621
      %v3141 = vunpack.c.l.b16 %v2622
      %v3142 = vunpack.c.l.b16 %v2623
      %v3143 = vunpack.c.l.b16 %v2624
      %v3144 = vunpack.c.l.b16 %v2625
      %v3145 = vunpack.c.l.b16 %v2626
      %v3146 = vunpack.c.l.b16 %v2627
      %v3147 = vunpack.c.l.b16 %v2628
      %v3148 = vunpack.c.l.b16 %v2629
      %v3149 = vunpack.c.l.b16 %v2630
      %v3150 = vunpack.c.l.b16 %v2631
      %v3151 = vunpack.c.l.b16 %v2632
      %v3152 = vunpack.c.l.b16 %v2633
      %v3153 = vunpack.c.l.b16 %v2634
      %v3154 = vunpack.c.l.b16 %v2635
      %v3155 = vunpack.c.l.b16 %v2636
      %v3156 = vunpack.c.l.b16 %v2637
      %v3157 = vunpack.c.l.b16 %v2638
      %v3158 = vunpack.c.l.b16 %v2639
      %v3159 = vunpack.c.l.b16 %v2640
      %v3160 = vunpack.c.l.b16 %v2641
      %v3161 = vunpack.c.l.b16 %v2642
      %v3162 = vunpack.c.l.b16 %v2643
      %v3163 = vunpack.c.l.b16 %v2644
      %v3164 = vunpack.c.l.b16 %v2645
      %v3165 = vunpack.c.l.b16 %v2646
      %v3166 = vunpack.c.l.b16 %v2647
      %v3167 = vunpack.c.l.b16 %v2648
      %v3168 = vunpack.c.l.b16 %v2649
      %v3169 = vunpack.c.l.b16 %v2650
      %v3170 = vunpack.c.l.b16 %v2651
      %v3171 = vunpack.c.l.b16 %v2652
      %v3172 = vunpack.c.l.b16 %v2653
      %v3173 = vunpack.c.l.b16 %v2654
      %v3174 = vunpack.c.l.b16 %v2655
      %v3175 = vunpack.c.l.b16 %v2656
      %v3176 = vunpack.c.l.b16 %v2657
      %v3177 = vunpack.c.l.b16 %v2658
      %v3178 = vunpack.c.l.b16 %v2659
      %v3179 = vunpack.c.l.b16 %v2660
      %v3180 = vunpack.c.l.b16 %v2661
      %v3181 = vunpack.c.l.b16 %v2662
      %v3182 = vunpack.c.l.b16 %v2663
      %v3183 = vunpack.c.l.b16 %v2664
      %v3184 = vunpack.c.l.b16 %v2665
      %v3185 = vunpack.c.l.b16 %v2666
      %v3186 = vunpack.c.l.b16 %v2667
      %v3187 = vunpack.c.l.b16 %v2668
      %v3188 = vunpack.c.l.b16 %v2669
      %v3189 = vunpack.c.l.b16 %v2670
      %v3190 = vunpack.c.l.b16 %v2671
      %v3191 = vunpack.c.l.b16 %v2672
      %v3192 = vunpack.c.l.b16 %v2673
      %v3193 = vunpack.c.l.b16 %v2674
      %v3194 = vunpack.c.l.b16 %v2675
      %v3195 = vunpack.c.l.b16 %v2676
      %v3196 = vunpack.c.l.b16 %v2677
      %v3197 = vunpack.c.l.b16 %v2678
      %v3198 = vunpack.c.l.b16 %v2679
      %v3199 = vunpack.c.l.b16 %v2680
      %v3200 = vunpack.c.l.b16 %v2681
      %v3201 = vunpack.c.l.b16 %v2682
      %v3202 = vunpack.c.l.b16 %v2683
      %v3203 = vunpack.c.l.b16 %v2684
      %v3204 = vunpack.c.l.b16 %v2685
      %v3205 = vunpack.c.l.b16 %v2686
      %v3206 = vunpack.c.l.b16 %v2687
      %v3207 = vunpack.c.l.b16 %v2688
      %v3208 = vunpack.c.l.b16 %v2689
      %v3209 = vunpack.c.l.b16 %v2690
      %v3210 = vunpack.c.l.b16 %v2691
      %v3211 = vunpack.c.l.b16 %v2692
      %v3212 = vunpack.c.l.b16 %v2693
      %v3213 = vunpack.c.l.b16 %v2694
      %v3214 = vunpack.c.l.b16 %v2695
      %v3215 = vunpack.c.l.b16 %v2696
      %v3216 = vunpack.c.l.b16 %v2697
      %v3217 = vunpack.c.l.b16 %v2698
      %v3218 = vunpack.c.l.b16 %v2699
      %v3219 = vunpack.c.l.b16 %v2700
      %v3220 = vunpack.c.l.b16 %v2701
      %v3221 = vunpack.c.l.b16 %v2702
      %v3222 = vunpack.c.l.b16 %v2703
      %v3223 = vunpack.c.l.b16 %v2704
      %v3224 = vunpack.c.l.b16 %v2705
      %v3225 = vunpack.c.l.b16 %v2706
      %v3226 = vunpack.c.l.b16 %v2707
      %v3227 = vunpack.c.l.b16 %v2708
      %v3228 = vunpack.c.l.b16 %v2709
      %v3229 = vunpack.c.l.b16 %v2710
      %v3230 = vunpack.c.l.b16 %v2711
      %v3231 = vunpack.c.l.b16 %v2712
      %v3232 = vunpack.c.l.b16 %v2713
      %v3233 = vunpack.c.l.b16 %v2714
      %v3234 = vunpack.c.l.b16 %v2715
      %v3235 = vunpack.c.l.b16 %v2716
      %v3236 = vunpack.c.l.b16 %v2717
      %v3237 = vunpack.c.l.b16 %v2718
      %v3238 = vunpack.c.l.b16 %v2719
      %v3239 = vunpack.c.l.b16 %v2720
      %v3240 = vunpack.c.l.b16 %v2721
      %v3241 = vunpack.c.l.b16 %v2722
      %v3242 = vunpack.c.l.b16 %v2723
      %v3243 = vunpack.c.l.b16 %v2724
      %v3244 = vunpack.c.l.b16 %v2725
      %v3245 = vunpack.c.l.b16 %v2726
      %v3246 = vunpack.c.l.b16 %v2727
      %v3247 = vunpack.c.l.b16 %v2728
      %v3248 = vunpack.c.l.b16 %v2729
      %v3249 = vunpack.c.l.b16 %v2730
      %v3250 = vunpack.c.l.b16 %v2731
      %v3251 = vunpack.c.l.b16 %v2732
      %v3252 = vunpack.c.l.b16 %v2733
      %v3253 = vunpack.c.l.b16 %v2734
      %v3254 = vunpack.c.l.b16 %v2735
      %v3255 = vunpack.c.l.b16 %v2736
      %v3256 = vunpack.c.l.b16 %v2737
      %v3257 = vunpack.c.l.b16 %v2738
      %v3258 = vunpack.c.l.b16 %v2739
      %v3259 = vunpack.c.l.b16 %v2740
      %v3260 = vunpack.c.l.b16 %v2741
      %v3261 = vunpack.c.l.b16 %v2742
      %v3262 = vunpack.c.l.b16 %v2743
      %v3263 = vunpack.c.l.b16 %v2744
      %v3264 = vunpack.c.l.b16 %v2745
      %v3265 = vunpack.c.l.b16 %v2746
      %v3266 = vunpack.c.l.b16 %v2747
      %v3267 = vunpack.c.l.b16 %v2748
      %v3268 = vunpack.c.l.b16 %v2749
      %v3269 = vunpack.c.l.b16 %v2750
      %v3270 = vunpack.c.l.b16 %v2751
      %v3271 = vunpack.c.l.b16 %v2752
      %v3272 = vunpack.c.l.b16 %v2753
      %v3273 = vunpack.c.l.b16 %v2754
      %v3274 = vunpack.c.l.b16 %v2755
      %v3275 = vunpack.c.l.b16 %v2756
      %v3276 = vunpack.c.l.b16 %v2757
      %v3277 = vunpack.c.l.b16 %v2758
      %v3278 = vunpack.c.l.b16 %v2759
      %v3279 = vunpack.c.l.b16 %v2760
      %v3280 = vunpack.c.l.b16 %v2761
      %v3281 = vunpack.c.l.b16 %v2762
      %v3282 = vunpack.c.l.b16 %v2763
      %v3283 = vunpack.c.l.b16 %v2764
      %v3284 = vunpack.c.l.b16 %v2765
      %v3285 = vunpack.c.l.b16 %v2766
      %v3286 = vunpack.c.l.b16 %v2767
      %v3287 = vunpack.c.l.b16 %v2768
      %v3288 = vunpack.c.l.b16 %v2769
      %v3289 = vunpack.c.l.b16 %v2770
      %v3290 = vunpack.c.l.b16 %v2771
      %v3291 = vunpack.c.l.b16 %v2772
      %v3292 = vunpack.c.l.b16 %v2773
      %v3293 = vunpack.c.l.b16 %v2774
      %v3294 = vunpack.c.l.b16 %v2775
      %v3295 = vunpack.c.l.b16 %v2776
      %v3296 = vunpack.c.l.b16 %v2777
      %v3297 = vunpack.c.l.b16 %v2778
      %v3298 = vunpack.c.l.b16 %v2779
      %v3299 = vunpack.c.l.b16 %v2780
      %v3300 = vunpack.c.l.b16 %v2781
      %v3301 = vunpack.c.l.b16 %v2782
      %v3302 = vunpack.c.l.b16 %v2783
      %v3303 = vunpack.c.l.b16 %v2784
      %v3304 = vunpack.c.l.b16 %v2785
      %v3305 = vunpack.c.l.b16 %v2786
      %v3306 = vunpack.c.l.b16 %v2787
      %v3307 = vunpack.c.l.b16 %v2788
      %v3308 = vunpack.c.l.b16 %v2789
      %v3309 = vunpack.c.l.b16 %v2790
      %v3310 = vunpack.c.l.b16 %v2791
      %v3311 = vunpack.c.l.b16 %v2792
      %v3312 = vunpack.c.l.b16 %v2793
      %v3313 = vunpack.c.l.b16 %v2794
      %v3314 = vunpack.c.l.b16 %v2795
      %v3315 = vunpack.c.l.b16 %v2796
      %v3316 = vunpack.c.l.b16 %v2797
      %v3317 = vunpack.c.l.b16 %v2798
      %v3318 = vunpack.c.l.b16 %v2799
      %v3319 = vunpack.c.l.b16 %v2800
      %v3320 = vunpack.c.l.b16 %v2801
      %v3321 = vunpack.c.l.b16 %v2802
      %v3322 = vunpack.c.l.b16 %v2803
      %v3323 = vunpack.c.l.b16 %v2804
      %v3324 = vunpack.c.l.b16 %v2805
      %v3325 = vunpack.c.l.b16 %v2806
      %v3326 = vunpack.c.l.b16 %v2807
      %v3327 = vunpack.c.l.b16 %v2808
      %v3328 = vunpack.c.l.b16 %v2809
      %v3329 = vunpack.c.l.b16 %v2810
      %v3330 = vunpack.c.l.b16 %v2811
      %v3331 = vunpack.c.l.b16 %v2812
      %v3332 = vunpack.c.l.b16 %v2813
      %v3333 = vunpack.c.l.b16 %v2814
      %v3334 = vunpack.c.l.b16 %v2815
      %v3335 = vunpack.c.l.b16 %v2816
      %v3336 = vunpack.c.l.b16 %v2817
      %v3337 = vunpack.c.l.b16 %v2818
      %v3338 = vunpack.c.l.b16 %v2819
      %v3339 = vunpack.c.l.b16 %v2820
      %v3340 = vunpack.c.l.b16 %v2821
      %v3341 = vunpack.c.l.b16 %v2822
      %v3342 = vunpack.c.l.b16 %v2823
      %v3343 = vunpack.c.l.b16 %v2824
      %v3344 = vunpack.c.l.b16 %v2825
      %v3345 = vunpack.c.l.b16 %v2826
      %v3346 = vunpack.c.l.b16 %v2827
      %v3347 = vunpack.c.l.b16 %v2828
      %v3348 = vunpack.c.l.b16 %v2829
      %v3349 = vunpack.c.l.b16 %v2830
      %v3350 = vunpack.c.l.b16 %v2831
      %v3351 = vunpack.c.l.b16 %v2832
      %v3352 = vunpack.c.l.b16 %v2833
      %v3353 = vunpack.c.l.b16 %v2834
      %v3354 = vunpack.c.l.b16 %v2835
      %v3355 = vunpack.c.l.b16 %v2836
      %v3356 = vunpack.c.l.b16 %v2837
      %v3357 = vunpack.c.l.b16 %v2838
      %v3358 = vunpack.c.l.b16 %v2839
      %v3359 = vunpack.c.l.b16 %v2840
      %v3360 = vunpack.c.l.b16 %v2841
      %v3361 = vunpack.c.l.b16 %v2842
      %v3362 = vunpack.c.l.b16 %v2843
      %v3363 = vunpack.c.l.b16 %v2844
      %v3364 = vunpack.c.l.b16 %v2845
      %v3365 = vunpack.c.l.b16 %v2846
      %v3366 = vunpack.c.l.b16 %v2847
      %v3367 = vunpack.c.l.b16 %v2848
      %v3368 = vunpack.c.l.b16 %v2849
      %v3369 = vunpack.c.l.b16 %v2850
      %v3370 = vunpack.c.l.b16 %v2851
      %v3371 = vunpack.c.l.b16 %v2852
      %v3372 = vunpack.c.l.b16 %v2853
      %v3373 = vunpack.c.l.b16 %v2854
      %v3374 = vunpack.c.l.b16 %v2855
      %v3375 = vunpack.c.l.b16 %v2856
      %v3376 = vpack.c.b16 %v3121, %v3120
      %v3377 = vpack.c.b16 %v3123, %v3122
      %v3378 = vpack.c.b16 %v3125, %v3124
      %v3379 = vpack.c.b16 %v3127, %v3126
      %v3380 = vpack.c.b16 %v3129, %v3128
      %v3381 = vpack.c.b16 %v3131, %v3130
      %v3382 = vpack.c.b16 %v3133, %v3132
      %v3383 = vpack.c.b16 %v3135, %v3134
      %v3384 = vpack.c.b16 %v3137, %v3136
      %v3385 = vpack.c.b16 %v3139, %v3138
      %v3386 = vpack.c.b16 %v3141, %v3140
      %v3387 = vpack.c.b16 %v3143, %v3142
      %v3388 = vpack.c.b16 %v3145, %v3144
      %v3389 = vpack.c.b16 %v3147, %v3146
      %v3390 = vpack.c.b16 %v3149, %v3148
      %v3391 = vpack.c.b16 %v3151, %v3150
      %v3392 = vpack.c.b16 %v3153, %v3152
      %v3393 = vpack.c.b16 %v3155, %v3154
      %v3394 = vpack.c.b16 %v3157, %v3156
      %v3395 = vpack.c.b16 %v3159, %v3158
      %v3396 = vpack.c.b16 %v3161, %v3160
      %v3397 = vpack.c.b16 %v3163, %v3162
      %v3398 = vpack.c.b16 %v3165, %v3164
      %v3399 = vpack.c.b16 %v3167, %v3166
      %v3400 = vpack.c.b16 %v3169, %v3168
      %v3401 = vpack.c.b16 %v3171, %v3170
      %v3402 = vpack.c.b16 %v3173, %v3172
      %v3403 = vpack.c.b16 %v3175, %v3174
      %v3404 = vpack.c.b16 %v3177, %v3176
      %v3405 = vpack.c.b16 %v3179, %v3178
      %v3406 = vpack.c.b16 %v3181, %v3180
      %v3407 = vpack.c.b16 %v3183, %v3182
      %v3408 = vpack.c.b16 %v3185, %v3184
      %v3409 = vpack.c.b16 %v3187, %v3186
      %v3410 = vpack.c.b16 %v3189, %v3188
      %v3411 = vpack.c.b16 %v3191, %v3190
      %v3412 = vpack.c.b16 %v3193, %v3192
      %v3413 = vpack.c.b16 %v3195, %v3194
      %v3414 = vpack.c.b16 %v3197, %v3196
      %v3415 = vpack.c.b16 %v3199, %v3198
      %v3416 = vpack.c.b16 %v3201, %v3200
      %v3417 = vpack.c.b16 %v3203, %v3202
      %v3418 = vpack.c.b16 %v3205, %v3204
      %v3419 = vpack.c.b16 %v3207, %v3206
      %v3420 = vpack.c.b16 %v3209, %v3208
      %v3421 = vpack.c.b16 %v3211, %v3210
      %v3422 = vpack.c.b16 %v3213, %v3212
      %v3423 = vpack.c.b16 %v3215, %v3214
      %v3424 = vpack.c.b16 %v3217, %v3216
      %v3425 = vpack.c.b16 %v3219, %v3218
      %v3426 = vpack.c.b16 %v3221, %v3220
      %v3427 = vpack.c.b16 %v3223, %v3222
      %v3428 = vpack.c.b16 %v3225, %v3224
      %v3429 = vpack.c.b16 %v3227, %v3226
      %v3430 = vpack.c.b16 %v3229, %v3228
      %v3431 = vpack.c.b16 %v3231, %v3230
      %v3432 = vpack.c.b16 %v3233, %v3232
      %v3433 = vpack.c.b16 %v3235, %v3234
      %v3434 = vpack.c.b16 %v3237, %v3236
      %v3435 = vpack.c.b16 %v3239, %v3238
      %v3436 = vpack.c.b16 %v3241, %v3240
      %v3437 = vpack.c.b16 %v3243, %v3242
      %v3438 = vpack.c.b16 %v3245, %v3244
      %v3439 = vpack.c.b16 %v3247, %v3246
      %v3440 = vpack.c.b16 %v3249, %v3248
      %v3441 = vpack.c.b16 %v3251, %v3250
      %v3442 = vpack.c.b16 %v3253, %v3252
      %v3443 = vpack.c.b16 %v3255, %v3254
      %v3444 = vpack.c.b16 %v3257, %v3256
      %v3445 = vpack.c.b16 %v3259, %v3258
      %v3446 = vpack.c.b16 %v3261, %v3260
      %v3447 = vpack.c.b16 %v3263, %v3262
      %v3448 = vpack.c.b16 %v3265, %v3264
      %v3449 = vpack.c.b16 %v3267, %v3266
      %v3450 = vpack.c.b16 %v3269, %v3268
      %v3451 = vpack.c.b16 %v3271, %v3270
      %v3452 = vpack.c.b16 %v3273, %v3272
      %v3453 = vpack.c.b16 %v3275, %v3274
      %v3454 = vpack.c.b16 %v3277, %v3276
      %v3455 = vpack.c.b16 %v3279, %v3278
      %v3456 = vpack.c.b16 %v3281, %v3280
      %v3457 = vpack.c.b16 %v3283, %v3282
      %v3458 = vpack.c.b16 %v3285, %v3284
      %v3459 = vpack.c.b16 %v3287, %v3286
      %v3460 = vpack.c.b16 %v3289, %v3288
      %v3461 = vpack.c.b16 %v3291, %v3290
      %v3462 = vpack.c.b16 %v3293, %v3292
      %v3463 = vpack.c.b16 %v3295, %v3294
      %v3464 = vpack.c.b16 %v3297, %v3296
      %v3465 = vpack.c.b16 %v3299, %v3298
      %v3466 = vpack.c.b16 %v3301, %v3300
      %v3467 = vpack.c.b16 %v3303, %v3302
      %v3468 = vpack.c.b16 %v3305, %v3304
      %v3469 = vpack.c.b16 %v3307, %v3306
      %v3470 = vpack.c.b16 %v3309, %v3308
      %v3471 = vpack.c.b16 %v3311, %v3310
      %v3472 = vpack.c.b16 %v3313, %v3312
      %v3473 = vpack.c.b16 %v3315, %v3314
      %v3474 = vpack.c.b16 %v3317, %v3316
      %v3475 = vpack.c.b16 %v3319, %v3318
      %v3476 = vpack.c.b16 %v3321, %v3320
      %v3477 = vpack.c.b16 %v3323, %v3322
      %v3478 = vpack.c.b16 %v3325, %v3324
      %v3479 = vpack.c.b16 %v3327, %v3326
      %v3480 = vpack.c.b16 %v3329, %v3328
      %v3481 = vpack.c.b16 %v3331, %v3330
      %v3482 = vpack.c.b16 %v3333, %v3332
      %v3483 = vpack.c.b16 %v3335, %v3334
      %v3484 = vpack.c.b16 %v3337, %v3336
      %v3485 = vpack.c.b16 %v3339, %v3338
      %v3486 = vpack.c.b16 %v3341, %v3340
      %v3487 = vpack.c.b16 %v3343, %v3342
      %v3488 = vpack.c.b16 %v3345, %v3344
      %v3489 = vpack.c.b16 %v3347, %v3346
      %v3490 = vpack.c.b16 %v3349, %v3348
      %v3491 = vpack.c.b16 %v3351, %v3350
      %v3492 = vpack.c.b16 %v3353, %v3352
      %v3493 = vpack.c.b16 %v3355, %v3354
      %v3494 = vpack.c.b16 %v3357, %v3356
      %v3495 = vpack.c.b16 %v3359, %v3358
      %v3496 = vpack.c.b16 %v3361, %v3360
      %v3497 = vpack.c.b16 %v3363, %v3362
      %v3498 = vpack.c.b16 %v3365, %v3364
      %v3499 = vpack.c.b16 %v3367, %v3366
      %v3500 = vpack.c.b16 %v3369, %v3368
      %v3501 = vpack.c.b16 %v3371, %v3370
      %v3502 = vpack.c.b16 %v3373, %v3372
      %v3503 = vpack.c.b16 %v3375, %v3374
      %3632 = vmatprep.subr.bf16.mxu0 0
      %3633 = vmatpush1.bf16.msra.mxu0 %v3376
      %3634 = vmatprep.subr.bf16.mxu0 0
      %3635 = vmatpush1.bf16.msra.mxu0 %v3377
      %3636 = vmatprep.subr.bf16.mxu0 0
      %3637 = vmatpush1.bf16.msra.mxu0 %v3378
      %3638 = vmatprep.subr.bf16.mxu0 0
      %3639 = vmatpush1.bf16.msra.mxu0 %v3379
      %3640 = vmatprep.subr.bf16.mxu0 0
      %3641 = vmatpush1.bf16.msra.mxu0 %v3380
      %3642 = vmatprep.subr.bf16.mxu0 0
      %3643 = vmatpush1.bf16.msra.mxu0 %v3381
      %3644 = vmatprep.subr.bf16.mxu0 0
      %3645 = vmatpush1.bf16.msra.mxu0 %v3382
      %3646 = vmatprep.subr.bf16.mxu0 0
      %3647 = vmatpush1.bf16.msra.mxu0 %v3383
      %3648 = vmatprep.subr.bf16.mxu0 0
      %3649 = vmatpush1.bf16.msra.mxu0 %v3384
      %3650 = vmatprep.subr.bf16.mxu0 0
      %3651 = vmatpush1.bf16.msra.mxu0 %v3385
      %3652 = vmatprep.subr.bf16.mxu0 0
      %3653 = vmatpush1.bf16.msra.mxu0 %v3386
      %3654 = vmatprep.subr.bf16.mxu0 0
      %3655 = vmatpush1.bf16.msra.mxu0 %v3387
      %3656 = vmatprep.subr.bf16.mxu0 0
      %3657 = vmatpush1.bf16.msra.mxu0 %v3388
      %3658 = vmatprep.subr.bf16.mxu0 0
      %3659 = vmatpush1.bf16.msra.mxu0 %v3389
      %3660 = vmatprep.subr.bf16.mxu0 0
      %3661 = vmatpush1.bf16.msra.mxu0 %v3390
      %3662 = vmatprep.subr.bf16.mxu0 0
      %3663 = vmatpush1.bf16.msra.mxu0 %v3391
      %3664 = vmatprep.mubr.bf16.mxu0 %v2346
      %3665 = vmatmul.mubr.bf16.gmra.mrb[0].mxu0 %v2345
      %v3666 = vpop.f32.mrb[0].mxu0
      %v3667 = vadd.f32 %v2862, %v3666
      %v3668 = vpop.f32.mrb[0].mxu0
      %v3669 = vpop.f32.mrb[0].mxu0
      %v3670 = vadd.f32 %v2862, %v3669
      %v3671 = vpop.f32.mrb[0].mxu0
      %3672 = vmatprep.mubr.bf16.mxu0 %v2362
      %3673 = vmatmul.mubr.bf16.gmra.mrb[0].mxu0 %v2361
      %v3674 = vpop.f32.mrb[0].mxu0
      %v3675 = vadd.f32 %v2862, %v3674
      %v3676 = vpop.f32.mrb[0].mxu0
      %v3677 = vpop.f32.mrb[0].mxu0
      %v3678 = vadd.f32 %v2862, %v3677
      %v3679 = vpop.f32.mrb[0].mxu0
      %3680 = vmatprep.mubr.bf16.mxu0 %v2378
      %3681 = vmatmul.mubr.bf16.gmra.mrb[0].mxu0 %v2377
      %v3682 = vpop.f32.mrb[0].mxu0
      %v3683 = vadd.f32 %v2862, %v3682
      %v3684 = vpop.f32.mrb[0].mxu0
      %v3685 = vpop.f32.mrb[0].mxu0
      %v3686 = vadd.f32 %v2862, %v3685
      %v3687 = vpop.f32.mrb[0].mxu0
      %3688 = vmatprep.mubr.bf16.mxu0 %v2394
      %3689 = vmatmul.mubr.bf16.gmra.mrb[0].mxu0 %v2393
      %v3690 = vpop.f32.mrb[0].mxu0
      %v3691 = vadd.f32 %v2862, %v3690
      %v3692 = vpop.f32.mrb[0].mxu0
      %v3693 = vpop.f32.mrb[0].mxu0
      %v3694 = vadd.f32 %v2862, %v3693
      %v3695 = vpop.f32.mrb[0].mxu0
      %3696 = vmatprep.mubr.bf16.mxu0 %v2410
      %3697 = vmatmul.mubr.bf16.gmra.mrb[0].mxu0 %v2409
      %v3698 = vpop.f32.mrb[0].mxu0
      %v3699 = vadd.f32 %v2862, %v3698
      %v3700 = vpop.f32.mrb[0].mxu0
      %v3701 = vpop.f32.mrb[0].mxu0
      %v3702 = vadd.f32 %v2862, %v3701
      %v3703 = vpop.f32.mrb[0].mxu0
      %3704 = vmatprep.mubr.bf16.mxu0 %v2426
      %3705 = vmatmul.mubr.bf16.gmra.mrb[0].mxu0 %v2425
      %v3706 = vpop.f32.mrb[0].mxu0
      %v3707 = vadd.f32 %v2862, %v3706
      %v3708 = vpop.f32.mrb[0].mxu0
      %v3709 = vpop.f32.mrb[0].mxu0
      %v3710 = vadd.f32 %v2862, %v3709
      %v3711 = vpop.f32.mrb[0].mxu0
      %3712 = vmatprep.mubr.bf16.mxu0 %v2442
      %3713 = vmatmul.mubr.bf16.gmra.mrb[0].mxu0 %v2441
      %v3714 = vpop.f32.mrb[0].mxu0
      %v3715 = vadd.f32 %v2862, %v3714
      %v3716 = vpop.f32.mrb[0].mxu0
      %v3717 = vpop.f32.mrb[0].mxu0
      %v3718 = vadd.f32 %v2862, %v3717
      %v3719 = vpop.f32.mrb[0].mxu0
      %3720 = vmatprep.mubr.bf16.mxu0 %v2458
      %3721 = vmatmul.mubr.bf16.gmra.mrb[0].mxu0 %v2457
      %v3722 = vpop.f32.mrb[0].mxu0
      %v3723 = vadd.f32 %v2862, %v3722
      %v3724 = vpop.f32.mrb[0].mxu0
      %v3725 = vpop.f32.mrb[0].mxu0
      %v3726 = vadd.f32 %v2862, %v3725
      %v3727 = vpop.f32.mrb[0].mxu0
      %3728 = vmatprep.mubr.bf16.mxu0 %v2474
      %3729 = vmatmul.mubr.bf16.gmra.mrb[0].mxu0 %v2473
      %v3730 = vpop.f32.mrb[0].mxu0
      %v3731 = vadd.f32 %v2862, %v3730
      %v3732 = vpop.f32.mrb[0].mxu0
      %v3733 = vpop.f32.mrb[0].mxu0
      %v3734 = vadd.f32 %v2862, %v3733
      %v3735 = vpop.f32.mrb[0].mxu0
      %3736 = vmatprep.mubr.bf16.mxu0 %v2490
      %3737 = vmatmul.mubr.bf16.gmra.mrb[0].mxu0 %v2489
      %v3738 = vpop.f32.mrb[0].mxu0
      %v3739 = vadd.f32 %v2862, %v3738
      %v3740 = vpop.f32.mrb[0].mxu0
      %v3741 = vpop.f32.mrb[0].mxu0
      %v3742 = vadd.f32 %v2862, %v3741
      %v3743 = vpop.f32.mrb[0].mxu0
      %3744 = vmatprep.mubr.bf16.mxu0 %v2506
      %3745 = vmatmul.mubr.bf16.gmra.mrb[0].mxu0 %v2505
      %v3746 = vpop.f32.mrb[0].mxu0
      %v3747 = vadd.f32 %v2862, %v3746
      %v3748 = vpop.f32.mrb[0].mxu0
      %v3749 = vpop.f32.mrb[0].mxu0
      %v3750 = vadd.f32 %v2862, %v3749
      %v3751 = vpop.f32.mrb[0].mxu0
      %3752 = vmatprep.mubr.bf16.mxu0 %v2522
      %3753 = vmatmul.mubr.bf16.gmra.mrb[0].mxu0 %v2521
      %v3754 = vpop.f32.mrb[0].mxu0
      %v3755 = vadd.f32 %v2862, %v3754
      %v3756 = vpop.f32.mrb[0].mxu0
      %v3757 = vpop.f32.mrb[0].mxu0
      %v3758 = vadd.f32 %v2862, %v3757
      %v3759 = vpop.f32.mrb[0].mxu0
      %3760 = vmatprep.mubr.bf16.mxu0 %v2538
      %3761 = vmatmul.mubr.bf16.gmra.mrb[0].mxu0 %v2537
      %v3762 = vpop.f32.mrb[0].mxu0
      %v3763 = vadd.f32 %v2862, %v3762
      %v3764 = vpop.f32.mrb[0].mxu0
      %v3765 = vpop.f32.mrb[0].mxu0
      %v3766 = vadd.f32 %v2862, %v3765
      %v3767 = vpop.f32.mrb[0].mxu0
      %3768 = vmatprep.mubr.bf16.mxu0 %v2554
      %3769 = vmatmul.mubr.bf16.gmra.mrb[0].mxu0 %v2553
      %v3770 = vpop.f32.mrb[0].mxu0
      %v3771 = vadd.f32 %v2862, %v3770
      %v3772 = vpop.f32.mrb[0].mxu0
      %v3773 = vpop.f32.mrb[0].mxu0
      %v3774 = vadd.f32 %v2862, %v3773
      %v3775 = vpop.f32.mrb[0].mxu0
      %3776 = vmatprep.mubr.bf16.mxu0 %v2570
      %3777 = vmatmul.mubr.bf16.gmra.mrb[0].mxu0 %v2569
      %v3778 = vpop.f32.mrb[0].mxu0
      %v3779 = vadd.f32 %v2862, %v3778
      %v3780 = vpop.f32.mrb[0].mxu0
      %v3781 = vpop.f32.mrb[0].mxu0
      %v3782 = vadd.f32 %v2862, %v3781
      %v3783 = vpop.f32.mrb[0].mxu0
      %3784 = vmatprep.mubr.bf16.mxu0 %v2586
      %3785 = vmatmul.mubr.bf16.gmra.mrb[0].mxu0 %v2585
      %v3786 = vpop.f32.mrb[0].mxu0
      %v3787 = vadd.f32 %v2862, %v3786
      %v3788 = vpop.f32.mrb[0].mxu0
      %v3789 = vpop.f32.mrb[0].mxu0
      %v3790 = vadd.f32 %v2862, %v3789
      %v3791 = vpop.f32.mrb[0].mxu0
      %3792 = vdwg.mxu0
      %3793 = vmatprep.subr.bf16.mxu0 0
      %3794 = vmatpush1.bf16.msra.mxu0 %v3392
      %3795 = vmatprep.subr.bf16.mxu0 0
      %3796 = vmatpush1.bf16.msra.mxu0 %v3393
      %3797 = vmatprep.subr.bf16.mxu0 0
      %3798 = vmatpush1.bf16.msra.mxu0 %v3394
      %3799 = vmatprep.subr.bf16.mxu0 0
      %3800 = vmatpush1.bf16.msra.mxu0 %v3395
      %3801 = vmatprep.subr.bf16.mxu0 0
      %3802 = vmatpush1.bf16.msra.mxu0 %v3396
      %3803 = vmatprep.subr.bf16.mxu0 0
      %3804 = vmatpush1.bf16.msra.mxu0 %v3397
      %3805 = vmatprep.subr.bf16.mxu0 0
      %3806 = vmatpush1.bf16.msra.mxu0 %v3398
      %3807 = vmatprep.subr.bf16.mxu0 0
      %3808 = vmatpush1.bf16.msra.mxu0 %v3399
      %3809 = vmatprep.subr.bf16.mxu0 0
      %3810 = vmatpush1.bf16.msra.mxu0 %v3400
      %3811 = vmatprep.subr.bf16.mxu0 0
      %3812 = vmatpush1.bf16.msra.mxu0 %v3401
      %3813 = vmatprep.subr.bf16.mxu0 0
      %3814 = vmatpush1.bf16.msra.mxu0 %v3402
      %3815 = vmatprep.subr.bf16.mxu0 0
      %3816 = vmatpush1.bf16.msra.mxu0 %v3403
      %3817 = vmatprep.subr.bf16.mxu0 0
      %3818 = vmatpush1.bf16.msra.mxu0 %v3404
      %3819 = vmatprep.subr.bf16.mxu0 0
      %3820 = vmatpush1.bf16.msra.mxu0 %v3405
      %3821 = vmatprep.subr.bf16.mxu0 0
      %3822 = vmatpush1.bf16.msra.mxu0 %v3406
      %3823 = vmatprep.subr.bf16.mxu0 0
      %3824 = vmatpush1.bf16.msra.mxu0 %v3407
      %3825 = vmatprep.mubr.bf16.mxu0 %v2348
      %3826 = vmatmul.mubr.bf16.gmra.mrb[0].mxu0 %v2347
      %v3827 = vpop.f32.mrb[0].mxu0
      %v3828 = vadd.f32 %v3667, %v3827
      %v3829 = vpop.f32.mrb[0].mxu0
      %v3830 = vpop.f32.mrb[0].mxu0
      %v3831 = vadd.f32 %v3670, %v3830
      %v3832 = vpop.f32.mrb[0].mxu0
      %3833 = vmatprep.mubr.bf16.mxu0 %v2364
      %3834 = vmatmul.mubr.bf16.gmra.mrb[0].mxu0 %v2363
      %v3835 = vpop.f32.mrb[0].mxu0
      %v3836 = vadd.f32 %v3675, %v3835
      %v3837 = vpop.f32.mrb[0].mxu0
      %v3838 = vpop.f32.mrb[0].mxu0
      %v3839 = vadd.f32 %v3678, %v3838
      %v3840 = vpop.f32.mrb[0].mxu0
      %3841 = vmatprep.mubr.bf16.mxu0 %v2380
      %3842 = vmatmul.mubr.bf16.gmra.mrb[0].mxu0 %v2379
      %v3843 = vpop.f32.mrb[0].mxu0
      %v3844 = vadd.f32 %v3683, %v3843
      %v3845 = vpop.f32.mrb[0].mxu0
      %v3846 = vpop.f32.mrb[0].mxu0
      %v3847 = vadd.f32 %v3686, %v3846
      %v3848 = vpop.f32.mrb[0].mxu0
      %3849 = vmatprep.mubr.bf16.mxu0 %v2396
      %3850 = vmatmul.mubr.bf16.gmra.mrb[0].mxu0 %v2395
      %v3851 = vpop.f32.mrb[0].mxu0
      %v3852 = vadd.f32 %v3691, %v3851
      %v3853 = vpop.f32.mrb[0].mxu0
      %v3854 = vpop.f32.mrb[0].mxu0
      %v3855 = vadd.f32 %v3694, %v3854
      %v3856 = vpop.f32.mrb[0].mxu0
      %3857 = vmatprep.mubr.bf16.mxu0 %v2412
      %3858 = vmatmul.mubr.bf16.gmra.mrb[0].mxu0 %v2411
      %v3859 = vpop.f32.mrb[0].mxu0
      %v3860 = vadd.f32 %v3699, %v3859
      %v3861 = vpop.f32.mrb[0].mxu0
      %v3862 = vpop.f32.mrb[0].mxu0
      %v3863 = vadd.f32 %v3702, %v3862
      %v3864 = vpop.f32.mrb[0].mxu0
      %3865 = vmatprep.mubr.bf16.mxu0 %v2428
      %3866 = vmatmul.mubr.bf16.gmra.mrb[0].mxu0 %v2427
      %v3867 = vpop.f32.mrb[0].mxu0
      %v3868 = vadd.f32 %v3707, %v3867
      %v3869 = vpop.f32.mrb[0].mxu0
      %v3870 = vpop.f32.mrb[0].mxu0
      %v3871 = vadd.f32 %v3710, %v3870
      %v3872 = vpop.f32.mrb[0].mxu0
      %3873 = vmatprep.mubr.bf16.mxu0 %v2444
      %3874 = vmatmul.mubr.bf16.gmra.mrb[0].mxu0 %v2443
      %v3875 = vpop.f32.mrb[0].mxu0
      %v3876 = vadd.f32 %v3715, %v3875
      %v3877 = vpop.f32.mrb[0].mxu0
      %v3878 = vpop.f32.mrb[0].mxu0
      %v3879 = vadd.f32 %v3718, %v3878
      %v3880 = vpop.f32.mrb[0].mxu0
      %3881 = vmatprep.mubr.bf16.mxu0 %v2460
      %3882 = vmatmul.mubr.bf16.gmra.mrb[0].mxu0 %v2459
      %v3883 = vpop.f32.mrb[0].mxu0
      %v3884 = vadd.f32 %v3723, %v3883
      %v3885 = vpop.f32.mrb[0].mxu0
      %v3886 = vpop.f32.mrb[0].mxu0
      %v3887 = vadd.f32 %v3726, %v3886
      %v3888 = vpop.f32.mrb[0].mxu0
      %3889 = vmatprep.mubr.bf16.mxu0 %v2476
      %3890 = vmatmul.mubr.bf16.gmra.mrb[0].mxu0 %v2475
      %v3891 = vpop.f32.mrb[0].mxu0
      %v3892 = vadd.f32 %v3731, %v3891
      %v3893 = vpop.f32.mrb[0].mxu0
      %v3894 = vpop.f32.mrb[0].mxu0
      %v3895 = vadd.f32 %v3734, %v3894
      %v3896 = vpop.f32.mrb[0].mxu0
      %3897 = vmatprep.mubr.bf16.mxu0 %v2492
      %3898 = vmatmul.mubr.bf16.gmra.mrb[0].mxu0 %v2491
      %v3899 = vpop.f32.mrb[0].mxu0
      %v3900 = vadd.f32 %v3739, %v3899
      %v3901 = vpop.f32.mrb[0].mxu0
      %v3902 = vpop.f32.mrb[0].mxu0
      %v3903 = vadd.f32 %v3742, %v3902
      %v3904 = vpop.f32.mrb[0].mxu0
      %3905 = vmatprep.mubr.bf16.mxu0 %v2508
      %3906 = vmatmul.mubr.bf16.gmra.mrb[0].mxu0 %v2507
      %v3907 = vpop.f32.mrb[0].mxu0
      %v3908 = vadd.f32 %v3747, %v3907
      %v3909 = vpop.f32.mrb[0].mxu0
      %v3910 = vpop.f32.mrb[0].mxu0
      %v3911 = vadd.f32 %v3750, %v3910
      %v3912 = vpop.f32.mrb[0].mxu0
      %3913 = vmatprep.mubr.bf16.mxu0 %v2524
      %3914 = vmatmul.mubr.bf16.gmra.mrb[0].mxu0 %v2523
      %v3915 = vpop.f32.mrb[0].mxu0
      %v3916 = vadd.f32 %v3755, %v3915
      %v3917 = vpop.f32.mrb[0].mxu0
      %v3918 = vpop.f32.mrb[0].mxu0
      %v3919 = vadd.f32 %v3758, %v3918
      %v3920 = vpop.f32.mrb[0].mxu0
      %3921 = vmatprep.mubr.bf16.mxu0 %v2540
      %3922 = vmatmul.mubr.bf16.gmra.mrb[0].mxu0 %v2539
      %v3923 = vpop.f32.mrb[0].mxu0
      %v3924 = vadd.f32 %v3763, %v3923
      %v3925 = vpop.f32.mrb[0].mxu0
      %v3926 = vpop.f32.mrb[0].mxu0
      %v3927 = vadd.f32 %v3766, %v3926
      %v3928 = vpop.f32.mrb[0].mxu0
      %3929 = vmatprep.mubr.bf16.mxu0 %v2556
      %3930 = vmatmul.mubr.bf16.gmra.mrb[0].mxu0 %v2555
      %v3931 = vpop.f32.mrb[0].mxu0
      %v3932 = vadd.f32 %v3771, %v3931
      %v3933 = vpop.f32.mrb[0].mxu0
      %v3934 = vpop.f32.mrb[0].mxu0
      %v3935 = vadd.f32 %v3774, %v3934
      %v3936 = vpop.f32.mrb[0].mxu0
      %3937 = vmatprep.mubr.bf16.mxu0 %v2572
      %3938 = vmatmul.mubr.bf16.gmra.mrb[0].mxu0 %v2571
      %v3939 = vpop.f32.mrb[0].mxu0
      %v3940 = vadd.f32 %v3779, %v3939
      %v3941 = vpop.f32.mrb[0].mxu0
      %v3942 = vpop.f32.mrb[0].mxu0
      %v3943 = vadd.f32 %v3782, %v3942
      %v3944 = vpop.f32.mrb[0].mxu0
      %3945 = vmatprep.mubr.bf16.mxu0 %v2588
      %3946 = vmatmul.mubr.bf16.gmra.mrb[0].mxu0 %v2587
      %v3947 = vpop.f32.mrb[0].mxu0
      %v3948 = vadd.f32 %v3787, %v3947
      %v3949 = vpop.f32.mrb[0].mxu0
      %v3950 = vpop.f32.mrb[0].mxu0
      %v3951 = vadd.f32 %v3790, %v3950
      %v3952 = vpop.f32.mrb[0].mxu0
      %3953 = vdwg.mxu0
      %3954 = vmatprep.subr.bf16.mxu0 0
      %3955 = vmatpush1.bf16.msra.mxu0 %v3408
      %3956 = vmatprep.subr.bf16.mxu0 0
      %3957 = vmatpush1.bf16.msra.mxu0 %v3409
      %3958 = vmatprep.subr.bf16.mxu0 0
      %3959 = vmatpush1.bf16.msra.mxu0 %v3410
      %3960 = vmatprep.subr.bf16.mxu0 0
      %3961 = vmatpush1.bf16.msra.mxu0 %v3411
      %3962 = vmatprep.subr.bf16.mxu0 0
      %3963 = vmatpush1.bf16.msra.mxu0 %v3412
      %3964 = vmatprep.subr.bf16.mxu0 0
      %3965 = vmatpush1.bf16.msra.mxu0 %v3413
      %3966 = vmatprep.subr.bf16.mxu0 0
      %3967 = vmatpush1.bf16.msra.mxu0 %v3414
      %3968 = vmatprep.subr.bf16.mxu0 0
      %3969 = vmatpush1.bf16.msra.mxu0 %v3415
      %3970 = vmatprep.subr.bf16.mxu0 0
      %3971 = vmatpush1.bf16.msra.mxu0 %v3416
      %3972 = vmatprep.subr.bf16.mxu0 0
      %3973 = vmatpush1.bf16.msra.mxu0 %v3417
      %3974 = vmatprep.subr.bf16.mxu0 0
      %3975 = vmatpush1.bf16.msra.mxu0 %v3418
      %3976 = vmatprep.subr.bf16.mxu0 0
      %3977 = vmatpush1.bf16.msra.mxu0 %v3419
      %3978 = vmatprep.subr.bf16.mxu0 0
      %3979 = vmatpush1.bf16.msra.mxu0 %v3420
      %3980 = vmatprep.subr.bf16.mxu0 0
      %3981 = vmatpush1.bf16.msra.mxu0 %v3421
      %3982 = vmatprep.subr.bf16.mxu0 0
      %3983 = vmatpush1.bf16.msra.mxu0 %v3422
      %3984 = vmatprep.subr.bf16.mxu0 0
      %3985 = vmatpush1.bf16.msra.mxu0 %v3423
      %3986 = vmatprep.mubr.bf16.mxu0 %v2350
      %3987 = vmatmul.mubr.bf16.gmra.mrb[0].mxu0 %v2349
      %v3988 = vpop.f32.mrb[0].mxu0
      %v3989 = vadd.f32 %v3828, %v3988
      %v3990 = vpop.f32.mrb[0].mxu0
      %v3991 = vpop.f32.mrb[0].mxu0
      %v3992 = vadd.f32 %v3831, %v3991
      %v3993 = vpop.f32.mrb[0].mxu0
      %3994 = vmatprep.mubr.bf16.mxu0 %v2366
      %3995 = vmatmul.mubr.bf16.gmra.mrb[0].mxu0 %v2365
      %v3996 = vpop.f32.mrb[0].mxu0
      %v3997 = vadd.f32 %v3836, %v3996
      %v3998 = vpop.f32.mrb[0].mxu0
      %v3999 = vpop.f32.mrb[0].mxu0
      %v4000 = vadd.f32 %v3839, %v3999
      %v4001 = vpop.f32.mrb[0].mxu0
      %4002 = vmatprep.mubr.bf16.mxu0 %v2382
      %4003 = vmatmul.mubr.bf16.gmra.mrb[0].mxu0 %v2381
      %v4004 = vpop.f32.mrb[0].mxu0
      %v4005 = vadd.f32 %v3844, %v4004
      %v4006 = vpop.f32.mrb[0].mxu0
      %v4007 = vpop.f32.mrb[0].mxu0
      %v4008 = vadd.f32 %v3847, %v4007
      %v4009 = vpop.f32.mrb[0].mxu0
      %4010 = vmatprep.mubr.bf16.mxu0 %v2398
      %4011 = vmatmul.mubr.bf16.gmra.mrb[0].mxu0 %v2397
      %v4012 = vpop.f32.mrb[0].mxu0
      %v4013 = vadd.f32 %v3852, %v4012
      %v4014 = vpop.f32.mrb[0].mxu0
      %v4015 = vpop.f32.mrb[0].mxu0
      %v4016 = vadd.f32 %v3855, %v4015
      %v4017 = vpop.f32.mrb[0].mxu0
      %4018 = vmatprep.mubr.bf16.mxu0 %v2414
      %4019 = vmatmul.mubr.bf16.gmra.mrb[0].mxu0 %v2413
      %v4020 = vpop.f32.mrb[0].mxu0
      %v4021 = vadd.f32 %v3860, %v4020
      %v4022 = vpop.f32.mrb[0].mxu0
      %v4023 = vpop.f32.mrb[0].mxu0
      %v4024 = vadd.f32 %v3863, %v4023
      %v4025 = vpop.f32.mrb[0].mxu0
      %4026 = vmatprep.mubr.bf16.mxu0 %v2430
      %4027 = vmatmul.mubr.bf16.gmra.mrb[0].mxu0 %v2429
      %v4028 = vpop.f32.mrb[0].mxu0
      %v4029 = vadd.f32 %v3868, %v4028
      %v4030 = vpop.f32.mrb[0].mxu0
      %v4031 = vpop.f32.mrb[0].mxu0
      %v4032 = vadd.f32 %v3871, %v4031
      %v4033 = vpop.f32.mrb[0].mxu0
      %4034 = vmatprep.mubr.bf16.mxu0 %v2446
      %4035 = vmatmul.mubr.bf16.gmra.mrb[0].mxu0 %v2445
      %v4036 = vpop.f32.mrb[0].mxu0
      %v4037 = vadd.f32 %v3876, %v4036
      %v4038 = vpop.f32.mrb[0].mxu0
      %v4039 = vpop.f32.mrb[0].mxu0
      %v4040 = vadd.f32 %v3879, %v4039
      %v4041 = vpop.f32.mrb[0].mxu0
      %4042 = vmatprep.mubr.bf16.mxu0 %v2462
      %4043 = vmatmul.mubr.bf16.gmra.mrb[0].mxu0 %v2461
      %v4044 = vpop.f32.mrb[0].mxu0
      %v4045 = vadd.f32 %v3884, %v4044
      %v4046 = vpop.f32.mrb[0].mxu0
      %v4047 = vpop.f32.mrb[0].mxu0
      %v4048 = vadd.f32 %v3887, %v4047
      %v4049 = vpop.f32.mrb[0].mxu0
      %4050 = vmatprep.mubr.bf16.mxu0 %v2478
      %4051 = vmatmul.mubr.bf16.gmra.mrb[0].mxu0 %v2477
      %v4052 = vpop.f32.mrb[0].mxu0
      %v4053 = vadd.f32 %v3892, %v4052
      %v4054 = vpop.f32.mrb[0].mxu0
      %v4055 = vpop.f32.mrb[0].mxu0
      %v4056 = vadd.f32 %v3895, %v4055
      %v4057 = vpop.f32.mrb[0].mxu0
      %4058 = vmatprep.mubr.bf16.mxu0 %v2494
      %4059 = vmatmul.mubr.bf16.gmra.mrb[0].mxu0 %v2493
      %v4060 = vpop.f32.mrb[0].mxu0
      %v4061 = vadd.f32 %v3900, %v4060
      %v4062 = vpop.f32.mrb[0].mxu0
      %v4063 = vpop.f32.mrb[0].mxu0
      %v4064 = vadd.f32 %v3903, %v4063
      %v4065 = vpop.f32.mrb[0].mxu0
      %4066 = vmatprep.mubr.bf16.mxu0 %v2510
      %4067 = vmatmul.mubr.bf16.gmra.mrb[0].mxu0 %v2509
      %v4068 = vpop.f32.mrb[0].mxu0
      %v4069 = vadd.f32 %v3908, %v4068
      %v4070 = vpop.f32.mrb[0].mxu0
      %v4071 = vpop.f32.mrb[0].mxu0
      %v4072 = vadd.f32 %v3911, %v4071
      %v4073 = vpop.f32.mrb[0].mxu0
      %4074 = vmatprep.mubr.bf16.mxu0 %v2526
      %4075 = vmatmul.mubr.bf16.gmra.mrb[0].mxu0 %v2525
      %v4076 = vpop.f32.mrb[0].mxu0
      %v4077 = vadd.f32 %v3916, %v4076
      %v4078 = vpop.f32.mrb[0].mxu0
      %v4079 = vpop.f32.mrb[0].mxu0
      %v4080 = vadd.f32 %v3919, %v4079
      %v4081 = vpop.f32.mrb[0].mxu0
      %4082 = vmatprep.mubr.bf16.mxu0 %v2542
      %4083 = vmatmul.mubr.bf16.gmra.mrb[0].mxu0 %v2541
      %v4084 = vpop.f32.mrb[0].mxu0
      %v4085 = vadd.f32 %v3924, %v4084
      %v4086 = vpop.f32.mrb[0].mxu0
      %v4087 = vpop.f32.mrb[0].mxu0
      %v4088 = vadd.f32 %v3927, %v4087
      %v4089 = vpop.f32.mrb[0].mxu0
      %4090 = vmatprep.mubr.bf16.mxu0 %v2558
      %4091 = vmatmul.mubr.bf16.gmra.mrb[0].mxu0 %v2557
      %v4092 = vpop.f32.mrb[0].mxu0
      %v4093 = vadd.f32 %v3932, %v4092
      %v4094 = vpop.f32.mrb[0].mxu0
      %v4095 = vpop.f32.mrb[0].mxu0
      %v4096 = vadd.f32 %v3935, %v4095
      %v4097 = vpop.f32.mrb[0].mxu0
      %4098 = vmatprep.mubr.bf16.mxu0 %v2574
      %4099 = vmatmul.mubr.bf16.gmra.mrb[0].mxu0 %v2573
      %v4100 = vpop.f32.mrb[0].mxu0
      %v4101 = vadd.f32 %v3940, %v4100
      %v4102 = vpop.f32.mrb[0].mxu0
      %v4103 = vpop.f32.mrb[0].mxu0
      %v4104 = vadd.f32 %v3943, %v4103
      %v4105 = vpop.f32.mrb[0].mxu0
      %4106 = vmatprep.mubr.bf16.mxu0 %v2590
      %4107 = vmatmul.mubr.bf16.gmra.mrb[0].mxu0 %v2589
      %v4108 = vpop.f32.mrb[0].mxu0
      %v4109 = vadd.f32 %v3948, %v4108
      %v4110 = vpop.f32.mrb[0].mxu0
      %v4111 = vpop.f32.mrb[0].mxu0
      %v4112 = vadd.f32 %v3951, %v4111
      %v4113 = vpop.f32.mrb[0].mxu0
      %4114 = vdwg.mxu0
      %4115 = vmatprep.subr.bf16.mxu0 0
      %4116 = vmatpush1.bf16.msra.mxu0 %v3424
      %4117 = vmatprep.subr.bf16.mxu0 0
      %4118 = vmatpush1.bf16.msra.mxu0 %v3425
      %4119 = vmatprep.subr.bf16.mxu0 0
      %4120 = vmatpush1.bf16.msra.mxu0 %v3426
      %4121 = vmatprep.subr.bf16.mxu0 0
      %4122 = vmatpush1.bf16.msra.mxu0 %v3427
      %4123 = vmatprep.subr.bf16.mxu0 0
      %4124 = vmatpush1.bf16.msra.mxu0 %v3428
      %4125 = vmatprep.subr.bf16.mxu0 0
      %4126 = vmatpush1.bf16.msra.mxu0 %v3429
      %4127 = vmatprep.subr.bf16.mxu0 0
      %4128 = vmatpush1.bf16.msra.mxu0 %v3430
      %4129 = vmatprep.subr.bf16.mxu0 0
      %4130 = vmatpush1.bf16.msra.mxu0 %v3431
      %4131 = vmatprep.subr.bf16.mxu0 0
      %4132 = vmatpush1.bf16.msra.mxu0 %v3432
      %4133 = vmatprep.subr.bf16.mxu0 0
      %4134 = vmatpush1.bf16.msra.mxu0 %v3433
      %4135 = vmatprep.subr.bf16.mxu0 0
      %4136 = vmatpush1.bf16.msra.mxu0 %v3434
      %4137 = vmatprep.subr.bf16.mxu0 0
      %4138 = vmatpush1.bf16.msra.mxu0 %v3435
      %4139 = vmatprep.subr.bf16.mxu0 0
      %4140 = vmatpush1.bf16.msra.mxu0 %v3436
      %4141 = vmatprep.subr.bf16.mxu0 0
      %4142 = vmatpush1.bf16.msra.mxu0 %v3437
      %4143 = vmatprep.subr.bf16.mxu0 0
      %4144 = vmatpush1.bf16.msra.mxu0 %v3438
      %4145 = vmatprep.subr.bf16.mxu0 0
      %4146 = vmatpush1.bf16.msra.mxu0 %v3439
      %4147 = vmatprep.mubr.bf16.mxu0 %v2352
      %4148 = vmatmul.mubr.bf16.gmra.mrb[0].mxu0 %v2351
      %v4149 = vpop.f32.mrb[0].mxu0
      %v4150 = vadd.f32 %v3989, %v4149
      %v4151 = vpop.f32.mrb[0].mxu0
      %v4152 = vpop.f32.mrb[0].mxu0
      %v4153 = vadd.f32 %v3992, %v4152
      %v4154 = vpop.f32.mrb[0].mxu0
      %4155 = vmatprep.mubr.bf16.mxu0 %v2368
      %4156 = vmatmul.mubr.bf16.gmra.mrb[0].mxu0 %v2367
      %v4157 = vpop.f32.mrb[0].mxu0
      %v4158 = vadd.f32 %v3997, %v4157
      %v4159 = vpop.f32.mrb[0].mxu0
      %v4160 = vpop.f32.mrb[0].mxu0
      %v4161 = vadd.f32 %v4000, %v4160
      %v4162 = vpop.f32.mrb[0].mxu0
      %4163 = vmatprep.mubr.bf16.mxu0 %v2384
      %4164 = vmatmul.mubr.bf16.gmra.mrb[0].mxu0 %v2383
      %v4165 = vpop.f32.mrb[0].mxu0
      %v4166 = vadd.f32 %v4005, %v4165
      %v4167 = vpop.f32.mrb[0].mxu0
      %v4168 = vpop.f32.mrb[0].mxu0
      %v4169 = vadd.f32 %v4008, %v4168
      %v4170 = vpop.f32.mrb[0].mxu0
      %4171 = vmatprep.mubr.bf16.mxu0 %v2400
      %4172 = vmatmul.mubr.bf16.gmra.mrb[0].mxu0 %v2399
      %v4173 = vpop.f32.mrb[0].mxu0
      %v4174 = vadd.f32 %v4013, %v4173
      %v4175 = vpop.f32.mrb[0].mxu0
      %v4176 = vpop.f32.mrb[0].mxu0
      %v4177 = vadd.f32 %v4016, %v4176
      %v4178 = vpop.f32.mrb[0].mxu0
      %4179 = vmatprep.mubr.bf16.mxu0 %v2416
      %4180 = vmatmul.mubr.bf16.gmra.mrb[0].mxu0 %v2415
      %v4181 = vpop.f32.mrb[0].mxu0
      %v4182 = vadd.f32 %v4021, %v4181
      %v4183 = vpop.f32.mrb[0].mxu0
      %v4184 = vpop.f32.mrb[0].mxu0
      %v4185 = vadd.f32 %v4024, %v4184
      %v4186 = vpop.f32.mrb[0].mxu0
      %4187 = vmatprep.mubr.bf16.mxu0 %v2432
      %4188 = vmatmul.mubr.bf16.gmra.mrb[0].mxu0 %v2431
      %v4189 = vpop.f32.mrb[0].mxu0
      %v4190 = vadd.f32 %v4029, %v4189
      %v4191 = vpop.f32.mrb[0].mxu0
      %v4192 = vpop.f32.mrb[0].mxu0
      %v4193 = vadd.f32 %v4032, %v4192
      %v4194 = vpop.f32.mrb[0].mxu0
      %4195 = vmatprep.mubr.bf16.mxu0 %v2448
      %4196 = vmatmul.mubr.bf16.gmra.mrb[0].mxu0 %v2447
      %v4197 = vpop.f32.mrb[0].mxu0
      %v4198 = vadd.f32 %v4037, %v4197
      %v4199 = vpop.f32.mrb[0].mxu0
      %v4200 = vpop.f32.mrb[0].mxu0
      %v4201 = vadd.f32 %v4040, %v4200
      %v4202 = vpop.f32.mrb[0].mxu0
      %4203 = vmatprep.mubr.bf16.mxu0 %v2464
      %4204 = vmatmul.mubr.bf16.gmra.mrb[0].mxu0 %v2463
      %v4205 = vpop.f32.mrb[0].mxu0
      %v4206 = vadd.f32 %v4045, %v4205
      %v4207 = vpop.f32.mrb[0].mxu0
      %v4208 = vpop.f32.mrb[0].mxu0
      %v4209 = vadd.f32 %v4048, %v4208
      %v4210 = vpop.f32.mrb[0].mxu0
      %4211 = vmatprep.mubr.bf16.mxu0 %v2480
      %4212 = vmatmul.mubr.bf16.gmra.mrb[0].mxu0 %v2479
      %v4213 = vpop.f32.mrb[0].mxu0
      %v4214 = vadd.f32 %v4053, %v4213
      %v4215 = vpop.f32.mrb[0].mxu0
      %v4216 = vpop.f32.mrb[0].mxu0
      %v4217 = vadd.f32 %v4056, %v4216
      %v4218 = vpop.f32.mrb[0].mxu0
      %4219 = vmatprep.mubr.bf16.mxu0 %v2496
      %4220 = vmatmul.mubr.bf16.gmra.mrb[0].mxu0 %v2495
      %v4221 = vpop.f32.mrb[0].mxu0
      %v4222 = vadd.f32 %v4061, %v4221
      %v4223 = vpop.f32.mrb[0].mxu0
      %v4224 = vpop.f32.mrb[0].mxu0
      %v4225 = vadd.f32 %v4064, %v4224
      %v4226 = vpop.f32.mrb[0].mxu0
      %4227 = vmatprep.mubr.bf16.mxu0 %v2512
      %4228 = vmatmul.mubr.bf16.gmra.mrb[0].mxu0 %v2511
      %v4229 = vpop.f32.mrb[0].mxu0
      %v4230 = vadd.f32 %v4069, %v4229
      %v4231 = vpop.f32.mrb[0].mxu0
      %v4232 = vpop.f32.mrb[0].mxu0
      %v4233 = vadd.f32 %v4072, %v4232
      %v4234 = vpop.f32.mrb[0].mxu0
      %4235 = vmatprep.mubr.bf16.mxu0 %v2528
      %4236 = vmatmul.mubr.bf16.gmra.mrb[0].mxu0 %v2527
      %v4237 = vpop.f32.mrb[0].mxu0
      %v4238 = vadd.f32 %v4077, %v4237
      %v4239 = vpop.f32.mrb[0].mxu0
      %v4240 = vpop.f32.mrb[0].mxu0
      %v4241 = vadd.f32 %v4080, %v4240
      %v4242 = vpop.f32.mrb[0].mxu0
      %4243 = vmatprep.mubr.bf16.mxu0 %v2544
      %4244 = vmatmul.mubr.bf16.gmra.mrb[0].mxu0 %v2543
      %v4245 = vpop.f32.mrb[0].mxu0
      %v4246 = vadd.f32 %v4085, %v4245
      %v4247 = vpop.f32.mrb[0].mxu0
      %v4248 = vpop.f32.mrb[0].mxu0
      %v4249 = vadd.f32 %v4088, %v4248
      %v4250 = vpop.f32.mrb[0].mxu0
      %4251 = vmatprep.mubr.bf16.mxu0 %v2560
      %4252 = vmatmul.mubr.bf16.gmra.mrb[0].mxu0 %v2559
      %v4253 = vpop.f32.mrb[0].mxu0
      %v4254 = vadd.f32 %v4093, %v4253
      %v4255 = vpop.f32.mrb[0].mxu0
      %v4256 = vpop.f32.mrb[0].mxu0
      %v4257 = vadd.f32 %v4096, %v4256
      %v4258 = vpop.f32.mrb[0].mxu0
      %4259 = vmatprep.mubr.bf16.mxu0 %v2576
      %4260 = vmatmul.mubr.bf16.gmra.mrb[0].mxu0 %v2575
      %v4261 = vpop.f32.mrb[0].mxu0
      %v4262 = vadd.f32 %v4101, %v4261
      %v4263 = vpop.f32.mrb[0].mxu0
      %v4264 = vpop.f32.mrb[0].mxu0
      %v4265 = vadd.f32 %v4104, %v4264
      %v4266 = vpop.f32.mrb[0].mxu0
      %4267 = vmatprep.mubr.bf16.mxu0 %v2592
      %4268 = vmatmul.mubr.bf16.gmra.mrb[0].mxu0 %v2591
      %v4269 = vpop.f32.mrb[0].mxu0
      %v4270 = vadd.f32 %v4109, %v4269
      %v4271 = vpop.f32.mrb[0].mxu0
      %v4272 = vpop.f32.mrb[0].mxu0
      %v4273 = vadd.f32 %v4112, %v4272
      %v4274 = vpop.f32.mrb[0].mxu0
      %4275 = vdwg.mxu0
      %4276 = vmatprep.subr.bf16.mxu0 0
      %4277 = vmatpush1.bf16.msra.mxu0 %v3440
      %4278 = vmatprep.subr.bf16.mxu0 0
      %4279 = vmatpush1.bf16.msra.mxu0 %v3441
      %4280 = vmatprep.subr.bf16.mxu0 0
      %4281 = vmatpush1.bf16.msra.mxu0 %v3442
      %4282 = vmatprep.subr.bf16.mxu0 0
      %4283 = vmatpush1.bf16.msra.mxu0 %v3443
      %4284 = vmatprep.subr.bf16.mxu0 0
      %4285 = vmatpush1.bf16.msra.mxu0 %v3444
      %4286 = vmatprep.subr.bf16.mxu0 0
      %4287 = vmatpush1.bf16.msra.mxu0 %v3445
      %4288 = vmatprep.subr.bf16.mxu0 0
      %4289 = vmatpush1.bf16.msra.mxu0 %v3446
      %4290 = vmatprep.subr.bf16.mxu0 0
      %4291 = vmatpush1.bf16.msra.mxu0 %v3447
      %4292 = vmatprep.subr.bf16.mxu0 0
      %4293 = vmatpush1.bf16.msra.mxu0 %v3448
      %4294 = vmatprep.subr.bf16.mxu0 0
      %4295 = vmatpush1.bf16.msra.mxu0 %v3449
      %4296 = vmatprep.subr.bf16.mxu0 0
      %4297 = vmatpush1.bf16.msra.mxu0 %v3450
      %4298 = vmatprep.subr.bf16.mxu0 0
      %4299 = vmatpush1.bf16.msra.mxu0 %v3451
      %4300 = vmatprep.subr.bf16.mxu0 0
      %4301 = vmatpush1.bf16.msra.mxu0 %v3452
      %4302 = vmatprep.subr.bf16.mxu0 0
      %4303 = vmatpush1.bf16.msra.mxu0 %v3453
      %4304 = vmatprep.subr.bf16.mxu0 0
      %4305 = vmatpush1.bf16.msra.mxu0 %v3454
      %4306 = vmatprep.subr.bf16.mxu0 0
      %4307 = vmatpush1.bf16.msra.mxu0 %v3455
      %4308 = vmatprep.mubr.bf16.mxu0 %v2354
      %4309 = vmatmul.mubr.bf16.gmra.mrb[0].mxu0 %v2353
      %v4310 = vpop.f32.mrb[0].mxu0
      %v4311 = vadd.f32 %v4150, %v4310
      %v4312 = vpop.f32.mrb[0].mxu0
      %v4313 = vpop.f32.mrb[0].mxu0
      %v4314 = vadd.f32 %v4153, %v4313
      %v4315 = vpop.f32.mrb[0].mxu0
      %4316 = vmatprep.mubr.bf16.mxu0 %v2370
      %4317 = vmatmul.mubr.bf16.gmra.mrb[0].mxu0 %v2369
      %v4318 = vpop.f32.mrb[0].mxu0
      %v4319 = vadd.f32 %v4158, %v4318
      %v4320 = vpop.f32.mrb[0].mxu0
      %v4321 = vpop.f32.mrb[0].mxu0
      %v4322 = vadd.f32 %v4161, %v4321
      %v4323 = vpop.f32.mrb[0].mxu0
      %4324 = vmatprep.mubr.bf16.mxu0 %v2386
      %4325 = vmatmul.mubr.bf16.gmra.mrb[0].mxu0 %v2385
      %v4326 = vpop.f32.mrb[0].mxu0
      %v4327 = vadd.f32 %v4166, %v4326
      %v4328 = vpop.f32.mrb[0].mxu0
      %v4329 = vpop.f32.mrb[0].mxu0
      %v4330 = vadd.f32 %v4169, %v4329
      %v4331 = vpop.f32.mrb[0].mxu0
      %4332 = vmatprep.mubr.bf16.mxu0 %v2402
      %4333 = vmatmul.mubr.bf16.gmra.mrb[0].mxu0 %v2401
      %v4334 = vpop.f32.mrb[0].mxu0
      %v4335 = vadd.f32 %v4174, %v4334
      %v4336 = vpop.f32.mrb[0].mxu0
      %v4337 = vpop.f32.mrb[0].mxu0
      %v4338 = vadd.f32 %v4177, %v4337
      %v4339 = vpop.f32.mrb[0].mxu0
      %4340 = vmatprep.mubr.bf16.mxu0 %v2418
      %4341 = vmatmul.mubr.bf16.gmra.mrb[0].mxu0 %v2417
      %v4342 = vpop.f32.mrb[0].mxu0
      %v4343 = vadd.f32 %v4182, %v4342
      %v4344 = vpop.f32.mrb[0].mxu0
      %v4345 = vpop.f32.mrb[0].mxu0
      %v4346 = vadd.f32 %v4185, %v4345
      %v4347 = vpop.f32.mrb[0].mxu0
      %4348 = vmatprep.mubr.bf16.mxu0 %v2434
      %4349 = vmatmul.mubr.bf16.gmra.mrb[0].mxu0 %v2433
      %v4350 = vpop.f32.mrb[0].mxu0
      %v4351 = vadd.f32 %v4190, %v4350
      %v4352 = vpop.f32.mrb[0].mxu0
      %v4353 = vpop.f32.mrb[0].mxu0
      %v4354 = vadd.f32 %v4193, %v4353
      %v4355 = vpop.f32.mrb[0].mxu0
      %4356 = vmatprep.mubr.bf16.mxu0 %v2450
      %4357 = vmatmul.mubr.bf16.gmra.mrb[0].mxu0 %v2449
      %v4358 = vpop.f32.mrb[0].mxu0
      %v4359 = vadd.f32 %v4198, %v4358
      %v4360 = vpop.f32.mrb[0].mxu0
      %v4361 = vpop.f32.mrb[0].mxu0
      %v4362 = vadd.f32 %v4201, %v4361
      %v4363 = vpop.f32.mrb[0].mxu0
      %4364 = vmatprep.mubr.bf16.mxu0 %v2466
      %4365 = vmatmul.mubr.bf16.gmra.mrb[0].mxu0 %v2465
      %v4366 = vpop.f32.mrb[0].mxu0
      %v4367 = vadd.f32 %v4206, %v4366
      %v4368 = vpop.f32.mrb[0].mxu0
      %v4369 = vpop.f32.mrb[0].mxu0
      %v4370 = vadd.f32 %v4209, %v4369
      %v4371 = vpop.f32.mrb[0].mxu0
      %4372 = vmatprep.mubr.bf16.mxu0 %v2482
      %4373 = vmatmul.mubr.bf16.gmra.mrb[0].mxu0 %v2481
      %v4374 = vpop.f32.mrb[0].mxu0
      %v4375 = vadd.f32 %v4214, %v4374
      %v4376 = vpop.f32.mrb[0].mxu0
      %v4377 = vpop.f32.mrb[0].mxu0
      %v4378 = vadd.f32 %v4217, %v4377
      %v4379 = vpop.f32.mrb[0].mxu0
      %4380 = vmatprep.mubr.bf16.mxu0 %v2498
      %4381 = vmatmul.mubr.bf16.gmra.mrb[0].mxu0 %v2497
      %v4382 = vpop.f32.mrb[0].mxu0
      %v4383 = vadd.f32 %v4222, %v4382
      %v4384 = vpop.f32.mrb[0].mxu0
      %v4385 = vpop.f32.mrb[0].mxu0
      %v4386 = vadd.f32 %v4225, %v4385
      %v4387 = vpop.f32.mrb[0].mxu0
      %4388 = vmatprep.mubr.bf16.mxu0 %v2514
      %4389 = vmatmul.mubr.bf16.gmra.mrb[0].mxu0 %v2513
      %v4390 = vpop.f32.mrb[0].mxu0
      %v4391 = vadd.f32 %v4230, %v4390
      %v4392 = vpop.f32.mrb[0].mxu0
      %v4393 = vpop.f32.mrb[0].mxu0
      %v4394 = vadd.f32 %v4233, %v4393
      %v4395 = vpop.f32.mrb[0].mxu0
      %4396 = vmatprep.mubr.bf16.mxu0 %v2530
      %4397 = vmatmul.mubr.bf16.gmra.mrb[0].mxu0 %v2529
      %v4398 = vpop.f32.mrb[0].mxu0
      %v4399 = vadd.f32 %v4238, %v4398
      %v4400 = vpop.f32.mrb[0].mxu0
      %v4401 = vpop.f32.mrb[0].mxu0
      %v4402 = vadd.f32 %v4241, %v4401
      %v4403 = vpop.f32.mrb[0].mxu0
      %4404 = vmatprep.mubr.bf16.mxu0 %v2546
      %4405 = vmatmul.mubr.bf16.gmra.mrb[0].mxu0 %v2545
      %v4406 = vpop.f32.mrb[0].mxu0
      %v4407 = vadd.f32 %v4246, %v4406
      %v4408 = vpop.f32.mrb[0].mxu0
      %v4409 = vpop.f32.mrb[0].mxu0
      %v4410 = vadd.f32 %v4249, %v4409
      %v4411 = vpop.f32.mrb[0].mxu0
      %4412 = vmatprep.mubr.bf16.mxu0 %v2562
      %4413 = vmatmul.mubr.bf16.gmra.mrb[0].mxu0 %v2561
      %v4414 = vpop.f32.mrb[0].mxu0
      %v4415 = vadd.f32 %v4254, %v4414
      %v4416 = vpop.f32.mrb[0].mxu0
      %v4417 = vpop.f32.mrb[0].mxu0
      %v4418 = vadd.f32 %v4257, %v4417
      %v4419 = vpop.f32.mrb[0].mxu0
      %4420 = vmatprep.mubr.bf16.mxu0 %v2578
      %4421 = vmatmul.mubr.bf16.gmra.mrb[0].mxu0 %v2577
      %v4422 = vpop.f32.mrb[0].mxu0
      %v4423 = vadd.f32 %v4262, %v4422
      %v4424 = vpop.f32.mrb[0].mxu0
      %v4425 = vpop.f32.mrb[0].mxu0
      %v4426 = vadd.f32 %v4265, %v4425
      %v4427 = vpop.f32.mrb[0].mxu0
      %4428 = vmatprep.mubr.bf16.mxu0 %v2594
      %4429 = vmatmul.mubr.bf16.gmra.mrb[0].mxu0 %v2593
      %v4430 = vpop.f32.mrb[0].mxu0
      %v4431 = vadd.f32 %v4270, %v4430
      %v4432 = vpop.f32.mrb[0].mxu0
      %v4433 = vpop.f32.mrb[0].mxu0
      %v4434 = vadd.f32 %v4273, %v4433
      %v4435 = vpop.f32.mrb[0].mxu0
      %4436 = vdwg.mxu0
      %4437 = vmatprep.subr.bf16.mxu0 0
      %4438 = vmatpush1.bf16.msra.mxu0 %v3456
      %4439 = vmatprep.subr.bf16.mxu0 0
      %4440 = vmatpush1.bf16.msra.mxu0 %v3457
      %4441 = vmatprep.subr.bf16.mxu0 0
      %4442 = vmatpush1.bf16.msra.mxu0 %v3458
      %4443 = vmatprep.subr.bf16.mxu0 0
      %4444 = vmatpush1.bf16.msra.mxu0 %v3459
      %4445 = vmatprep.subr.bf16.mxu0 0
      %4446 = vmatpush1.bf16.msra.mxu0 %v3460
      %4447 = vmatprep.subr.bf16.mxu0 0
      %4448 = vmatpush1.bf16.msra.mxu0 %v3461
      %4449 = vmatprep.subr.bf16.mxu0 0
      %4450 = vmatpush1.bf16.msra.mxu0 %v3462
      %4451 = vmatprep.subr.bf16.mxu0 0
      %4452 = vmatpush1.bf16.msra.mxu0 %v3463
      %4453 = vmatprep.subr.bf16.mxu0 0
      %4454 = vmatpush1.bf16.msra.mxu0 %v3464
      %4455 = vmatprep.subr.bf16.mxu0 0
      %4456 = vmatpush1.bf16.msra.mxu0 %v3465
      %4457 = vmatprep.subr.bf16.mxu0 0
      %4458 = vmatpush1.bf16.msra.mxu0 %v3466
      %4459 = vmatprep.subr.bf16.mxu0 0
      %4460 = vmatpush1.bf16.msra.mxu0 %v3467
      %4461 = vmatprep.subr.bf16.mxu0 0
      %4462 = vmatpush1.bf16.msra.mxu0 %v3468
      %4463 = vmatprep.subr.bf16.mxu0 0
      %4464 = vmatpush1.bf16.msra.mxu0 %v3469
      %4465 = vmatprep.subr.bf16.mxu0 0
      %4466 = vmatpush1.bf16.msra.mxu0 %v3470
      %4467 = vmatprep.subr.bf16.mxu0 0
      %4468 = vmatpush1.bf16.msra.mxu0 %v3471
      %4469 = vmatprep.mubr.bf16.mxu0 %v2356
      %4470 = vmatmul.mubr.bf16.gmra.mrb[0].mxu0 %v2355
      %v4471 = vpop.f32.mrb[0].mxu0
      %v4472 = vadd.f32 %v4311, %v4471
      %v4473 = vpop.f32.mrb[0].mxu0
      %v4474 = vpop.f32.mrb[0].mxu0
      %v4475 = vadd.f32 %v4314, %v4474
      %v4476 = vpop.f32.mrb[0].mxu0
      %4477 = vmatprep.mubr.bf16.mxu0 %v2372
      %4478 = vmatmul.mubr.bf16.gmra.mrb[0].mxu0 %v2371
      %v4479 = vpop.f32.mrb[0].mxu0
      %v4480 = vadd.f32 %v4319, %v4479
      %v4481 = vpop.f32.mrb[0].mxu0
      %v4482 = vpop.f32.mrb[0].mxu0
      %v4483 = vadd.f32 %v4322, %v4482
      %v4484 = vpop.f32.mrb[0].mxu0
      %4485 = vmatprep.mubr.bf16.mxu0 %v2388
      %4486 = vmatmul.mubr.bf16.gmra.mrb[0].mxu0 %v2387
      %v4487 = vpop.f32.mrb[0].mxu0
      %v4488 = vadd.f32 %v4327, %v4487
      %v4489 = vpop.f32.mrb[0].mxu0
      %v4490 = vpop.f32.mrb[0].mxu0
      %v4491 = vadd.f32 %v4330, %v4490
      %v4492 = vpop.f32.mrb[0].mxu0
      %4493 = vmatprep.mubr.bf16.mxu0 %v2404
      %4494 = vmatmul.mubr.bf16.gmra.mrb[0].mxu0 %v2403
      %v4495 = vpop.f32.mrb[0].mxu0
      %v4496 = vadd.f32 %v4335, %v4495
      %v4497 = vpop.f32.mrb[0].mxu0
      %v4498 = vpop.f32.mrb[0].mxu0
      %v4499 = vadd.f32 %v4338, %v4498
      %v4500 = vpop.f32.mrb[0].mxu0
      %4501 = vmatprep.mubr.bf16.mxu0 %v2420
      %4502 = vmatmul.mubr.bf16.gmra.mrb[0].mxu0 %v2419
      %v4503 = vpop.f32.mrb[0].mxu0
      %v4504 = vadd.f32 %v4343, %v4503
      %v4505 = vpop.f32.mrb[0].mxu0
      %v4506 = vpop.f32.mrb[0].mxu0
      %v4507 = vadd.f32 %v4346, %v4506
      %v4508 = vpop.f32.mrb[0].mxu0
      %4509 = vmatprep.mubr.bf16.mxu0 %v2436
      %4510 = vmatmul.mubr.bf16.gmra.mrb[0].mxu0 %v2435
      %v4511 = vpop.f32.mrb[0].mxu0
      %v4512 = vadd.f32 %v4351, %v4511
      %v4513 = vpop.f32.mrb[0].mxu0
      %v4514 = vpop.f32.mrb[0].mxu0
      %v4515 = vadd.f32 %v4354, %v4514
      %v4516 = vpop.f32.mrb[0].mxu0
      %4517 = vmatprep.mubr.bf16.mxu0 %v2452
      %4518 = vmatmul.mubr.bf16.gmra.mrb[0].mxu0 %v2451
      %v4519 = vpop.f32.mrb[0].mxu0
      %v4520 = vadd.f32 %v4359, %v4519
      %v4521 = vpop.f32.mrb[0].mxu0
      %v4522 = vpop.f32.mrb[0].mxu0
      %v4523 = vadd.f32 %v4362, %v4522
      %v4524 = vpop.f32.mrb[0].mxu0
      %4525 = vmatprep.mubr.bf16.mxu0 %v2468
      %4526 = vmatmul.mubr.bf16.gmra.mrb[0].mxu0 %v2467
      %v4527 = vpop.f32.mrb[0].mxu0
      %v4528 = vadd.f32 %v4367, %v4527
      %v4529 = vpop.f32.mrb[0].mxu0
      %v4530 = vpop.f32.mrb[0].mxu0
      %v4531 = vadd.f32 %v4370, %v4530
      %v4532 = vpop.f32.mrb[0].mxu0
      %4533 = vmatprep.mubr.bf16.mxu0 %v2484
      %4534 = vmatmul.mubr.bf16.gmra.mrb[0].mxu0 %v2483
      %v4535 = vpop.f32.mrb[0].mxu0
      %v4536 = vadd.f32 %v4375, %v4535
      %v4537 = vpop.f32.mrb[0].mxu0
      %v4538 = vpop.f32.mrb[0].mxu0
      %v4539 = vadd.f32 %v4378, %v4538
      %v4540 = vpop.f32.mrb[0].mxu0
      %4541 = vmatprep.mubr.bf16.mxu0 %v2500
      %4542 = vmatmul.mubr.bf16.gmra.mrb[0].mxu0 %v2499
      %v4543 = vpop.f32.mrb[0].mxu0
      %v4544 = vadd.f32 %v4383, %v4543
      %v4545 = vpop.f32.mrb[0].mxu0
      %v4546 = vpop.f32.mrb[0].mxu0
      %v4547 = vadd.f32 %v4386, %v4546
      %v4548 = vpop.f32.mrb[0].mxu0
      %4549 = vmatprep.mubr.bf16.mxu0 %v2516
      %4550 = vmatmul.mubr.bf16.gmra.mrb[0].mxu0 %v2515
      %v4551 = vpop.f32.mrb[0].mxu0
      %v4552 = vadd.f32 %v4391, %v4551
      %v4553 = vpop.f32.mrb[0].mxu0
      %v4554 = vpop.f32.mrb[0].mxu0
      %v4555 = vadd.f32 %v4394, %v4554
      %v4556 = vpop.f32.mrb[0].mxu0
      %4557 = vmatprep.mubr.bf16.mxu0 %v2532
      %4558 = vmatmul.mubr.bf16.gmra.mrb[0].mxu0 %v2531
      %v4559 = vpop.f32.mrb[0].mxu0
      %v4560 = vadd.f32 %v4399, %v4559
      %v4561 = vpop.f32.mrb[0].mxu0
      %v4562 = vpop.f32.mrb[0].mxu0
      %v4563 = vadd.f32 %v4402, %v4562
      %v4564 = vpop.f32.mrb[0].mxu0
      %4565 = vmatprep.mubr.bf16.mxu0 %v2548
      %4566 = vmatmul.mubr.bf16.gmra.mrb[0].mxu0 %v2547
      %v4567 = vpop.f32.mrb[0].mxu0
      %v4568 = vadd.f32 %v4407, %v4567
      %v4569 = vpop.f32.mrb[0].mxu0
      %v4570 = vpop.f32.mrb[0].mxu0
      %v4571 = vadd.f32 %v4410, %v4570
      %v4572 = vpop.f32.mrb[0].mxu0
      %4573 = vmatprep.mubr.bf16.mxu0 %v2564
      %4574 = vmatmul.mubr.bf16.gmra.mrb[0].mxu0 %v2563
      %v4575 = vpop.f32.mrb[0].mxu0
      %v4576 = vadd.f32 %v4415, %v4575
      %v4577 = vpop.f32.mrb[0].mxu0
      %v4578 = vpop.f32.mrb[0].mxu0
      %v4579 = vadd.f32 %v4418, %v4578
      %v4580 = vpop.f32.mrb[0].mxu0
      %4581 = vmatprep.mubr.bf16.mxu0 %v2580
      %4582 = vmatmul.mubr.bf16.gmra.mrb[0].mxu0 %v2579
      %v4583 = vpop.f32.mrb[0].mxu0
      %v4584 = vadd.f32 %v4423, %v4583
      %v4585 = vpop.f32.mrb[0].mxu0
      %v4586 = vpop.f32.mrb[0].mxu0
      %v4587 = vadd.f32 %v4426, %v4586
      %v4588 = vpop.f32.mrb[0].mxu0
      %4589 = vmatprep.mubr.bf16.mxu0 %v2596
      %4590 = vmatmul.mubr.bf16.gmra.mrb[0].mxu0 %v2595
      %v4591 = vpop.f32.mrb[0].mxu0
      %v4592 = vadd.f32 %v4431, %v4591
      %v4593 = vpop.f32.mrb[0].mxu0
      %v4594 = vpop.f32.mrb[0].mxu0
      %v4595 = vadd.f32 %v4434, %v4594
      %v4596 = vpop.f32.mrb[0].mxu0
      %4597 = vdwg.mxu0
      %4598 = vmatprep.subr.bf16.mxu0 0
      %4599 = vmatpush1.bf16.msra.mxu0 %v3472
      %4600 = vmatprep.subr.bf16.mxu0 0
      %4601 = vmatpush1.bf16.msra.mxu0 %v3473
      %4602 = vmatprep.subr.bf16.mxu0 0
      %4603 = vmatpush1.bf16.msra.mxu0 %v3474
      %4604 = vmatprep.subr.bf16.mxu0 0
      %4605 = vmatpush1.bf16.msra.mxu0 %v3475
      %4606 = vmatprep.subr.bf16.mxu0 0
      %4607 = vmatpush1.bf16.msra.mxu0 %v3476
      %4608 = vmatprep.subr.bf16.mxu0 0
      %4609 = vmatpush1.bf16.msra.mxu0 %v3477
      %4610 = vmatprep.subr.bf16.mxu0 0
      %4611 = vmatpush1.bf16.msra.mxu0 %v3478
      %4612 = vmatprep.subr.bf16.mxu0 0
      %4613 = vmatpush1.bf16.msra.mxu0 %v3479
      %4614 = vmatprep.subr.bf16.mxu0 0
      %4615 = vmatpush1.bf16.msra.mxu0 %v3480
      %4616 = vmatprep.subr.bf16.mxu0 0
      %4617 = vmatpush1.bf16.msra.mxu0 %v3481
      %4618 = vmatprep.subr.bf16.mxu0 0
      %4619 = vmatpush1.bf16.msra.mxu0 %v3482
      %4620 = vmatprep.subr.bf16.mxu0 0
      %4621 = vmatpush1.bf16.msra.mxu0 %v3483
      %4622 = vmatprep.subr.bf16.mxu0 0
      %4623 = vmatpush1.bf16.msra.mxu0 %v3484
      %4624 = vmatprep.subr.bf16.mxu0 0
      %4625 = vmatpush1.bf16.msra.mxu0 %v3485
      %4626 = vmatprep.subr.bf16.mxu0 0
      %4627 = vmatpush1.bf16.msra.mxu0 %v3486
      %4628 = vmatprep.subr.bf16.mxu0 0
      %4629 = vmatpush1.bf16.msra.mxu0 %v3487
      %4630 = vmatprep.mubr.bf16.mxu0 %v2358
      %4631 = vmatmul.mubr.bf16.gmra.mrb[0].mxu0 %v2357
      %v4632 = vpop.f32.mrb[0].mxu0
      %v4633 = vadd.f32 %v4472, %v4632
      %v4634 = vpop.f32.mrb[0].mxu0
      %v4635 = vpop.f32.mrb[0].mxu0
      %v4636 = vadd.f32 %v4475, %v4635
      %v4637 = vpop.f32.mrb[0].mxu0
      %4638 = vmatprep.mubr.bf16.mxu0 %v2374
      %4639 = vmatmul.mubr.bf16.gmra.mrb[0].mxu0 %v2373
      %v4640 = vpop.f32.mrb[0].mxu0
      %v4641 = vadd.f32 %v4480, %v4640
      %v4642 = vpop.f32.mrb[0].mxu0
      %v4643 = vpop.f32.mrb[0].mxu0
      %v4644 = vadd.f32 %v4483, %v4643
      %v4645 = vpop.f32.mrb[0].mxu0
      %4646 = vmatprep.mubr.bf16.mxu0 %v2390
      %4647 = vmatmul.mubr.bf16.gmra.mrb[0].mxu0 %v2389
      %v4648 = vpop.f32.mrb[0].mxu0
      %v4649 = vadd.f32 %v4488, %v4648
      %v4650 = vpop.f32.mrb[0].mxu0
      %v4651 = vpop.f32.mrb[0].mxu0
      %v4652 = vadd.f32 %v4491, %v4651
      %v4653 = vpop.f32.mrb[0].mxu0
      %4654 = vmatprep.mubr.bf16.mxu0 %v2406
      %4655 = vmatmul.mubr.bf16.gmra.mrb[0].mxu0 %v2405
      %v4656 = vpop.f32.mrb[0].mxu0
      %v4657 = vadd.f32 %v4496, %v4656
      %v4658 = vpop.f32.mrb[0].mxu0
      %v4659 = vpop.f32.mrb[0].mxu0
      %v4660 = vadd.f32 %v4499, %v4659
      %v4661 = vpop.f32.mrb[0].mxu0
      %4662 = vmatprep.mubr.bf16.mxu0 %v2422
      %4663 = vmatmul.mubr.bf16.gmra.mrb[0].mxu0 %v2421
      %v4664 = vpop.f32.mrb[0].mxu0
      %v4665 = vadd.f32 %v4504, %v4664
      %v4666 = vpop.f32.mrb[0].mxu0
      %v4667 = vpop.f32.mrb[0].mxu0
      %v4668 = vadd.f32 %v4507, %v4667
      %v4669 = vpop.f32.mrb[0].mxu0
      %4670 = vmatprep.mubr.bf16.mxu0 %v2438
      %4671 = vmatmul.mubr.bf16.gmra.mrb[0].mxu0 %v2437
      %v4672 = vpop.f32.mrb[0].mxu0
      %v4673 = vadd.f32 %v4512, %v4672
      %v4674 = vpop.f32.mrb[0].mxu0
      %v4675 = vpop.f32.mrb[0].mxu0
      %v4676 = vadd.f32 %v4515, %v4675
      %v4677 = vpop.f32.mrb[0].mxu0
      %4678 = vmatprep.mubr.bf16.mxu0 %v2454
      %4679 = vmatmul.mubr.bf16.gmra.mrb[0].mxu0 %v2453
      %v4680 = vpop.f32.mrb[0].mxu0
      %v4681 = vadd.f32 %v4520, %v4680
      %v4682 = vpop.f32.mrb[0].mxu0
      %v4683 = vpop.f32.mrb[0].mxu0
      %v4684 = vadd.f32 %v4523, %v4683
      %v4685 = vpop.f32.mrb[0].mxu0
      %4686 = vmatprep.mubr.bf16.mxu0 %v2470
      %4687 = vmatmul.mubr.bf16.gmra.mrb[0].mxu0 %v2469
      %v4688 = vpop.f32.mrb[0].mxu0
      %v4689 = vadd.f32 %v4528, %v4688
      %v4690 = vpop.f32.mrb[0].mxu0
      %v4691 = vpop.f32.mrb[0].mxu0
      %v4692 = vadd.f32 %v4531, %v4691
      %v4693 = vpop.f32.mrb[0].mxu0
      %4694 = vmatprep.mubr.bf16.mxu0 %v2486
      %4695 = vmatmul.mubr.bf16.gmra.mrb[0].mxu0 %v2485
      %v4696 = vpop.f32.mrb[0].mxu0
      %v4697 = vadd.f32 %v4536, %v4696
      %v4698 = vpop.f32.mrb[0].mxu0
      %v4699 = vpop.f32.mrb[0].mxu0
      %v4700 = vadd.f32 %v4539, %v4699
      %v4701 = vpop.f32.mrb[0].mxu0
      %4702 = vmatprep.mubr.bf16.mxu0 %v2502
      %4703 = vmatmul.mubr.bf16.gmra.mrb[0].mxu0 %v2501
      %v4704 = vpop.f32.mrb[0].mxu0
      %v4705 = vadd.f32 %v4544, %v4704
      %v4706 = vpop.f32.mrb[0].mxu0
      %v4707 = vpop.f32.mrb[0].mxu0
      %v4708 = vadd.f32 %v4547, %v4707
      %v4709 = vpop.f32.mrb[0].mxu0
      %4710 = vmatprep.mubr.bf16.mxu0 %v2518
      %4711 = vmatmul.mubr.bf16.gmra.mrb[0].mxu0 %v2517
      %v4712 = vpop.f32.mrb[0].mxu0
      %v4713 = vadd.f32 %v4552, %v4712
      %v4714 = vpop.f32.mrb[0].mxu0
      %v4715 = vpop.f32.mrb[0].mxu0
      %v4716 = vadd.f32 %v4555, %v4715
      %v4717 = vpop.f32.mrb[0].mxu0
      %4718 = vmatprep.mubr.bf16.mxu0 %v2534
      %4719 = vmatmul.mubr.bf16.gmra.mrb[0].mxu0 %v2533
      %v4720 = vpop.f32.mrb[0].mxu0
      %v4721 = vadd.f32 %v4560, %v4720
      %v4722 = vpop.f32.mrb[0].mxu0
      %v4723 = vpop.f32.mrb[0].mxu0
      %v4724 = vadd.f32 %v4563, %v4723
      %v4725 = vpop.f32.mrb[0].mxu0
      %4726 = vmatprep.mubr.bf16.mxu0 %v2550
      %4727 = vmatmul.mubr.bf16.gmra.mrb[0].mxu0 %v2549
      %v4728 = vpop.f32.mrb[0].mxu0
      %v4729 = vadd.f32 %v4568, %v4728
      %v4730 = vpop.f32.mrb[0].mxu0
      %v4731 = vpop.f32.mrb[0].mxu0
      %v4732 = vadd.f32 %v4571, %v4731
      %v4733 = vpop.f32.mrb[0].mxu0
      %4734 = vmatprep.mubr.bf16.mxu0 %v2566
      %4735 = vmatmul.mubr.bf16.gmra.mrb[0].mxu0 %v2565
      %v4736 = vpop.f32.mrb[0].mxu0
      %v4737 = vadd.f32 %v4576, %v4736
      %v4738 = vpop.f32.mrb[0].mxu0
      %v4739 = vpop.f32.mrb[0].mxu0
      %v4740 = vadd.f32 %v4579, %v4739
      %v4741 = vpop.f32.mrb[0].mxu0
      %4742 = vmatprep.mubr.bf16.mxu0 %v2582
      %4743 = vmatmul.mubr.bf16.gmra.mrb[0].mxu0 %v2581
      %v4744 = vpop.f32.mrb[0].mxu0
      %v4745 = vadd.f32 %v4584, %v4744
      %v4746 = vpop.f32.mrb[0].mxu0
      %v4747 = vpop.f32.mrb[0].mxu0
      %v4748 = vadd.f32 %v4587, %v4747
      %v4749 = vpop.f32.mrb[0].mxu0
      %4750 = vmatprep.mubr.bf16.mxu0 %v2598
      %4751 = vmatmul.mubr.bf16.gmra.mrb[0].mxu0 %v2597
      %v4752 = vpop.f32.mrb[0].mxu0
      %v4753 = vadd.f32 %v4592, %v4752
      %v4754 = vpop.f32.mrb[0].mxu0
      %v4755 = vpop.f32.mrb[0].mxu0
      %v4756 = vadd.f32 %v4595, %v4755
      %v4757 = vpop.f32.mrb[0].mxu0
      %4758 = vdwg.mxu0
      %4759 = vmatprep.subr.bf16.mxu0 0
      %4760 = vmatpush1.bf16.msra.mxu0 %v3488
      %4761 = vmatprep.subr.bf16.mxu0 0
      %4762 = vmatpush1.bf16.msra.mxu0 %v3489
      %4763 = vmatprep.subr.bf16.mxu0 0
      %4764 = vmatpush1.bf16.msra.mxu0 %v3490
      %4765 = vmatprep.subr.bf16.mxu0 0
      %4766 = vmatpush1.bf16.msra.mxu0 %v3491
      %4767 = vmatprep.subr.bf16.mxu0 0
      %4768 = vmatpush1.bf16.msra.mxu0 %v3492
      %4769 = vmatprep.subr.bf16.mxu0 0
      %4770 = vmatpush1.bf16.msra.mxu0 %v3493
      %4771 = vmatprep.subr.bf16.mxu0 0
      %4772 = vmatpush1.bf16.msra.mxu0 %v3494
      %4773 = vmatprep.subr.bf16.mxu0 0
      %4774 = vmatpush1.bf16.msra.mxu0 %v3495
      %4775 = vmatprep.subr.bf16.mxu0 0
      %4776 = vmatpush1.bf16.msra.mxu0 %v3496
      %4777 = vmatprep.subr.bf16.mxu0 0
      %4778 = vmatpush1.bf16.msra.mxu0 %v3497
      %4779 = vmatprep.subr.bf16.mxu0 0
      %4780 = vmatpush1.bf16.msra.mxu0 %v3498
      %4781 = vmatprep.subr.bf16.mxu0 0
      %4782 = vmatpush1.bf16.msra.mxu0 %v3499
      %4783 = vmatprep.subr.bf16.mxu0 0
      %4784 = vmatpush1.bf16.msra.mxu0 %v3500
      %4785 = vmatprep.subr.bf16.mxu0 0
      %4786 = vmatpush1.bf16.msra.mxu0 %v3501
      %4787 = vmatprep.subr.bf16.mxu0 0
      %4788 = vmatpush1.bf16.msra.mxu0 %v3502
      %4789 = vmatprep.subr.bf16.mxu0 0
      %4790 = vmatpush1.bf16.msra.mxu0 %v3503
      %4791 = vmatprep.mubr.bf16.mxu0 %v2360
      %4792 = vmatmul.mubr.bf16.gmra.mrb[0].mxu0 %v2359
      %v4793 = vpop.f32.mrb[0].mxu0
      %v4794 = vadd.f32 %v4633, %v4793
      %v4795 = vpop.f32.mrb[0].mxu0
      %v4796 = vpop.f32.mrb[0].mxu0
      %v4797 = vadd.f32 %v4636, %v4796
      %v4798 = vpop.f32.mrb[0].mxu0
      %4799 = vmatprep.mubr.bf16.mxu0 %v2376
      %4800 = vmatmul.mubr.bf16.gmra.mrb[0].mxu0 %v2375
      %v4801 = vpop.f32.mrb[0].mxu0
      %v4802 = vadd.f32 %v4641, %v4801
      %v4803 = vpop.f32.mrb[0].mxu0
      %v4804 = vpop.f32.mrb[0].mxu0
      %v4805 = vadd.f32 %v4644, %v4804
      %v4806 = vpop.f32.mrb[0].mxu0
      %4807 = vmatprep.mubr.bf16.mxu0 %v2392
      %4808 = vmatmul.mubr.bf16.gmra.mrb[0].mxu0 %v2391
      %v4809 = vpop.f32.mrb[0].mxu0
      %v4810 = vadd.f32 %v4649, %v4809
      %v4811 = vpop.f32.mrb[0].mxu0
      %v4812 = vpop.f32.mrb[0].mxu0
      %v4813 = vadd.f32 %v4652, %v4812
      %v4814 = vpop.f32.mrb[0].mxu0
      %4815 = vmatprep.mubr.bf16.mxu0 %v2408
      %4816 = vmatmul.mubr.bf16.gmra.mrb[0].mxu0 %v2407
      %v4817 = vpop.f32.mrb[0].mxu0
      %v4818 = vadd.f32 %v4657, %v4817
      %v4819 = vpop.f32.mrb[0].mxu0
      %v4820 = vpop.f32.mrb[0].mxu0
      %v4821 = vadd.f32 %v4660, %v4820
      %v4822 = vpop.f32.mrb[0].mxu0
      %4823 = vmatprep.mubr.bf16.mxu0 %v2424
      %4824 = vmatmul.mubr.bf16.gmra.mrb[0].mxu0 %v2423
      %v4825 = vpop.f32.mrb[0].mxu0
      %v4826 = vadd.f32 %v4665, %v4825
      %v4827 = vpop.f32.mrb[0].mxu0
      %v4828 = vpop.f32.mrb[0].mxu0
      %v4829 = vadd.f32 %v4668, %v4828
      %v4830 = vpop.f32.mrb[0].mxu0
      %4831 = vmatprep.mubr.bf16.mxu0 %v2440
      %4832 = vmatmul.mubr.bf16.gmra.mrb[0].mxu0 %v2439
      %v4833 = vpop.f32.mrb[0].mxu0
      %v4834 = vadd.f32 %v4673, %v4833
      %v4835 = vpop.f32.mrb[0].mxu0
      %v4836 = vpop.f32.mrb[0].mxu0
      %v4837 = vadd.f32 %v4676, %v4836
      %v4838 = vpop.f32.mrb[0].mxu0
      %4839 = vmatprep.mubr.bf16.mxu0 %v2456
      %4840 = vmatmul.mubr.bf16.gmra.mrb[0].mxu0 %v2455
      %v4841 = vpop.f32.mrb[0].mxu0
      %v4842 = vadd.f32 %v4681, %v4841
      %v4843 = vpop.f32.mrb[0].mxu0
      %v4844 = vpop.f32.mrb[0].mxu0
      %v4845 = vadd.f32 %v4684, %v4844
      %v4846 = vpop.f32.mrb[0].mxu0
      %4847 = vmatprep.mubr.bf16.mxu0 %v2472
      %4848 = vmatmul.mubr.bf16.gmra.mrb[0].mxu0 %v2471
      %v4849 = vpop.f32.mrb[0].mxu0
      %v4850 = vadd.f32 %v4689, %v4849
      %v4851 = vpop.f32.mrb[0].mxu0
      %v4852 = vpop.f32.mrb[0].mxu0
      %v4853 = vadd.f32 %v4692, %v4852
      %v4854 = vpop.f32.mrb[0].mxu0
      %4855 = vmatprep.mubr.bf16.mxu0 %v2488
      %4856 = vmatmul.mubr.bf16.gmra.mrb[0].mxu0 %v2487
      %v4857 = vpop.f32.mrb[0].mxu0
      %v4858 = vadd.f32 %v4697, %v4857
      %v4859 = vpop.f32.mrb[0].mxu0
      %v4860 = vpop.f32.mrb[0].mxu0
      %v4861 = vadd.f32 %v4700, %v4860
      %v4862 = vpop.f32.mrb[0].mxu0
      %4863 = vmatprep.mubr.bf16.mxu0 %v2504
      %4864 = vmatmul.mubr.bf16.gmra.mrb[0].mxu0 %v2503
      %v4865 = vpop.f32.mrb[0].mxu0
      %v4866 = vadd.f32 %v4705, %v4865
      %v4867 = vpop.f32.mrb[0].mxu0
      %v4868 = vpop.f32.mrb[0].mxu0
      %v4869 = vadd.f32 %v4708, %v4868
      %v4870 = vpop.f32.mrb[0].mxu0
      %4871 = vmatprep.mubr.bf16.mxu0 %v2520
      %4872 = vmatmul.mubr.bf16.gmra.mrb[0].mxu0 %v2519
      %v4873 = vpop.f32.mrb[0].mxu0
      %v4874 = vadd.f32 %v4713, %v4873
      %v4875 = vpop.f32.mrb[0].mxu0
      %v4876 = vpop.f32.mrb[0].mxu0
      %v4877 = vadd.f32 %v4716, %v4876
      %v4878 = vpop.f32.mrb[0].mxu0
      %4879 = vmatprep.mubr.bf16.mxu0 %v2536
      %4880 = vmatmul.mubr.bf16.gmra.mrb[0].mxu0 %v2535
      %v4881 = vpop.f32.mrb[0].mxu0
      %v4882 = vadd.f32 %v4721, %v4881
      %v4883 = vpop.f32.mrb[0].mxu0
      %v4884 = vpop.f32.mrb[0].mxu0
      %v4885 = vadd.f32 %v4724, %v4884
      %v4886 = vpop.f32.mrb[0].mxu0
      %4887 = vmatprep.mubr.bf16.mxu0 %v2552
      %4888 = vmatmul.mubr.bf16.gmra.mrb[0].mxu0 %v2551
      %v4889 = vpop.f32.mrb[0].mxu0
      %v4890 = vadd.f32 %v4729, %v4889
      %v4891 = vpop.f32.mrb[0].mxu0
      %v4892 = vpop.f32.mrb[0].mxu0
      %v4893 = vadd.f32 %v4732, %v4892
      %v4894 = vpop.f32.mrb[0].mxu0
      %4895 = vmatprep.mubr.bf16.mxu0 %v2568
      %4896 = vmatmul.mubr.bf16.gmra.mrb[0].mxu0 %v2567
      %v4897 = vpop.f32.mrb[0].mxu0
      %v4898 = vadd.f32 %v4737, %v4897
      %v4899 = vpop.f32.mrb[0].mxu0
      %v4900 = vpop.f32.mrb[0].mxu0
      %v4901 = vadd.f32 %v4740, %v4900
      %v4902 = vpop.f32.mrb[0].mxu0
      %4903 = vmatprep.mubr.bf16.mxu0 %v2584
      %4904 = vmatmul.mubr.bf16.gmra.mrb[0].mxu0 %v2583
      %v4905 = vpop.f32.mrb[0].mxu0
      %v4906 = vadd.f32 %v4745, %v4905
      %v4907 = vpop.f32.mrb[0].mxu0
      %v4908 = vpop.f32.mrb[0].mxu0
      %v4909 = vadd.f32 %v4748, %v4908
      %v4910 = vpop.f32.mrb[0].mxu0
      %4911 = vmatprep.mubr.bf16.mxu0 %v2600
      %4912 = vmatmul.mubr.bf16.gmra.mrb[0].mxu0 %v2599
      %v4913 = vpop.f32.mrb[0].mxu0
      %v4914 = vadd.f32 %v4753, %v4913
      %v4915 = vpop.f32.mrb[0].mxu0
      %v4916 = vpop.f32.mrb[0].mxu0
      %v4917 = vadd.f32 %v4756, %v4916
      %v4918 = vpop.f32.mrb[0].mxu0
      %4919 = vdwg.mxu0
      %v4920 = vmax.f32 %v4794, 0.0
      %v4921 = vmax.f32 %v4797, 0.0
      %v4922 = vmax.f32 %v4802, 0.0
      %v4923 = vmax.f32 %v4805, 0.0
      %v4924 = vmax.f32 %v4810, 0.0
      %v4925 = vmax.f32 %v4813, 0.0
      %v4926 = vmax.f32 %v4818, 0.0
      %v4927 = vmax.f32 %v4821, 0.0
      %v4928 = vmax.f32 %v4826, 0.0
      %v4929 = vmax.f32 %v4829, 0.0
      %v4930 = vmax.f32 %v4834, 0.0
      %v4931 = vmax.f32 %v4837, 0.0
      %v4932 = vmax.f32 %v4842, 0.0
      %v4933 = vmax.f32 %v4845, 0.0
      %v4934 = vmax.f32 %v4850, 0.0
      %v4935 = vmax.f32 %v4853, 0.0
      %v4936 = vmax.f32 %v4858, 0.0
      %v4937 = vmax.f32 %v4861, 0.0
      %v4938 = vmax.f32 %v4866, 0.0
      %v4939 = vmax.f32 %v4869, 0.0
      %v4940 = vmax.f32 %v4874, 0.0
      %v4941 = vmax.f32 %v4877, 0.0
      %v4942 = vmax.f32 %v4882, 0.0
      %v4943 = vmax.f32 %v4885, 0.0
      %v4944 = vmax.f32 %v4890, 0.0
      %v4945 = vmax.f32 %v4893, 0.0
      %v4946 = vmax.f32 %v4898, 0.0
      %v4947 = vmax.f32 %v4901, 0.0
      %v4948 = vmax.f32 %v4906, 0.0
      %v4949 = vmax.f32 %v4909, 0.0
      %v4950 = vmax.f32 %v4914, 0.0
      %v4951 = vmax.f32 %v4917, 0.0
      %v4952 = vpack.c.bf16 %v4921, %v4920
      %v4953 = vpack.c.bf16 %v4923, %v4922
      %v4954 = vpack.c.bf16 %v4925, %v4924
      %v4955 = vpack.c.bf16 %v4927, %v4926
      %v4956 = vpack.c.bf16 %v4929, %v4928
      %v4957 = vpack.c.bf16 %v4931, %v4930
      %v4958 = vpack.c.bf16 %v4933, %v4932
      %v4959 = vpack.c.bf16 %v4935, %v4934
      %v4960 = vpack.c.bf16 %v4937, %v4936
      %v4961 = vpack.c.bf16 %v4939, %v4938
      %v4962 = vpack.c.bf16 %v4941, %v4940
      %v4963 = vpack.c.bf16 %v4943, %v4942
      %v4964 = vpack.c.bf16 %v4945, %v4944
      %v4965 = vpack.c.bf16 %v4947, %v4946
      %v4966 = vpack.c.bf16 %v4949, %v4948
      %v4967 = vpack.c.bf16 %v4951, %v4950
      %s4968 = scalar_lea.vmem [#allocation3], 56
      %4969 = vst [vmem:[%s4968] sm:$0xff] %v4952
      %4970 = vst [vmem:[%s4968 + $0x8] sm:$0xff] %v4953
      %4971 = vst [vmem:[%s4968 + $0x10] sm:$0xff] %v4954
      %4972 = vst [vmem:[%s4968 + $0x18] sm:$0xff] %v4955
      %4973 = vst [vmem:[%s4968 + $0x30] sm:$0xff] %v4956
      %4974 = vst [vmem:[%s4968 + $0x38] sm:$0xff] %v4957
      %4975 = vst [vmem:[%s4968 + $0x40] sm:$0xff] %v4958
      %4976 = vst [vmem:[%s4968 + $0x48] sm:$0xff] %v4959
      %4977 = vst [vmem:[%s4968 + $0x60] sm:$0xff] %v4960
      %4978 = vst [vmem:[%s4968 + $0x68] sm:$0xff] %v4961
      %4979 = vst [vmem:[%s4968 + $0x70] sm:$0xff] %v4962
      %4980 = vst [vmem:[%s4968 + $0x78] sm:$0xff] %v4963
      %4981 = vst [vmem:[%s4968 + $0x90] sm:$0xff] %v4964
      %4982 = vst [vmem:[%s4968 + $0x98] sm:$0xff] %v4965
      %4983 = vst [vmem:[%s4968 + $0xa0] sm:$0xff] %v4966
      %4984 = vst [vmem:[%s4968 + $0xa8] sm:$0xff] %v4967
      %v4985 = vld [vmem:[#allocation3] sm:$0xff]
      %v4986 = vld [vmem:[#allocation3 + $0x8] sm:$0xff]
      %v4987 = vld [vmem:[#allocation3 + $0x10] sm:$0xff]
      %v4988 = vld [vmem:[#allocation3 + $0x18] sm:$0xff]
      %v4989 = vld [vmem:[#allocation3 + $0x30] sm:$0xff]
      %v4990 = vld [vmem:[#allocation3 + $0x38] sm:$0xff]
      %v4991 = vld [vmem:[#allocation3 + $0x40] sm:$0xff]
      %v4992 = vld [vmem:[#allocation3 + $0x48] sm:$0xff]
      %v4993 = vld [vmem:[#allocation3 + $0x60] sm:$0xff]
      %v4994 = vld [vmem:[#allocation3 + $0x68] sm:$0xff]
      %v4995 = vld [vmem:[#allocation3 + $0x70] sm:$0xff]
      %v4996 = vld [vmem:[#allocation3 + $0x78] sm:$0xff]
      %v4997 = vld [vmem:[#allocation3 + $0x90] sm:$0xff]
      %v4998 = vld [vmem:[#allocation3 + $0x98] sm:$0xff]
      %v4999 = vld [vmem:[#allocation3 + $0xa0] sm:$0xff]
      %v5000 = vld [vmem:[#allocation3 + $0xa8] sm:$0xff]
      %5001 = vst [vmem:[#allocation5] sm:$0xff] %v4985
      %5002 = vst [vmem:[#allocation5 + $0x48] sm:$0xff] %v4986
      %5003 = vst [vmem:[#allocation5 + $0x90] sm:$0xff] %v4987
      %5004 = vst [vmem:[#allocation5 + $0xd8] sm:$0xff] %v4988
      %5005 = vst [vmem:[#allocation5 + $0x120] sm:$0xff] %v4989
      %5006 = vst [vmem:[#allocation5 + $0x168] sm:$0xff] %v4990
      %5007 = vst [vmem:[#allocation5 + $0x1b0] sm:$0xff] %v4991
      %5008 = vst [vmem:[#allocation5 + $0x1f8] sm:$0xff] %v4992
      %5009 = vst [vmem:[#allocation5 + $0x240] sm:$0xff] %v4993
      %5010 = vst [vmem:[#allocation5 + $0x288] sm:$0xff] %v4994
      %5011 = vst [vmem:[#allocation5 + $0x2d0] sm:$0xff] %v4995
      %5012 = vst [vmem:[#allocation5 + $0x318] sm:$0xff] %v4996
      %5013 = vst [vmem:[#allocation5 + $0x360] sm:$0xff] %v4997
      %5014 = vst [vmem:[#allocation5 + $0x3a8] sm:$0xff] %v4998
      %5015 = vst [vmem:[#allocation5 + $0x3f0] sm:$0xff] %v4999
      %5016 = vst [vmem:[#allocation5 + $0x438] sm:$0xff] %v5000
      %s5017 = scalar_lea.vmem [#allocation3], 8
      %v5018 = vld [vmem:[%s5017] sm:$0xff]
      %v5019 = vld [vmem:[%s5017 + $0x8] sm:$0xff]
      %v5020 = vld [vmem:[%s5017 + $0x10] sm:$0xff]
      %v5021 = vld [vmem:[%s5017 + $0x18] sm:$0xff]
      %v5022 = vld [vmem:[%s5017 + $0x30] sm:$0xff]
      %v5023 = vld [vmem:[%s5017 + $0x38] sm:$0xff]
      %v5024 = vld [vmem:[%s5017 + $0x40] sm:$0xff]
      %v5025 = vld [vmem:[%s5017 + $0x48] sm:$0xff]
      %v5026 = vld [vmem:[%s5017 + $0x60] sm:$0xff]
      %v5027 = vld [vmem:[%s5017 + $0x68] sm:$0xff]
      %v5028 = vld [vmem:[%s5017 + $0x70] sm:$0xff]
      %v5029 = vld [vmem:[%s5017 + $0x78] sm:$0xff]
      %v5030 = vld [vmem:[%s5017 + $0x90] sm:$0xff]
      %v5031 = vld [vmem:[%s5017 + $0x98] sm:$0xff]
      %v5032 = vld [vmem:[%s5017 + $0xa0] sm:$0xff]
      %v5033 = vld [vmem:[%s5017 + $0xa8] sm:$0xff]
      %5034 = vst [vmem:[#allocation5 + $0x8] sm:$0xff] %v5018
      %5035 = vst [vmem:[#allocation5 + $0x50] sm:$0xff] %v5019
      %5036 = vst [vmem:[#allocation5 + $0x98] sm:$0xff] %v5020
      %5037 = vst [vmem:[#allocation5 + $0xe0] sm:$0xff] %v5021
      %5038 = vst [vmem:[#allocation5 + $0x128] sm:$0xff] %v5022
      %5039 = vst [vmem:[#allocation5 + $0x170] sm:$0xff] %v5023
      %5040 = vst [vmem:[#allocation5 + $0x1b8] sm:$0xff] %v5024
      %5041 = vst [vmem:[#allocation5 + $0x200] sm:$0xff] %v5025
      %5042 = vst [vmem:[#allocation5 + $0x248] sm:$0xff] %v5026
      %5043 = vst [vmem:[#allocation5 + $0x290] sm:$0xff] %v5027
      %5044 = vst [vmem:[#allocation5 + $0x2d8] sm:$0xff] %v5028
      %5045 = vst [vmem:[#allocation5 + $0x320] sm:$0xff] %v5029
      %5046 = vst [vmem:[#allocation5 + $0x368] sm:$0xff] %v5030
      %5047 = vst [vmem:[#allocation5 + $0x3b0] sm:$0xff] %v5031
      %5048 = vst [vmem:[#allocation5 + $0x3f8] sm:$0xff] %v5032
      %5049 = vst [vmem:[#allocation5 + $0x440] sm:$0xff] %v5033
      %s5050 = scalar_lea.vmem [#allocation3], 16
      %v5051 = vld [vmem:[%s5050] sm:$0xff]
      %v5052 = vld [vmem:[%s5050 + $0x8] sm:$0xff]
      %v5053 = vld [vmem:[%s5050 + $0x10] sm:$0xff]
      %v5054 = vld [vmem:[%s5050 + $0x18] sm:$0xff]
      %v5055 = vld [vmem:[%s5050 + $0x30] sm:$0xff]
      %v5056 = vld [vmem:[%s5050 + $0x38] sm:$0xff]
      %v5057 = vld [vmem:[%s5050 + $0x40] sm:$0xff]
      %v5058 = vld [vmem:[%s5050 + $0x48] sm:$0xff]
      %v5059 = vld [vmem:[%s5050 + $0x60] sm:$0xff]
      %v5060 = vld [vmem:[%s5050 + $0x68] sm:$0xff]
      %v5061 = vld [vmem:[%s5050 + $0x70] sm:$0xff]
      %v5062 = vld [vmem:[%s5050 + $0x78] sm:$0xff]
      %v5063 = vld [vmem:[%s5050 + $0x90] sm:$0xff]
      %v5064 = vld [vmem:[%s5050 + $0x98] sm:$0xff]
      %v5065 = vld [vmem:[%s5050 + $0xa0] sm:$0xff]
      %v5066 = vld [vmem:[%s5050 + $0xa8] sm:$0xff]
      %5067 = vst [vmem:[#allocation5 + $0x10] sm:$0xff] %v5051
      %5068 = vst [vmem:[#allocation5 + $0x58] sm:$0xff] %v5052
      %5069 = vst [vmem:[#allocation5 + $0xa0] sm:$0xff] %v5053
      %5070 = vst [vmem:[#allocation5 + $0xe8] sm:$0xff] %v5054
      %5071 = vst [vmem:[#allocation5 + $0x130] sm:$0xff] %v5055
      %5072 = vst [vmem:[#allocation5 + $0x178] sm:$0xff] %v5056
      %5073 = vst [vmem:[#allocation5 + $0x1c0] sm:$0xff] %v5057
      %5074 = vst [vmem:[#allocation5 + $0x208] sm:$0xff] %v5058
      %5075 = vst [vmem:[#allocation5 + $0x250] sm:$0xff] %v5059
      %5076 = vst [vmem:[#allocation5 + $0x298] sm:$0xff] %v5060
      %5077 = vst [vmem:[#allocation5 + $0x2e0] sm:$0xff] %v5061
      %5078 = vst [vmem:[#allocation5 + $0x328] sm:$0xff] %v5062
      %5079 = vst [vmem:[#allocation5 + $0x370] sm:$0xff] %v5063
      %5080 = vst [vmem:[#allocation5 + $0x3b8] sm:$0xff] %v5064
      %5081 = vst [vmem:[#allocation5 + $0x400] sm:$0xff] %v5065
      %5082 = vst [vmem:[#allocation5 + $0x448] sm:$0xff] %v5066
      %s5083 = scalar_lea.vmem [#allocation3], 48
      %v5084 = vld [vmem:[%s5083] sm:$0xff]
      %v5085 = vld [vmem:[%s5083 + $0x8] sm:$0xff]
      %v5086 = vld [vmem:[%s5083 + $0x10] sm:$0xff]
      %v5087 = vld [vmem:[%s5083 + $0x18] sm:$0xff]
      %v5088 = vld [vmem:[%s5083 + $0x30] sm:$0xff]
      %v5089 = vld [vmem:[%s5083 + $0x38] sm:$0xff]
      %v5090 = vld [vmem:[%s5083 + $0x40] sm:$0xff]
      %v5091 = vld [vmem:[%s5083 + $0x48] sm:$0xff]
      %v5092 = vld [vmem:[%s5083 + $0x60] sm:$0xff]
      %v5093 = vld [vmem:[%s5083 + $0x68] sm:$0xff]
      %v5094 = vld [vmem:[%s5083 + $0x70] sm:$0xff]
      %v5095 = vld [vmem:[%s5083 + $0x78] sm:$0xff]
      %v5096 = vld [vmem:[%s5083 + $0x90] sm:$0xff]
      %v5097 = vld [vmem:[%s5083 + $0x98] sm:$0xff]
      %v5098 = vld [vmem:[%s5083 + $0xa0] sm:$0xff]
      %v5099 = vld [vmem:[%s5083 + $0xa8] sm:$0xff]
      %5100 = vst [vmem:[#allocation5 + $0x18] sm:$0xff] %v5084
      %5101 = vst [vmem:[#allocation5 + $0x60] sm:$0xff] %v5085
      %5102 = vst [vmem:[#allocation5 + $0xa8] sm:$0xff] %v5086
      %5103 = vst [vmem:[#allocation5 + $0xf0] sm:$0xff] %v5087
      %5104 = vst [vmem:[#allocation5 + $0x138] sm:$0xff] %v5088
      %5105 = vst [vmem:[#allocation5 + $0x180] sm:$0xff] %v5089
      %5106 = vst [vmem:[#allocation5 + $0x1c8] sm:$0xff] %v5090
      %5107 = vst [vmem:[#allocation5 + $0x210] sm:$0xff] %v5091
      %5108 = vst [vmem:[#allocation5 + $0x258] sm:$0xff] %v5092
      %5109 = vst [vmem:[#allocation5 + $0x2a0] sm:$0xff] %v5093
      %5110 = vst [vmem:[#allocation5 + $0x2e8] sm:$0xff] %v5094
      %5111 = vst [vmem:[#allocation5 + $0x330] sm:$0xff] %v5095
      %5112 = vst [vmem:[#allocation5 + $0x378] sm:$0xff] %v5096
      %5113 = vst [vmem:[#allocation5 + $0x3c0] sm:$0xff] %v5097
      %5114 = vst [vmem:[#allocation5 + $0x408] sm:$0xff] %v5098
      %5115 = vst [vmem:[#allocation5 + $0x450] sm:$0xff] %v5099
      %v5116 = vld [vmem:[%s4968] sm:$0xff]
      %v5117 = vld [vmem:[%s4968 + $0x8] sm:$0xff]
      %v5118 = vld [vmem:[%s4968 + $0x10] sm:$0xff]
      %v5119 = vld [vmem:[%s4968 + $0x18] sm:$0xff]
      %v5120 = vld [vmem:[%s4968 + $0x30] sm:$0xff]
      %v5121 = vld [vmem:[%s4968 + $0x38] sm:$0xff]
      %v5122 = vld [vmem:[%s4968 + $0x40] sm:$0xff]
      %v5123 = vld [vmem:[%s4968 + $0x48] sm:$0xff]
      %v5124 = vld [vmem:[%s4968 + $0x60] sm:$0xff]
      %v5125 = vld [vmem:[%s4968 + $0x68] sm:$0xff]
      %v5126 = vld [vmem:[%s4968 + $0x70] sm:$0xff]
      %v5127 = vld [vmem:[%s4968 + $0x78] sm:$0xff]
      %v5128 = vld [vmem:[%s4968 + $0x90] sm:$0xff]
      %v5129 = vld [vmem:[%s4968 + $0x98] sm:$0xff]
      %v5130 = vld [vmem:[%s4968 + $0xa0] sm:$0xff]
      %v5131 = vld [vmem:[%s4968 + $0xa8] sm:$0xff]
      %5132 = vst [vmem:[#allocation5 + $0x20] sm:$0xff] %v5116
      %5133 = vst [vmem:[#allocation5 + $0x68] sm:$0xff] %v5117
      %5134 = vst [vmem:[#allocation5 + $0xb0] sm:$0xff] %v5118
      %5135 = vst [vmem:[#allocation5 + $0xf8] sm:$0xff] %v5119
      %5136 = vst [vmem:[#allocation5 + $0x140] sm:$0xff] %v5120
      %5137 = vst [vmem:[#allocation5 + $0x188] sm:$0xff] %v5121
      %5138 = vst [vmem:[#allocation5 + $0x1d0] sm:$0xff] %v5122
      %5139 = vst [vmem:[#allocation5 + $0x218] sm:$0xff] %v5123
      %5140 = vst [vmem:[#allocation5 + $0x260] sm:$0xff] %v5124
      %5141 = vst [vmem:[#allocation5 + $0x2a8] sm:$0xff] %v5125
      %5142 = vst [vmem:[#allocation5 + $0x2f0] sm:$0xff] %v5126
      %5143 = vst [vmem:[#allocation5 + $0x338] sm:$0xff] %v5127
      %5144 = vst [vmem:[#allocation5 + $0x380] sm:$0xff] %v5128
      %5145 = vst [vmem:[#allocation5 + $0x3c8] sm:$0xff] %v5129
      %5146 = vst [vmem:[#allocation5 + $0x410] sm:$0xff] %v5130
      %5147 = vst [vmem:[#allocation5 + $0x458] sm:$0xff] %v5131
      %s5148 = scalar_lea.vmem [#allocation3], 64
      %v5149 = vld [vmem:[%s5148] sm:$0xff]
      %v5150 = vld [vmem:[%s5148 + $0x8] sm:$0xff]
      %v5151 = vld [vmem:[%s5148 + $0x10] sm:$0xff]
      %v5152 = vld [vmem:[%s5148 + $0x18] sm:$0xff]
      %v5153 = vld [vmem:[%s5148 + $0x30] sm:$0xff]
      %v5154 = vld [vmem:[%s5148 + $0x38] sm:$0xff]
      %v5155 = vld [vmem:[%s5148 + $0x40] sm:$0xff]
      %v5156 = vld [vmem:[%s5148 + $0x48] sm:$0xff]
      %v5157 = vld [vmem:[%s5148 + $0x60] sm:$0xff]
      %v5158 = vld [vmem:[%s5148 + $0x68] sm:$0xff]
      %v5159 = vld [vmem:[%s5148 + $0x70] sm:$0xff]
      %v5160 = vld [vmem:[%s5148 + $0x78] sm:$0xff]
      %v5161 = vld [vmem:[%s5148 + $0x90] sm:$0xff]
      %v5162 = vld [vmem:[%s5148 + $0x98] sm:$0xff]
      %v5163 = vld [vmem:[%s5148 + $0xa0] sm:$0xff]
      %v5164 = vld [vmem:[%s5148 + $0xa8] sm:$0xff]
      %5165 = vst [vmem:[#allocation5 + $0x28] sm:$0xff] %v5149
      %5166 = vst [vmem:[#allocation5 + $0x70] sm:$0xff] %v5150
      %5167 = vst [vmem:[#allocation5 + $0xb8] sm:$0xff] %v5151
      %5168 = vst [vmem:[#allocation5 + $0x100] sm:$0xff] %v5152
      %5169 = vst [vmem:[#allocation5 + $0x148] sm:$0xff] %v5153
      %5170 = vst [vmem:[#allocation5 + $0x190] sm:$0xff] %v5154
      %5171 = vst [vmem:[#allocation5 + $0x1d8] sm:$0xff] %v5155
      %5172 = vst [vmem:[#allocation5 + $0x220] sm:$0xff] %v5156
      %5173 = vst [vmem:[#allocation5 + $0x268] sm:$0xff] %v5157
      %5174 = vst [vmem:[#allocation5 + $0x2b0] sm:$0xff] %v5158
      %5175 = vst [vmem:[#allocation5 + $0x2f8] sm:$0xff] %v5159
      %5176 = vst [vmem:[#allocation5 + $0x340] sm:$0xff] %v5160
      %5177 = vst [vmem:[#allocation5 + $0x388] sm:$0xff] %v5161
      %5178 = vst [vmem:[#allocation5 + $0x3d0] sm:$0xff] %v5162
      %5179 = vst [vmem:[#allocation5 + $0x418] sm:$0xff] %v5163
      %5180 = vst [vmem:[#allocation5 + $0x460] sm:$0xff] %v5164
      %s5181 = scalar_lea.vmem [#allocation3], 96
      %v5182 = vld [vmem:[%s5181] sm:$0xff]
      %v5183 = vld [vmem:[%s5181 + $0x8] sm:$0xff]
      %v5184 = vld [vmem:[%s5181 + $0x10] sm:$0xff]
      %v5185 = vld [vmem:[%s5181 + $0x18] sm:$0xff]
      %v5186 = vld [vmem:[%s5181 + $0x30] sm:$0xff]
      %v5187 = vld [vmem:[%s5181 + $0x38] sm:$0xff]
      %v5188 = vld [vmem:[%s5181 + $0x40] sm:$0xff]
      %v5189 = vld [vmem:[%s5181 + $0x48] sm:$0xff]
      %v5190 = vld [vmem:[%s5181 + $0x60] sm:$0xff]
      %v5191 = vld [vmem:[%s5181 + $0x68] sm:$0xff]
      %v5192 = vld [vmem:[%s5181 + $0x70] sm:$0xff]
      %v5193 = vld [vmem:[%s5181 + $0x78] sm:$0xff]
      %v5194 = vld [vmem:[%s5181 + $0x90] sm:$0xff]
      %v5195 = vld [vmem:[%s5181 + $0x98] sm:$0xff]
      %v5196 = vld [vmem:[%s5181 + $0xa0] sm:$0xff]
      %v5197 = vld [vmem:[%s5181 + $0xa8] sm:$0xff]
      %5198 = vst [vmem:[#allocation5 + $0x30] sm:$0xff] %v5182
      %5199 = vst [vmem:[#allocation5 + $0x78] sm:$0xff] %v5183
      %5200 = vst [vmem:[#allocation5 + $0xc0] sm:$0xff] %v5184
      %5201 = vst [vmem:[#allocation5 + $0x108] sm:$0xff] %v5185
      %5202 = vst [vmem:[#allocation5 + $0x150] sm:$0xff] %v5186
      %5203 = vst [vmem:[#allocation5 + $0x198] sm:$0xff] %v5187
      %5204 = vst [vmem:[#allocation5 + $0x1e0] sm:$0xff] %v5188
      %5205 = vst [vmem:[#allocation5 + $0x228] sm:$0xff] %v5189
      %5206 = vst [vmem:[#allocation5 + $0x270] sm:$0xff] %v5190
      %5207 = vst [vmem:[#allocation5 + $0x2b8] sm:$0xff] %v5191
      %5208 = vst [vmem:[#allocation5 + $0x300] sm:$0xff] %v5192
      %5209 = vst [vmem:[#allocation5 + $0x348] sm:$0xff] %v5193
      %5210 = vst [vmem:[#allocation5 + $0x390] sm:$0xff] %v5194
      %5211 = vst [vmem:[#allocation5 + $0x3d8] sm:$0xff] %v5195
      %5212 = vst [vmem:[#allocation5 + $0x420] sm:$0xff] %v5196
      %5213 = vst [vmem:[#allocation5 + $0x468] sm:$0xff] %v5197
      %s5214 = scalar_lea.vmem [#allocation3], 104
      %v5215 = vld [vmem:[%s5214] sm:$0xff]
      %v5216 = vld [vmem:[%s5214 + $0x8] sm:$0xff]
      %v5217 = vld [vmem:[%s5214 + $0x10] sm:$0xff]
      %v5218 = vld [vmem:[%s5214 + $0x18] sm:$0xff]
      %v5219 = vld [vmem:[%s5214 + $0x30] sm:$0xff]
      %v5220 = vld [vmem:[%s5214 + $0x38] sm:$0xff]
      %v5221 = vld [vmem:[%s5214 + $0x40] sm:$0xff]
      %v5222 = vld [vmem:[%s5214 + $0x48] sm:$0xff]
      %v5223 = vld [vmem:[%s5214 + $0x60] sm:$0xff]
      %v5224 = vld [vmem:[%s5214 + $0x68] sm:$0xff]
      %v5225 = vld [vmem:[%s5214 + $0x70] sm:$0xff]
      %v5226 = vld [vmem:[%s5214 + $0x78] sm:$0xff]
      %v5227 = vld [vmem:[%s5214 + $0x90] sm:$0xff]
      %v5228 = vld [vmem:[%s5214 + $0x98] sm:$0xff]
      %v5229 = vld [vmem:[%s5214 + $0xa0] sm:$0xff]
      %v5230 = vld [vmem:[%s5214 + $0xa8] sm:$0xff]
      %5231 = vst [vmem:[#allocation5 + $0x38] sm:$0xff] %v5215
      %5232 = vst [vmem:[#allocation5 + $0x80] sm:$0xff] %v5216
      %5233 = vst [vmem:[#allocation5 + $0xc8] sm:$0xff] %v5217
      %5234 = vst [vmem:[#allocation5 + $0x110] sm:$0xff] %v5218
      %5235 = vst [vmem:[#allocation5 + $0x158] sm:$0xff] %v5219
      %5236 = vst [vmem:[#allocation5 + $0x1a0] sm:$0xff] %v5220
      %5237 = vst [vmem:[#allocation5 + $0x1e8] sm:$0xff] %v5221
      %5238 = vst [vmem:[#allocation5 + $0x230] sm:$0xff] %v5222
      %5239 = vst [vmem:[#allocation5 + $0x278] sm:$0xff] %v5223
      %5240 = vst [vmem:[#allocation5 + $0x2c0] sm:$0xff] %v5224
      %5241 = vst [vmem:[#allocation5 + $0x308] sm:$0xff] %v5225
      %5242 = vst [vmem:[#allocation5 + $0x350] sm:$0xff] %v5226
      %5243 = vst [vmem:[#allocation5 + $0x398] sm:$0xff] %v5227
      %5244 = vst [vmem:[#allocation5 + $0x3e0] sm:$0xff] %v5228
      %5245 = vst [vmem:[#allocation5 + $0x428] sm:$0xff] %v5229
      %5246 = vst [vmem:[#allocation5 + $0x470] sm:$0xff] %v5230
      %s5247 = scalar_lea.vmem [#allocation3], 112
      %v5248 = vld [vmem:[%s5247] sm:$0xff]
      %v5249 = vld [vmem:[%s5247 + $0x8] sm:$0xff]
      %v5250 = vld [vmem:[%s5247 + $0x10] sm:$0xff]
      %v5251 = vld [vmem:[%s5247 + $0x18] sm:$0xff]
      %v5252 = vld [vmem:[%s5247 + $0x30] sm:$0xff]
      %v5253 = vld [vmem:[%s5247 + $0x38] sm:$0xff]
      %v5254 = vld [vmem:[%s5247 + $0x40] sm:$0xff]
      %v5255 = vld [vmem:[%s5247 + $0x48] sm:$0xff]
      %v5256 = vld [vmem:[%s5247 + $0x60] sm:$0xff]
      %v5257 = vld [vmem:[%s5247 + $0x68] sm:$0xff]
      %v5258 = vld [vmem:[%s5247 + $0x70] sm:$0xff]
      %v5259 = vld [vmem:[%s5247 + $0x78] sm:$0xff]
      %v5260 = vld [vmem:[%s5247 + $0x90] sm:$0xff]
      %v5261 = vld [vmem:[%s5247 + $0x98] sm:$0xff]
      %v5262 = vld [vmem:[%s5247 + $0xa0] sm:$0xff]
      %v5263 = vld [vmem:[%s5247 + $0xa8] sm:$0xff]
      %5264 = vst [vmem:[#allocation5 + $0x40] sm:$0xff] %v5248
      %5265 = vst [vmem:[#allocation5 + $0x88] sm:$0xff] %v5249
      %5266 = vst [vmem:[#allocation5 + $0xd0] sm:$0xff] %v5250
      %5267 = vst [vmem:[#allocation5 + $0x118] sm:$0xff] %v5251
      %5268 = vst [vmem:[#allocation5 + $0x160] sm:$0xff] %v5252
      %5269 = vst [vmem:[#allocation5 + $0x1a8] sm:$0xff] %v5253
      %5270 = vst [vmem:[#allocation5 + $0x1f0] sm:$0xff] %v5254
      %5271 = vst [vmem:[#allocation5 + $0x238] sm:$0xff] %v5255
      %5272 = vst [vmem:[#allocation5 + $0x280] sm:$0xff] %v5256
      %5273 = vst [vmem:[#allocation5 + $0x2c8] sm:$0xff] %v5257
      %5274 = vst [vmem:[#allocation5 + $0x310] sm:$0xff] %v5258
      %5275 = vst [vmem:[#allocation5 + $0x358] sm:$0xff] %v5259
      %5276 = vst [vmem:[#allocation5 + $0x3a0] sm:$0xff] %v5260
      %5277 = vst [vmem:[#allocation5 + $0x3e8] sm:$0xff] %v5261
      %5278 = vst [vmem:[#allocation5 + $0x430] sm:$0xff] %v5262
      %5279 = vst [vmem:[#allocation5 + $0x478] sm:$0xff] %v5263
      %v5280 = vld [vmem:[#allocation5] sm:$0xff]
      %v5281 = vld [vmem:[#allocation5 + $0x8] sm:$0xff]
      %v5282 = vld [vmem:[#allocation5 + $0x10] sm:$0xff]
      %v5283 = vld [vmem:[#allocation5 + $0x18] sm:$0xff]
      %v5284 = vld [vmem:[#allocation5 + $0x20] sm:$0xff]
      %v5285 = vld [vmem:[#allocation5 + $0x28] sm:$0xff]
      %v5286 = vld [vmem:[#allocation5 + $0x30] sm:$0xff]
      %v5287 = vld [vmem:[#allocation5 + $0x38] sm:$0xff]
      %v5288 = vld [vmem:[#allocation5 + $0x40] sm:$0xff]
      %v5289 = vld [vmem:[#allocation5 + $0x48] sm:$0xff]
      %v5290 = vld [vmem:[#allocation5 + $0x50] sm:$0xff]
      %v5291 = vld [vmem:[#allocation5 + $0x58] sm:$0xff]
      %v5292 = vld [vmem:[#allocation5 + $0x60] sm:$0xff]
      %v5293 = vld [vmem:[#allocation5 + $0x68] sm:$0xff]
      %v5294 = vld [vmem:[#allocation5 + $0x70] sm:$0xff]
      %v5295 = vld [vmem:[#allocation5 + $0x78] sm:$0xff]
      %v5296 = vld [vmem:[#allocation5 + $0x80] sm:$0xff]
      %v5297 = vld [vmem:[#allocation5 + $0x88] sm:$0xff]
      %v5298 = vld [vmem:[#allocation5 + $0x90] sm:$0xff]
      %v5299 = vld [vmem:[#allocation5 + $0x98] sm:$0xff]
      %v5300 = vld [vmem:[#allocation5 + $0xa0] sm:$0xff]
      %v5301 = vld [vmem:[#allocation5 + $0xa8] sm:$0xff]
      %v5302 = vld [vmem:[#allocation5 + $0xb0] sm:$0xff]
      %v5303 = vld [vmem:[#allocation5 + $0xb8] sm:$0xff]
      %v5304 = vld [vmem:[#allocation5 + $0xc0] sm:$0xff]
      %v5305 = vld [vmem:[#allocation5 + $0xc8] sm:$0xff]
      %v5306 = vld [vmem:[#allocation5 + $0xd0] sm:$0xff]
      %v5307 = vld [vmem:[#allocation5 + $0xd8] sm:$0xff]
      %v5308 = vld [vmem:[#allocation5 + $0xe0] sm:$0xff]
      %v5309 = vld [vmem:[#allocation5 + $0xe8] sm:$0xff]
      %v5310 = vld [vmem:[#allocation5 + $0xf0] sm:$0xff]
      %v5311 = vld [vmem:[#allocation5 + $0xf8] sm:$0xff]
      %v5312 = vld [vmem:[#allocation5 + $0x100] sm:$0xff]
      %v5313 = vld [vmem:[#allocation5 + $0x108] sm:$0xff]
      %v5314 = vld [vmem:[#allocation5 + $0x110] sm:$0xff]
      %v5315 = vld [vmem:[#allocation5 + $0x118] sm:$0xff]
      %v5316 = vld [vmem:[#allocation5 + $0x120] sm:$0xff]
      %v5317 = vld [vmem:[#allocation5 + $0x128] sm:$0xff]
      %v5318 = vld [vmem:[#allocation5 + $0x130] sm:$0xff]
      %v5319 = vld [vmem:[#allocation5 + $0x138] sm:$0xff]
      %v5320 = vld [vmem:[#allocation5 + $0x140] sm:$0xff]
      %v5321 = vld [vmem:[#allocation5 + $0x148] sm:$0xff]
      %v5322 = vld [vmem:[#allocation5 + $0x150] sm:$0xff]
      %v5323 = vld [vmem:[#allocation5 + $0x158] sm:$0xff]
      %v5324 = vld [vmem:[#allocation5 + $0x160] sm:$0xff]
      %v5325 = vld [vmem:[#allocation5 + $0x168] sm:$0xff]
      %v5326 = vld [vmem:[#allocation5 + $0x170] sm:$0xff]
      %v5327 = vld [vmem:[#allocation5 + $0x178] sm:$0xff]
      %v5328 = vld [vmem:[#allocation5 + $0x180] sm:$0xff]
      %v5329 = vld [vmem:[#allocation5 + $0x188] sm:$0xff]
      %v5330 = vld [vmem:[#allocation5 + $0x190] sm:$0xff]
      %v5331 = vld [vmem:[#allocation5 + $0x198] sm:$0xff]
      %v5332 = vld [vmem:[#allocation5 + $0x1a0] sm:$0xff]
      %v5333 = vld [vmem:[#allocation5 + $0x1a8] sm:$0xff]
      %v5334 = vld [vmem:[#allocation5 + $0x1b0] sm:$0xff]
      %v5335 = vld [vmem:[#allocation5 + $0x1b8] sm:$0xff]
      %v5336 = vld [vmem:[#allocation5 + $0x1c0] sm:$0xff]
      %v5337 = vld [vmem:[#allocation5 + $0x1c8] sm:$0xff]
      %v5338 = vld [vmem:[#allocation5 + $0x1d0] sm:$0xff]
      %v5339 = vld [vmem:[#allocation5 + $0x1d8] sm:$0xff]
      %v5340 = vld [vmem:[#allocation5 + $0x1e0] sm:$0xff]
      %v5341 = vld [vmem:[#allocation5 + $0x1e8] sm:$0xff]
      %v5342 = vld [vmem:[#allocation5 + $0x1f0] sm:$0xff]
      %v5343 = vld [vmem:[#allocation5 + $0x1f8] sm:$0xff]
      %v5344 = vld [vmem:[#allocation5 + $0x200] sm:$0xff]
      %v5345 = vld [vmem:[#allocation5 + $0x208] sm:$0xff]
      %v5346 = vld [vmem:[#allocation5 + $0x210] sm:$0xff]
      %v5347 = vld [vmem:[#allocation5 + $0x218] sm:$0xff]
      %v5348 = vld [vmem:[#allocation5 + $0x220] sm:$0xff]
      %v5349 = vld [vmem:[#allocation5 + $0x228] sm:$0xff]
      %v5350 = vld [vmem:[#allocation5 + $0x230] sm:$0xff]
      %v5351 = vld [vmem:[#allocation5 + $0x238] sm:$0xff]
      %v5352 = vld [vmem:[#allocation5 + $0x240] sm:$0xff]
      %v5353 = vld [vmem:[#allocation5 + $0x248] sm:$0xff]
      %v5354 = vld [vmem:[#allocation5 + $0x250] sm:$0xff]
      %v5355 = vld [vmem:[#allocation5 + $0x258] sm:$0xff]
      %v5356 = vld [vmem:[#allocation5 + $0x260] sm:$0xff]
      %v5357 = vld [vmem:[#allocation5 + $0x268] sm:$0xff]
      %v5358 = vld [vmem:[#allocation5 + $0x270] sm:$0xff]
      %v5359 = vld [vmem:[#allocation5 + $0x278] sm:$0xff]
      %v5360 = vld [vmem:[#allocation5 + $0x280] sm:$0xff]
      %v5361 = vld [vmem:[#allocation5 + $0x288] sm:$0xff]
      %v5362 = vld [vmem:[#allocation5 + $0x290] sm:$0xff]
      %v5363 = vld [vmem:[#allocation5 + $0x298] sm:$0xff]
      %v5364 = vld [vmem:[#allocation5 + $0x2a0] sm:$0xff]
      %v5365 = vld [vmem:[#allocation5 + $0x2a8] sm:$0xff]
      %v5366 = vld [vmem:[#allocation5 + $0x2b0] sm:$0xff]
      %v5367 = vld [vmem:[#allocation5 + $0x2b8] sm:$0xff]
      %v5368 = vld [vmem:[#allocation5 + $0x2c0] sm:$0xff]
      %v5369 = vld [vmem:[#allocation5 + $0x2c8] sm:$0xff]
      %v5370 = vld [vmem:[#allocation5 + $0x2d0] sm:$0xff]
      %v5371 = vld [vmem:[#allocation5 + $0x2d8] sm:$0xff]
      %v5372 = vld [vmem:[#allocation5 + $0x2e0] sm:$0xff]
      %v5373 = vld [vmem:[#allocation5 + $0x2e8] sm:$0xff]
      %v5374 = vld [vmem:[#allocation5 + $0x2f0] sm:$0xff]
      %v5375 = vld [vmem:[#allocation5 + $0x2f8] sm:$0xff]
      %v5376 = vld [vmem:[#allocation5 + $0x300] sm:$0xff]
      %v5377 = vld [vmem:[#allocation5 + $0x308] sm:$0xff]
      %v5378 = vld [vmem:[#allocation5 + $0x310] sm:$0xff]
      %v5379 = vld [vmem:[#allocation5 + $0x318] sm:$0xff]
      %v5380 = vld [vmem:[#allocation5 + $0x320] sm:$0xff]
      %v5381 = vld [vmem:[#allocation5 + $0x328] sm:$0xff]
      %v5382 = vld [vmem:[#allocation5 + $0x330] sm:$0xff]
      %v5383 = vld [vmem:[#allocation5 + $0x338] sm:$0xff]
      %v5384 = vld [vmem:[#allocation5 + $0x340] sm:$0xff]
      %v5385 = vld [vmem:[#allocation5 + $0x348] sm:$0xff]
      %v5386 = vld [vmem:[#allocation5 + $0x350] sm:$0xff]
      %v5387 = vld [vmem:[#allocation5 + $0x358] sm:$0xff]
      %v5388 = vld [vmem:[#allocation5 + $0x360] sm:$0xff]
      %v5389 = vld [vmem:[#allocation5 + $0x368] sm:$0xff]
      %v5390 = vld [vmem:[#allocation5 + $0x370] sm:$0xff]
      %v5391 = vld [vmem:[#allocation5 + $0x378] sm:$0xff]
      %v5392 = vld [vmem:[#allocation5 + $0x380] sm:$0xff]
      %v5393 = vld [vmem:[#allocation5 + $0x388] sm:$0xff]
      %v5394 = vld [vmem:[#allocation5 + $0x390] sm:$0xff]
      %v5395 = vld [vmem:[#allocation5 + $0x398] sm:$0xff]
      %v5396 = vld [vmem:[#allocation5 + $0x3a0] sm:$0xff]
      %v5397 = vld [vmem:[#allocation5 + $0x3a8] sm:$0xff]
      %v5398 = vld [vmem:[#allocation5 + $0x3b0] sm:$0xff]
      %v5399 = vld [vmem:[#allocation5 + $0x3b8] sm:$0xff]
      %v5400 = vld [vmem:[#allocation5 + $0x3c0] sm:$0xff]
      %v5401 = vld [vmem:[#allocation5 + $0x3c8] sm:$0xff]
      %v5402 = vld [vmem:[#allocation5 + $0x3d0] sm:$0xff]
      %v5403 = vld [vmem:[#allocation5 + $0x3d8] sm:$0xff]
      %v5404 = vld [vmem:[#allocation5 + $0x3e0] sm:$0xff]
      %v5405 = vld [vmem:[#allocation5 + $0x3e8] sm:$0xff]
      %v5406 = vld [vmem:[#allocation5 + $0x3f0] sm:$0xff]
      %v5407 = vld [vmem:[#allocation5 + $0x3f8] sm:$0xff]
      %v5408 = vld [vmem:[#allocation5 + $0x400] sm:$0xff]
      %v5409 = vld [vmem:[#allocation5 + $0x408] sm:$0xff]
      %v5410 = vld [vmem:[#allocation5 + $0x410] sm:$0xff]
      %v5411 = vld [vmem:[#allocation5 + $0x418] sm:$0xff]
      %v5412 = vld [vmem:[#allocation5 + $0x420] sm:$0xff]
      %v5413 = vld [vmem:[#allocation5 + $0x428] sm:$0xff]
      %v5414 = vld [vmem:[#allocation5 + $0x430] sm:$0xff]
      %v5415 = vld [vmem:[#allocation5 + $0x438] sm:$0xff]
      %v5416 = vld [vmem:[#allocation5 + $0x440] sm:$0xff]
      %v5417 = vld [vmem:[#allocation5 + $0x448] sm:$0xff]
      %v5418 = vld [vmem:[#allocation5 + $0x450] sm:$0xff]
      %v5419 = vld [vmem:[#allocation5 + $0x458] sm:$0xff]
      %v5420 = vld [vmem:[#allocation5 + $0x460] sm:$0xff]
      %v5421 = vld [vmem:[#allocation5 + $0x468] sm:$0xff]
      %v5422 = vld [vmem:[#allocation5 + $0x470] sm:$0xff]
      %v5423 = vld [vmem:[#allocation5 + $0x478] sm:$0xff]
      %v5424 = vld [vmem:[%s5] sm:$0xf]
      %v5425 = vld [vmem:[%s5 + $0x4] sm:$0xf]
      %v5426 = vld [vmem:[%s5 + $0x8] sm:$0xf]
      %v5427 = vld [vmem:[%s5 + $0xc] sm:$0xf]
      %v5428 = vld [vmem:[%s5 + $0x10] sm:$0xf]
      %v5429 = vld [vmem:[%s5 + $0x14] sm:$0xf]
      %v5430 = vld [vmem:[%s5 + $0x18] sm:$0xf]
      %v5431 = vld [vmem:[%s5 + $0x1c] sm:$0xf]
      %v5432 = vld [vmem:[%s5 + $0x20] sm:$0xf]
      %v5433 = vld [vmem:[%s5 + $0x24] sm:$0xf]
      %v5434 = vld [vmem:[%s5 + $0x28] sm:$0xf]
      %v5435 = vld [vmem:[%s5 + $0x2c] sm:$0xf]
      %v5436 = vld [vmem:[%s5 + $0x30] sm:$0xf]
      %v5437 = vld [vmem:[%s5 + $0x34] sm:$0xf]
      %v5438 = vld [vmem:[%s5 + $0x38] sm:$0xf]
      %v5439 = vld [vmem:[%s5 + $0x3c] sm:$0xf]
      %v5440 = vld [vmem:[%s5 + $0x40] sm:$0xf]
      %v5441 = vld [vmem:[%s5 + $0x44] sm:$0xf]
      %v5442 = vld [vmem:[%s5 + $0x48] sm:$0xf]
      %v5443 = vld [vmem:[%s5 + $0x4c] sm:$0xf]
      %v5444 = vld [vmem:[%s5 + $0x50] sm:$0xf]
      %v5445 = vld [vmem:[%s5 + $0x54] sm:$0xf]
      %v5446 = vld [vmem:[%s5 + $0x58] sm:$0xf]
      %v5447 = vld [vmem:[%s5 + $0x5c] sm:$0xf]
      %v5448 = vld [vmem:[%s5 + $0x60] sm:$0xf]
      %v5449 = vld [vmem:[%s5 + $0x64] sm:$0xf]
      %v5450 = vld [vmem:[%s5 + $0x68] sm:$0xf]
      %v5451 = vld [vmem:[%s5 + $0x6c] sm:$0xf]
      %v5452 = vld [vmem:[%s5 + $0x70] sm:$0xf]
      %v5453 = vld [vmem:[%s5 + $0x74] sm:$0xf]
      %v5454 = vld [vmem:[%s5 + $0x78] sm:$0xf]
      %v5455 = vld [vmem:[%s5 + $0x7c] sm:$0xf]
      %v5456 = vld [vmem:[%s5 + $0x80] sm:$0xf]
      %v5457 = vld [vmem:[%s5 + $0x84] sm:$0xf]
      %v5458 = vld [vmem:[%s5 + $0x88] sm:$0xf]
      %v5459 = vld [vmem:[%s5 + $0x8c] sm:$0xf]
      %v5460 = vld [vmem:[%s5 + $0x90] sm:$0xf]
      %v5461 = vld [vmem:[%s5 + $0x94] sm:$0xf]
      %v5462 = vld [vmem:[%s5 + $0x98] sm:$0xf]
      %v5463 = vld [vmem:[%s5 + $0x9c] sm:$0xf]
      %v5464 = vld [vmem:[%s5 + $0xa0] sm:$0xf]
      %v5465 = vld [vmem:[%s5 + $0xa4] sm:$0xf]
      %v5466 = vld [vmem:[%s5 + $0xa8] sm:$0xf]
      %v5467 = vld [vmem:[%s5 + $0xac] sm:$0xf]
      %v5468 = vld [vmem:[%s5 + $0xb0] sm:$0xf]
      %v5469 = vld [vmem:[%s5 + $0xb4] sm:$0xf]
      %v5470 = vld [vmem:[%s5 + $0xb8] sm:$0xf]
      %v5471 = vld [vmem:[%s5 + $0xbc] sm:$0xf]
      %v5472 = vld [vmem:[%s5 + $0xc0] sm:$0xf]
      %v5473 = vld [vmem:[%s5 + $0xc4] sm:$0xf]
      %v5474 = vld [vmem:[%s5 + $0xc8] sm:$0xf]
      %v5475 = vld [vmem:[%s5 + $0xcc] sm:$0xf]
      %v5476 = vld [vmem:[%s5 + $0xd0] sm:$0xf]
      %v5477 = vld [vmem:[%s5 + $0xd4] sm:$0xf]
      %v5478 = vld [vmem:[%s5 + $0xd8] sm:$0xf]
      %v5479 = vld [vmem:[%s5 + $0xdc] sm:$0xf]
      %v5480 = vld [vmem:[%s5 + $0xe0] sm:$0xf]
      %v5481 = vld [vmem:[%s5 + $0xe4] sm:$0xf]
      %v5482 = vld [vmem:[%s5 + $0xe8] sm:$0xf]
      %v5483 = vld [vmem:[%s5 + $0xec] sm:$0xf]
      %v5484 = vld [vmem:[%s5 + $0xf0] sm:$0xf]
      %v5485 = vld [vmem:[%s5 + $0xf4] sm:$0xf]
      %v5486 = vld [vmem:[%s5 + $0xf8] sm:$0xf]
      %v5487 = vld [vmem:[%s5 + $0xfc] sm:$0xf]
      %v5488 = vld [vmem:[%s5 + $0x100] sm:$0xf]
      %v5489 = vld [vmem:[%s5 + $0x104] sm:$0xf]
      %v5490 = vld [vmem:[%s5 + $0x108] sm:$0xf]
      %v5491 = vld [vmem:[%s5 + $0x10c] sm:$0xf]
      %v5492 = vld [vmem:[%s5 + $0x110] sm:$0xf]
      %v5493 = vld [vmem:[%s5 + $0x114] sm:$0xf]
      %v5494 = vld [vmem:[%s5 + $0x118] sm:$0xf]
      %v5495 = vld [vmem:[%s5 + $0x11c] sm:$0xf]
      %v5496 = vld [vmem:[%s5 + $0x120] sm:$0xf]
      %v5497 = vld [vmem:[%s5 + $0x124] sm:$0xf]
      %v5498 = vld [vmem:[%s5 + $0x128] sm:$0xf]
      %v5499 = vld [vmem:[%s5 + $0x12c] sm:$0xf]
      %v5500 = vld [vmem:[%s5 + $0x130] sm:$0xf]
      %v5501 = vld [vmem:[%s5 + $0x134] sm:$0xf]
      %v5502 = vld [vmem:[%s5 + $0x138] sm:$0xf]
      %v5503 = vld [vmem:[%s5 + $0x13c] sm:$0xf]
      %v5504 = vld [vmem:[%s5 + $0x140] sm:$0xf]
      %v5505 = vld [vmem:[%s5 + $0x144] sm:$0xf]
      %v5506 = vld [vmem:[%s5 + $0x148] sm:$0xf]
      %v5507 = vld [vmem:[%s5 + $0x14c] sm:$0xf]
      %v5508 = vld [vmem:[%s5 + $0x150] sm:$0xf]
      %v5509 = vld [vmem:[%s5 + $0x154] sm:$0xf]
      %v5510 = vld [vmem:[%s5 + $0x158] sm:$0xf]
      %v5511 = vld [vmem:[%s5 + $0x15c] sm:$0xf]
      %v5512 = vld [vmem:[%s5 + $0x160] sm:$0xf]
      %v5513 = vld [vmem:[%s5 + $0x164] sm:$0xf]
      %v5514 = vld [vmem:[%s5 + $0x168] sm:$0xf]
      %v5515 = vld [vmem:[%s5 + $0x16c] sm:$0xf]
      %v5516 = vld [vmem:[%s5 + $0x170] sm:$0xf]
      %v5517 = vld [vmem:[%s5 + $0x174] sm:$0xf]
      %v5518 = vld [vmem:[%s5 + $0x178] sm:$0xf]
      %v5519 = vld [vmem:[%s5 + $0x17c] sm:$0xf]
      %v5520 = vld [vmem:[%s5 + $0x180] sm:$0xf]
      %v5521 = vld [vmem:[%s5 + $0x184] sm:$0xf]
      %v5522 = vld [vmem:[%s5 + $0x188] sm:$0xf]
      %v5523 = vld [vmem:[%s5 + $0x18c] sm:$0xf]
      %v5524 = vld [vmem:[%s5 + $0x190] sm:$0xf]
      %v5525 = vld [vmem:[%s5 + $0x194] sm:$0xf]
      %v5526 = vld [vmem:[%s5 + $0x198] sm:$0xf]
      %v5527 = vld [vmem:[%s5 + $0x19c] sm:$0xf]
      %v5528 = vld [vmem:[%s5 + $0x1a0] sm:$0xf]
      %v5529 = vld [vmem:[%s5 + $0x1a4] sm:$0xf]
      %v5530 = vld [vmem:[%s5 + $0x1a8] sm:$0xf]
      %v5531 = vld [vmem:[%s5 + $0x1ac] sm:$0xf]
      %v5532 = vld [vmem:[%s5 + $0x1b0] sm:$0xf]
      %v5533 = vld [vmem:[%s5 + $0x1b4] sm:$0xf]
      %v5534 = vld [vmem:[%s5 + $0x1b8] sm:$0xf]
      %v5535 = vld [vmem:[%s5 + $0x1bc] sm:$0xf]
      %v5536 = vld [vmem:[%s5 + $0x1c0] sm:$0xf]
      %v5537 = vld [vmem:[%s5 + $0x1c4] sm:$0xf]
      %v5538 = vld [vmem:[%s5 + $0x1c8] sm:$0xf]
      %v5539 = vld [vmem:[%s5 + $0x1cc] sm:$0xf]
      %v5540 = vld [vmem:[%s5 + $0x1d0] sm:$0xf]
      %v5541 = vld [vmem:[%s5 + $0x1d4] sm:$0xf]
      %v5542 = vld [vmem:[%s5 + $0x1d8] sm:$0xf]
      %v5543 = vld [vmem:[%s5 + $0x1dc] sm:$0xf]
      %v5544 = vld [vmem:[%s5 + $0x1e0] sm:$0xf]
      %v5545 = vld [vmem:[%s5 + $0x1e4] sm:$0xf]
      %v5546 = vld [vmem:[%s5 + $0x1e8] sm:$0xf]
      %v5547 = vld [vmem:[%s5 + $0x1ec] sm:$0xf]
      %v5548 = vld [vmem:[%s5 + $0x1f0] sm:$0xf]
      %v5549 = vld [vmem:[%s5 + $0x1f4] sm:$0xf]
      %v5550 = vld [vmem:[%s5 + $0x1f8] sm:$0xf]
      %v5551 = vld [vmem:[%s5 + $0x1fc] sm:$0xf]
      %v5552 = vld [vmem:[%s5 + $0x200] sm:$0xf]
      %v5553 = vld [vmem:[%s5 + $0x204] sm:$0xf]
      %v5554 = vld [vmem:[%s5 + $0x208] sm:$0xf]
      %v5555 = vld [vmem:[%s5 + $0x20c] sm:$0xf]
      %v5556 = vld [vmem:[%s5 + $0x210] sm:$0xf]
      %v5557 = vld [vmem:[%s5 + $0x214] sm:$0xf]
      %v5558 = vld [vmem:[%s5 + $0x218] sm:$0xf]
      %v5559 = vld [vmem:[%s5 + $0x21c] sm:$0xf]
      %v5560 = vld [vmem:[%s5 + $0x220] sm:$0xf]
      %v5561 = vld [vmem:[%s5 + $0x224] sm:$0xf]
      %v5562 = vld [vmem:[%s5 + $0x228] sm:$0xf]
      %v5563 = vld [vmem:[%s5 + $0x22c] sm:$0xf]
      %v5564 = vld [vmem:[%s5 + $0x230] sm:$0xf]
      %v5565 = vld [vmem:[%s5 + $0x234] sm:$0xf]
      %v5566 = vld [vmem:[%s5 + $0x238] sm:$0xf]
      %v5567 = vld [vmem:[%s5 + $0x23c] sm:$0xf]
      %v5568 = vld [vmem:[%s6] sm:$0x1]
      %v5570 = vlaneseq
      %v5571 = vshrl.u32 %v5570, 7
      %v5572 = vsub.s32 0, %v5571
      %v5573 = vrot.slane %v5568, %v5572
      %v5719 = vunpack.c.l.b16 %v5424
      %v5720 = vunpack.c.l.b16 %v5425
      %v5721 = vunpack.c.l.b16 %v5426
      %v5722 = vunpack.c.l.b16 %v5427
      %v5723 = vunpack.c.l.b16 %v5428
      %v5724 = vunpack.c.l.b16 %v5429
      %v5725 = vunpack.c.l.b16 %v5430
      %v5726 = vunpack.c.l.b16 %v5431
      %v5727 = vunpack.c.l.b16 %v5432
      %v5728 = vunpack.c.l.b16 %v5433
      %v5729 = vunpack.c.l.b16 %v5434
      %v5730 = vunpack.c.l.b16 %v5435
      %v5731 = vunpack.c.l.b16 %v5436
      %v5732 = vunpack.c.l.b16 %v5437
      %v5733 = vunpack.c.l.b16 %v5438
      %v5734 = vunpack.c.l.b16 %v5439
      %v5735 = vunpack.c.l.b16 %v5440
      %v5736 = vunpack.c.l.b16 %v5441
      %v5737 = vunpack.c.l.b16 %v5442
      %v5738 = vunpack.c.l.b16 %v5443
      %v5739 = vunpack.c.l.b16 %v5444
      %v5740 = vunpack.c.l.b16 %v5445
      %v5741 = vunpack.c.l.b16 %v5446
      %v5742 = vunpack.c.l.b16 %v5447
      %v5743 = vunpack.c.l.b16 %v5448
      %v5744 = vunpack.c.l.b16 %v5449
      %v5745 = vunpack.c.l.b16 %v5450
      %v5746 = vunpack.c.l.b16 %v5451
      %v5747 = vunpack.c.l.b16 %v5452
      %v5748 = vunpack.c.l.b16 %v5453
      %v5749 = vunpack.c.l.b16 %v5454
      %v5750 = vunpack.c.l.b16 %v5455
      %v5751 = vunpack.c.l.b16 %v5456
      %v5752 = vunpack.c.l.b16 %v5457
      %v5753 = vunpack.c.l.b16 %v5458
      %v5754 = vunpack.c.l.b16 %v5459
      %v5755 = vunpack.c.l.b16 %v5460
      %v5756 = vunpack.c.l.b16 %v5461
      %v5757 = vunpack.c.l.b16 %v5462
      %v5758 = vunpack.c.l.b16 %v5463
      %v5759 = vunpack.c.l.b16 %v5464
      %v5760 = vunpack.c.l.b16 %v5465
      %v5761 = vunpack.c.l.b16 %v5466
      %v5762 = vunpack.c.l.b16 %v5467
      %v5763 = vunpack.c.l.b16 %v5468
      %v5764 = vunpack.c.l.b16 %v5469
      %v5765 = vunpack.c.l.b16 %v5470
      %v5766 = vunpack.c.l.b16 %v5471
      %v5767 = vunpack.c.l.b16 %v5472
      %v5768 = vunpack.c.l.b16 %v5473
      %v5769 = vunpack.c.l.b16 %v5474
      %v5770 = vunpack.c.l.b16 %v5475
      %v5771 = vunpack.c.l.b16 %v5476
      %v5772 = vunpack.c.l.b16 %v5477
      %v5773 = vunpack.c.l.b16 %v5478
      %v5774 = vunpack.c.l.b16 %v5479
      %v5775 = vunpack.c.l.b16 %v5480
      %v5776 = vunpack.c.l.b16 %v5481
      %v5777 = vunpack.c.l.b16 %v5482
      %v5778 = vunpack.c.l.b16 %v5483
      %v5779 = vunpack.c.l.b16 %v5484
      %v5780 = vunpack.c.l.b16 %v5485
      %v5781 = vunpack.c.l.b16 %v5486
      %v5782 = vunpack.c.l.b16 %v5487
      %v5783 = vunpack.c.l.b16 %v5488
      %v5784 = vunpack.c.l.b16 %v5489
      %v5785 = vunpack.c.l.b16 %v5490
      %v5786 = vunpack.c.l.b16 %v5491
      %v5787 = vunpack.c.l.b16 %v5492
      %v5788 = vunpack.c.l.b16 %v5493
      %v5789 = vunpack.c.l.b16 %v5494
      %v5790 = vunpack.c.l.b16 %v5495
      %v5791 = vunpack.c.l.b16 %v5496
      %v5792 = vunpack.c.l.b16 %v5497
      %v5793 = vunpack.c.l.b16 %v5498
      %v5794 = vunpack.c.l.b16 %v5499
      %v5795 = vunpack.c.l.b16 %v5500
      %v5796 = vunpack.c.l.b16 %v5501
      %v5797 = vunpack.c.l.b16 %v5502
      %v5798 = vunpack.c.l.b16 %v5503
      %v5799 = vunpack.c.l.b16 %v5504
      %v5800 = vunpack.c.l.b16 %v5505
      %v5801 = vunpack.c.l.b16 %v5506
      %v5802 = vunpack.c.l.b16 %v5507
      %v5803 = vunpack.c.l.b16 %v5508
      %v5804 = vunpack.c.l.b16 %v5509
      %v5805 = vunpack.c.l.b16 %v5510
      %v5806 = vunpack.c.l.b16 %v5511
      %v5807 = vunpack.c.l.b16 %v5512
      %v5808 = vunpack.c.l.b16 %v5513
      %v5809 = vunpack.c.l.b16 %v5514
      %v5810 = vunpack.c.l.b16 %v5515
      %v5811 = vunpack.c.l.b16 %v5516
      %v5812 = vunpack.c.l.b16 %v5517
      %v5813 = vunpack.c.l.b16 %v5518
      %v5814 = vunpack.c.l.b16 %v5519
      %v5815 = vunpack.c.l.b16 %v5520
      %v5816 = vunpack.c.l.b16 %v5521
      %v5817 = vunpack.c.l.b16 %v5522
      %v5818 = vunpack.c.l.b16 %v5523
      %v5819 = vunpack.c.l.b16 %v5524
      %v5820 = vunpack.c.l.b16 %v5525
      %v5821 = vunpack.c.l.b16 %v5526
      %v5822 = vunpack.c.l.b16 %v5527
      %v5823 = vunpack.c.l.b16 %v5528
      %v5824 = vunpack.c.l.b16 %v5529
      %v5825 = vunpack.c.l.b16 %v5530
      %v5826 = vunpack.c.l.b16 %v5531
      %v5827 = vunpack.c.l.b16 %v5532
      %v5828 = vunpack.c.l.b16 %v5533
      %v5829 = vunpack.c.l.b16 %v5534
      %v5830 = vunpack.c.l.b16 %v5535
      %v5831 = vunpack.c.l.b16 %v5536
      %v5832 = vunpack.c.l.b16 %v5537
      %v5833 = vunpack.c.l.b16 %v5538
      %v5834 = vunpack.c.l.b16 %v5539
      %v5835 = vunpack.c.l.b16 %v5540
      %v5836 = vunpack.c.l.b16 %v5541
      %v5837 = vunpack.c.l.b16 %v5542
      %v5838 = vunpack.c.l.b16 %v5543
      %v5839 = vunpack.c.l.b16 %v5544
      %v5840 = vunpack.c.l.b16 %v5545
      %v5841 = vunpack.c.l.b16 %v5546
      %v5842 = vunpack.c.l.b16 %v5547
      %v5843 = vunpack.c.l.b16 %v5548
      %v5844 = vunpack.c.l.b16 %v5549
      %v5845 = vunpack.c.l.b16 %v5550
      %v5846 = vunpack.c.l.b16 %v5551
      %v5847 = vunpack.c.l.b16 %v5552
      %v5848 = vunpack.c.l.b16 %v5553
      %v5849 = vunpack.c.l.b16 %v5554
      %v5850 = vunpack.c.l.b16 %v5555
      %v5851 = vunpack.c.l.b16 %v5556
      %v5852 = vunpack.c.l.b16 %v5557
      %v5853 = vunpack.c.l.b16 %v5558
      %v5854 = vunpack.c.l.b16 %v5559
      %v5855 = vunpack.c.l.b16 %v5560
      %v5856 = vunpack.c.l.b16 %v5561
      %v5857 = vunpack.c.l.b16 %v5562
      %v5858 = vunpack.c.l.b16 %v5563
      %v5859 = vunpack.c.l.b16 %v5564
      %v5860 = vunpack.c.l.b16 %v5565
      %v5861 = vunpack.c.l.b16 %v5566
      %v5862 = vunpack.c.l.b16 %v5567
      %v5863 = vpack.c.b16 %v5720, %v5719
      %v5864 = vpack.c.b16 %v5722, %v5721
      %v5865 = vpack.c.b16 %v5724, %v5723
      %v5866 = vpack.c.b16 %v5726, %v5725
      %v5867 = vpack.c.b16 %v5728, %v5727
      %v5868 = vpack.c.b16 %v5730, %v5729
      %v5869 = vpack.c.b16 %v5732, %v5731
      %v5870 = vpack.c.b16 %v5734, %v5733
      %v5871 = vpack.c.b16 %v5736, %v5735
      %v5872 = vpack.c.b16 %v5738, %v5737
      %v5873 = vpack.c.b16 %v5740, %v5739
      %v5874 = vpack.c.b16 %v5742, %v5741
      %v5875 = vpack.c.b16 %v5744, %v5743
      %v5876 = vpack.c.b16 %v5746, %v5745
      %v5877 = vpack.c.b16 %v5748, %v5747
      %v5878 = vpack.c.b16 %v5750, %v5749
      %v5879 = vpack.c.b16 %v5752, %v5751
      %v5880 = vpack.c.b16 %v5754, %v5753
      %v5881 = vpack.c.b16 %v5756, %v5755
      %v5882 = vpack.c.b16 %v5758, %v5757
      %v5883 = vpack.c.b16 %v5760, %v5759
      %v5884 = vpack.c.b16 %v5762, %v5761
      %v5885 = vpack.c.b16 %v5764, %v5763
      %v5886 = vpack.c.b16 %v5766, %v5765
      %v5887 = vpack.c.b16 %v5768, %v5767
      %v5888 = vpack.c.b16 %v5770, %v5769
      %v5889 = vpack.c.b16 %v5772, %v5771
      %v5890 = vpack.c.b16 %v5774, %v5773
      %v5891 = vpack.c.b16 %v5776, %v5775
      %v5892 = vpack.c.b16 %v5778, %v5777
      %v5893 = vpack.c.b16 %v5780, %v5779
      %v5894 = vpack.c.b16 %v5782, %v5781
      %v5895 = vpack.c.b16 %v5784, %v5783
      %v5896 = vpack.c.b16 %v5786, %v5785
      %v5897 = vpack.c.b16 %v5788, %v5787
      %v5898 = vpack.c.b16 %v5790, %v5789
      %v5899 = vpack.c.b16 %v5792, %v5791
      %v5900 = vpack.c.b16 %v5794, %v5793
      %v5901 = vpack.c.b16 %v5796, %v5795
      %v5902 = vpack.c.b16 %v5798, %v5797
      %v5903 = vpack.c.b16 %v5800, %v5799
      %v5904 = vpack.c.b16 %v5802, %v5801
      %v5905 = vpack.c.b16 %v5804, %v5803
      %v5906 = vpack.c.b16 %v5806, %v5805
      %v5907 = vpack.c.b16 %v5808, %v5807
      %v5908 = vpack.c.b16 %v5810, %v5809
      %v5909 = vpack.c.b16 %v5812, %v5811
      %v5910 = vpack.c.b16 %v5814, %v5813
      %v5911 = vpack.c.b16 %v5816, %v5815
      %v5912 = vpack.c.b16 %v5818, %v5817
      %v5913 = vpack.c.b16 %v5820, %v5819
      %v5914 = vpack.c.b16 %v5822, %v5821
      %v5915 = vpack.c.b16 %v5824, %v5823
      %v5916 = vpack.c.b16 %v5826, %v5825
      %v5917 = vpack.c.b16 %v5828, %v5827
      %v5918 = vpack.c.b16 %v5830, %v5829
      %v5919 = vpack.c.b16 %v5832, %v5831
      %v5920 = vpack.c.b16 %v5834, %v5833
      %v5921 = vpack.c.b16 %v5836, %v5835
      %v5922 = vpack.c.b16 %v5838, %v5837
      %v5923 = vpack.c.b16 %v5840, %v5839
      %v5924 = vpack.c.b16 %v5842, %v5841
      %v5925 = vpack.c.b16 %v5844, %v5843
      %v5926 = vpack.c.b16 %v5846, %v5845
      %v5927 = vpack.c.b16 %v5848, %v5847
      %v5928 = vpack.c.b16 %v5850, %v5849
      %v5929 = vpack.c.b16 %v5852, %v5851
      %v5930 = vpack.c.b16 %v5854, %v5853
      %v5931 = vpack.c.b16 %v5856, %v5855
      %v5932 = vpack.c.b16 %v5858, %v5857
      %v5933 = vpack.c.b16 %v5860, %v5859
      %v5934 = vpack.c.b16 %v5862, %v5861
      %6007 = vmatprep.subr.bf16.mxu0 0
      %6008 = vmatpush1.bf16.msra.mxu0 %v5863
      %6009 = vmatprep.subr.bf16.mxu0 0
      %6010 = vmatpush1.bf16.msra.mxu0 %v5864
      %6011 = vmatprep.subr.bf16.mxu0 0
      %6012 = vmatpush1.bf16.msra.mxu0 %v5865
      %6013 = vmatprep.subr.bf16.mxu0 0
      %6014 = vmatpush1.bf16.msra.mxu0 %v5866
      %6015 = vmatprep.subr.bf16.mxu0 0
      %6016 = vmatpush1.bf16.msra.mxu0 %v5867
      %6017 = vmatprep.subr.bf16.mxu0 0
      %6018 = vmatpush1.bf16.msra.mxu0 %v5868
      %6019 = vmatprep.subr.bf16.mxu0 0
      %6020 = vmatpush1.bf16.msra.mxu0 %v5869
      %6021 = vmatprep.subr.bf16.mxu0 0
      %6022 = vmatpush1.bf16.msra.mxu0 %v5870
      %6023 = vmatprep.subr.bf16.mxu0 0
      %6024 = vmatpush1.bf16.msra.mxu0 %v5871
      %6025 = vmatprep.subr.bf16.mxu0 0
      %6026 = vmatpush1.bf16.msra.mxu0 %v5872
      %6027 = vmatprep.subr.bf16.mxu0 0
      %6028 = vmatpush1.bf16.msra.mxu0 %v5873
      %6029 = vmatprep.subr.bf16.mxu0 0
      %6030 = vmatpush1.bf16.msra.mxu0 %v5874
      %6031 = vmatprep.subr.bf16.mxu0 0
      %6032 = vmatpush1.bf16.msra.mxu0 %v5875
      %6033 = vmatprep.subr.bf16.mxu0 0
      %6034 = vmatpush1.bf16.msra.mxu0 %v5876
      %6035 = vmatprep.subr.bf16.mxu0 0
      %6036 = vmatpush1.bf16.msra.mxu0 %v5877
      %6037 = vmatprep.subr.bf16.mxu0 0
      %6038 = vmatpush1.bf16.msra.mxu0 %v5878
      %6039 = vmatprep.mubr.bf16.mxu0 %v5281
      %6040 = vmatmul.mubr.bf16.gmra.mrb[0].mxu0 %v5280
      %v6041 = vpop.f32.mrb[0].mxu0
      %v6042 = vadd.f32 %v5573, %v6041
      %v6043 = vpop.f32.mrb[0].mxu0
      %v6044 = vpop.f32.mrb[0].mxu0
      %v6045 = vadd.f32 %v5573, %v6044
      %v6046 = vpop.f32.mrb[0].mxu0
      %6047 = vmatprep.mubr.bf16.mxu0 %v5290
      %6048 = vmatmul.mubr.bf16.gmra.mrb[0].mxu0 %v5289
      %v6049 = vpop.f32.mrb[0].mxu0
      %v6050 = vadd.f32 %v5573, %v6049
      %v6051 = vpop.f32.mrb[0].mxu0
      %v6052 = vpop.f32.mrb[0].mxu0
      %v6053 = vadd.f32 %v5573, %v6052
      %v6054 = vpop.f32.mrb[0].mxu0
      %6055 = vmatprep.mubr.bf16.mxu0 %v5299
      %6056 = vmatmul.mubr.bf16.gmra.mrb[0].mxu0 %v5298
      %v6057 = vpop.f32.mrb[0].mxu0
      %v6058 = vadd.f32 %v5573, %v6057
      %v6059 = vpop.f32.mrb[0].mxu0
      %v6060 = vpop.f32.mrb[0].mxu0
      %v6061 = vadd.f32 %v5573, %v6060
      %v6062 = vpop.f32.mrb[0].mxu0
      %6063 = vmatprep.mubr.bf16.mxu0 %v5308
      %6064 = vmatmul.mubr.bf16.gmra.mrb[0].mxu0 %v5307
      %v6065 = vpop.f32.mrb[0].mxu0
      %v6066 = vadd.f32 %v5573, %v6065
      %v6067 = vpop.f32.mrb[0].mxu0
      %v6068 = vpop.f32.mrb[0].mxu0
      %v6069 = vadd.f32 %v5573, %v6068
      %v6070 = vpop.f32.mrb[0].mxu0
      %6071 = vmatprep.mubr.bf16.mxu0 %v5317
      %6072 = vmatmul.mubr.bf16.gmra.mrb[0].mxu0 %v5316
      %v6073 = vpop.f32.mrb[0].mxu0
      %v6074 = vadd.f32 %v5573, %v6073
      %v6075 = vpop.f32.mrb[0].mxu0
      %v6076 = vpop.f32.mrb[0].mxu0
      %v6077 = vadd.f32 %v5573, %v6076
      %v6078 = vpop.f32.mrb[0].mxu0
      %6079 = vmatprep.mubr.bf16.mxu0 %v5326
      %6080 = vmatmul.mubr.bf16.gmra.mrb[0].mxu0 %v5325
      %v6081 = vpop.f32.mrb[0].mxu0
      %v6082 = vadd.f32 %v5573, %v6081
      %v6083 = vpop.f32.mrb[0].mxu0
      %v6084 = vpop.f32.mrb[0].mxu0
      %v6085 = vadd.f32 %v5573, %v6084
      %v6086 = vpop.f32.mrb[0].mxu0
      %6087 = vmatprep.mubr.bf16.mxu0 %v5335
      %6088 = vmatmul.mubr.bf16.gmra.mrb[0].mxu0 %v5334
      %v6089 = vpop.f32.mrb[0].mxu0
      %v6090 = vadd.f32 %v5573, %v6089
      %v6091 = vpop.f32.mrb[0].mxu0
      %v6092 = vpop.f32.mrb[0].mxu0
      %v6093 = vadd.f32 %v5573, %v6092
      %v6094 = vpop.f32.mrb[0].mxu0
      %6095 = vmatprep.mubr.bf16.mxu0 %v5344
      %6096 = vmatmul.mubr.bf16.gmra.mrb[0].mxu0 %v5343
      %v6097 = vpop.f32.mrb[0].mxu0
      %v6098 = vadd.f32 %v5573, %v6097
      %v6099 = vpop.f32.mrb[0].mxu0
      %v6100 = vpop.f32.mrb[0].mxu0
      %v6101 = vadd.f32 %v5573, %v6100
      %v6102 = vpop.f32.mrb[0].mxu0
      %6103 = vmatprep.mubr.bf16.mxu0 %v5353
      %6104 = vmatmul.mubr.bf16.gmra.mrb[0].mxu0 %v5352
      %v6105 = vpop.f32.mrb[0].mxu0
      %v6106 = vadd.f32 %v5573, %v6105
      %v6107 = vpop.f32.mrb[0].mxu0
      %v6108 = vpop.f32.mrb[0].mxu0
      %v6109 = vadd.f32 %v5573, %v6108
      %v6110 = vpop.f32.mrb[0].mxu0
      %6111 = vmatprep.mubr.bf16.mxu0 %v5362
      %6112 = vmatmul.mubr.bf16.gmra.mrb[0].mxu0 %v5361
      %v6113 = vpop.f32.mrb[0].mxu0
      %v6114 = vadd.f32 %v5573, %v6113
      %v6115 = vpop.f32.mrb[0].mxu0
      %v6116 = vpop.f32.mrb[0].mxu0
      %v6117 = vadd.f32 %v5573, %v6116
      %v6118 = vpop.f32.mrb[0].mxu0
      %6119 = vmatprep.mubr.bf16.mxu0 %v5371
      %6120 = vmatmul.mubr.bf16.gmra.mrb[0].mxu0 %v5370
      %v6121 = vpop.f32.mrb[0].mxu0
      %v6122 = vadd.f32 %v5573, %v6121
      %v6123 = vpop.f32.mrb[0].mxu0
      %v6124 = vpop.f32.mrb[0].mxu0
      %v6125 = vadd.f32 %v5573, %v6124
      %v6126 = vpop.f32.mrb[0].mxu0
      %6127 = vmatprep.mubr.bf16.mxu0 %v5380
      %6128 = vmatmul.mubr.bf16.gmra.mrb[0].mxu0 %v5379
      %v6129 = vpop.f32.mrb[0].mxu0
      %v6130 = vadd.f32 %v5573, %v6129
      %v6131 = vpop.f32.mrb[0].mxu0
      %v6132 = vpop.f32.mrb[0].mxu0
      %v6133 = vadd.f32 %v5573, %v6132
      %v6134 = vpop.f32.mrb[0].mxu0
      %6135 = vmatprep.mubr.bf16.mxu0 %v5389
      %6136 = vmatmul.mubr.bf16.gmra.mrb[0].mxu0 %v5388
      %v6137 = vpop.f32.mrb[0].mxu0
      %v6138 = vadd.f32 %v5573, %v6137
      %v6139 = vpop.f32.mrb[0].mxu0
      %v6140 = vpop.f32.mrb[0].mxu0
      %v6141 = vadd.f32 %v5573, %v6140
      %v6142 = vpop.f32.mrb[0].mxu0
      %6143 = vmatprep.mubr.bf16.mxu0 %v5398
      %6144 = vmatmul.mubr.bf16.gmra.mrb[0].mxu0 %v5397
      %v6145 = vpop.f32.mrb[0].mxu0
      %v6146 = vadd.f32 %v5573, %v6145
      %v6147 = vpop.f32.mrb[0].mxu0
      %v6148 = vpop.f32.mrb[0].mxu0
      %v6149 = vadd.f32 %v5573, %v6148
      %v6150 = vpop.f32.mrb[0].mxu0
      %6151 = vmatprep.mubr.bf16.mxu0 %v5407
      %6152 = vmatmul.mubr.bf16.gmra.mrb[0].mxu0 %v5406
      %v6153 = vpop.f32.mrb[0].mxu0
      %v6154 = vadd.f32 %v5573, %v6153
      %v6155 = vpop.f32.mrb[0].mxu0
      %v6156 = vpop.f32.mrb[0].mxu0
      %v6157 = vadd.f32 %v5573, %v6156
      %v6158 = vpop.f32.mrb[0].mxu0
      %6159 = vmatprep.mubr.bf16.mxu0 %v5416
      %6160 = vmatmul.mubr.bf16.gmra.mrb[0].mxu0 %v5415
      %v6161 = vpop.f32.mrb[0].mxu0
      %v6162 = vadd.f32 %v5573, %v6161
      %v6163 = vpop.f32.mrb[0].mxu0
      %v6164 = vpop.f32.mrb[0].mxu0
      %v6165 = vadd.f32 %v5573, %v6164
      %v6166 = vpop.f32.mrb[0].mxu0
      %6167 = vdwg.mxu0
      %6168 = vmatprep.subr.bf16.mxu0 0
      %6169 = vmatpush1.bf16.msra.mxu0 %v5879
      %6170 = vmatprep.subr.bf16.mxu0 0
      %6171 = vmatpush1.bf16.msra.mxu0 %v5880
      %6172 = vmatprep.subr.bf16.mxu0 0
      %6173 = vmatpush1.bf16.msra.mxu0 %v5881
      %6174 = vmatprep.subr.bf16.mxu0 0
      %6175 = vmatpush1.bf16.msra.mxu0 %v5882
      %6176 = vmatprep.subr.bf16.mxu0 0
      %6177 = vmatpush1.bf16.msra.mxu0 %v5883
      %6178 = vmatprep.subr.bf16.mxu0 0
      %6179 = vmatpush1.bf16.msra.mxu0 %v5884
      %6180 = vmatprep.subr.bf16.mxu0 0
      %6181 = vmatpush1.bf16.msra.mxu0 %v5885
      %6182 = vmatprep.subr.bf16.mxu0 0
      %6183 = vmatpush1.bf16.msra.mxu0 %v5886
      %6184 = vmatprep.subr.bf16.mxu0 0
      %6185 = vmatpush1.bf16.msra.mxu0 %v5887
      %6186 = vmatprep.subr.bf16.mxu0 0
      %6187 = vmatpush1.bf16.msra.mxu0 %v5888
      %6188 = vmatprep.subr.bf16.mxu0 0
      %6189 = vmatpush1.bf16.msra.mxu0 %v5889
      %6190 = vmatprep.subr.bf16.mxu0 0
      %6191 = vmatpush1.bf16.msra.mxu0 %v5890
      %6192 = vmatprep.subr.bf16.mxu0 0
      %6193 = vmatpush1.bf16.msra.mxu0 %v5891
      %6194 = vmatprep.subr.bf16.mxu0 0
      %6195 = vmatpush1.bf16.msra.mxu0 %v5892
      %6196 = vmatprep.subr.bf16.mxu0 0
      %6197 = vmatpush1.bf16.msra.mxu0 %v5893
      %6198 = vmatprep.subr.bf16.mxu0 0
      %6199 = vmatpush1.bf16.msra.mxu0 %v5894
      %6200 = vmatprep.mubr.bf16.mxu0 %v5283
      %6201 = vmatmul.mubr.bf16.gmra.mrb[0].mxu0 %v5282
      %v6202 = vpop.f32.mrb[0].mxu0
      %v6203 = vadd.f32 %v6042, %v6202
      %v6204 = vpop.f32.mrb[0].mxu0
      %v6205 = vpop.f32.mrb[0].mxu0
      %v6206 = vadd.f32 %v6045, %v6205
      %v6207 = vpop.f32.mrb[0].mxu0
      %6208 = vmatprep.mubr.bf16.mxu0 %v5292
      %6209 = vmatmul.mubr.bf16.gmra.mrb[0].mxu0 %v5291
      %v6210 = vpop.f32.mrb[0].mxu0
      %v6211 = vadd.f32 %v6050, %v6210
      %v6212 = vpop.f32.mrb[0].mxu0
      %v6213 = vpop.f32.mrb[0].mxu0
      %v6214 = vadd.f32 %v6053, %v6213
      %v6215 = vpop.f32.mrb[0].mxu0
      %6216 = vmatprep.mubr.bf16.mxu0 %v5301
      %6217 = vmatmul.mubr.bf16.gmra.mrb[0].mxu0 %v5300
      %v6218 = vpop.f32.mrb[0].mxu0
      %v6219 = vadd.f32 %v6058, %v6218
      %v6220 = vpop.f32.mrb[0].mxu0
      %v6221 = vpop.f32.mrb[0].mxu0
      %v6222 = vadd.f32 %v6061, %v6221
      %v6223 = vpop.f32.mrb[0].mxu0
      %6224 = vmatprep.mubr.bf16.mxu0 %v5310
      %6225 = vmatmul.mubr.bf16.gmra.mrb[0].mxu0 %v5309
      %v6226 = vpop.f32.mrb[0].mxu0
      %v6227 = vadd.f32 %v6066, %v6226
      %v6228 = vpop.f32.mrb[0].mxu0
      %v6229 = vpop.f32.mrb[0].mxu0
      %v6230 = vadd.f32 %v6069, %v6229
      %v6231 = vpop.f32.mrb[0].mxu0
      %6232 = vmatprep.mubr.bf16.mxu0 %v5319
      %6233 = vmatmul.mubr.bf16.gmra.mrb[0].mxu0 %v5318
      %v6234 = vpop.f32.mrb[0].mxu0
      %v6235 = vadd.f32 %v6074, %v6234
      %v6236 = vpop.f32.mrb[0].mxu0
      %v6237 = vpop.f32.mrb[0].mxu0
      %v6238 = vadd.f32 %v6077, %v6237
      %v6239 = vpop.f32.mrb[0].mxu0
      %6240 = vmatprep.mubr.bf16.mxu0 %v5328
      %6241 = vmatmul.mubr.bf16.gmra.mrb[0].mxu0 %v5327
      %v6242 = vpop.f32.mrb[0].mxu0
      %v6243 = vadd.f32 %v6082, %v6242
      %v6244 = vpop.f32.mrb[0].mxu0
      %v6245 = vpop.f32.mrb[0].mxu0
      %v6246 = vadd.f32 %v6085, %v6245
      %v6247 = vpop.f32.mrb[0].mxu0
      %6248 = vmatprep.mubr.bf16.mxu0 %v5337
      %6249 = vmatmul.mubr.bf16.gmra.mrb[0].mxu0 %v5336
      %v6250 = vpop.f32.mrb[0].mxu0
      %v6251 = vadd.f32 %v6090, %v6250
      %v6252 = vpop.f32.mrb[0].mxu0
      %v6253 = vpop.f32.mrb[0].mxu0
      %v6254 = vadd.f32 %v6093, %v6253
      %v6255 = vpop.f32.mrb[0].mxu0
      %6256 = vmatprep.mubr.bf16.mxu0 %v5346
      %6257 = vmatmul.mubr.bf16.gmra.mrb[0].mxu0 %v5345
      %v6258 = vpop.f32.mrb[0].mxu0
      %v6259 = vadd.f32 %v6098, %v6258
      %v6260 = vpop.f32.mrb[0].mxu0
      %v6261 = vpop.f32.mrb[0].mxu0
      %v6262 = vadd.f32 %v6101, %v6261
      %v6263 = vpop.f32.mrb[0].mxu0
      %6264 = vmatprep.mubr.bf16.mxu0 %v5355
      %6265 = vmatmul.mubr.bf16.gmra.mrb[0].mxu0 %v5354
      %v6266 = vpop.f32.mrb[0].mxu0
      %v6267 = vadd.f32 %v6106, %v6266
      %v6268 = vpop.f32.mrb[0].mxu0
      %v6269 = vpop.f32.mrb[0].mxu0
      %v6270 = vadd.f32 %v6109, %v6269
      %v6271 = vpop.f32.mrb[0].mxu0
      %6272 = vmatprep.mubr.bf16.mxu0 %v5364
      %6273 = vmatmul.mubr.bf16.gmra.mrb[0].mxu0 %v5363
      %v6274 = vpop.f32.mrb[0].mxu0
      %v6275 = vadd.f32 %v6114, %v6274
      %v6276 = vpop.f32.mrb[0].mxu0
      %v6277 = vpop.f32.mrb[0].mxu0
      %v6278 = vadd.f32 %v6117, %v6277
      %v6279 = vpop.f32.mrb[0].mxu0
      %6280 = vmatprep.mubr.bf16.mxu0 %v5373
      %6281 = vmatmul.mubr.bf16.gmra.mrb[0].mxu0 %v5372
      %v6282 = vpop.f32.mrb[0].mxu0
      %v6283 = vadd.f32 %v6122, %v6282
      %v6284 = vpop.f32.mrb[0].mxu0
      %v6285 = vpop.f32.mrb[0].mxu0
      %v6286 = vadd.f32 %v6125, %v6285
      %v6287 = vpop.f32.mrb[0].mxu0
      %6288 = vmatprep.mubr.bf16.mxu0 %v5382
      %6289 = vmatmul.mubr.bf16.gmra.mrb[0].mxu0 %v5381
      %v6290 = vpop.f32.mrb[0].mxu0
      %v6291 = vadd.f32 %v6130, %v6290
      %v6292 = vpop.f32.mrb[0].mxu0
      %v6293 = vpop.f32.mrb[0].mxu0
      %v6294 = vadd.f32 %v6133, %v6293
      %v6295 = vpop.f32.mrb[0].mxu0
      %6296 = vmatprep.mubr.bf16.mxu0 %v5391
      %6297 = vmatmul.mubr.bf16.gmra.mrb[0].mxu0 %v5390
      %v6298 = vpop.f32.mrb[0].mxu0
      %v6299 = vadd.f32 %v6138, %v6298
      %v6300 = vpop.f32.mrb[0].mxu0
      %v6301 = vpop.f32.mrb[0].mxu0
      %v6302 = vadd.f32 %v6141, %v6301
      %v6303 = vpop.f32.mrb[0].mxu0
      %6304 = vmatprep.mubr.bf16.mxu0 %v5400
      %6305 = vmatmul.mubr.bf16.gmra.mrb[0].mxu0 %v5399
      %v6306 = vpop.f32.mrb[0].mxu0
      %v6307 = vadd.f32 %v6146, %v6306
      %v6308 = vpop.f32.mrb[0].mxu0
      %v6309 = vpop.f32.mrb[0].mxu0
      %v6310 = vadd.f32 %v6149, %v6309
      %v6311 = vpop.f32.mrb[0].mxu0
      %6312 = vmatprep.mubr.bf16.mxu0 %v5409
      %6313 = vmatmul.mubr.bf16.gmra.mrb[0].mxu0 %v5408
      %v6314 = vpop.f32.mrb[0].mxu0
      %v6315 = vadd.f32 %v6154, %v6314
      %v6316 = vpop.f32.mrb[0].mxu0
      %v6317 = vpop.f32.mrb[0].mxu0
      %v6318 = vadd.f32 %v6157, %v6317
      %v6319 = vpop.f32.mrb[0].mxu0
      %6320 = vmatprep.mubr.bf16.mxu0 %v5418
      %6321 = vmatmul.mubr.bf16.gmra.mrb[0].mxu0 %v5417
      %v6322 = vpop.f32.mrb[0].mxu0
      %v6323 = vadd.f32 %v6162, %v6322
      %v6324 = vpop.f32.mrb[0].mxu0
      %v6325 = vpop.f32.mrb[0].mxu0
      %v6326 = vadd.f32 %v6165, %v6325
      %v6327 = vpop.f32.mrb[0].mxu0
      %6328 = vdwg.mxu0
      %6329 = vmatprep.subr.bf16.mxu0 0
      %6330 = vmatpush1.bf16.msra.mxu0 %v5895
      %6331 = vmatprep.subr.bf16.mxu0 0
      %6332 = vmatpush1.bf16.msra.mxu0 %v5896
      %6333 = vmatprep.subr.bf16.mxu0 0
      %6334 = vmatpush1.bf16.msra.mxu0 %v5897
      %6335 = vmatprep.subr.bf16.mxu0 0
      %6336 = vmatpush1.bf16.msra.mxu0 %v5898
      %6337 = vmatprep.subr.bf16.mxu0 0
      %6338 = vmatpush1.bf16.msra.mxu0 %v5899
      %6339 = vmatprep.subr.bf16.mxu0 0
      %6340 = vmatpush1.bf16.msra.mxu0 %v5900
      %6341 = vmatprep.subr.bf16.mxu0 0
      %6342 = vmatpush1.bf16.msra.mxu0 %v5901
      %6343 = vmatprep.subr.bf16.mxu0 0
      %6344 = vmatpush1.bf16.msra.mxu0 %v5902
      %6345 = vmatprep.subr.bf16.mxu0 0
      %6346 = vmatpush1.bf16.msra.mxu0 %v5903
      %6347 = vmatprep.subr.bf16.mxu0 0
      %6348 = vmatpush1.bf16.msra.mxu0 %v5904
      %6349 = vmatprep.subr.bf16.mxu0 0
      %6350 = vmatpush1.bf16.msra.mxu0 %v5905
      %6351 = vmatprep.subr.bf16.mxu0 0
      %6352 = vmatpush1.bf16.msra.mxu0 %v5906
      %6353 = vmatprep.subr.bf16.mxu0 0
      %6354 = vmatpush1.bf16.msra.mxu0 %v5907
      %6355 = vmatprep.subr.bf16.mxu0 0
      %6356 = vmatpush1.bf16.msra.mxu0 %v5908
      %6357 = vmatprep.subr.bf16.mxu0 0
      %6358 = vmatpush1.bf16.msra.mxu0 %v5909
      %6359 = vmatprep.subr.bf16.mxu0 0
      %6360 = vmatpush1.bf16.msra.mxu0 %v5910
      %6361 = vmatprep.mubr.bf16.mxu0 %v5285
      %6362 = vmatmul.mubr.bf16.gmra.mrb[0].mxu0 %v5284
      %v6363 = vpop.f32.mrb[0].mxu0
      %v6364 = vadd.f32 %v6203, %v6363
      %v6365 = vpop.f32.mrb[0].mxu0
      %v6366 = vpop.f32.mrb[0].mxu0
      %v6367 = vadd.f32 %v6206, %v6366
      %v6368 = vpop.f32.mrb[0].mxu0
      %6369 = vmatprep.mubr.bf16.mxu0 %v5294
      %6370 = vmatmul.mubr.bf16.gmra.mrb[0].mxu0 %v5293
      %v6371 = vpop.f32.mrb[0].mxu0
      %v6372 = vadd.f32 %v6211, %v6371
      %v6373 = vpop.f32.mrb[0].mxu0
      %v6374 = vpop.f32.mrb[0].mxu0
      %v6375 = vadd.f32 %v6214, %v6374
      %v6376 = vpop.f32.mrb[0].mxu0
      %6377 = vmatprep.mubr.bf16.mxu0 %v5303
      %6378 = vmatmul.mubr.bf16.gmra.mrb[0].mxu0 %v5302
      %v6379 = vpop.f32.mrb[0].mxu0
      %v6380 = vadd.f32 %v6219, %v6379
      %v6381 = vpop.f32.mrb[0].mxu0
      %v6382 = vpop.f32.mrb[0].mxu0
      %v6383 = vadd.f32 %v6222, %v6382
      %v6384 = vpop.f32.mrb[0].mxu0
      %6385 = vmatprep.mubr.bf16.mxu0 %v5312
      %6386 = vmatmul.mubr.bf16.gmra.mrb[0].mxu0 %v5311
      %v6387 = vpop.f32.mrb[0].mxu0
      %v6388 = vadd.f32 %v6227, %v6387
      %v6389 = vpop.f32.mrb[0].mxu0
      %v6390 = vpop.f32.mrb[0].mxu0
      %v6391 = vadd.f32 %v6230, %v6390
      %v6392 = vpop.f32.mrb[0].mxu0
      %6393 = vmatprep.mubr.bf16.mxu0 %v5321
      %6394 = vmatmul.mubr.bf16.gmra.mrb[0].mxu0 %v5320
      %v6395 = vpop.f32.mrb[0].mxu0
      %v6396 = vadd.f32 %v6235, %v6395
      %v6397 = vpop.f32.mrb[0].mxu0
      %v6398 = vpop.f32.mrb[0].mxu0
      %v6399 = vadd.f32 %v6238, %v6398
      %v6400 = vpop.f32.mrb[0].mxu0
      %6401 = vmatprep.mubr.bf16.mxu0 %v5330
      %6402 = vmatmul.mubr.bf16.gmra.mrb[0].mxu0 %v5329
      %v6403 = vpop.f32.mrb[0].mxu0
      %v6404 = vadd.f32 %v6243, %v6403
      %v6405 = vpop.f32.mrb[0].mxu0
      %v6406 = vpop.f32.mrb[0].mxu0
      %v6407 = vadd.f32 %v6246, %v6406
      %v6408 = vpop.f32.mrb[0].mxu0
      %6409 = vmatprep.mubr.bf16.mxu0 %v5339
      %6410 = vmatmul.mubr.bf16.gmra.mrb[0].mxu0 %v5338
      %v6411 = vpop.f32.mrb[0].mxu0
      %v6412 = vadd.f32 %v6251, %v6411
      %v6413 = vpop.f32.mrb[0].mxu0
      %v6414 = vpop.f32.mrb[0].mxu0
      %v6415 = vadd.f32 %v6254, %v6414
      %v6416 = vpop.f32.mrb[0].mxu0
      %6417 = vmatprep.mubr.bf16.mxu0 %v5348
      %6418 = vmatmul.mubr.bf16.gmra.mrb[0].mxu0 %v5347
      %v6419 = vpop.f32.mrb[0].mxu0
      %v6420 = vadd.f32 %v6259, %v6419
      %v6421 = vpop.f32.mrb[0].mxu0
      %v6422 = vpop.f32.mrb[0].mxu0
      %v6423 = vadd.f32 %v6262, %v6422
      %v6424 = vpop.f32.mrb[0].mxu0
      %6425 = vmatprep.mubr.bf16.mxu0 %v5357
      %6426 = vmatmul.mubr.bf16.gmra.mrb[0].mxu0 %v5356
      %v6427 = vpop.f32.mrb[0].mxu0
      %v6428 = vadd.f32 %v6267, %v6427
      %v6429 = vpop.f32.mrb[0].mxu0
      %v6430 = vpop.f32.mrb[0].mxu0
      %v6431 = vadd.f32 %v6270, %v6430
      %v6432 = vpop.f32.mrb[0].mxu0
      %6433 = vmatprep.mubr.bf16.mxu0 %v5366
      %6434 = vmatmul.mubr.bf16.gmra.mrb[0].mxu0 %v5365
      %v6435 = vpop.f32.mrb[0].mxu0
      %v6436 = vadd.f32 %v6275, %v6435
      %v6437 = vpop.f32.mrb[0].mxu0
      %v6438 = vpop.f32.mrb[0].mxu0
      %v6439 = vadd.f32 %v6278, %v6438
      %v6440 = vpop.f32.mrb[0].mxu0
      %6441 = vmatprep.mubr.bf16.mxu0 %v5375
      %6442 = vmatmul.mubr.bf16.gmra.mrb[0].mxu0 %v5374
      %v6443 = vpop.f32.mrb[0].mxu0
      %v6444 = vadd.f32 %v6283, %v6443
      %v6445 = vpop.f32.mrb[0].mxu0
      %v6446 = vpop.f32.mrb[0].mxu0
      %v6447 = vadd.f32 %v6286, %v6446
      %v6448 = vpop.f32.mrb[0].mxu0
      %6449 = vmatprep.mubr.bf16.mxu0 %v5384
      %6450 = vmatmul.mubr.bf16.gmra.mrb[0].mxu0 %v5383
      %v6451 = vpop.f32.mrb[0].mxu0
      %v6452 = vadd.f32 %v6291, %v6451
      %v6453 = vpop.f32.mrb[0].mxu0
      %v6454 = vpop.f32.mrb[0].mxu0
      %v6455 = vadd.f32 %v6294, %v6454
      %v6456 = vpop.f32.mrb[0].mxu0
      %6457 = vmatprep.mubr.bf16.mxu0 %v5393
      %6458 = vmatmul.mubr.bf16.gmra.mrb[0].mxu0 %v5392
      %v6459 = vpop.f32.mrb[0].mxu0
      %v6460 = vadd.f32 %v6299, %v6459
      %v6461 = vpop.f32.mrb[0].mxu0
      %v6462 = vpop.f32.mrb[0].mxu0
      %v6463 = vadd.f32 %v6302, %v6462
      %v6464 = vpop.f32.mrb[0].mxu0
      %6465 = vmatprep.mubr.bf16.mxu0 %v5402
      %6466 = vmatmul.mubr.bf16.gmra.mrb[0].mxu0 %v5401
      %v6467 = vpop.f32.mrb[0].mxu0
      %v6468 = vadd.f32 %v6307, %v6467
      %v6469 = vpop.f32.mrb[0].mxu0
      %v6470 = vpop.f32.mrb[0].mxu0
      %v6471 = vadd.f32 %v6310, %v6470
      %v6472 = vpop.f32.mrb[0].mxu0
      %6473 = vmatprep.mubr.bf16.mxu0 %v5411
      %6474 = vmatmul.mubr.bf16.gmra.mrb[0].mxu0 %v5410
      %v6475 = vpop.f32.mrb[0].mxu0
      %v6476 = vadd.f32 %v6315, %v6475
      %v6477 = vpop.f32.mrb[0].mxu0
      %v6478 = vpop.f32.mrb[0].mxu0
      %v6479 = vadd.f32 %v6318, %v6478
      %v6480 = vpop.f32.mrb[0].mxu0
      %6481 = vmatprep.mubr.bf16.mxu0 %v5420
      %6482 = vmatmul.mubr.bf16.gmra.mrb[0].mxu0 %v5419
      %v6483 = vpop.f32.mrb[0].mxu0
      %v6484 = vadd.f32 %v6323, %v6483
      %v6485 = vpop.f32.mrb[0].mxu0
      %v6486 = vpop.f32.mrb[0].mxu0
      %v6487 = vadd.f32 %v6326, %v6486
      %v6488 = vpop.f32.mrb[0].mxu0
      %6489 = vdwg.mxu0
      %6490 = vmatprep.subr.bf16.mxu0 0
      %6491 = vmatpush1.bf16.msra.mxu0 %v5911
      %6492 = vmatprep.subr.bf16.mxu0 0
      %6493 = vmatpush1.bf16.msra.mxu0 %v5912
      %6494 = vmatprep.subr.bf16.mxu0 0
      %6495 = vmatpush1.bf16.msra.mxu0 %v5913
      %6496 = vmatprep.subr.bf16.mxu0 0
      %6497 = vmatpush1.bf16.msra.mxu0 %v5914
      %6498 = vmatprep.subr.bf16.mxu0 0
      %6499 = vmatpush1.bf16.msra.mxu0 %v5915
      %6500 = vmatprep.subr.bf16.mxu0 0
      %6501 = vmatpush1.bf16.msra.mxu0 %v5916
      %6502 = vmatprep.subr.bf16.mxu0 0
      %6503 = vmatpush1.bf16.msra.mxu0 %v5917
      %6504 = vmatprep.subr.bf16.mxu0 0
      %6505 = vmatpush1.bf16.msra.mxu0 %v5918
      %6506 = vmatprep.subr.bf16.mxu0 0
      %6507 = vmatpush1.bf16.msra.mxu0 %v5919
      %6508 = vmatprep.subr.bf16.mxu0 0
      %6509 = vmatpush1.bf16.msra.mxu0 %v5920
      %6510 = vmatprep.subr.bf16.mxu0 0
      %6511 = vmatpush1.bf16.msra.mxu0 %v5921
      %6512 = vmatprep.subr.bf16.mxu0 0
      %6513 = vmatpush1.bf16.msra.mxu0 %v5922
      %6514 = vmatprep.subr.bf16.mxu0 0
      %6515 = vmatpush1.bf16.msra.mxu0 %v5923
      %6516 = vmatprep.subr.bf16.mxu0 0
      %6517 = vmatpush1.bf16.msra.mxu0 %v5924
      %6518 = vmatprep.subr.bf16.mxu0 0
      %6519 = vmatpush1.bf16.msra.mxu0 %v5925
      %6520 = vmatprep.subr.bf16.mxu0 0
      %6521 = vmatpush1.bf16.msra.mxu0 %v5926
      %6522 = vmatprep.mubr.bf16.mxu0 %v5287
      %6523 = vmatmul.mubr.bf16.gmra.mrb[0].mxu0 %v5286
      %v6524 = vpop.f32.mrb[0].mxu0
      %v6525 = vadd.f32 %v6364, %v6524
      %v6526 = vpop.f32.mrb[0].mxu0
      %v6527 = vpop.f32.mrb[0].mxu0
      %v6528 = vadd.f32 %v6367, %v6527
      %v6529 = vpop.f32.mrb[0].mxu0
      %6530 = vmatprep.mubr.bf16.mxu0 %v5296
      %6531 = vmatmul.mubr.bf16.gmra.mrb[0].mxu0 %v5295
      %v6532 = vpop.f32.mrb[0].mxu0
      %v6533 = vadd.f32 %v6372, %v6532
      %v6534 = vpop.f32.mrb[0].mxu0
      %v6535 = vpop.f32.mrb[0].mxu0
      %v6536 = vadd.f32 %v6375, %v6535
      %v6537 = vpop.f32.mrb[0].mxu0
      %6538 = vmatprep.mubr.bf16.mxu0 %v5305
      %6539 = vmatmul.mubr.bf16.gmra.mrb[0].mxu0 %v5304
      %v6540 = vpop.f32.mrb[0].mxu0
      %v6541 = vadd.f32 %v6380, %v6540
      %v6542 = vpop.f32.mrb[0].mxu0
      %v6543 = vpop.f32.mrb[0].mxu0
      %v6544 = vadd.f32 %v6383, %v6543
      %v6545 = vpop.f32.mrb[0].mxu0
      %6546 = vmatprep.mubr.bf16.mxu0 %v5314
      %6547 = vmatmul.mubr.bf16.gmra.mrb[0].mxu0 %v5313
      %v6548 = vpop.f32.mrb[0].mxu0
      %v6549 = vadd.f32 %v6388, %v6548
      %v6550 = vpop.f32.mrb[0].mxu0
      %v6551 = vpop.f32.mrb[0].mxu0
      %v6552 = vadd.f32 %v6391, %v6551
      %v6553 = vpop.f32.mrb[0].mxu0
      %6554 = vmatprep.mubr.bf16.mxu0 %v5323
      %6555 = vmatmul.mubr.bf16.gmra.mrb[0].mxu0 %v5322
      %v6556 = vpop.f32.mrb[0].mxu0
      %v6557 = vadd.f32 %v6396, %v6556
      %v6558 = vpop.f32.mrb[0].mxu0
      %v6559 = vpop.f32.mrb[0].mxu0
      %v6560 = vadd.f32 %v6399, %v6559
      %v6561 = vpop.f32.mrb[0].mxu0
      %6562 = vmatprep.mubr.bf16.mxu0 %v5332
      %6563 = vmatmul.mubr.bf16.gmra.mrb[0].mxu0 %v5331
      %v6564 = vpop.f32.mrb[0].mxu0
      %v6565 = vadd.f32 %v6404, %v6564
      %v6566 = vpop.f32.mrb[0].mxu0
      %v6567 = vpop.f32.mrb[0].mxu0
      %v6568 = vadd.f32 %v6407, %v6567
      %v6569 = vpop.f32.mrb[0].mxu0
      %6570 = vmatprep.mubr.bf16.mxu0 %v5341
      %6571 = vmatmul.mubr.bf16.gmra.mrb[0].mxu0 %v5340
      %v6572 = vpop.f32.mrb[0].mxu0
      %v6573 = vadd.f32 %v6412, %v6572
      %v6574 = vpop.f32.mrb[0].mxu0
      %v6575 = vpop.f32.mrb[0].mxu0
      %v6576 = vadd.f32 %v6415, %v6575
      %v6577 = vpop.f32.mrb[0].mxu0
      %6578 = vmatprep.mubr.bf16.mxu0 %v5350
      %6579 = vmatmul.mubr.bf16.gmra.mrb[0].mxu0 %v5349
      %v6580 = vpop.f32.mrb[0].mxu0
      %v6581 = vadd.f32 %v6420, %v6580
      %v6582 = vpop.f32.mrb[0].mxu0
      %v6583 = vpop.f32.mrb[0].mxu0
      %v6584 = vadd.f32 %v6423, %v6583
      %v6585 = vpop.f32.mrb[0].mxu0
      %6586 = vmatprep.mubr.bf16.mxu0 %v5359
      %6587 = vmatmul.mubr.bf16.gmra.mrb[0].mxu0 %v5358
      %v6588 = vpop.f32.mrb[0].mxu0
      %v6589 = vadd.f32 %v6428, %v6588
      %v6590 = vpop.f32.mrb[0].mxu0
      %v6591 = vpop.f32.mrb[0].mxu0
      %v6592 = vadd.f32 %v6431, %v6591
      %v6593 = vpop.f32.mrb[0].mxu0
      %6594 = vmatprep.mubr.bf16.mxu0 %v5368
      %6595 = vmatmul.mubr.bf16.gmra.mrb[0].mxu0 %v5367
      %v6596 = vpop.f32.mrb[0].mxu0
      %v6597 = vadd.f32 %v6436, %v6596
      %v6598 = vpop.f32.mrb[0].mxu0
      %v6599 = vpop.f32.mrb[0].mxu0
      %v6600 = vadd.f32 %v6439, %v6599
      %v6601 = vpop.f32.mrb[0].mxu0
      %6602 = vmatprep.mubr.bf16.mxu0 %v5377
      %6603 = vmatmul.mubr.bf16.gmra.mrb[0].mxu0 %v5376
      %v6604 = vpop.f32.mrb[0].mxu0
      %v6605 = vadd.f32 %v6444, %v6604
      %v6606 = vpop.f32.mrb[0].mxu0
      %v6607 = vpop.f32.mrb[0].mxu0
      %v6608 = vadd.f32 %v6447, %v6607
      %v6609 = vpop.f32.mrb[0].mxu0
      %6610 = vmatprep.mubr.bf16.mxu0 %v5386
      %6611 = vmatmul.mubr.bf16.gmra.mrb[0].mxu0 %v5385
      %v6612 = vpop.f32.mrb[0].mxu0
      %v6613 = vadd.f32 %v6452, %v6612
      %v6614 = vpop.f32.mrb[0].mxu0
      %v6615 = vpop.f32.mrb[0].mxu0
      %v6616 = vadd.f32 %v6455, %v6615
      %v6617 = vpop.f32.mrb[0].mxu0
      %6618 = vmatprep.mubr.bf16.mxu0 %v5395
      %6619 = vmatmul.mubr.bf16.gmra.mrb[0].mxu0 %v5394
      %v6620 = vpop.f32.mrb[0].mxu0
      %v6621 = vadd.f32 %v6460, %v6620
      %v6622 = vpop.f32.mrb[0].mxu0
      %v6623 = vpop.f32.mrb[0].mxu0
      %v6624 = vadd.f32 %v6463, %v6623
      %v6625 = vpop.f32.mrb[0].mxu0
      %6626 = vmatprep.mubr.bf16.mxu0 %v5404
      %6627 = vmatmul.mubr.bf16.gmra.mrb[0].mxu0 %v5403
      %v6628 = vpop.f32.mrb[0].mxu0
      %v6629 = vadd.f32 %v6468, %v6628
      %v6630 = vpop.f32.mrb[0].mxu0
      %v6631 = vpop.f32.mrb[0].mxu0
      %v6632 = vadd.f32 %v6471, %v6631
      %v6633 = vpop.f32.mrb[0].mxu0
      %6634 = vmatprep.mubr.bf16.mxu0 %v5413
      %6635 = vmatmul.mubr.bf16.gmra.mrb[0].mxu0 %v5412
      %v6636 = vpop.f32.mrb[0].mxu0
      %v6637 = vadd.f32 %v6476, %v6636
      %v6638 = vpop.f32.mrb[0].mxu0
      %v6639 = vpop.f32.mrb[0].mxu0
      %v6640 = vadd.f32 %v6479, %v6639
      %v6641 = vpop.f32.mrb[0].mxu0
      %6642 = vmatprep.mubr.bf16.mxu0 %v5422
      %6643 = vmatmul.mubr.bf16.gmra.mrb[0].mxu0 %v5421
      %v6644 = vpop.f32.mrb[0].mxu0
      %v6645 = vadd.f32 %v6484, %v6644
      %v6646 = vpop.f32.mrb[0].mxu0
      %v6647 = vpop.f32.mrb[0].mxu0
      %v6648 = vadd.f32 %v6487, %v6647
      %v6649 = vpop.f32.mrb[0].mxu0
      %6650 = vdwg.mxu0
      %6651 = vmatprep.subr.bf16.mxu0 0
      %6652 = vmatpush1.bf16.msra.mxu0 %v5927
      %6653 = vmatprep.subr.bf16.mxu0 0
      %6654 = vmatpush1.bf16.msra.mxu0 %v5928
      %6655 = vmatprep.subr.bf16.mxu0 0
      %6656 = vmatpush1.bf16.msra.mxu0 %v5929
      %6657 = vmatprep.subr.bf16.mxu0 0
      %6658 = vmatpush1.bf16.msra.mxu0 %v5930
      %6659 = vmatprep.subr.bf16.mxu0 0
      %6660 = vmatpush1.bf16.msra.mxu0 %v5931
      %6661 = vmatprep.subr.bf16.mxu0 0
      %6662 = vmatpush1.bf16.msra.mxu0 %v5932
      %6663 = vmatprep.subr.bf16.mxu0 0
      %6664 = vmatpush1.bf16.msra.mxu0 %v5933
      %6665 = vmatprep.subr.bf16.mxu0 0
      %6666 = vmatpush1.bf16.msra.mxu0 %v5934
      %6667 = vmatprep.subr.bf16.mxu0 0
      %6668 = vmatpush1.bf16.msra.mxu0 0
      %6669 = vmatprep.subr.bf16.mxu0 0
      %6670 = vmatpush1.bf16.msra.mxu0 0
      %6671 = vmatprep.subr.bf16.mxu0 0
      %6672 = vmatpush1.bf16.msra.mxu0 0
      %6673 = vmatprep.subr.bf16.mxu0 0
      %6674 = vmatpush1.bf16.msra.mxu0 0
      %6675 = vmatprep.subr.bf16.mxu0 0
      %6676 = vmatpush1.bf16.msra.mxu0 0
      %6677 = vmatprep.subr.bf16.mxu0 0
      %6678 = vmatpush1.bf16.msra.mxu0 0
      %6679 = vmatprep.subr.bf16.mxu0 0
      %6680 = vmatpush1.bf16.msra.mxu0 0
      %6681 = vmatprep.subr.bf16.mxu0 0
      %6682 = vmatpush1.bf16.msra.mxu0 0
      %6683 = vmatprep.mubr.bf16.mxu0 0
      %6684 = vmatmul.mubr.bf16.gmra.mrb[0].mxu0 %v5288
      %v6685 = vpop.f32.mrb[0].mxu0
      %v6686 = vadd.f32 %v6525, %v6685
      %v6687 = vpop.f32.mrb[0].mxu0
      %v6688 = vpop.f32.mrb[0].mxu0
      %v6689 = vadd.f32 %v6528, %v6688
      %v6690 = vpop.f32.mrb[0].mxu0
      %6691 = vmatprep.mubr.bf16.mxu0 0
      %6692 = vmatmul.mubr.bf16.gmra.mrb[0].mxu0 %v5297
      %v6693 = vpop.f32.mrb[0].mxu0
      %v6694 = vadd.f32 %v6533, %v6693
      %v6695 = vpop.f32.mrb[0].mxu0
      %v6696 = vpop.f32.mrb[0].mxu0
      %v6697 = vadd.f32 %v6536, %v6696
      %v6698 = vpop.f32.mrb[0].mxu0
      %6699 = vmatprep.mubr.bf16.mxu0 0
      %6700 = vmatmul.mubr.bf16.gmra.mrb[0].mxu0 %v5306
      %v6701 = vpop.f32.mrb[0].mxu0
      %v6702 = vadd.f32 %v6541, %v6701
      %v6703 = vpop.f32.mrb[0].mxu0
      %v6704 = vpop.f32.mrb[0].mxu0
      %v6705 = vadd.f32 %v6544, %v6704
      %v6706 = vpop.f32.mrb[0].mxu0
      %6707 = vmatprep.mubr.bf16.mxu0 0
      %6708 = vmatmul.mubr.bf16.gmra.mrb[0].mxu0 %v5315
      %v6709 = vpop.f32.mrb[0].mxu0
      %v6710 = vadd.f32 %v6549, %v6709
      %v6711 = vpop.f32.mrb[0].mxu0
      %v6712 = vpop.f32.mrb[0].mxu0
      %v6713 = vadd.f32 %v6552, %v6712
      %v6714 = vpop.f32.mrb[0].mxu0
      %6715 = vmatprep.mubr.bf16.mxu0 0
      %6716 = vmatmul.mubr.bf16.gmra.mrb[0].mxu0 %v5324
      %v6717 = vpop.f32.mrb[0].mxu0
      %v6718 = vadd.f32 %v6557, %v6717
      %v6719 = vpop.f32.mrb[0].mxu0
      %v6720 = vpop.f32.mrb[0].mxu0
      %v6721 = vadd.f32 %v6560, %v6720
      %v6722 = vpop.f32.mrb[0].mxu0
      %6723 = vmatprep.mubr.bf16.mxu0 0
      %6724 = vmatmul.mubr.bf16.gmra.mrb[0].mxu0 %v5333
      %v6725 = vpop.f32.mrb[0].mxu0
      %v6726 = vadd.f32 %v6565, %v6725
      %v6727 = vpop.f32.mrb[0].mxu0
      %v6728 = vpop.f32.mrb[0].mxu0
      %v6729 = vadd.f32 %v6568, %v6728
      %v6730 = vpop.f32.mrb[0].mxu0
      %6731 = vmatprep.mubr.bf16.mxu0 0
      %6732 = vmatmul.mubr.bf16.gmra.mrb[0].mxu0 %v5342
      %v6733 = vpop.f32.mrb[0].mxu0
      %v6734 = vadd.f32 %v6573, %v6733
      %v6735 = vpop.f32.mrb[0].mxu0
      %v6736 = vpop.f32.mrb[0].mxu0
      %v6737 = vadd.f32 %v6576, %v6736
      %v6738 = vpop.f32.mrb[0].mxu0
      %6739 = vmatprep.mubr.bf16.mxu0 0
      %6740 = vmatmul.mubr.bf16.gmra.mrb[0].mxu0 %v5351
      %v6741 = vpop.f32.mrb[0].mxu0
      %v6742 = vadd.f32 %v6581, %v6741
      %v6743 = vpop.f32.mrb[0].mxu0
      %v6744 = vpop.f32.mrb[0].mxu0
      %v6745 = vadd.f32 %v6584, %v6744
      %v6746 = vpop.f32.mrb[0].mxu0
      %6747 = vmatprep.mubr.bf16.mxu0 0
      %6748 = vmatmul.mubr.bf16.gmra.mrb[0].mxu0 %v5360
      %v6749 = vpop.f32.mrb[0].mxu0
      %v6750 = vadd.f32 %v6589, %v6749
      %v6751 = vpop.f32.mrb[0].mxu0
      %v6752 = vpop.f32.mrb[0].mxu0
      %v6753 = vadd.f32 %v6592, %v6752
      %v6754 = vpop.f32.mrb[0].mxu0
      %6755 = vmatprep.mubr.bf16.mxu0 0
      %6756 = vmatmul.mubr.bf16.gmra.mrb[0].mxu0 %v5369
      %v6757 = vpop.f32.mrb[0].mxu0
      %v6758 = vadd.f32 %v6597, %v6757
      %v6759 = vpop.f32.mrb[0].mxu0
      %v6760 = vpop.f32.mrb[0].mxu0
      %v6761 = vadd.f32 %v6600, %v6760
      %v6762 = vpop.f32.mrb[0].mxu0
      %6763 = vmatprep.mubr.bf16.mxu0 0
      %6764 = vmatmul.mubr.bf16.gmra.mrb[0].mxu0 %v5378
      %v6765 = vpop.f32.mrb[0].mxu0
      %v6766 = vadd.f32 %v6605, %v6765
      %v6767 = vpop.f32.mrb[0].mxu0
      %v6768 = vpop.f32.mrb[0].mxu0
      %v6769 = vadd.f32 %v6608, %v6768
      %v6770 = vpop.f32.mrb[0].mxu0
      %6771 = vmatprep.mubr.bf16.mxu0 0
      %6772 = vmatmul.mubr.bf16.gmra.mrb[0].mxu0 %v5387
      %v6773 = vpop.f32.mrb[0].mxu0
      %v6774 = vadd.f32 %v6613, %v6773
      %v6775 = vpop.f32.mrb[0].mxu0
      %v6776 = vpop.f32.mrb[0].mxu0
      %v6777 = vadd.f32 %v6616, %v6776
      %v6778 = vpop.f32.mrb[0].mxu0
      %6779 = vmatprep.mubr.bf16.mxu0 0
      %6780 = vmatmul.mubr.bf16.gmra.mrb[0].mxu0 %v5396
      %v6781 = vpop.f32.mrb[0].mxu0
      %v6782 = vadd.f32 %v6621, %v6781
      %v6783 = vpop.f32.mrb[0].mxu0
      %v6784 = vpop.f32.mrb[0].mxu0
      %v6785 = vadd.f32 %v6624, %v6784
      %v6786 = vpop.f32.mrb[0].mxu0
      %6787 = vmatprep.mubr.bf16.mxu0 0
      %6788 = vmatmul.mubr.bf16.gmra.mrb[0].mxu0 %v5405
      %v6789 = vpop.f32.mrb[0].mxu0
      %v6790 = vadd.f32 %v6629, %v6789
      %v6791 = vpop.f32.mrb[0].mxu0
      %v6792 = vpop.f32.mrb[0].mxu0
      %v6793 = vadd.f32 %v6632, %v6792
      %v6794 = vpop.f32.mrb[0].mxu0
      %6795 = vmatprep.mubr.bf16.mxu0 0
      %6796 = vmatmul.mubr.bf16.gmra.mrb[0].mxu0 %v5414
      %v6797 = vpop.f32.mrb[0].mxu0
      %v6798 = vadd.f32 %v6637, %v6797
      %v6799 = vpop.f32.mrb[0].mxu0
      %v6800 = vpop.f32.mrb[0].mxu0
      %v6801 = vadd.f32 %v6640, %v6800
      %v6802 = vpop.f32.mrb[0].mxu0
      %6803 = vmatprep.mubr.bf16.mxu0 0
      %6804 = vmatmul.mubr.bf16.gmra.mrb[0].mxu0 %v5423
      %v6805 = vpop.f32.mrb[0].mxu0
      %v6806 = vadd.f32 %v6645, %v6805
      %v6807 = vpop.f32.mrb[0].mxu0
      %v6808 = vpop.f32.mrb[0].mxu0
      %v6809 = vadd.f32 %v6648, %v6808
      %v6810 = vpop.f32.mrb[0].mxu0
      %6811 = vdwg.mxu0
      %6812 = vst [vmem:[%s280] sm:$0xff] %v6686
      %6813 = vst [vmem:[%s280 + $0x8] sm:$0xff] %v6689
      %6814 = vst [vmem:[%s280 + $0x10] sm:$0xff] %v6694
      %6815 = vst [vmem:[%s280 + $0x18] sm:$0xff] %v6697
      %6816 = vst [vmem:[%s280 + $0x20] sm:$0xff] %v6702
      %6817 = vst [vmem:[%s280 + $0x28] sm:$0xff] %v6705
      %6818 = vst [vmem:[%s280 + $0x30] sm:$0xff] %v6710
      %6819 = vst [vmem:[%s280 + $0x38] sm:$0xff] %v6713
      %6820 = vst [vmem:[%s280 + $0x40] sm:$0xff] %v6718
      %6821 = vst [vmem:[%s280 + $0x48] sm:$0xff] %v6721
      %6822 = vst [vmem:[%s280 + $0x50] sm:$0xff] %v6726
      %6823 = vst [vmem:[%s280 + $0x58] sm:$0xff] %v6729
      %6824 = vst [vmem:[%s280 + $0x60] sm:$0xff] %v6734
      %6825 = vst [vmem:[%s280 + $0x68] sm:$0xff] %v6737
      %6826 = vst [vmem:[%s280 + $0x70] sm:$0xff] %v6742
      %6827 = vst [vmem:[%s280 + $0x78] sm:$0xff] %v6745
      %6828 = vst [vmem:[%s280 + $0x80] sm:$0xff] %v6750
      %6829 = vst [vmem:[%s280 + $0x88] sm:$0xff] %v6753
      %6830 = vst [vmem:[%s280 + $0x90] sm:$0xff] %v6758
      %6831 = vst [vmem:[%s280 + $0x98] sm:$0xff] %v6761
      %6832 = vst [vmem:[%s280 + $0xa0] sm:$0xff] %v6766
      %6833 = vst [vmem:[%s280 + $0xa8] sm:$0xff] %v6769
      %6834 = vst [vmem:[%s280 + $0xb0] sm:$0xff] %v6774
      %6835 = vst [vmem:[%s280 + $0xb8] sm:$0xff] %v6777
      %6836 = vst [vmem:[%s280 + $0xc0] sm:$0xff] %v6782
      %6837 = vst [vmem:[%s280 + $0xc8] sm:$0xff] %v6785
      %6838 = vst [vmem:[%s280 + $0xd0] sm:$0xff] %v6790
      %6839 = vst [vmem:[%s280 + $0xd8] sm:$0xff] %v6793
      %6840 = vst [vmem:[%s280 + $0xe0] sm:$0xff] %v6798
      %6841 = vst [vmem:[%s280 + $0xe8] sm:$0xff] %v6801
      %6842 = vst [vmem:[%s280 + $0xf0] sm:$0xff] %v6806
      %6843 = vst [vmem:[%s280 + $0xf8] sm:$0xff] %v6809
      %s6844 = smul.u32 32, %s18
      %p6845 = scmp.lt.s32.totalorder %s6844, 63
      %s6846 = scalar_select %p6845, %s6844, 63
      %s6847 = smul.addr %s6846, 8
      %s6848 = scalar_lea.vmem %s7, %s6847
      // Predicated region
      $region49: #{encoder_forward.1} parent=47 // pred_check
        %p6849 = pneg %p188
      $region50: #{encoder_forward.1} parent=47 // pred_check_branch
        %6851 = sbr.rel (%p6849) target = $region52
      $region51: #{encoder_forward.1} parent=47 // pred_region
        %s6852 = smul.u32 32, %s18
      $region52: #{encoder_forward.1} parent=47 // pred_fallthru
        _
    $region48: #{encoder_forward.1} parent=5 // pred_fallthru
      _
    %p6853 = scmp.le.s32.totalorder 2, %s13
    // Predicated region
    $region53: #{encoder_forward.1} parent=5 // pred_check
      %p6854 = pneg %p6853
    $region54: #{encoder_forward.1} parent=5 // pred_check_branch
      %6856 = sbr.rel (%p6854) target = $region56
    $region55: #{encoder_forward.1} parent=5 // pred_region
      %s6857 = ssub.s32 %s13, 2
      // Predicated region
      $region57: #{encoder_forward.1} parent=55 // pred_check
        %p6858 = pneg %p194
      $region58: #{encoder_forward.1} parent=55 // pred_check_branch
        %6860 = sbr.rel (%p6858) target = $region60
      $region59: #{encoder_forward.1} parent=55 // pred_region
        %s6861 = smul.u32 32, %s19
        %p6862 = scmp.lt.s32.totalorder %s6861, 63
        %s6863 = scalar_select %p6862, %s6861, 63
        %s6864 = smul.addr %s6863, 8
        %s6865 = scalar_lea.vmem %s7, %s6864
      $region60: #{encoder_forward.1} parent=55 // pred_fallthru
        _
    $region56: #{encoder_forward.1} parent=5 // pred_fallthru
      _
  $region6: #{encoder_forward.1} parent=0 // loop_footer
    %s17 = sadd.s32 1, %s13
  $region7: #{encoder_forward.1} parent=0 // loop_footer_branch
    %12 = sbr.rel target = $region3
  $region8: #{encoder_forward.1} parent=0 // loop_exit
    _

</llo_original>
